<compile_context>
chip_gen: v7x
topology: tpu7x:2x2x1
jax: 0.10.0
libtpu: 0.0.40
codegen_flags: <defaults>
</compile_context>

<pallas_src>
import jax
import jax.numpy as jnp
from jax import lax
from jax.experimental import pallas as pl
from jax.experimental.pallas import tpu as pltpu

# ---------------- configuration (small, consistent with the module) -------------
B, S = 2, 8
B_PAD = 8                                   # batch padded to a full sublane group
LEX_DIM, CHAR_DIM, FT_DIM = 16, 8, 8
IN_DIM = LEX_DIM + CHAR_DIM + FT_DIM        # LSTM input size = 32
MLP_INPUT = 32                              # LSTM hidden per direction / biaffine dim
MLP_TAG_HIDDEN = 32
MLP_ARC_HIDDEN = 32
MLP_LAB_HIDDEN = 32
TAGSET_SIZE = 12
NUM_LABELS = 6
NUM_LSTM_LAYERS = 3
WORD_VOCAB, CHAR_VOCAB, FT_VOCAB = 40, 30, 30
HEADS_OUT_PAD = 256                         # MLP second-stage slab width (zero-padded)
PW = S * B_PAD                              # 64: width of one score block in the output
OUT_W = (1 + NUM_LABELS) * PW + 2 * MLP_INPUT   # 512: [arc | lab_0..5 | tag(+pad)]


# ---------------------------------- fused kernel ---------------------------------
def parser_fused_kernel(x0_ref,
                        wih0_ref, whh0_ref, lb0_ref,
                        wih1_ref, whh1_ref, lb1_ref,
                        wih2_ref, whh2_ref, lb2_ref,
                        w1_ref, b1_ref, w2_ref, b2_ref,
                        uarc_ref, ulab_ref,
                        out_ref,
                        act0_ref, act1_ref, act2_ref):
    """Whole BiAffineParser forward (post-embedding) in one kernel.

    x0_ref   : (S*Bp, 2*IN)   row t*Bp+b = [x_t | x_{S-1-t}]
    wihL_ref : (DinL, 8H)     gate-interleaved cols [i_f i_b f_f f_b g_f g_b o_f o_b]
    whhL_ref : (2H, 8H)       block-diagonal (fwd rows -> fwd cols, bwd rows -> bwd cols)
    lbL_ref  : (1, 8H)        (b_ih + b_hh) per direction, interleaved like the gates
    w1_ref   : (4H, 160)      5 MLP heads' first layers, row-permuted to the act layout
    w2_ref   : (160, 256)     block-diagonal second layers, zero-padded
    uarc_ref : (d, d)
    ulab_ref : (d, L*d)
    out_ref  : (S*Bp, 512)    [arc P | lab P_0..P_5 | tags+pad], lane-dense
    actL_ref : (S*Bp, 4H)     scratch: row t = [h_f(t) | h_b(rt) | h_f(rt) | h_b(t)]
    """
    H = MLP_INPUT
    Bp = B_PAD
    f32 = jnp.float32

    def bilstm_layer(in_slab, wih_ref, whh_ref, b_ref, out_act_ref):
        # Hoisted input projection: ONE MXU matmul covers both directions and all
        # timesteps (the bwd time-flip is baked into the slab/weight layout).
        gin = jnp.dot(in_slab, wih_ref[...], preferred_element_type=f32) + b_ref[...]
        whh = whh_ref[...]
        h = jnp.zeros((Bp, 2 * H), f32)          # packed [h_f | h_b]
        c = jnp.zeros((Bp, 2 * H), f32)          # packed [c_f | c_b]
        for t in range(S):                       # statically unrolled serial recurrence
            rt = S - 1 - t
            # one fused fwd+bwd (8,64)x(64,256) recurrent matmul per step
            g = gin[t * Bp:(t + 1) * Bp, :] + jnp.dot(h, whh, preferred_element_type=f32)
            i_g = jax.nn.sigmoid(g[:, 0:2 * H])
            f_g = jax.nn.sigmoid(g[:, 2 * H:4 * H])
            c_g = jnp.tanh(g[:, 4 * H:6 * H])
            o_g = jax.nn.sigmoid(g[:, 6 * H:8 * H])
            c = f_g * c + i_g * c_g
            h = o_g * jnp.tanh(c)                # [h_f(t) | h_b(rt)]
            # two tile-row-aligned stores; no concatenate / roll needed
            out_act_ref[t * Bp:(t + 1) * Bp, 0:2 * H] = h
            out_act_ref[rt * Bp:(rt + 1) * Bp, 2 * H:4 * H] = h

    bilstm_layer(x0_ref[...], wih0_ref, whh0_ref, lb0_ref, act0_ref)
    bilstm_layer(act0_ref[...], wih1_ref, whh1_ref, lb1_ref, act1_ref)
    bilstm_layer(act1_ref[...], wih2_ref, whh2_ref, lb2_ref, act2_ref)

    # ---- 5 MLP heads (Linear -> ReLU -> Linear; dropout = identity at eval) ----
    act = act2_ref[...]                                                  # (64, 4H)
    hidden = jnp.maximum(
        jnp.dot(act, w1_ref[...], preferred_element_type=f32) + b1_ref[...], 0.0)
    slab = jnp.dot(hidden, w2_ref[...], preferred_element_type=f32) + b2_ref[...]

    d = H
    arc_h = slab[:, 0 * d:1 * d]
    arc_d = slab[:, 1 * d:2 * d]
    lab_h = slab[:, 2 * d:3 * d]
    lab_d = slab[:, 3 * d:4 * d]
    tag_pad = slab[:, 4 * d:4 * d + 2 * H]       # 12 tag cols + W2's zero-padded cols

    # ---- biaffine scoring: U-multiplies hoisted, all-rows A @ B^T products ----
    dnt = (((1,), (1,)), ((), ()))               # A @ B^T
    arc_P = lax.dot_general(
        jnp.dot(arc_h, uarc_ref[...], preferred_element_type=f32),
        arc_d, dnt, preferred_element_type=f32)                          # (64, 64)
    lab_M = jnp.dot(lab_h, ulab_ref[...], preferred_element_type=f32)    # (64, L*d)
    pieces = [arc_P]
    for l in range(NUM_LABELS):
        pieces.append(lax.dot_general(lab_M[:, l * d:(l + 1) * d], lab_d, dnt,
                                      preferred_element_type=f32))       # (64, 64)
    pieces.append(tag_pad)
    out_ref[...] = jnp.concatenate(pieces, axis=1)   # single lane-dense (64,512) store


# ------------------------------ pallas wrapper ------------------------------------
_VMEM = pl.BlockSpec(memory_space=pltpu.MemorySpace.VMEM)


def run_parser(x0, lstm_params, w1, b1, w2, b2, u_arc, u_lab_flat):
    args = [x0]
    for (wih_p, whh_p, b_p) in lstm_params:
        args += [wih_p, whh_p, b_p]
    args += [w1, b1, w2, b2, u_arc, u_lab_flat]
    n_rows = x0.shape[0]
    return pl.pallas_call(
        parser_fused_kernel,
        out_shape=jax.ShapeDtypeStruct((n_rows, OUT_W), jnp.float32),
        in_specs=[_VMEM] * len(args),
        out_specs=_VMEM,
        scratch_shapes=[pltpu.VMEM((n_rows, 4 * MLP_INPUT), jnp.float32)
                        for _ in range(NUM_LSTM_LAYERS)],
    )(*args)


# ------------------------------ parameter init -----------------------------------
def init_params(key):
    keys = iter(jax.random.split(key, 64))
    nrm = lambda shape, scale=0.1: (scale * jax.random.normal(next(keys), shape)
                                    ).astype(jnp.float32)
    H = MLP_INPUT
    params = {}
    # lexers (modeled as embeddings)
    params["lex_emb"] = nrm((WORD_VOCAB, LEX_DIM))
    params["char_emb"] = nrm((CHAR_VOCAB, CHAR_DIM))
    params["ft_emb"] = nrm((FT_VOCAB, FT_DIM))

    def pack_gate_cols(dst, w, rows, parity):
        """Place a (nrows, 4H) [i,f,g,o] gate matrix into gate-interleaved columns.
        parity 0 -> fwd half of each gate block, 1 -> bwd half."""
        for gi in range(4):
            dst = dst.at[rows, (2 * gi + parity) * H:(2 * gi + parity + 1) * H].set(
                w[:, gi * H:(gi + 1) * H])
        return dst

    # 3-layer bidirectional LSTM, weights pre-packed for the fused kernel:
    #   Whh_packed (2H,8H): packed state [h_f|h_b] -> interleaved gates.
    #   Wih_packed: layer0 input rows = [x_t | x_rt]; layers 1/2 input rows follow the
    #   inter-layer slab layout [h_f(t) | h_b(rt) | h_f(rt) | h_b(t)].
    lstm = []
    for layer in range(NUM_LSTM_LAYERS):
        d_in = IN_DIM if layer == 0 else 2 * H
        wih_f, wih_b = nrm((d_in, 4 * H)), nrm((d_in, 4 * H))
        whh_f, whh_b = nrm((H, 4 * H)), nrm((H, 4 * H))
        b_f = nrm((1, 4 * H)) + nrm((1, 4 * H))        # b_ih + b_hh (fwd)
        b_b = nrm((1, 4 * H)) + nrm((1, 4 * H))        # b_ih + b_hh (bwd)

        if layer == 0:
            wih_p = jnp.zeros((2 * d_in, 8 * H), jnp.float32)
            wih_p = pack_gate_cols(wih_p, wih_f, slice(0, d_in), 0)          # x_t -> fwd
            wih_p = pack_gate_cols(wih_p, wih_b, slice(d_in, 2 * d_in), 1)   # x_rt -> bwd
        else:
            wih_p = jnp.zeros((4 * H, 8 * H), jnp.float32)
            wih_p = pack_gate_cols(wih_p, wih_f[0:H], slice(0, H), 0)        # h_f(t) -> fwd
            wih_p = pack_gate_cols(wih_p, wih_f[H:2 * H], slice(3 * H, 4 * H), 0)  # h_b(t)
            wih_p = pack_gate_cols(wih_p, wih_b[0:H], slice(2 * H, 3 * H), 1)      # h_f(rt)
            wih_p = pack_gate_cols(wih_p, wih_b[H:2 * H], slice(H, 2 * H), 1)      # h_b(rt)

        whh_p = jnp.zeros((2 * H, 8 * H), jnp.float32)
        whh_p = pack_gate_cols(whh_p, whh_f, slice(0, H), 0)
        whh_p = pack_gate_cols(whh_p, whh_b, slice(H, 2 * H), 1)

        b_p = jnp.zeros((1, 8 * H), jnp.float32)
        b_p = pack_gate_cols(b_p, b_f, slice(0, 1), 0)
        b_p = pack_gate_cols(b_p, b_b, slice(0, 1), 1)
        lstm.append((wih_p, whh_p, b_p))
    params["lstm"] = lstm

    # 5 MLP heads packed for the fused kernel:
    #   hidden layout (160): [arc_h | arc_d | lab_h | lab_d | tag] x 32
    #   output layout (256): arc_h[0:32] arc_d[32:64] lab_h[64:96] lab_d[96:128]
    #                        tag[128:140] zero-pad[140:256]
    def head(d_in, d_hid, d_out):
        return (nrm((d_in, d_hid)), nrm((1, d_hid)),
                nrm((d_hid, d_out)), nrm((1, d_out)))

    heads = [head(2 * H, MLP_ARC_HIDDEN, MLP_INPUT),    # arc_mlp_h
             head(2 * H, MLP_ARC_HIDDEN, MLP_INPUT),    # arc_mlp_d
             head(2 * H, MLP_LAB_HIDDEN, MLP_INPUT),    # lab_mlp_h
             head(2 * H, MLP_LAB_HIDDEN, MLP_INPUT),    # lab_mlp_d
             head(2 * H, MLP_TAG_HIDDEN, TAGSET_SIZE)]  # pos_tagger
    hid_cat = sum(h[0].shape[1] for h in heads)         # 160
    w1 = jnp.concatenate([h[0] for h in heads], axis=1)                  # (2H, 160)
    params["heads_b1"] = jnp.concatenate([h[1] for h in heads], axis=1)  # (1, 160)
    # row-permute W1 into the 4H act-slab layout: token input = cols {0:H, 3H:4H}
    w1_p = jnp.zeros((4 * H, hid_cat), jnp.float32)
    w1_p = w1_p.at[0:H, :].set(w1[0:H, :])              # h_f(t) rows
    w1_p = w1_p.at[3 * H:4 * H, :].set(w1[H:2 * H, :])  # h_b(t) rows
    params["heads_w1"] = w1_p

    w2 = jnp.zeros((hid_cat, HEADS_OUT_PAD), jnp.float32)
    b2 = jnp.zeros((1, HEADS_OUT_PAD), jnp.float32)
    row = col = 0
    for (_, _, w2_h, b2_h) in heads:                    # block-diagonal second layer
        hdim, odim = w2_h.shape
        w2 = w2.at[row:row + hdim, col:col + odim].set(w2_h)
        b2 = b2.at[:, col:col + odim].set(b2_h)
        row += hdim
        col += odim
    params["heads_w2"], params["heads_b2"] = w2, b2

    # biaffine U tensors; U_lab flattened (L,d,d) -> (d, L*d) so the in-kernel
    # lab_h @ U_all stage is a single matmul.
    params["U_arc"] = nrm((MLP_INPUT, MLP_INPUT))
    u_lab = nrm((NUM_LABELS, MLP_INPUT, MLP_INPUT))
    params["U_lab_flat"] = jnp.transpose(u_lab, (1, 0, 2)).reshape(
        MLP_INPUT, NUM_LABELS * MLP_INPUT)
    return params


# ------------------------------ full forward pass --------------------------------
def biaffine_parser_forward(params, xwords, xchars_cols, xft_cols):
    # --- embedding lookups (glue) ---
    lex_emb = params["lex_emb"][xwords]                                     # (B,S,LEX)
    char_embed = jnp.transpose(params["char_emb"][xchars_cols], (1, 0, 2))  # (B,S,CHAR)
    ft_embed = jnp.transpose(params["ft_emb"][xft_cols], (1, 0, 2))         # (B,S,FT)
    xinput = jnp.concatenate([lex_emb, char_embed, ft_embed], axis=2)       # (B,S,IN)

    # pad batch to 8 sublanes, go time-major, append the time-flip for the bwd direction
    x_pad = jnp.zeros((B_PAD, S, IN_DIM), jnp.float32).at[:B].set(xinput)
    x_tm = jnp.transpose(x_pad, (1, 0, 2))                                  # (S,Bp,IN)
    x_cat = jnp.concatenate([x_tm, x_tm[::-1]], axis=-1)                    # [x_t | x_rt]
    x0 = x_cat.reshape(S * B_PAD, 2 * IN_DIM)

    # --- ONE fused Pallas call: 3x biLSTM + MLP heads + biaffine scoring ---
    out = run_parser(x0, params["lstm"], params["heads_w1"], params["heads_b1"],
                     params["heads_w2"], params["heads_b2"],
                     params["U_arc"], params["U_lab_flat"])                 # (S*Bp, 512)

    # --- lane-dense slab -> (B,S,T)/(B,S,S)/(B,L,S,S) (tiny gather/transpose glue) ---
    o = out.reshape(S, B_PAD, OUT_W)
    idx_b = jnp.arange(B)
    arc_p = o[:, :, 0:PW].reshape(S, B_PAD, S, B_PAD)
    arc_scores = arc_p[:, idx_b, :, idx_b]                                  # (B,S,S)
    lab_p = o[:, :, PW:PW * (1 + NUM_LABELS)].reshape(S, B_PAD, NUM_LABELS, S, B_PAD)
    lab_scores = jnp.transpose(lab_p[:, idx_b, :, :, idx_b], (0, 2, 1, 3))  # (B,L,S,S)
    tag = o[:, :, PW * (1 + NUM_LABELS):PW * (1 + NUM_LABELS) + TAGSET_SIZE]
    tag_scores = jnp.transpose(tag, (1, 0, 2))[:B]                          # (B,S,T)
    return tag_scores, arc_scores, lab_scores


# -------------------------------------- main --------------------------------------
if __name__ == "__main__":
    key = jax.random.PRNGKey(0)
    pkey, k1, k2, k3 = jax.random.split(key, 4)
    params = init_params(pkey)

    xwords = jax.random.randint(k1, (B, S), 0, WORD_VOCAB)       # (B, S) word ids
    xchars_cols = jax.random.randint(k2, (S, B), 0, CHAR_VOCAB)  # S columns of (B,)
    xft_cols = jax.random.randint(k3, (S, B), 0, FT_VOCAB)       # S columns of (B,)

    forward = jax.jit(biaffine_parser_forward)
    tag_scores, arc_scores, lab_scores = forward(params, xwords, xchars_cols, xft_cols)
    jax.block_until_ready((tag_scores, arc_scores, lab_scores))

    assert tag_scores.shape == (B, S, TAGSET_SIZE)
    assert arc_scores.shape == (B, S, S)
    assert lab_scores.shape == (B, NUM_LABELS, S, S)
    assert bool(jnp.isfinite(tag_scores).all())
    assert bool(jnp.isfinite(arc_scores).all())
    assert bool(jnp.isfinite(lab_scores).all())
    print("KERNEL_OK")
</pallas_src>

<mosaic_0001>
module attributes {stable_mosaic.version = 11 : i64} {
  func.func @parser_fused_kernel(%arg0: memref<64x64xf32, #tpu.memory_space<vmem>>, %arg1: memref<64x256xf32, #tpu.memory_space<vmem>>, %arg2: memref<64x256xf32, #tpu.memory_space<vmem>>, %arg3: memref<1x256xf32, #tpu.memory_space<vmem>>, %arg4: memref<128x256xf32, #tpu.memory_space<vmem>>, %arg5: memref<64x256xf32, #tpu.memory_space<vmem>>, %arg6: memref<1x256xf32, #tpu.memory_space<vmem>>, %arg7: memref<128x256xf32, #tpu.memory_space<vmem>>, %arg8: memref<64x256xf32, #tpu.memory_space<vmem>>, %arg9: memref<1x256xf32, #tpu.memory_space<vmem>>, %arg10: memref<128x160xf32, #tpu.memory_space<vmem>>, %arg11: memref<1x160xf32, #tpu.memory_space<vmem>>, %arg12: memref<160x256xf32, #tpu.memory_space<vmem>>, %arg13: memref<1x256xf32, #tpu.memory_space<vmem>>, %arg14: memref<32x32xf32, #tpu.memory_space<vmem>>, %arg15: memref<32x192xf32, #tpu.memory_space<vmem>>, %arg16: memref<64x512xf32, #tpu.memory_space<vmem>>, %arg17: memref<64x128xf32, #tpu.memory_space<vmem>>, %arg18: memref<64x128xf32, #tpu.memory_space<vmem>>, %arg19: memref<64x128xf32, #tpu.memory_space<vmem>>) attributes {dimension_semantics = [], scalar_prefetch = 0 : i64, scratch_operands = 3 : i64, tpu.core_type = #tpu.core_type<tc>} {
    %c0 = arith.constant 0 : index
    %c0_0 = arith.constant 0 : index
    %0 = vector.load %arg0[%c0, %c0_0] : memref<64x64xf32, #tpu.memory_space<vmem>>, vector<64x64xf32>
    %c0_1 = arith.constant 0 : index
    %c0_2 = arith.constant 0 : index
    %1 = vector.load %arg1[%c0_1, %c0_2] : memref<64x256xf32, #tpu.memory_space<vmem>>, vector<64x256xf32>
    %cst = arith.constant dense<0.000000e+00> : vector<64x256xf32>
    %2 = tpu.matmul %0, %1, %cst {dimension_numbers = #tpu.dot_dimension_numbers<[1], [0], [0], [1], [0, 0, 1, 1], [], []>} : vector<64x64xf32>, vector<64x256xf32>, vector<64x256xf32> -> vector<64x256xf32>
    %c0_3 = arith.constant 0 : index
    %c0_4 = arith.constant 0 : index
    %3 = vector.load %arg3[%c0_3, %c0_4] : memref<1x256xf32, #tpu.memory_space<vmem>>, vector<1x256xf32>
    %4 = vector.broadcast %3 : vector<1x256xf32> to vector<64x256xf32>
    %5 = arith.addf %2, %4 : vector<64x256xf32>
    %c0_5 = arith.constant 0 : index
    %c0_6 = arith.constant 0 : index
    %6 = vector.load %arg2[%c0_5, %c0_6] : memref<64x256xf32, #tpu.memory_space<vmem>>, vector<64x256xf32>
    %cst_7 = arith.constant 0.000000e+00 : f32
    %7 = vector.broadcast %cst_7 : f32 to vector<8x64xf32>
    %cst_8 = arith.constant 0.000000e+00 : f32
    %8 = vector.broadcast %cst_8 : f32 to vector<8x64xf32>
    %9 = vector.extract_strided_slice %5 {offsets = [0, 0], sizes = [8, 256], strides = [1, 1]} : vector<64x256xf32> to vector<8x256xf32>
    %cst_9 = arith.constant dense<0.000000e+00> : vector<8x256xf32>
    %10 = tpu.matmul %7, %6, %cst_9 {dimension_numbers = #tpu.dot_dimension_numbers<[1], [0], [0], [1], [0, 0, 1, 1], [], []>} : vector<8x64xf32>, vector<64x256xf32>, vector<8x256xf32> -> vector<8x256xf32>
    %11 = arith.addf %9, %10 : vector<8x256xf32>
    %12 = vector.extract_strided_slice %11 {offsets = [0, 0], sizes = [8, 64], strides = [1, 1]} : vector<8x256xf32> to vector<8x64xf32>
    %13 = arith.negf %12 : vector<8x64xf32>
    %14 = math.exp %13 : vector<8x64xf32>
    %cst_10 = arith.constant 1.000000e+00 : f32
    %15 = vector.broadcast %cst_10 : f32 to vector<8x64xf32>
    %16 = arith.addf %15, %14 : vector<8x64xf32>
    %17 = arith.divf %15, %16 : vector<8x64xf32>
    %18 = vector.extract_strided_slice %11 {offsets = [0, 64], sizes = [8, 64], strides = [1, 1]} : vector<8x256xf32> to vector<8x64xf32>
    %19 = arith.negf %18 : vector<8x64xf32>
    %20 = math.exp %19 : vector<8x64xf32>
    %cst_11 = arith.constant 1.000000e+00 : f32
    %21 = vector.broadcast %cst_11 : f32 to vector<8x64xf32>
    %22 = arith.addf %21, %20 : vector<8x64xf32>
    %23 = arith.divf %21, %22 : vector<8x64xf32>
    %24 = vector.extract_strided_slice %11 {offsets = [0, 128], sizes = [8, 64], strides = [1, 1]} : vector<8x256xf32> to vector<8x64xf32>
    %25 = math.tanh %24 : vector<8x64xf32>
    %26 = vector.extract_strided_slice %11 {offsets = [0, 192], sizes = [8, 64], strides = [1, 1]} : vector<8x256xf32> to vector<8x64xf32>
    %27 = arith.negf %26 : vector<8x64xf32>
    %28 = math.exp %27 : vector<8x64xf32>
    %cst_12 = arith.constant 1.000000e+00 : f32
    %29 = vector.broadcast %cst_12 : f32 to vector<8x64xf32>
    %30 = arith.addf %29, %28 : vector<8x64xf32>
    %31 = arith.divf %29, %30 : vector<8x64xf32>
    %32 = arith.mulf %23, %8 : vector<8x64xf32>
    %33 = arith.mulf %17, %25 : vector<8x64xf32>
    %34 = arith.addf %32, %33 : vector<8x64xf32>
    %35 = math.tanh %34 : vector<8x64xf32>
    %36 = arith.mulf %31, %35 : vector<8x64xf32>
    %c0_13 = arith.constant 0 : index
    %c0_14 = arith.constant 0 : index
    %37 = vector.load %arg17[%c0_13, %c0_14] : memref<64x128xf32, #tpu.memory_space<vmem>>, vector<8x64xf32>
    tpu.vector_store %arg17[%c0_13, %c0_14], %36 {strides = array<i32>} : memref<64x128xf32, #tpu.memory_space<vmem>>, vector<8x64xf32>,
    %c56 = arith.constant 56 : index
    %c64 = arith.constant 64 : index
    %38 = vector.load %arg17[%c56, %c64] : memref<64x128xf32, #tpu.memory_space<vmem>>, vector<8x64xf32>
    tpu.vector_store %arg17[%c56, %c64], %36 {strides = array<i32>} : memref<64x128xf32, #tpu.memory_space<vmem>>, vector<8x64xf32>,
    %39 = vector.extract_strided_slice %5 {offsets = [8, 0], sizes = [8, 256], strides = [1, 1]} : vector<64x256xf32> to vector<8x256xf32>
    %cst_15 = arith.constant dense<0.000000e+00> : vector<8x256xf32>
    %40 = tpu.matmul %36, %6, %cst_15 {dimension_numbers = #tpu.dot_dimension_numbers<[1], [0], [0], [1], [0, 0, 1, 1], [], []>} : vector<8x64xf32>, vector<64x256xf32>, vector<8x256xf32> -> vector<8x256xf32>
    %41 = arith.addf %39, %40 : vector<8x256xf32>
    %42 = vector.extract_strided_slice %41 {offsets = [0, 0], sizes = [8, 64], strides = [1, 1]} : vector<8x256xf32> to vector<8x64xf32>
    %43 = arith.negf %42 : vector<8x64xf32>
    %44 = math.exp %43 : vector<8x64xf32>
    %cst_16 = arith.constant 1.000000e+00 : f32
    %45 = vector.broadcast %cst_16 : f32 to vector<8x64xf32>
    %46 = arith.addf %45, %44 : vector<8x64xf32>
    %47 = arith.divf %45, %46 : vector<8x64xf32>
    %48 = vector.extract_strided_slice %41 {offsets = [0, 64], sizes = [8, 64], strides = [1, 1]} : vector<8x256xf32> to vector<8x64xf32>
    %49 = arith.negf %48 : vector<8x64xf32>
    %50 = math.exp %49 : vector<8x64xf32>
    %cst_17 = arith.constant 1.000000e+00 : f32
    %51 = vector.broadcast %cst_17 : f32 to vector<8x64xf32>
    %52 = arith.addf %51, %50 : vector<8x64xf32>
    %53 = arith.divf %51, %52 : vector<8x64xf32>
    %54 = vector.extract_strided_slice %41 {offsets = [0, 128], sizes = [8, 64], strides = [1, 1]} : vector<8x256xf32> to vector<8x64xf32>
    %55 = math.tanh %54 : vector<8x64xf32>
    %56 = vector.extract_strided_slice %41 {offsets = [0, 192], sizes = [8, 64], strides = [1, 1]} : vector<8x256xf32> to vector<8x64xf32>
    %57 = arith.negf %56 : vector<8x64xf32>
    %58 = math.exp %57 : vector<8x64xf32>
    %cst_18 = arith.constant 1.000000e+00 : f32
    %59 = vector.broadcast %cst_18 : f32 to vector<8x64xf32>
    %60 = arith.addf %59, %58 : vector<8x64xf32>
    %61 = arith.divf %59, %60 : vector<8x64xf32>
    %62 = arith.mulf %53, %34 : vector<8x64xf32>
    %63 = arith.mulf %47, %55 : vector<8x64xf32>
    %64 = arith.addf %62, %63 : vector<8x64xf32>
    %65 = math.tanh %64 : vector<8x64xf32>
    %66 = arith.mulf %61, %65 : vector<8x64xf32>
    %c8 = arith.constant 8 : index
    %c0_19 = arith.constant 0 : index
    %67 = vector.load %arg17[%c8, %c0_19] : memref<64x128xf32, #tpu.memory_space<vmem>>, vector<8x64xf32>
    tpu.vector_store %arg17[%c8, %c0_19], %66 {strides = array<i32>} : memref<64x128xf32, #tpu.memory_space<vmem>>, vector<8x64xf32>,
    %c48 = arith.constant 48 : index
    %c64_20 = arith.constant 64 : index
    %68 = vector.load %arg17[%c48, %c64_20] : memref<64x128xf32, #tpu.memory_space<vmem>>, vector<8x64xf32>
    tpu.vector_store %arg17[%c48, %c64_20], %66 {strides = array<i32>} : memref<64x128xf32, #tpu.memory_space<vmem>>, vector<8x64xf32>,
    %69 = vector.extract_strided_slice %5 {offsets = [16, 0], sizes = [8, 256], strides = [1, 1]} : vector<64x256xf32> to vector<8x256xf32>
    %cst_21 = arith.constant dense<0.000000e+00> : vector<8x256xf32>
    %70 = tpu.matmul %66, %6, %cst_21 {dimension_numbers = #tpu.dot_dimension_numbers<[1], [0], [0], [1], [0, 0, 1, 1], [], []>} : vector<8x64xf32>, vector<64x256xf32>, vector<8x256xf32> -> vector<8x256xf32>
    %71 = arith.addf %69, %70 : vector<8x256xf32>
    %72 = vector.extract_strided_slice %71 {offsets = [0, 0], sizes = [8, 64], strides = [1, 1]} : vector<8x256xf32> to vector<8x64xf32>
    %73 = arith.negf %72 : vector<8x64xf32>
    %74 = math.exp %73 : vector<8x64xf32>
    %cst_22 = arith.constant 1.000000e+00 : f32
    %75 = vector.broadcast %cst_22 : f32 to vector<8x64xf32>
    %76 = arith.addf %75, %74 : vector<8x64xf32>
    %77 = arith.divf %75, %76 : vector<8x64xf32>
    %78 = vector.extract_strided_slice %71 {offsets = [0, 64], sizes = [8, 64], strides = [1, 1]} : vector<8x256xf32> to vector<8x64xf32>
    %79 = arith.negf %78 : vector<8x64xf32>
    %80 = math.exp %79 : vector<8x64xf32>
    %cst_23 = arith.constant 1.000000e+00 : f32
    %81 = vector.broadcast %cst_23 : f32 to vector<8x64xf32>
    %82 = arith.addf %81, %80 : vector<8x64xf32>
    %83 = arith.divf %81, %82 : vector<8x64xf32>
    %84 = vector.extract_strided_slice %71 {offsets = [0, 128], sizes = [8, 64], strides = [1, 1]} : vector<8x256xf32> to vector<8x64xf32>
    %85 = math.tanh %84 : vector<8x64xf32>
    %86 = vector.extract_strided_slice %71 {offsets = [0, 192], sizes = [8, 64], strides = [1, 1]} : vector<8x256xf32> to vector<8x64xf32>
    %87 = arith.negf %86 : vector<8x64xf32>
    %88 = math.exp %87 : vector<8x64xf32>
    %cst_24 = arith.constant 1.000000e+00 : f32
    %89 = vector.broadcast %cst_24 : f32 to vector<8x64xf32>
    %90 = arith.addf %89, %88 : vector<8x64xf32>
    %91 = arith.divf %89, %90 : vector<8x64xf32>
    %92 = arith.mulf %83, %64 : vector<8x64xf32>
    %93 = arith.mulf %77, %85 : vector<8x64xf32>
    %94 = arith.addf %92, %93 : vector<8x64xf32>
    %95 = math.tanh %94 : vector<8x64xf32>
    %96 = arith.mulf %91, %95 : vector<8x64xf32>
    %c16 = arith.constant 16 : index
    %c0_25 = arith.constant 0 : index
    %97 = vector.load %arg17[%c16, %c0_25] : memref<64x128xf32, #tpu.memory_space<vmem>>, vector<8x64xf32>
    tpu.vector_store %arg17[%c16, %c0_25], %96 {strides = array<i32>} : memref<64x128xf32, #tpu.memory_space<vmem>>, vector<8x64xf32>,
    %c40 = arith.constant 40 : index
    %c64_26 = arith.constant 64 : index
    %98 = vector.load %arg17[%c40, %c64_26] : memref<64x128xf32, #tpu.memory_space<vmem>>, vector<8x64xf32>
    tpu.vector_store %arg17[%c40, %c64_26], %96 {strides = array<i32>} : memref<64x128xf32, #tpu.memory_space<vmem>>, vector<8x64xf32>,
    %99 = vector.extract_strided_slice %5 {offsets = [24, 0], sizes = [8, 256], strides = [1, 1]} : vector<64x256xf32> to vector<8x256xf32>
    %cst_27 = arith.constant dense<0.000000e+00> : vector<8x256xf32>
    %100 = tpu.matmul %96, %6, %cst_27 {dimension_numbers = #tpu.dot_dimension_numbers<[1], [0], [0], [1], [0, 0, 1, 1], [], []>} : vector<8x64xf32>, vector<64x256xf32>, vector<8x256xf32> -> vector<8x256xf32>
    %101 = arith.addf %99, %100 : vector<8x256xf32>
    %102 = vector.extract_strided_slice %101 {offsets = [0, 0], sizes = [8, 64], strides = [1, 1]} : vector<8x256xf32> to vector<8x64xf32>
    %103 = arith.negf %102 : vector<8x64xf32>
    %104 = math.exp %103 : vector<8x64xf32>
    %cst_28 = arith.constant 1.000000e+00 : f32
    %105 = vector.broadcast %cst_28 : f32 to vector<8x64xf32>
    %106 = arith.addf %105, %104 : vector<8x64xf32>
    %107 = arith.divf %105, %106 : vector<8x64xf32>
    %108 = vector.extract_strided_slice %101 {offsets = [0, 64], sizes = [8, 64], strides = [1, 1]} : vector<8x256xf32> to vector<8x64xf32>
    %109 = arith.negf %108 : vector<8x64xf32>
    %110 = math.exp %109 : vector<8x64xf32>
    %cst_29 = arith.constant 1.000000e+00 : f32
    %111 = vector.broadcast %cst_29 : f32 to vector<8x64xf32>
    %112 = arith.addf %111, %110 : vector<8x64xf32>
    %113 = arith.divf %111, %112 : vector<8x64xf32>
    %114 = vector.extract_strided_slice %101 {offsets = [0, 128], sizes = [8, 64], strides = [1, 1]} : vector<8x256xf32> to vector<8x64xf32>
    %115 = math.tanh %114 : vector<8x64xf32>
    %116 = vector.extract_strided_slice %101 {offsets = [0, 192], sizes = [8, 64], strides = [1, 1]} : vector<8x256xf32> to vector<8x64xf32>
    %117 = arith.negf %116 : vector<8x64xf32>
    %118 = math.exp %117 : vector<8x64xf32>
    %cst_30 = arith.constant 1.000000e+00 : f32
    %119 = vector.broadcast %cst_30 : f32 to vector<8x64xf32>
    %120 = arith.addf %119, %118 : vector<8x64xf32>
    %121 = arith.divf %119, %120 : vector<8x64xf32>
    %122 = arith.mulf %113, %94 : vector<8x64xf32>
    %123 = arith.mulf %107, %115 : vector<8x64xf32>
    %124 = arith.addf %122, %123 : vector<8x64xf32>
    %125 = math.tanh %124 : vector<8x64xf32>
    %126 = arith.mulf %121, %125 : vector<8x64xf32>
    %c24 = arith.constant 24 : index
    %c0_31 = arith.constant 0 : index
    %127 = vector.load %arg17[%c24, %c0_31] : memref<64x128xf32, #tpu.memory_space<vmem>>, vector<8x64xf32>
    tpu.vector_store %arg17[%c24, %c0_31], %126 {strides = array<i32>} : memref<64x128xf32, #tpu.memory_space<vmem>>, vector<8x64xf32>,
    %c32 = arith.constant 32 : index
    %c64_32 = arith.constant 64 : index
    %128 = vector.load %arg17[%c32, %c64_32] : memref<64x128xf32, #tpu.memory_space<vmem>>, vector<8x64xf32>
    tpu.vector_store %arg17[%c32, %c64_32], %126 {strides = array<i32>} : memref<64x128xf32, #tpu.memory_space<vmem>>, vector<8x64xf32>,
    %129 = vector.extract_strided_slice %5 {offsets = [32, 0], sizes = [8, 256], strides = [1, 1]} : vector<64x256xf32> to vector<8x256xf32>
    %cst_33 = arith.constant dense<0.000000e+00> : vector<8x256xf32>
    %130 = tpu.matmul %126, %6, %cst_33 {dimension_numbers = #tpu.dot_dimension_numbers<[1], [0], [0], [1], [0, 0, 1, 1], [], []>} : vector<8x64xf32>, vector<64x256xf32>, vector<8x256xf32> -> vector<8x256xf32>
    %131 = arith.addf %129, %130 : vector<8x256xf32>
    %132 = vector.extract_strided_slice %131 {offsets = [0, 0], sizes = [8, 64], strides = [1, 1]} : vector<8x256xf32> to vector<8x64xf32>
    %133 = arith.negf %132 : vector<8x64xf32>
    %134 = math.exp %133 : vector<8x64xf32>
    %cst_34 = arith.constant 1.000000e+00 : f32
    %135 = vector.broadcast %cst_34 : f32 to vector<8x64xf32>
    %136 = arith.addf %135, %134 : vector<8x64xf32>
    %137 = arith.divf %135, %136 : vector<8x64xf32>
    %138 = vector.extract_strided_slice %131 {offsets = [0, 64], sizes = [8, 64], strides = [1, 1]} : vector<8x256xf32> to vector<8x64xf32>
    %139 = arith.negf %138 : vector<8x64xf32>
    %140 = math.exp %139 : vector<8x64xf32>
    %cst_35 = arith.constant 1.000000e+00 : f32
    %141 = vector.broadcast %cst_35 : f32 to vector<8x64xf32>
    %142 = arith.addf %141, %140 : vector<8x64xf32>
    %143 = arith.divf %141, %142 : vector<8x64xf32>
    %144 = vector.extract_strided_slice %131 {offsets = [0, 128], sizes = [8, 64], strides = [1, 1]} : vector<8x256xf32> to vector<8x64xf32>
    %145 = math.tanh %144 : vector<8x64xf32>
    %146 = vector.extract_strided_slice %131 {offsets = [0, 192], sizes = [8, 64], strides = [1, 1]} : vector<8x256xf32> to vector<8x64xf32>
    %147 = arith.negf %146 : vector<8x64xf32>
    %148 = math.exp %147 : vector<8x64xf32>
    %cst_36 = arith.constant 1.000000e+00 : f32
    %149 = vector.broadcast %cst_36 : f32 to vector<8x64xf32>
    %150 = arith.addf %149, %148 : vector<8x64xf32>
    %151 = arith.divf %149, %150 : vector<8x64xf32>
    %152 = arith.mulf %143, %124 : vector<8x64xf32>
    %153 = arith.mulf %137, %145 : vector<8x64xf32>
    %154 = arith.addf %152, %153 : vector<8x64xf32>
    %155 = math.tanh %154 : vector<8x64xf32>
    %156 = arith.mulf %151, %155 : vector<8x64xf32>
    %c32_37 = arith.constant 32 : index
    %c0_38 = arith.constant 0 : index
    %157 = vector.load %arg17[%c32_37, %c0_38] : memref<64x128xf32, #tpu.memory_space<vmem>>, vector<8x64xf32>
    tpu.vector_store %arg17[%c32_37, %c0_38], %156 {strides = array<i32>} : memref<64x128xf32, #tpu.memory_space<vmem>>, vector<8x64xf32>,
    %c24_39 = arith.constant 24 : index
    %c64_40 = arith.constant 64 : index
    %158 = vector.load %arg17[%c24_39, %c64_40] : memref<64x128xf32, #tpu.memory_space<vmem>>, vector<8x64xf32>
    tpu.vector_store %arg17[%c24_39, %c64_40], %156 {strides = array<i32>} : memref<64x128xf32, #tpu.memory_space<vmem>>, vector<8x64xf32>,
    %159 = vector.extract_strided_slice %5 {offsets = [40, 0], sizes = [8, 256], strides = [1, 1]} : vector<64x256xf32> to vector<8x256xf32>
    %cst_41 = arith.constant dense<0.000000e+00> : vector<8x256xf32>
    %160 = tpu.matmul %156, %6, %cst_41 {dimension_numbers = #tpu.dot_dimension_numbers<[1], [0], [0], [1], [0, 0, 1, 1], [], []>} : vector<8x64xf32>, vector<64x256xf32>, vector<8x256xf32> -> vector<8x256xf32>
    %161 = arith.addf %159, %160 : vector<8x256xf32>
    %162 = vector.extract_strided_slice %161 {offsets = [0, 0], sizes = [8, 64], strides = [1, 1]} : vector<8x256xf32> to vector<8x64xf32>
    %163 = arith.negf %162 : vector<8x64xf32>
    %164 = math.exp %163 : vector<8x64xf32>
    %cst_42 = arith.constant 1.000000e+00 : f32
    %165 = vector.broadcast %cst_42 : f32 to vector<8x64xf32>
    %166 = arith.addf %165, %164 : vector<8x64xf32>
    %167 = arith.divf %165, %166 : vector<8x64xf32>
    %168 = vector.extract_strided_slice %161 {offsets = [0, 64], sizes = [8, 64], strides = [1, 1]} : vector<8x256xf32> to vector<8x64xf32>
    %169 = arith.negf %168 : vector<8x64xf32>
    %170 = math.exp %169 : vector<8x64xf32>
    %cst_43 = arith.constant 1.000000e+00 : f32
    %171 = vector.broadcast %cst_43 : f32 to vector<8x64xf32>
    %172 = arith.addf %171, %170 : vector<8x64xf32>
    %173 = arith.divf %171, %172 : vector<8x64xf32>
    %174 = vector.extract_strided_slice %161 {offsets = [0, 128], sizes = [8, 64], strides = [1, 1]} : vector<8x256xf32> to vector<8x64xf32>
    %175 = math.tanh %174 : vector<8x64xf32>
    %176 = vector.extract_strided_slice %161 {offsets = [0, 192], sizes = [8, 64], strides = [1, 1]} : vector<8x256xf32> to vector<8x64xf32>
    %177 = arith.negf %176 : vector<8x64xf32>
    %178 = math.exp %177 : vector<8x64xf32>
    %cst_44 = arith.constant 1.000000e+00 : f32
    %179 = vector.broadcast %cst_44 : f32 to vector<8x64xf32>
    %180 = arith.addf %179, %178 : vector<8x64xf32>
    %181 = arith.divf %179, %180 : vector<8x64xf32>
    %182 = arith.mulf %173, %154 : vector<8x64xf32>
    %183 = arith.mulf %167, %175 : vector<8x64xf32>
    %184 = arith.addf %182, %183 : vector<8x64xf32>
    %185 = math.tanh %184 : vector<8x64xf32>
    %186 = arith.mulf %181, %185 : vector<8x64xf32>
    %c40_45 = arith.constant 40 : index
    %c0_46 = arith.constant 0 : index
    %187 = vector.load %arg17[%c40_45, %c0_46] : memref<64x128xf32, #tpu.memory_space<vmem>>, vector<8x64xf32>
    tpu.vector_store %arg17[%c40_45, %c0_46], %186 {strides = array<i32>} : memref<64x128xf32, #tpu.memory_space<vmem>>, vector<8x64xf32>,
    %c16_47 = arith.constant 16 : index
    %c64_48 = arith.constant 64 : index
    %188 = vector.load %arg17[%c16_47, %c64_48] : memref<64x128xf32, #tpu.memory_space<vmem>>, vector<8x64xf32>
    tpu.vector_store %arg17[%c16_47, %c64_48], %186 {strides = array<i32>} : memref<64x128xf32, #tpu.memory_space<vmem>>, vector<8x64xf32>,
    %189 = vector.extract_strided_slice %5 {offsets = [48, 0], sizes = [8, 256], strides = [1, 1]} : vector<64x256xf32> to vector<8x256xf32>
    %cst_49 = arith.constant dense<0.000000e+00> : vector<8x256xf32>
    %190 = tpu.matmul %186, %6, %cst_49 {dimension_numbers = #tpu.dot_dimension_numbers<[1], [0], [0], [1], [0, 0, 1, 1], [], []>} : vector<8x64xf32>, vector<64x256xf32>, vector<8x256xf32> -> vector<8x256xf32>
    %191 = arith.addf %189, %190 : vector<8x256xf32>
    %192 = vector.extract_strided_slice %191 {offsets = [0, 0], sizes = [8, 64], strides = [1, 1]} : vector<8x256xf32> to vector<8x64xf32>
    %193 = arith.negf %192 : vector<8x64xf32>
    %194 = math.exp %193 : vector<8x64xf32>
    %cst_50 = arith.constant 1.000000e+00 : f32
    %195 = vector.broadcast %cst_50 : f32 to vector<8x64xf32>
    %196 = arith.addf %195, %194 : vector<8x64xf32>
    %197 = arith.divf %195, %196 : vector<8x64xf32>
    %198 = vector.extract_strided_slice %191 {offsets = [0, 64], sizes = [8, 64], strides = [1, 1]} : vector<8x256xf32> to vector<8x64xf32>
    %199 = arith.negf %198 : vector<8x64xf32>
    %200 = math.exp %199 : vector<8x64xf32>
    %cst_51 = arith.constant 1.000000e+00 : f32
    %201 = vector.broadcast %cst_51 : f32 to vector<8x64xf32>
    %202 = arith.addf %201, %200 : vector<8x64xf32>
    %203 = arith.divf %201, %202 : vector<8x64xf32>
    %204 = vector.extract_strided_slice %191 {offsets = [0, 128], sizes = [8, 64], strides = [1, 1]} : vector<8x256xf32> to vector<8x64xf32>
    %205 = math.tanh %204 : vector<8x64xf32>
    %206 = vector.extract_strided_slice %191 {offsets = [0, 192], sizes = [8, 64], strides = [1, 1]} : vector<8x256xf32> to vector<8x64xf32>
    %207 = arith.negf %206 : vector<8x64xf32>
    %208 = math.exp %207 : vector<8x64xf32>
    %cst_52 = arith.constant 1.000000e+00 : f32
    %209 = vector.broadcast %cst_52 : f32 to vector<8x64xf32>
    %210 = arith.addf %209, %208 : vector<8x64xf32>
    %211 = arith.divf %209, %210 : vector<8x64xf32>
    %212 = arith.mulf %203, %184 : vector<8x64xf32>
    %213 = arith.mulf %197, %205 : vector<8x64xf32>
    %214 = arith.addf %212, %213 : vector<8x64xf32>
    %215 = math.tanh %214 : vector<8x64xf32>
    %216 = arith.mulf %211, %215 : vector<8x64xf32>
    %c48_53 = arith.constant 48 : index
    %c0_54 = arith.constant 0 : index
    %217 = vector.load %arg17[%c48_53, %c0_54] : memref<64x128xf32, #tpu.memory_space<vmem>>, vector<8x64xf32>
    tpu.vector_store %arg17[%c48_53, %c0_54], %216 {strides = array<i32>} : memref<64x128xf32, #tpu.memory_space<vmem>>, vector<8x64xf32>,
    %c8_55 = arith.constant 8 : index
    %c64_56 = arith.constant 64 : index
    %218 = vector.load %arg17[%c8_55, %c64_56] : memref<64x128xf32, #tpu.memory_space<vmem>>, vector<8x64xf32>
    tpu.vector_store %arg17[%c8_55, %c64_56], %216 {strides = array<i32>} : memref<64x128xf32, #tpu.memory_space<vmem>>, vector<8x64xf32>,
    %219 = vector.extract_strided_slice %5 {offsets = [56, 0], sizes = [8, 256], strides = [1, 1]} : vector<64x256xf32> to vector<8x256xf32>
    %cst_57 = arith.constant dense<0.000000e+00> : vector<8x256xf32>
    %220 = tpu.matmul %216, %6, %cst_57 {dimension_numbers = #tpu.dot_dimension_numbers<[1], [0], [0], [1], [0, 0, 1, 1], [], []>} : vector<8x64xf32>, vector<64x256xf32>, vector<8x256xf32> -> vector<8x256xf32>
    %221 = arith.addf %219, %220 : vector<8x256xf32>
    %222 = vector.extract_strided_slice %221 {offsets = [0, 0], sizes = [8, 64], strides = [1, 1]} : vector<8x256xf32> to vector<8x64xf32>
    %223 = arith.negf %222 : vector<8x64xf32>
    %224 = math.exp %223 : vector<8x64xf32>
    %cst_58 = arith.constant 1.000000e+00 : f32
    %225 = vector.broadcast %cst_58 : f32 to vector<8x64xf32>
    %226 = arith.addf %225, %224 : vector<8x64xf32>
    %227 = arith.divf %225, %226 : vector<8x64xf32>
    %228 = vector.extract_strided_slice %221 {offsets = [0, 64], sizes = [8, 64], strides = [1, 1]} : vector<8x256xf32> to vector<8x64xf32>
    %229 = arith.negf %228 : vector<8x64xf32>
    %230 = math.exp %229 : vector<8x64xf32>
    %cst_59 = arith.constant 1.000000e+00 : f32
    %231 = vector.broadcast %cst_59 : f32 to vector<8x64xf32>
    %232 = arith.addf %231, %230 : vector<8x64xf32>
    %233 = arith.divf %231, %232 : vector<8x64xf32>
    %234 = vector.extract_strided_slice %221 {offsets = [0, 128], sizes = [8, 64], strides = [1, 1]} : vector<8x256xf32> to vector<8x64xf32>
    %235 = math.tanh %234 : vector<8x64xf32>
    %236 = vector.extract_strided_slice %221 {offsets = [0, 192], sizes = [8, 64], strides = [1, 1]} : vector<8x256xf32> to vector<8x64xf32>
    %237 = arith.negf %236 : vector<8x64xf32>
    %238 = math.exp %237 : vector<8x64xf32>
    %cst_60 = arith.constant 1.000000e+00 : f32
    %239 = vector.broadcast %cst_60 : f32 to vector<8x64xf32>
    %240 = arith.addf %239, %238 : vector<8x64xf32>
    %241 = arith.divf %239, %240 : vector<8x64xf32>
    %242 = arith.mulf %233, %214 : vector<8x64xf32>
    %243 = arith.mulf %227, %235 : vector<8x64xf32>
    %244 = arith.addf %242, %243 : vector<8x64xf32>
    %245 = math.tanh %244 : vector<8x64xf32>
    %246 = arith.mulf %241, %245 : vector<8x64xf32>
    %c56_61 = arith.constant 56 : index
    %c0_62 = arith.constant 0 : index
    %247 = vector.load %arg17[%c56_61, %c0_62] : memref<64x128xf32, #tpu.memory_space<vmem>>, vector<8x64xf32>
    tpu.vector_store %arg17[%c56_61, %c0_62], %246 {strides = array<i32>} : memref<64x128xf32, #tpu.memory_space<vmem>>, vector<8x64xf32>,
    %c0_63 = arith.constant 0 : index
    %c64_64 = arith.constant 64 : index
    %248 = vector.load %arg17[%c0_63, %c64_64] : memref<64x128xf32, #tpu.memory_space<vmem>>, vector<8x64xf32>
    tpu.vector_store %arg17[%c0_63, %c64_64], %246 {strides = array<i32>} : memref<64x128xf32, #tpu.memory_space<vmem>>, vector<8x64xf32>,
    %c0_65 = arith.constant 0 : index
    %c0_66 = arith.constant 0 : index
    %249 = vector.load %arg17[%c0_65, %c0_66] : memref<64x128xf32, #tpu.memory_space<vmem>>, vector<64x128xf32>
    %c0_67 = arith.constant 0 : index
    %c0_68 = arith.constant 0 : index
    %250 = vector.load %arg4[%c0_67, %c0_68] : memref<128x256xf32, #tpu.memory_space<vmem>>, vector<128x256xf32>
    %cst_69 = arith.constant dense<0.000000e+00> : vector<64x256xf32>
    %251 = tpu.matmul %249, %250, %cst_69 {dimension_numbers = #tpu.dot_dimension_numbers<[1], [0], [0], [1], [0, 0, 1, 1], [], []>} : vector<64x128xf32>, vector<128x256xf32>, vector<64x256xf32> -> vector<64x256xf32>
    %c0_70 = arith.constant 0 : index
    %c0_71 = arith.constant 0 : index
    %252 = vector.load %arg6[%c0_70, %c0_71] : memref<1x256xf32, #tpu.memory_space<vmem>>, vector<1x256xf32>
    %253 = vector.broadcast %252 : vector<1x256xf32> to vector<64x256xf32>
    %254 = arith.addf %251, %253 : vector<64x256xf32>
    %c0_72 = arith.constant 0 : index
    %c0_73 = arith.constant 0 : index
    %255 = vector.load %arg5[%c0_72, %c0_73] : memref<64x256xf32, #tpu.memory_space<vmem>>, vector<64x256xf32>
    %cst_74 = arith.constant 0.000000e+00 : f32
    %256 = vector.broadcast %cst_74 : f32 to vector<8x64xf32>
    %cst_75 = arith.constant 0.000000e+00 : f32
    %257 = vector.broadcast %cst_75 : f32 to vector<8x64xf32>
    %258 = vector.extract_strided_slice %254 {offsets = [0, 0], sizes = [8, 256], strides = [1, 1]} : vector<64x256xf32> to vector<8x256xf32>
    %cst_76 = arith.constant dense<0.000000e+00> : vector<8x256xf32>
    %259 = tpu.matmul %256, %255, %cst_76 {dimension_numbers = #tpu.dot_dimension_numbers<[1], [0], [0], [1], [0, 0, 1, 1], [], []>} : vector<8x64xf32>, vector<64x256xf32>, vector<8x256xf32> -> vector<8x256xf32>
    %260 = arith.addf %258, %259 : vector<8x256xf32>
    %261 = vector.extract_strided_slice %260 {offsets = [0, 0], sizes = [8, 64], strides = [1, 1]} : vector<8x256xf32> to vector<8x64xf32>
    %262 = arith.negf %261 : vector<8x64xf32>
    %263 = math.exp %262 : vector<8x64xf32>
    %cst_77 = arith.constant 1.000000e+00 : f32
    %264 = vector.broadcast %cst_77 : f32 to vector<8x64xf32>
    %265 = arith.addf %264, %263 : vector<8x64xf32>
    %266 = arith.divf %264, %265 : vector<8x64xf32>
    %267 = vector.extract_strided_slice %260 {offsets = [0, 64], sizes = [8, 64], strides = [1, 1]} : vector<8x256xf32> to vector<8x64xf32>
    %268 = arith.negf %267 : vector<8x64xf32>
    %269 = math.exp %268 : vector<8x64xf32>
    %cst_78 = arith.constant 1.000000e+00 : f32
    %270 = vector.broadcast %cst_78 : f32 to vector<8x64xf32>
    %271 = arith.addf %270, %269 : vector<8x64xf32>
    %272 = arith.divf %270, %271 : vector<8x64xf32>
    %273 = vector.extract_strided_slice %260 {offsets = [0, 128], sizes = [8, 64], strides = [1, 1]} : vector<8x256xf32> to vector<8x64xf32>
    %274 = math.tanh %273 : vector<8x64xf32>
    %275 = vector.extract_strided_slice %260 {offsets = [0, 192], sizes = [8, 64], strides = [1, 1]} : vector<8x256xf32> to vector<8x64xf32>
    %276 = arith.negf %275 : vector<8x64xf32>
    %277 = math.exp %276 : vector<8x64xf32>
    %cst_79 = arith.constant 1.000000e+00 : f32
    %278 = vector.broadcast %cst_79 : f32 to vector<8x64xf32>
    %279 = arith.addf %278, %277 : vector<8x64xf32>
    %280 = arith.divf %278, %279 : vector<8x64xf32>
    %281 = arith.mulf %272, %257 : vector<8x64xf32>
    %282 = arith.mulf %266, %274 : vector<8x64xf32>
    %283 = arith.addf %281, %282 : vector<8x64xf32>
    %284 = math.tanh %283 : vector<8x64xf32>
    %285 = arith.mulf %280, %284 : vector<8x64xf32>
    %c0_80 = arith.constant 0 : index
    %c0_81 = arith.constant 0 : index
    %286 = vector.load %arg18[%c0_80, %c0_81] : memref<64x128xf32, #tpu.memory_space<vmem>>, vector<8x64xf32>
    tpu.vector_store %arg18[%c0_80, %c0_81], %285 {strides = array<i32>} : memref<64x128xf32, #tpu.memory_space<vmem>>, vector<8x64xf32>,
    %c56_82 = arith.constant 56 : index
    %c64_83 = arith.constant 64 : index
    %287 = vector.load %arg18[%c56_82, %c64_83] : memref<64x128xf32, #tpu.memory_space<vmem>>, vector<8x64xf32>
    tpu.vector_store %arg18[%c56_82, %c64_83], %285 {strides = array<i32>} : memref<64x128xf32, #tpu.memory_space<vmem>>, vector<8x64xf32>,
    %288 = vector.extract_strided_slice %254 {offsets = [8, 0], sizes = [8, 256], strides = [1, 1]} : vector<64x256xf32> to vector<8x256xf32>
    %cst_84 = arith.constant dense<0.000000e+00> : vector<8x256xf32>
    %289 = tpu.matmul %285, %255, %cst_84 {dimension_numbers = #tpu.dot_dimension_numbers<[1], [0], [0], [1], [0, 0, 1, 1], [], []>} : vector<8x64xf32>, vector<64x256xf32>, vector<8x256xf32> -> vector<8x256xf32>
    %290 = arith.addf %288, %289 : vector<8x256xf32>
    %291 = vector.extract_strided_slice %290 {offsets = [0, 0], sizes = [8, 64], strides = [1, 1]} : vector<8x256xf32> to vector<8x64xf32>
    %292 = arith.negf %291 : vector<8x64xf32>
    %293 = math.exp %292 : vector<8x64xf32>
    %cst_85 = arith.constant 1.000000e+00 : f32
    %294 = vector.broadcast %cst_85 : f32 to vector<8x64xf32>
    %295 = arith.addf %294, %293 : vector<8x64xf32>
    %296 = arith.divf %294, %295 : vector<8x64xf32>
    %297 = vector.extract_strided_slice %290 {offsets = [0, 64], sizes = [8, 64], strides = [1, 1]} : vector<8x256xf32> to vector<8x64xf32>
    %298 = arith.negf %297 : vector<8x64xf32>
    %299 = math.exp %298 : vector<8x64xf32>
    %cst_86 = arith.constant 1.000000e+00 : f32
    %300 = vector.broadcast %cst_86 : f32 to vector<8x64xf32>
    %301 = arith.addf %300, %299 : vector<8x64xf32>
    %302 = arith.divf %300, %301 : vector<8x64xf32>
    %303 = vector.extract_strided_slice %290 {offsets = [0, 128], sizes = [8, 64], strides = [1, 1]} : vector<8x256xf32> to vector<8x64xf32>
    %304 = math.tanh %303 : vector<8x64xf32>
    %305 = vector.extract_strided_slice %290 {offsets = [0, 192], sizes = [8, 64], strides = [1, 1]} : vector<8x256xf32> to vector<8x64xf32>
    %306 = arith.negf %305 : vector<8x64xf32>
    %307 = math.exp %306 : vector<8x64xf32>
    %cst_87 = arith.constant 1.000000e+00 : f32
    %308 = vector.broadcast %cst_87 : f32 to vector<8x64xf32>
    %309 = arith.addf %308, %307 : vector<8x64xf32>
    %310 = arith.divf %308, %309 : vector<8x64xf32>
    %311 = arith.mulf %302, %283 : vector<8x64xf32>
    %312 = arith.mulf %296, %304 : vector<8x64xf32>
    %313 = arith.addf %311, %312 : vector<8x64xf32>
    %314 = math.tanh %313 : vector<8x64xf32>
    %315 = arith.mulf %310, %314 : vector<8x64xf32>
    %c8_88 = arith.constant 8 : index
    %c0_89 = arith.constant 0 : index
    %316 = vector.load %arg18[%c8_88, %c0_89] : memref<64x128xf32, #tpu.memory_space<vmem>>, vector<8x64xf32>
    tpu.vector_store %arg18[%c8_88, %c0_89], %315 {strides = array<i32>} : memref<64x128xf32, #tpu.memory_space<vmem>>, vector<8x64xf32>,
    %c48_90 = arith.constant 48 : index
    %c64_91 = arith.constant 64 : index
    %317 = vector.load %arg18[%c48_90, %c64_91] : memref<64x128xf32, #tpu.memory_space<vmem>>, vector<8x64xf32>
    tpu.vector_store %arg18[%c48_90, %c64_91], %315 {strides = array<i32>} : memref<64x128xf32, #tpu.memory_space<vmem>>, vector<8x64xf32>,
    %318 = vector.extract_strided_slice %254 {offsets = [16, 0], sizes = [8, 256], strides = [1, 1]} : vector<64x256xf32> to vector<8x256xf32>
    %cst_92 = arith.constant dense<0.000000e+00> : vector<8x256xf32>
    %319 = tpu.matmul %315, %255, %cst_92 {dimension_numbers = #tpu.dot_dimension_numbers<[1], [0], [0], [1], [0, 0, 1, 1], [], []>} : vector<8x64xf32>, vector<64x256xf32>, vector<8x256xf32> -> vector<8x256xf32>
    %320 = arith.addf %318, %319 : vector<8x256xf32>
    %321 = vector.extract_strided_slice %320 {offsets = [0, 0], sizes = [8, 64], strides = [1, 1]} : vector<8x256xf32> to vector<8x64xf32>
    %322 = arith.negf %321 : vector<8x64xf32>
    %323 = math.exp %322 : vector<8x64xf32>
    %cst_93 = arith.constant 1.000000e+00 : f32
    %324 = vector.broadcast %cst_93 : f32 to vector<8x64xf32>
    %325 = arith.addf %324, %323 : vector<8x64xf32>
    %326 = arith.divf %324, %325 : vector<8x64xf32>
    %327 = vector.extract_strided_slice %320 {offsets = [0, 64], sizes = [8, 64], strides = [1, 1]} : vector<8x256xf32> to vector<8x64xf32>
    %328 = arith.negf %327 : vector<8x64xf32>
    %329 = math.exp %328 : vector<8x64xf32>
    %cst_94 = arith.constant 1.000000e+00 : f32
    %330 = vector.broadcast %cst_94 : f32 to vector<8x64xf32>
    %331 = arith.addf %330, %329 : vector<8x64xf32>
    %332 = arith.divf %330, %331 : vector<8x64xf32>
    %333 = vector.extract_strided_slice %320 {offsets = [0, 128], sizes = [8, 64], strides = [1, 1]} : vector<8x256xf32> to vector<8x64xf32>
    %334 = math.tanh %333 : vector<8x64xf32>
    %335 = vector.extract_strided_slice %320 {offsets = [0, 192], sizes = [8, 64], strides = [1, 1]} : vector<8x256xf32> to vector<8x64xf32>
    %336 = arith.negf %335 : vector<8x64xf32>
    %337 = math.exp %336 : vector<8x64xf32>
    %cst_95 = arith.constant 1.000000e+00 : f32
    %338 = vector.broadcast %cst_95 : f32 to vector<8x64xf32>
    %339 = arith.addf %338, %337 : vector<8x64xf32>
    %340 = arith.divf %338, %339 : vector<8x64xf32>
    %341 = arith.mulf %332, %313 : vector<8x64xf32>
    %342 = arith.mulf %326, %334 : vector<8x64xf32>
    %343 = arith.addf %341, %342 : vector<8x64xf32>
    %344 = math.tanh %343 : vector<8x64xf32>
    %345 = arith.mulf %340, %344 : vector<8x64xf32>
    %c16_96 = arith.constant 16 : index
    %c0_97 = arith.constant 0 : index
    %346 = vector.load %arg18[%c16_96, %c0_97] : memref<64x128xf32, #tpu.memory_space<vmem>>, vector<8x64xf32>
    tpu.vector_store %arg18[%c16_96, %c0_97], %345 {strides = array<i32>} : memref<64x128xf32, #tpu.memory_space<vmem>>, vector<8x64xf32>,
    %c40_98 = arith.constant 40 : index
    %c64_99 = arith.constant 64 : index
    %347 = vector.load %arg18[%c40_98, %c64_99] : memref<64x128xf32, #tpu.memory_space<vmem>>, vector<8x64xf32>
    tpu.vector_store %arg18[%c40_98, %c64_99], %345 {strides = array<i32>} : memref<64x128xf32, #tpu.memory_space<vmem>>, vector<8x64xf32>,
    %348 = vector.extract_strided_slice %254 {offsets = [24, 0], sizes = [8, 256], strides = [1, 1]} : vector<64x256xf32> to vector<8x256xf32>
    %cst_100 = arith.constant dense<0.000000e+00> : vector<8x256xf32>
    %349 = tpu.matmul %345, %255, %cst_100 {dimension_numbers = #tpu.dot_dimension_numbers<[1], [0], [0], [1], [0, 0, 1, 1], [], []>} : vector<8x64xf32>, vector<64x256xf32>, vector<8x256xf32> -> vector<8x256xf32>
    %350 = arith.addf %348, %349 : vector<8x256xf32>
    %351 = vector.extract_strided_slice %350 {offsets = [0, 0], sizes = [8, 64], strides = [1, 1]} : vector<8x256xf32> to vector<8x64xf32>
    %352 = arith.negf %351 : vector<8x64xf32>
    %353 = math.exp %352 : vector<8x64xf32>
    %cst_101 = arith.constant 1.000000e+00 : f32
    %354 = vector.broadcast %cst_101 : f32 to vector<8x64xf32>
    %355 = arith.addf %354, %353 : vector<8x64xf32>
    %356 = arith.divf %354, %355 : vector<8x64xf32>
    %357 = vector.extract_strided_slice %350 {offsets = [0, 64], sizes = [8, 64], strides = [1, 1]} : vector<8x256xf32> to vector<8x64xf32>
    %358 = arith.negf %357 : vector<8x64xf32>
    %359 = math.exp %358 : vector<8x64xf32>
    %cst_102 = arith.constant 1.000000e+00 : f32
    %360 = vector.broadcast %cst_102 : f32 to vector<8x64xf32>
    %361 = arith.addf %360, %359 : vector<8x64xf32>
    %362 = arith.divf %360, %361 : vector<8x64xf32>
    %363 = vector.extract_strided_slice %350 {offsets = [0, 128], sizes = [8, 64], strides = [1, 1]} : vector<8x256xf32> to vector<8x64xf32>
    %364 = math.tanh %363 : vector<8x64xf32>
    %365 = vector.extract_strided_slice %350 {offsets = [0, 192], sizes = [8, 64], strides = [1, 1]} : vector<8x256xf32> to vector<8x64xf32>
    %366 = arith.negf %365 : vector<8x64xf32>
    %367 = math.exp %366 : vector<8x64xf32>
    %cst_103 = arith.constant 1.000000e+00 : f32
    %368 = vector.broadcast %cst_103 : f32 to vector<8x64xf32>
    %369 = arith.addf %368, %367 : vector<8x64xf32>
    %370 = arith.divf %368, %369 : vector<8x64xf32>
    %371 = arith.mulf %362, %343 : vector<8x64xf32>
    %372 = arith.mulf %356, %364 : vector<8x64xf32>
    %373 = arith.addf %371, %372 : vector<8x64xf32>
    %374 = math.tanh %373 : vector<8x64xf32>
    %375 = arith.mulf %370, %374 : vector<8x64xf32>
    %c24_104 = arith.constant 24 : index
    %c0_105 = arith.constant 0 : index
    %376 = vector.load %arg18[%c24_104, %c0_105] : memref<64x128xf32, #tpu.memory_space<vmem>>, vector<8x64xf32>
    tpu.vector_store %arg18[%c24_104, %c0_105], %375 {strides = array<i32>} : memref<64x128xf32, #tpu.memory_space<vmem>>, vector<8x64xf32>,
    %c32_106 = arith.constant 32 : index
    %c64_107 = arith.constant 64 : index
    %377 = vector.load %arg18[%c32_106, %c64_107] : memref<64x128xf32, #tpu.memory_space<vmem>>, vector<8x64xf32>
    tpu.vector_store %arg18[%c32_106, %c64_107], %375 {strides = array<i32>} : memref<64x128xf32, #tpu.memory_space<vmem>>, vector<8x64xf32>,
    %378 = vector.extract_strided_slice %254 {offsets = [32, 0], sizes = [8, 256], strides = [1, 1]} : vector<64x256xf32> to vector<8x256xf32>
    %cst_108 = arith.constant dense<0.000000e+00> : vector<8x256xf32>
    %379 = tpu.matmul %375, %255, %cst_108 {dimension_numbers = #tpu.dot_dimension_numbers<[1], [0], [0], [1], [0, 0, 1, 1], [], []>} : vector<8x64xf32>, vector<64x256xf32>, vector<8x256xf32> -> vector<8x256xf32>
    %380 = arith.addf %378, %379 : vector<8x256xf32>
    %381 = vector.extract_strided_slice %380 {offsets = [0, 0], sizes = [8, 64], strides = [1, 1]} : vector<8x256xf32> to vector<8x64xf32>
    %382 = arith.negf %381 : vector<8x64xf32>
    %383 = math.exp %382 : vector<8x64xf32>
    %cst_109 = arith.constant 1.000000e+00 : f32
    %384 = vector.broadcast %cst_109 : f32 to vector<8x64xf32>
    %385 = arith.addf %384, %383 : vector<8x64xf32>
    %386 = arith.divf %384, %385 : vector<8x64xf32>
    %387 = vector.extract_strided_slice %380 {offsets = [0, 64], sizes = [8, 64], strides = [1, 1]} : vector<8x256xf32> to vector<8x64xf32>
    %388 = arith.negf %387 : vector<8x64xf32>
    %389 = math.exp %388 : vector<8x64xf32>
    %cst_110 = arith.constant 1.000000e+00 : f32
    %390 = vector.broadcast %cst_110 : f32 to vector<8x64xf32>
    %391 = arith.addf %390, %389 : vector<8x64xf32>
    %392 = arith.divf %390, %391 : vector<8x64xf32>
    %393 = vector.extract_strided_slice %380 {offsets = [0, 128], sizes = [8, 64], strides = [1, 1]} : vector<8x256xf32> to vector<8x64xf32>
    %394 = math.tanh %393 : vector<8x64xf32>
    %395 = vector.extract_strided_slice %380 {offsets = [0, 192], sizes = [8, 64], strides = [1, 1]} : vector<8x256xf32> to vector<8x64xf32>
    %396 = arith.negf %395 : vector<8x64xf32>
    %397 = math.exp %396 : vector<8x64xf32>
    %cst_111 = arith.constant 1.000000e+00 : f32
    %398 = vector.broadcast %cst_111 : f32 to vector<8x64xf32>
    %399 = arith.addf %398, %397 : vector<8x64xf32>
    %400 = arith.divf %398, %399 : vector<8x64xf32>
    %401 = arith.mulf %392, %373 : vector<8x64xf32>
    %402 = arith.mulf %386, %394 : vector<8x64xf32>
    %403 = arith.addf %401, %402 : vector<8x64xf32>
    %404 = math.tanh %403 : vector<8x64xf32>
    %405 = arith.mulf %400, %404 : vector<8x64xf32>
    %c32_112 = arith.constant 32 : index
    %c0_113 = arith.constant 0 : index
    %406 = vector.load %arg18[%c32_112, %c0_113] : memref<64x128xf32, #tpu.memory_space<vmem>>, vector<8x64xf32>
    tpu.vector_store %arg18[%c32_112, %c0_113], %405 {strides = array<i32>} : memref<64x128xf32, #tpu.memory_space<vmem>>, vector<8x64xf32>,
    %c24_114 = arith.constant 24 : index
    %c64_115 = arith.constant 64 : index
    %407 = vector.load %arg18[%c24_114, %c64_115] : memref<64x128xf32, #tpu.memory_space<vmem>>, vector<8x64xf32>
    tpu.vector_store %arg18[%c24_114, %c64_115], %405 {strides = array<i32>} : memref<64x128xf32, #tpu.memory_space<vmem>>, vector<8x64xf32>,
    %408 = vector.extract_strided_slice %254 {offsets = [40, 0], sizes = [8, 256], strides = [1, 1]} : vector<64x256xf32> to vector<8x256xf32>
    %cst_116 = arith.constant dense<0.000000e+00> : vector<8x256xf32>
    %409 = tpu.matmul %405, %255, %cst_116 {dimension_numbers = #tpu.dot_dimension_numbers<[1], [0], [0], [1], [0, 0, 1, 1], [], []>} : vector<8x64xf32>, vector<64x256xf32>, vector<8x256xf32> -> vector<8x256xf32>
    %410 = arith.addf %408, %409 : vector<8x256xf32>
    %411 = vector.extract_strided_slice %410 {offsets = [0, 0], sizes = [8, 64], strides = [1, 1]} : vector<8x256xf32> to vector<8x64xf32>
    %412 = arith.negf %411 : vector<8x64xf32>
    %413 = math.exp %412 : vector<8x64xf32>
    %cst_117 = arith.constant 1.000000e+00 : f32
    %414 = vector.broadcast %cst_117 : f32 to vector<8x64xf32>
    %415 = arith.addf %414, %413 : vector<8x64xf32>
    %416 = arith.divf %414, %415 : vector<8x64xf32>
    %417 = vector.extract_strided_slice %410 {offsets = [0, 64], sizes = [8, 64], strides = [1, 1]} : vector<8x256xf32> to vector<8x64xf32>
    %418 = arith.negf %417 : vector<8x64xf32>
    %419 = math.exp %418 : vector<8x64xf32>
    %cst_118 = arith.constant 1.000000e+00 : f32
    %420 = vector.broadcast %cst_118 : f32 to vector<8x64xf32>
    %421 = arith.addf %420, %419 : vector<8x64xf32>
    %422 = arith.divf %420, %421 : vector<8x64xf32>
    %423 = vector.extract_strided_slice %410 {offsets = [0, 128], sizes = [8, 64], strides = [1, 1]} : vector<8x256xf32> to vector<8x64xf32>
    %424 = math.tanh %423 : vector<8x64xf32>
    %425 = vector.extract_strided_slice %410 {offsets = [0, 192], sizes = [8, 64], strides = [1, 1]} : vector<8x256xf32> to vector<8x64xf32>
    %426 = arith.negf %425 : vector<8x64xf32>
    %427 = math.exp %426 : vector<8x64xf32>
    %cst_119 = arith.constant 1.000000e+00 : f32
    %428 = vector.broadcast %cst_119 : f32 to vector<8x64xf32>
    %429 = arith.addf %428, %427 : vector<8x64xf32>
    %430 = arith.divf %428, %429 : vector<8x64xf32>
    %431 = arith.mulf %422, %403 : vector<8x64xf32>
    %432 = arith.mulf %416, %424 : vector<8x64xf32>
    %433 = arith.addf %431, %432 : vector<8x64xf32>
    %434 = math.tanh %433 : vector<8x64xf32>
    %435 = arith.mulf %430, %434 : vector<8x64xf32>
    %c40_120 = arith.constant 40 : index
    %c0_121 = arith.constant 0 : index
    %436 = vector.load %arg18[%c40_120, %c0_121] : memref<64x128xf32, #tpu.memory_space<vmem>>, vector<8x64xf32>
    tpu.vector_store %arg18[%c40_120, %c0_121], %435 {strides = array<i32>} : memref<64x128xf32, #tpu.memory_space<vmem>>, vector<8x64xf32>,
    %c16_122 = arith.constant 16 : index
    %c64_123 = arith.constant 64 : index
    %437 = vector.load %arg18[%c16_122, %c64_123] : memref<64x128xf32, #tpu.memory_space<vmem>>, vector<8x64xf32>
    tpu.vector_store %arg18[%c16_122, %c64_123], %435 {strides = array<i32>} : memref<64x128xf32, #tpu.memory_space<vmem>>, vector<8x64xf32>,
    %438 = vector.extract_strided_slice %254 {offsets = [48, 0], sizes = [8, 256], strides = [1, 1]} : vector<64x256xf32> to vector<8x256xf32>
    %cst_124 = arith.constant dense<0.000000e+00> : vector<8x256xf32>
    %439 = tpu.matmul %435, %255, %cst_124 {dimension_numbers = #tpu.dot_dimension_numbers<[1], [0], [0], [1], [0, 0, 1, 1], [], []>} : vector<8x64xf32>, vector<64x256xf32>, vector<8x256xf32> -> vector<8x256xf32>
    %440 = arith.addf %438, %439 : vector<8x256xf32>
    %441 = vector.extract_strided_slice %440 {offsets = [0, 0], sizes = [8, 64], strides = [1, 1]} : vector<8x256xf32> to vector<8x64xf32>
    %442 = arith.negf %441 : vector<8x64xf32>
    %443 = math.exp %442 : vector<8x64xf32>
    %cst_125 = arith.constant 1.000000e+00 : f32
    %444 = vector.broadcast %cst_125 : f32 to vector<8x64xf32>
    %445 = arith.addf %444, %443 : vector<8x64xf32>
    %446 = arith.divf %444, %445 : vector<8x64xf32>
    %447 = vector.extract_strided_slice %440 {offsets = [0, 64], sizes = [8, 64], strides = [1, 1]} : vector<8x256xf32> to vector<8x64xf32>
    %448 = arith.negf %447 : vector<8x64xf32>
    %449 = math.exp %448 : vector<8x64xf32>
    %cst_126 = arith.constant 1.000000e+00 : f32
    %450 = vector.broadcast %cst_126 : f32 to vector<8x64xf32>
    %451 = arith.addf %450, %449 : vector<8x64xf32>
    %452 = arith.divf %450, %451 : vector<8x64xf32>
    %453 = vector.extract_strided_slice %440 {offsets = [0, 128], sizes = [8, 64], strides = [1, 1]} : vector<8x256xf32> to vector<8x64xf32>
    %454 = math.tanh %453 : vector<8x64xf32>
    %455 = vector.extract_strided_slice %440 {offsets = [0, 192], sizes = [8, 64], strides = [1, 1]} : vector<8x256xf32> to vector<8x64xf32>
    %456 = arith.negf %455 : vector<8x64xf32>
    %457 = math.exp %456 : vector<8x64xf32>
    %cst_127 = arith.constant 1.000000e+00 : f32
    %458 = vector.broadcast %cst_127 : f32 to vector<8x64xf32>
    %459 = arith.addf %458, %457 : vector<8x64xf32>
    %460 = arith.divf %458, %459 : vector<8x64xf32>
    %461 = arith.mulf %452, %433 : vector<8x64xf32>
    %462 = arith.mulf %446, %454 : vector<8x64xf32>
    %463 = arith.addf %461, %462 : vector<8x64xf32>
    %464 = math.tanh %463 : vector<8x64xf32>
    %465 = arith.mulf %460, %464 : vector<8x64xf32>
    %c48_128 = arith.constant 48 : index
    %c0_129 = arith.constant 0 : index
    %466 = vector.load %arg18[%c48_128, %c0_129] : memref<64x128xf32, #tpu.memory_space<vmem>>, vector<8x64xf32>
    tpu.vector_store %arg18[%c48_128, %c0_129], %465 {strides = array<i32>} : memref<64x128xf32, #tpu.memory_space<vmem>>, vector<8x64xf32>,
    %c8_130 = arith.constant 8 : index
    %c64_131 = arith.constant 64 : index
    %467 = vector.load %arg18[%c8_130, %c64_131] : memref<64x128xf32, #tpu.memory_space<vmem>>, vector<8x64xf32>
    tpu.vector_store %arg18[%c8_130, %c64_131], %465 {strides = array<i32>} : memref<64x128xf32, #tpu.memory_space<vmem>>, vector<8x64xf32>,
    %468 = vector.extract_strided_slice %254 {offsets = [56, 0], sizes = [8, 256], strides = [1, 1]} : vector<64x256xf32> to vector<8x256xf32>
    %cst_132 = arith.constant dense<0.000000e+00> : vector<8x256xf32>
    %469 = tpu.matmul %465, %255, %cst_132 {dimension_numbers = #tpu.dot_dimension_numbers<[1], [0], [0], [1], [0, 0, 1, 1], [], []>} : vector<8x64xf32>, vector<64x256xf32>, vector<8x256xf32> -> vector<8x256xf32>
    %470 = arith.addf %468, %469 : vector<8x256xf32>
    %471 = vector.extract_strided_slice %470 {offsets = [0, 0], sizes = [8, 64], strides = [1, 1]} : vector<8x256xf32> to vector<8x64xf32>
    %472 = arith.negf %471 : vector<8x64xf32>
    %473 = math.exp %472 : vector<8x64xf32>
    %cst_133 = arith.constant 1.000000e+00 : f32
    %474 = vector.broadcast %cst_133 : f32 to vector<8x64xf32>
    %475 = arith.addf %474, %473 : vector<8x64xf32>
    %476 = arith.divf %474, %475 : vector<8x64xf32>
    %477 = vector.extract_strided_slice %470 {offsets = [0, 64], sizes = [8, 64], strides = [1, 1]} : vector<8x256xf32> to vector<8x64xf32>
    %478 = arith.negf %477 : vector<8x64xf32>
    %479 = math.exp %478 : vector<8x64xf32>
    %cst_134 = arith.constant 1.000000e+00 : f32
    %480 = vector.broadcast %cst_134 : f32 to vector<8x64xf32>
    %481 = arith.addf %480, %479 : vector<8x64xf32>
    %482 = arith.divf %480, %481 : vector<8x64xf32>
    %483 = vector.extract_strided_slice %470 {offsets = [0, 128], sizes = [8, 64], strides = [1, 1]} : vector<8x256xf32> to vector<8x64xf32>
    %484 = math.tanh %483 : vector<8x64xf32>
    %485 = vector.extract_strided_slice %470 {offsets = [0, 192], sizes = [8, 64], strides = [1, 1]} : vector<8x256xf32> to vector<8x64xf32>
    %486 = arith.negf %485 : vector<8x64xf32>
    %487 = math.exp %486 : vector<8x64xf32>
    %cst_135 = arith.constant 1.000000e+00 : f32
    %488 = vector.broadcast %cst_135 : f32 to vector<8x64xf32>
    %489 = arith.addf %488, %487 : vector<8x64xf32>
    %490 = arith.divf %488, %489 : vector<8x64xf32>
    %491 = arith.mulf %482, %463 : vector<8x64xf32>
    %492 = arith.mulf %476, %484 : vector<8x64xf32>
    %493 = arith.addf %491, %492 : vector<8x64xf32>
    %494 = math.tanh %493 : vector<8x64xf32>
    %495 = arith.mulf %490, %494 : vector<8x64xf32>
    %c56_136 = arith.constant 56 : index
    %c0_137 = arith.constant 0 : index
    %496 = vector.load %arg18[%c56_136, %c0_137] : memref<64x128xf32, #tpu.memory_space<vmem>>, vector<8x64xf32>
    tpu.vector_store %arg18[%c56_136, %c0_137], %495 {strides = array<i32>} : memref<64x128xf32, #tpu.memory_space<vmem>>, vector<8x64xf32>,
    %c0_138 = arith.constant 0 : index
    %c64_139 = arith.constant 64 : index
    %497 = vector.load %arg18[%c0_138, %c64_139] : memref<64x128xf32, #tpu.memory_space<vmem>>, vector<8x64xf32>
    tpu.vector_store %arg18[%c0_138, %c64_139], %495 {strides = array<i32>} : memref<64x128xf32, #tpu.memory_space<vmem>>, vector<8x64xf32>,
    %c0_140 = arith.constant 0 : index
    %c0_141 = arith.constant 0 : index
    %498 = vector.load %arg18[%c0_140, %c0_141] : memref<64x128xf32, #tpu.memory_space<vmem>>, vector<64x128xf32>
    %c0_142 = arith.constant 0 : index
    %c0_143 = arith.constant 0 : index
    %499 = vector.load %arg7[%c0_142, %c0_143] : memref<128x256xf32, #tpu.memory_space<vmem>>, vector<128x256xf32>
    %cst_144 = arith.constant dense<0.000000e+00> : vector<64x256xf32>
    %500 = tpu.matmul %498, %499, %cst_144 {dimension_numbers = #tpu.dot_dimension_numbers<[1], [0], [0], [1], [0, 0, 1, 1], [], []>} : vector<64x128xf32>, vector<128x256xf32>, vector<64x256xf32> -> vector<64x256xf32>
    %c0_145 = arith.constant 0 : index
    %c0_146 = arith.constant 0 : index
    %501 = vector.load %arg9[%c0_145, %c0_146] : memref<1x256xf32, #tpu.memory_space<vmem>>, vector<1x256xf32>
    %502 = vector.broadcast %501 : vector<1x256xf32> to vector<64x256xf32>
    %503 = arith.addf %500, %502 : vector<64x256xf32>
    %c0_147 = arith.constant 0 : index
    %c0_148 = arith.constant 0 : index
    %504 = vector.load %arg8[%c0_147, %c0_148] : memref<64x256xf32, #tpu.memory_space<vmem>>, vector<64x256xf32>
    %cst_149 = arith.constant 0.000000e+00 : f32
    %505 = vector.broadcast %cst_149 : f32 to vector<8x64xf32>
    %cst_150 = arith.constant 0.000000e+00 : f32
    %506 = vector.broadcast %cst_150 : f32 to vector<8x64xf32>
    %507 = vector.extract_strided_slice %503 {offsets = [0, 0], sizes = [8, 256], strides = [1, 1]} : vector<64x256xf32> to vector<8x256xf32>
    %cst_151 = arith.constant dense<0.000000e+00> : vector<8x256xf32>
    %508 = tpu.matmul %505, %504, %cst_151 {dimension_numbers = #tpu.dot_dimension_numbers<[1], [0], [0], [1], [0, 0, 1, 1], [], []>} : vector<8x64xf32>, vector<64x256xf32>, vector<8x256xf32> -> vector<8x256xf32>
    %509 = arith.addf %507, %508 : vector<8x256xf32>
    %510 = vector.extract_strided_slice %509 {offsets = [0, 0], sizes = [8, 64], strides = [1, 1]} : vector<8x256xf32> to vector<8x64xf32>
    %511 = arith.negf %510 : vector<8x64xf32>
    %512 = math.exp %511 : vector<8x64xf32>
    %cst_152 = arith.constant 1.000000e+00 : f32
    %513 = vector.broadcast %cst_152 : f32 to vector<8x64xf32>
    %514 = arith.addf %513, %512 : vector<8x64xf32>
    %515 = arith.divf %513, %514 : vector<8x64xf32>
    %516 = vector.extract_strided_slice %509 {offsets = [0, 64], sizes = [8, 64], strides = [1, 1]} : vector<8x256xf32> to vector<8x64xf32>
    %517 = arith.negf %516 : vector<8x64xf32>
    %518 = math.exp %517 : vector<8x64xf32>
    %cst_153 = arith.constant 1.000000e+00 : f32
    %519 = vector.broadcast %cst_153 : f32 to vector<8x64xf32>
    %520 = arith.addf %519, %518 : vector<8x64xf32>
    %521 = arith.divf %519, %520 : vector<8x64xf32>
    %522 = vector.extract_strided_slice %509 {offsets = [0, 128], sizes = [8, 64], strides = [1, 1]} : vector<8x256xf32> to vector<8x64xf32>
    %523 = math.tanh %522 : vector<8x64xf32>
    %524 = vector.extract_strided_slice %509 {offsets = [0, 192], sizes = [8, 64], strides = [1, 1]} : vector<8x256xf32> to vector<8x64xf32>
    %525 = arith.negf %524 : vector<8x64xf32>
    %526 = math.exp %525 : vector<8x64xf32>
    %cst_154 = arith.constant 1.000000e+00 : f32
    %527 = vector.broadcast %cst_154 : f32 to vector<8x64xf32>
    %528 = arith.addf %527, %526 : vector<8x64xf32>
    %529 = arith.divf %527, %528 : vector<8x64xf32>
    %530 = arith.mulf %521, %506 : vector<8x64xf32>
    %531 = arith.mulf %515, %523 : vector<8x64xf32>
    %532 = arith.addf %530, %531 : vector<8x64xf32>
    %533 = math.tanh %532 : vector<8x64xf32>
    %534 = arith.mulf %529, %533 : vector<8x64xf32>
    %c0_155 = arith.constant 0 : index
    %c0_156 = arith.constant 0 : index
    %535 = vector.load %arg19[%c0_155, %c0_156] : memref<64x128xf32, #tpu.memory_space<vmem>>, vector<8x64xf32>
    tpu.vector_store %arg19[%c0_155, %c0_156], %534 {strides = array<i32>} : memref<64x128xf32, #tpu.memory_space<vmem>>, vector<8x64xf32>,
    %c56_157 = arith.constant 56 : index
    %c64_158 = arith.constant 64 : index
    %536 = vector.load %arg19[%c56_157, %c64_158] : memref<64x128xf32, #tpu.memory_space<vmem>>, vector<8x64xf32>
    tpu.vector_store %arg19[%c56_157, %c64_158], %534 {strides = array<i32>} : memref<64x128xf32, #tpu.memory_space<vmem>>, vector<8x64xf32>,
    %537 = vector.extract_strided_slice %503 {offsets = [8, 0], sizes = [8, 256], strides = [1, 1]} : vector<64x256xf32> to vector<8x256xf32>
    %cst_159 = arith.constant dense<0.000000e+00> : vector<8x256xf32>
    %538 = tpu.matmul %534, %504, %cst_159 {dimension_numbers = #tpu.dot_dimension_numbers<[1], [0], [0], [1], [0, 0, 1, 1], [], []>} : vector<8x64xf32>, vector<64x256xf32>, vector<8x256xf32> -> vector<8x256xf32>
    %539 = arith.addf %537, %538 : vector<8x256xf32>
    %540 = vector.extract_strided_slice %539 {offsets = [0, 0], sizes = [8, 64], strides = [1, 1]} : vector<8x256xf32> to vector<8x64xf32>
    %541 = arith.negf %540 : vector<8x64xf32>
    %542 = math.exp %541 : vector<8x64xf32>
    %cst_160 = arith.constant 1.000000e+00 : f32
    %543 = vector.broadcast %cst_160 : f32 to vector<8x64xf32>
    %544 = arith.addf %543, %542 : vector<8x64xf32>
    %545 = arith.divf %543, %544 : vector<8x64xf32>
    %546 = vector.extract_strided_slice %539 {offsets = [0, 64], sizes = [8, 64], strides = [1, 1]} : vector<8x256xf32> to vector<8x64xf32>
    %547 = arith.negf %546 : vector<8x64xf32>
    %548 = math.exp %547 : vector<8x64xf32>
    %cst_161 = arith.constant 1.000000e+00 : f32
    %549 = vector.broadcast %cst_161 : f32 to vector<8x64xf32>
    %550 = arith.addf %549, %548 : vector<8x64xf32>
    %551 = arith.divf %549, %550 : vector<8x64xf32>
    %552 = vector.extract_strided_slice %539 {offsets = [0, 128], sizes = [8, 64], strides = [1, 1]} : vector<8x256xf32> to vector<8x64xf32>
    %553 = math.tanh %552 : vector<8x64xf32>
    %554 = vector.extract_strided_slice %539 {offsets = [0, 192], sizes = [8, 64], strides = [1, 1]} : vector<8x256xf32> to vector<8x64xf32>
    %555 = arith.negf %554 : vector<8x64xf32>
    %556 = math.exp %555 : vector<8x64xf32>
    %cst_162 = arith.constant 1.000000e+00 : f32
    %557 = vector.broadcast %cst_162 : f32 to vector<8x64xf32>
    %558 = arith.addf %557, %556 : vector<8x64xf32>
    %559 = arith.divf %557, %558 : vector<8x64xf32>
    %560 = arith.mulf %551, %532 : vector<8x64xf32>
    %561 = arith.mulf %545, %553 : vector<8x64xf32>
    %562 = arith.addf %560, %561 : vector<8x64xf32>
    %563 = math.tanh %562 : vector<8x64xf32>
    %564 = arith.mulf %559, %563 : vector<8x64xf32>
    %c8_163 = arith.constant 8 : index
    %c0_164 = arith.constant 0 : index
    %565 = vector.load %arg19[%c8_163, %c0_164] : memref<64x128xf32, #tpu.memory_space<vmem>>, vector<8x64xf32>
    tpu.vector_store %arg19[%c8_163, %c0_164], %564 {strides = array<i32>} : memref<64x128xf32, #tpu.memory_space<vmem>>, vector<8x64xf32>,
    %c48_165 = arith.constant 48 : index
    %c64_166 = arith.constant 64 : index
    %566 = vector.load %arg19[%c48_165, %c64_166] : memref<64x128xf32, #tpu.memory_space<vmem>>, vector<8x64xf32>
    tpu.vector_store %arg19[%c48_165, %c64_166], %564 {strides = array<i32>} : memref<64x128xf32, #tpu.memory_space<vmem>>, vector<8x64xf32>,
    %567 = vector.extract_strided_slice %503 {offsets = [16, 0], sizes = [8, 256], strides = [1, 1]} : vector<64x256xf32> to vector<8x256xf32>
    %cst_167 = arith.constant dense<0.000000e+00> : vector<8x256xf32>
    %568 = tpu.matmul %564, %504, %cst_167 {dimension_numbers = #tpu.dot_dimension_numbers<[1], [0], [0], [1], [0, 0, 1, 1], [], []>} : vector<8x64xf32>, vector<64x256xf32>, vector<8x256xf32> -> vector<8x256xf32>
    %569 = arith.addf %567, %568 : vector<8x256xf32>
    %570 = vector.extract_strided_slice %569 {offsets = [0, 0], sizes = [8, 64], strides = [1, 1]} : vector<8x256xf32> to vector<8x64xf32>
    %571 = arith.negf %570 : vector<8x64xf32>
    %572 = math.exp %571 : vector<8x64xf32>
    %cst_168 = arith.constant 1.000000e+00 : f32
    %573 = vector.broadcast %cst_168 : f32 to vector<8x64xf32>
    %574 = arith.addf %573, %572 : vector<8x64xf32>
    %575 = arith.divf %573, %574 : vector<8x64xf32>
    %576 = vector.extract_strided_slice %569 {offsets = [0, 64], sizes = [8, 64], strides = [1, 1]} : vector<8x256xf32> to vector<8x64xf32>
    %577 = arith.negf %576 : vector<8x64xf32>
    %578 = math.exp %577 : vector<8x64xf32>
    %cst_169 = arith.constant 1.000000e+00 : f32
    %579 = vector.broadcast %cst_169 : f32 to vector<8x64xf32>
    %580 = arith.addf %579, %578 : vector<8x64xf32>
    %581 = arith.divf %579, %580 : vector<8x64xf32>
    %582 = vector.extract_strided_slice %569 {offsets = [0, 128], sizes = [8, 64], strides = [1, 1]} : vector<8x256xf32> to vector<8x64xf32>
    %583 = math.tanh %582 : vector<8x64xf32>
    %584 = vector.extract_strided_slice %569 {offsets = [0, 192], sizes = [8, 64], strides = [1, 1]} : vector<8x256xf32> to vector<8x64xf32>
    %585 = arith.negf %584 : vector<8x64xf32>
    %586 = math.exp %585 : vector<8x64xf32>
    %cst_170 = arith.constant 1.000000e+00 : f32
    %587 = vector.broadcast %cst_170 : f32 to vector<8x64xf32>
    %588 = arith.addf %587, %586 : vector<8x64xf32>
    %589 = arith.divf %587, %588 : vector<8x64xf32>
    %590 = arith.mulf %581, %562 : vector<8x64xf32>
    %591 = arith.mulf %575, %583 : vector<8x64xf32>
    %592 = arith.addf %590, %591 : vector<8x64xf32>
    %593 = math.tanh %592 : vector<8x64xf32>
    %594 = arith.mulf %589, %593 : vector<8x64xf32>
    %c16_171 = arith.constant 16 : index
    %c0_172 = arith.constant 0 : index
    %595 = vector.load %arg19[%c16_171, %c0_172] : memref<64x128xf32, #tpu.memory_space<vmem>>, vector<8x64xf32>
    tpu.vector_store %arg19[%c16_171, %c0_172], %594 {strides = array<i32>} : memref<64x128xf32, #tpu.memory_space<vmem>>, vector<8x64xf32>,
    %c40_173 = arith.constant 40 : index
    %c64_174 = arith.constant 64 : index
    %596 = vector.load %arg19[%c40_173, %c64_174] : memref<64x128xf32, #tpu.memory_space<vmem>>, vector<8x64xf32>
    tpu.vector_store %arg19[%c40_173, %c64_174], %594 {strides = array<i32>} : memref<64x128xf32, #tpu.memory_space<vmem>>, vector<8x64xf32>,
    %597 = vector.extract_strided_slice %503 {offsets = [24, 0], sizes = [8, 256], strides = [1, 1]} : vector<64x256xf32> to vector<8x256xf32>
    %cst_175 = arith.constant dense<0.000000e+00> : vector<8x256xf32>
    %598 = tpu.matmul %594, %504, %cst_175 {dimension_numbers = #tpu.dot_dimension_numbers<[1], [0], [0], [1], [0, 0, 1, 1], [], []>} : vector<8x64xf32>, vector<64x256xf32>, vector<8x256xf32> -> vector<8x256xf32>
    %599 = arith.addf %597, %598 : vector<8x256xf32>
    %600 = vector.extract_strided_slice %599 {offsets = [0, 0], sizes = [8, 64], strides = [1, 1]} : vector<8x256xf32> to vector<8x64xf32>
    %601 = arith.negf %600 : vector<8x64xf32>
    %602 = math.exp %601 : vector<8x64xf32>
    %cst_176 = arith.constant 1.000000e+00 : f32
    %603 = vector.broadcast %cst_176 : f32 to vector<8x64xf32>
    %604 = arith.addf %603, %602 : vector<8x64xf32>
    %605 = arith.divf %603, %604 : vector<8x64xf32>
    %606 = vector.extract_strided_slice %599 {offsets = [0, 64], sizes = [8, 64], strides = [1, 1]} : vector<8x256xf32> to vector<8x64xf32>
    %607 = arith.negf %606 : vector<8x64xf32>
    %608 = math.exp %607 : vector<8x64xf32>
    %cst_177 = arith.constant 1.000000e+00 : f32
    %609 = vector.broadcast %cst_177 : f32 to vector<8x64xf32>
    %610 = arith.addf %609, %608 : vector<8x64xf32>
    %611 = arith.divf %609, %610 : vector<8x64xf32>
    %612 = vector.extract_strided_slice %599 {offsets = [0, 128], sizes = [8, 64], strides = [1, 1]} : vector<8x256xf32> to vector<8x64xf32>
    %613 = math.tanh %612 : vector<8x64xf32>
    %614 = vector.extract_strided_slice %599 {offsets = [0, 192], sizes = [8, 64], strides = [1, 1]} : vector<8x256xf32> to vector<8x64xf32>
    %615 = arith.negf %614 : vector<8x64xf32>
    %616 = math.exp %615 : vector<8x64xf32>
    %cst_178 = arith.constant 1.000000e+00 : f32
    %617 = vector.broadcast %cst_178 : f32 to vector<8x64xf32>
    %618 = arith.addf %617, %616 : vector<8x64xf32>
    %619 = arith.divf %617, %618 : vector<8x64xf32>
    %620 = arith.mulf %611, %592 : vector<8x64xf32>
    %621 = arith.mulf %605, %613 : vector<8x64xf32>
    %622 = arith.addf %620, %621 : vector<8x64xf32>
    %623 = math.tanh %622 : vector<8x64xf32>
    %624 = arith.mulf %619, %623 : vector<8x64xf32>
    %c24_179 = arith.constant 24 : index
    %c0_180 = arith.constant 0 : index
    %625 = vector.load %arg19[%c24_179, %c0_180] : memref<64x128xf32, #tpu.memory_space<vmem>>, vector<8x64xf32>
    tpu.vector_store %arg19[%c24_179, %c0_180], %624 {strides = array<i32>} : memref<64x128xf32, #tpu.memory_space<vmem>>, vector<8x64xf32>,
    %c32_181 = arith.constant 32 : index
    %c64_182 = arith.constant 64 : index
    %626 = vector.load %arg19[%c32_181, %c64_182] : memref<64x128xf32, #tpu.memory_space<vmem>>, vector<8x64xf32>
    tpu.vector_store %arg19[%c32_181, %c64_182], %624 {strides = array<i32>} : memref<64x128xf32, #tpu.memory_space<vmem>>, vector<8x64xf32>,
    %627 = vector.extract_strided_slice %503 {offsets = [32, 0], sizes = [8, 256], strides = [1, 1]} : vector<64x256xf32> to vector<8x256xf32>
    %cst_183 = arith.constant dense<0.000000e+00> : vector<8x256xf32>
    %628 = tpu.matmul %624, %504, %cst_183 {dimension_numbers = #tpu.dot_dimension_numbers<[1], [0], [0], [1], [0, 0, 1, 1], [], []>} : vector<8x64xf32>, vector<64x256xf32>, vector<8x256xf32> -> vector<8x256xf32>
    %629 = arith.addf %627, %628 : vector<8x256xf32>
    %630 = vector.extract_strided_slice %629 {offsets = [0, 0], sizes = [8, 64], strides = [1, 1]} : vector<8x256xf32> to vector<8x64xf32>
    %631 = arith.negf %630 : vector<8x64xf32>
    %632 = math.exp %631 : vector<8x64xf32>
    %cst_184 = arith.constant 1.000000e+00 : f32
    %633 = vector.broadcast %cst_184 : f32 to vector<8x64xf32>
    %634 = arith.addf %633, %632 : vector<8x64xf32>
    %635 = arith.divf %633, %634 : vector<8x64xf32>
    %636 = vector.extract_strided_slice %629 {offsets = [0, 64], sizes = [8, 64], strides = [1, 1]} : vector<8x256xf32> to vector<8x64xf32>
    %637 = arith.negf %636 : vector<8x64xf32>
    %638 = math.exp %637 : vector<8x64xf32>
    %cst_185 = arith.constant 1.000000e+00 : f32
    %639 = vector.broadcast %cst_185 : f32 to vector<8x64xf32>
    %640 = arith.addf %639, %638 : vector<8x64xf32>
    %641 = arith.divf %639, %640 : vector<8x64xf32>
    %642 = vector.extract_strided_slice %629 {offsets = [0, 128], sizes = [8, 64], strides = [1, 1]} : vector<8x256xf32> to vector<8x64xf32>
    %643 = math.tanh %642 : vector<8x64xf32>
    %644 = vector.extract_strided_slice %629 {offsets = [0, 192], sizes = [8, 64], strides = [1, 1]} : vector<8x256xf32> to vector<8x64xf32>
    %645 = arith.negf %644 : vector<8x64xf32>
    %646 = math.exp %645 : vector<8x64xf32>
    %cst_186 = arith.constant 1.000000e+00 : f32
    %647 = vector.broadcast %cst_186 : f32 to vector<8x64xf32>
    %648 = arith.addf %647, %646 : vector<8x64xf32>
    %649 = arith.divf %647, %648 : vector<8x64xf32>
    %650 = arith.mulf %641, %622 : vector<8x64xf32>
    %651 = arith.mulf %635, %643 : vector<8x64xf32>
    %652 = arith.addf %650, %651 : vector<8x64xf32>
    %653 = math.tanh %652 : vector<8x64xf32>
    %654 = arith.mulf %649, %653 : vector<8x64xf32>
    %c32_187 = arith.constant 32 : index
    %c0_188 = arith.constant 0 : index
    %655 = vector.load %arg19[%c32_187, %c0_188] : memref<64x128xf32, #tpu.memory_space<vmem>>, vector<8x64xf32>
    tpu.vector_store %arg19[%c32_187, %c0_188], %654 {strides = array<i32>} : memref<64x128xf32, #tpu.memory_space<vmem>>, vector<8x64xf32>,
    %c24_189 = arith.constant 24 : index
    %c64_190 = arith.constant 64 : index
    %656 = vector.load %arg19[%c24_189, %c64_190] : memref<64x128xf32, #tpu.memory_space<vmem>>, vector<8x64xf32>
    tpu.vector_store %arg19[%c24_189, %c64_190], %654 {strides = array<i32>} : memref<64x128xf32, #tpu.memory_space<vmem>>, vector<8x64xf32>,
    %657 = vector.extract_strided_slice %503 {offsets = [40, 0], sizes = [8, 256], strides = [1, 1]} : vector<64x256xf32> to vector<8x256xf32>
    %cst_191 = arith.constant dense<0.000000e+00> : vector<8x256xf32>
    %658 = tpu.matmul %654, %504, %cst_191 {dimension_numbers = #tpu.dot_dimension_numbers<[1], [0], [0], [1], [0, 0, 1, 1], [], []>} : vector<8x64xf32>, vector<64x256xf32>, vector<8x256xf32> -> vector<8x256xf32>
    %659 = arith.addf %657, %658 : vector<8x256xf32>
    %660 = vector.extract_strided_slice %659 {offsets = [0, 0], sizes = [8, 64], strides = [1, 1]} : vector<8x256xf32> to vector<8x64xf32>
    %661 = arith.negf %660 : vector<8x64xf32>
    %662 = math.exp %661 : vector<8x64xf32>
    %cst_192 = arith.constant 1.000000e+00 : f32
    %663 = vector.broadcast %cst_192 : f32 to vector<8x64xf32>
    %664 = arith.addf %663, %662 : vector<8x64xf32>
    %665 = arith.divf %663, %664 : vector<8x64xf32>
    %666 = vector.extract_strided_slice %659 {offsets = [0, 64], sizes = [8, 64], strides = [1, 1]} : vector<8x256xf32> to vector<8x64xf32>
    %667 = arith.negf %666 : vector<8x64xf32>
    %668 = math.exp %667 : vector<8x64xf32>
    %cst_193 = arith.constant 1.000000e+00 : f32
    %669 = vector.broadcast %cst_193 : f32 to vector<8x64xf32>
    %670 = arith.addf %669, %668 : vector<8x64xf32>
    %671 = arith.divf %669, %670 : vector<8x64xf32>
    %672 = vector.extract_strided_slice %659 {offsets = [0, 128], sizes = [8, 64], strides = [1, 1]} : vector<8x256xf32> to vector<8x64xf32>
    %673 = math.tanh %672 : vector<8x64xf32>
    %674 = vector.extract_strided_slice %659 {offsets = [0, 192], sizes = [8, 64], strides = [1, 1]} : vector<8x256xf32> to vector<8x64xf32>
    %675 = arith.negf %674 : vector<8x64xf32>
    %676 = math.exp %675 : vector<8x64xf32>
    %cst_194 = arith.constant 1.000000e+00 : f32
    %677 = vector.broadcast %cst_194 : f32 to vector<8x64xf32>
    %678 = arith.addf %677, %676 : vector<8x64xf32>
    %679 = arith.divf %677, %678 : vector<8x64xf32>
    %680 = arith.mulf %671, %652 : vector<8x64xf32>
    %681 = arith.mulf %665, %673 : vector<8x64xf32>
    %682 = arith.addf %680, %681 : vector<8x64xf32>
    %683 = math.tanh %682 : vector<8x64xf32>
    %684 = arith.mulf %679, %683 : vector<8x64xf32>
    %c40_195 = arith.constant 40 : index
    %c0_196 = arith.constant 0 : index
    %685 = vector.load %arg19[%c40_195, %c0_196] : memref<64x128xf32, #tpu.memory_space<vmem>>, vector<8x64xf32>
    tpu.vector_store %arg19[%c40_195, %c0_196], %684 {strides = array<i32>} : memref<64x128xf32, #tpu.memory_space<vmem>>, vector<8x64xf32>,
    %c16_197 = arith.constant 16 : index
    %c64_198 = arith.constant 64 : index
    %686 = vector.load %arg19[%c16_197, %c64_198] : memref<64x128xf32, #tpu.memory_space<vmem>>, vector<8x64xf32>
    tpu.vector_store %arg19[%c16_197, %c64_198], %684 {strides = array<i32>} : memref<64x128xf32, #tpu.memory_space<vmem>>, vector<8x64xf32>,
    %687 = vector.extract_strided_slice %503 {offsets = [48, 0], sizes = [8, 256], strides = [1, 1]} : vector<64x256xf32> to vector<8x256xf32>
    %cst_199 = arith.constant dense<0.000000e+00> : vector<8x256xf32>
    %688 = tpu.matmul %684, %504, %cst_199 {dimension_numbers = #tpu.dot_dimension_numbers<[1], [0], [0], [1], [0, 0, 1, 1], [], []>} : vector<8x64xf32>, vector<64x256xf32>, vector<8x256xf32> -> vector<8x256xf32>
    %689 = arith.addf %687, %688 : vector<8x256xf32>
    %690 = vector.extract_strided_slice %689 {offsets = [0, 0], sizes = [8, 64], strides = [1, 1]} : vector<8x256xf32> to vector<8x64xf32>
    %691 = arith.negf %690 : vector<8x64xf32>
    %692 = math.exp %691 : vector<8x64xf32>
    %cst_200 = arith.constant 1.000000e+00 : f32
    %693 = vector.broadcast %cst_200 : f32 to vector<8x64xf32>
    %694 = arith.addf %693, %692 : vector<8x64xf32>
    %695 = arith.divf %693, %694 : vector<8x64xf32>
    %696 = vector.extract_strided_slice %689 {offsets = [0, 64], sizes = [8, 64], strides = [1, 1]} : vector<8x256xf32> to vector<8x64xf32>
    %697 = arith.negf %696 : vector<8x64xf32>
    %698 = math.exp %697 : vector<8x64xf32>
    %cst_201 = arith.constant 1.000000e+00 : f32
    %699 = vector.broadcast %cst_201 : f32 to vector<8x64xf32>
    %700 = arith.addf %699, %698 : vector<8x64xf32>
    %701 = arith.divf %699, %700 : vector<8x64xf32>
    %702 = vector.extract_strided_slice %689 {offsets = [0, 128], sizes = [8, 64], strides = [1, 1]} : vector<8x256xf32> to vector<8x64xf32>
    %703 = math.tanh %702 : vector<8x64xf32>
    %704 = vector.extract_strided_slice %689 {offsets = [0, 192], sizes = [8, 64], strides = [1, 1]} : vector<8x256xf32> to vector<8x64xf32>
    %705 = arith.negf %704 : vector<8x64xf32>
    %706 = math.exp %705 : vector<8x64xf32>
    %cst_202 = arith.constant 1.000000e+00 : f32
    %707 = vector.broadcast %cst_202 : f32 to vector<8x64xf32>
    %708 = arith.addf %707, %706 : vector<8x64xf32>
    %709 = arith.divf %707, %708 : vector<8x64xf32>
    %710 = arith.mulf %701, %682 : vector<8x64xf32>
    %711 = arith.mulf %695, %703 : vector<8x64xf32>
    %712 = arith.addf %710, %711 : vector<8x64xf32>
    %713 = math.tanh %712 : vector<8x64xf32>
    %714 = arith.mulf %709, %713 : vector<8x64xf32>
    %c48_203 = arith.constant 48 : index
    %c0_204 = arith.constant 0 : index
    %715 = vector.load %arg19[%c48_203, %c0_204] : memref<64x128xf32, #tpu.memory_space<vmem>>, vector<8x64xf32>
    tpu.vector_store %arg19[%c48_203, %c0_204], %714 {strides = array<i32>} : memref<64x128xf32, #tpu.memory_space<vmem>>, vector<8x64xf32>,
    %c8_205 = arith.constant 8 : index
    %c64_206 = arith.constant 64 : index
    %716 = vector.load %arg19[%c8_205, %c64_206] : memref<64x128xf32, #tpu.memory_space<vmem>>, vector<8x64xf32>
    tpu.vector_store %arg19[%c8_205, %c64_206], %714 {strides = array<i32>} : memref<64x128xf32, #tpu.memory_space<vmem>>, vector<8x64xf32>,
    %717 = vector.extract_strided_slice %503 {offsets = [56, 0], sizes = [8, 256], strides = [1, 1]} : vector<64x256xf32> to vector<8x256xf32>
    %cst_207 = arith.constant dense<0.000000e+00> : vector<8x256xf32>
    %718 = tpu.matmul %714, %504, %cst_207 {dimension_numbers = #tpu.dot_dimension_numbers<[1], [0], [0], [1], [0, 0, 1, 1], [], []>} : vector<8x64xf32>, vector<64x256xf32>, vector<8x256xf32> -> vector<8x256xf32>
    %719 = arith.addf %717, %718 : vector<8x256xf32>
    %720 = vector.extract_strided_slice %719 {offsets = [0, 0], sizes = [8, 64], strides = [1, 1]} : vector<8x256xf32> to vector<8x64xf32>
    %721 = arith.negf %720 : vector<8x64xf32>
    %722 = math.exp %721 : vector<8x64xf32>
    %cst_208 = arith.constant 1.000000e+00 : f32
    %723 = vector.broadcast %cst_208 : f32 to vector<8x64xf32>
    %724 = arith.addf %723, %722 : vector<8x64xf32>
    %725 = arith.divf %723, %724 : vector<8x64xf32>
    %726 = vector.extract_strided_slice %719 {offsets = [0, 64], sizes = [8, 64], strides = [1, 1]} : vector<8x256xf32> to vector<8x64xf32>
    %727 = arith.negf %726 : vector<8x64xf32>
    %728 = math.exp %727 : vector<8x64xf32>
    %cst_209 = arith.constant 1.000000e+00 : f32
    %729 = vector.broadcast %cst_209 : f32 to vector<8x64xf32>
    %730 = arith.addf %729, %728 : vector<8x64xf32>
    %731 = arith.divf %729, %730 : vector<8x64xf32>
    %732 = vector.extract_strided_slice %719 {offsets = [0, 128], sizes = [8, 64], strides = [1, 1]} : vector<8x256xf32> to vector<8x64xf32>
    %733 = math.tanh %732 : vector<8x64xf32>
    %734 = vector.extract_strided_slice %719 {offsets = [0, 192], sizes = [8, 64], strides = [1, 1]} : vector<8x256xf32> to vector<8x64xf32>
    %735 = arith.negf %734 : vector<8x64xf32>
    %736 = math.exp %735 : vector<8x64xf32>
    %cst_210 = arith.constant 1.000000e+00 : f32
    %737 = vector.broadcast %cst_210 : f32 to vector<8x64xf32>
    %738 = arith.addf %737, %736 : vector<8x64xf32>
    %739 = arith.divf %737, %738 : vector<8x64xf32>
    %740 = arith.mulf %731, %712 : vector<8x64xf32>
    %741 = arith.mulf %725, %733 : vector<8x64xf32>
    %742 = arith.addf %740, %741 : vector<8x64xf32>
    %743 = math.tanh %742 : vector<8x64xf32>
    %744 = arith.mulf %739, %743 : vector<8x64xf32>
    %c56_211 = arith.constant 56 : index
    %c0_212 = arith.constant 0 : index
    %745 = vector.load %arg19[%c56_211, %c0_212] : memref<64x128xf32, #tpu.memory_space<vmem>>, vector<8x64xf32>
    tpu.vector_store %arg19[%c56_211, %c0_212], %744 {strides = array<i32>} : memref<64x128xf32, #tpu.memory_space<vmem>>, vector<8x64xf32>,
    %c0_213 = arith.constant 0 : index
    %c64_214 = arith.constant 64 : index
    %746 = vector.load %arg19[%c0_213, %c64_214] : memref<64x128xf32, #tpu.memory_space<vmem>>, vector<8x64xf32>
    tpu.vector_store %arg19[%c0_213, %c64_214], %744 {strides = array<i32>} : memref<64x128xf32, #tpu.memory_space<vmem>>, vector<8x64xf32>,
    %c0_215 = arith.constant 0 : index
    %c0_216 = arith.constant 0 : index
    %747 = vector.load %arg19[%c0_215, %c0_216] : memref<64x128xf32, #tpu.memory_space<vmem>>, vector<64x128xf32>
    %c0_217 = arith.constant 0 : index
    %c0_218 = arith.constant 0 : index
    %748 = vector.load %arg10[%c0_217, %c0_218] : memref<128x160xf32, #tpu.memory_space<vmem>>, vector<128x160xf32>
    %cst_219 = arith.constant dense<0.000000e+00> : vector<64x160xf32>
    %749 = tpu.matmul %747, %748, %cst_219 {dimension_numbers = #tpu.dot_dimension_numbers<[1], [0], [0], [1], [0, 0, 1, 1], [], []>} : vector<64x128xf32>, vector<128x160xf32>, vector<64x160xf32> -> vector<64x160xf32>
    %c0_220 = arith.constant 0 : index
    %c0_221 = arith.constant 0 : index
    %750 = vector.load %arg11[%c0_220, %c0_221] : memref<1x160xf32, #tpu.memory_space<vmem>>, vector<1x160xf32>
    %751 = vector.broadcast %750 : vector<1x160xf32> to vector<64x160xf32>
    %752 = arith.addf %749, %751 : vector<64x160xf32>
    %cst_222 = arith.constant 0.000000e+00 : f32
    %753 = vector.broadcast %cst_222 : f32 to vector<64x160xf32>
    %754 = arith.maximumf %752, %753 : vector<64x160xf32>
    %c0_223 = arith.constant 0 : index
    %c0_224 = arith.constant 0 : index
    %755 = vector.load %arg12[%c0_223, %c0_224] : memref<160x256xf32, #tpu.memory_space<vmem>>, vector<160x256xf32>
    %cst_225 = arith.constant dense<0.000000e+00> : vector<64x256xf32>
    %756 = tpu.matmul %754, %755, %cst_225 {dimension_numbers = #tpu.dot_dimension_numbers<[1], [0], [0], [1], [0, 0, 1, 1], [], []>} : vector<64x160xf32>, vector<160x256xf32>, vector<64x256xf32> -> vector<64x256xf32>
    %c0_226 = arith.constant 0 : index
    %c0_227 = arith.constant 0 : index
    %757 = vector.load %arg13[%c0_226, %c0_227] : memref<1x256xf32, #tpu.memory_space<vmem>>, vector<1x256xf32>
    %758 = vector.broadcast %757 : vector<1x256xf32> to vector<64x256xf32>
    %759 = arith.addf %756, %758 : vector<64x256xf32>
    %760 = vector.extract_strided_slice %759 {offsets = [0, 0], sizes = [64, 32], strides = [1, 1]} : vector<64x256xf32> to vector<64x32xf32>
    %761 = vector.extract_strided_slice %759 {offsets = [0, 32], sizes = [64, 32], strides = [1, 1]} : vector<64x256xf32> to vector<64x32xf32>
    %762 = vector.extract_strided_slice %759 {offsets = [0, 64], sizes = [64, 32], strides = [1, 1]} : vector<64x256xf32> to vector<64x32xf32>
    %763 = vector.extract_strided_slice %759 {offsets = [0, 96], sizes = [64, 32], strides = [1, 1]} : vector<64x256xf32> to vector<64x32xf32>
    %764 = vector.extract_strided_slice %759 {offsets = [0, 128], sizes = [64, 64], strides = [1, 1]} : vector<64x256xf32> to vector<64x64xf32>
    %c0_228 = arith.constant 0 : index
    %c0_229 = arith.constant 0 : index
    %765 = vector.load %arg14[%c0_228, %c0_229] : memref<32x32xf32, #tpu.memory_space<vmem>>, vector<32x32xf32>
    %cst_230 = arith.constant dense<0.000000e+00> : vector<64x32xf32>
    %766 = tpu.matmul %760, %765, %cst_230 {dimension_numbers = #tpu.dot_dimension_numbers<[1], [0], [0], [1], [0, 0, 1, 1], [], []>} : vector<64x32xf32>, vector<32x32xf32>, vector<64x32xf32> -> vector<64x32xf32>
    %cst_231 = arith.constant dense<0.000000e+00> : vector<64x64xf32>
    %767 = tpu.matmul %766, %761, %cst_231 {dimension_numbers = #tpu.dot_dimension_numbers<[1], [1], [0], [0], [0, 0, 1, 0], [], []>} : vector<64x32xf32>, vector<64x32xf32>, vector<64x64xf32> -> vector<64x64xf32>
    %c0_232 = arith.constant 0 : index
    %c0_233 = arith.constant 0 : index
    %768 = vector.load %arg15[%c0_232, %c0_233] : memref<32x192xf32, #tpu.memory_space<vmem>>, vector<32x192xf32>
    %cst_234 = arith.constant dense<0.000000e+00> : vector<64x192xf32>
    %769 = tpu.matmul %762, %768, %cst_234 {dimension_numbers = #tpu.dot_dimension_numbers<[1], [0], [0], [1], [0, 0, 1, 1], [], []>} : vector<64x32xf32>, vector<32x192xf32>, vector<64x192xf32> -> vector<64x192xf32>
    %770 = vector.extract_strided_slice %769 {offsets = [0, 0], sizes = [64, 32], strides = [1, 1]} : vector<64x192xf32> to vector<64x32xf32>
    %cst_235 = arith.constant dense<0.000000e+00> : vector<64x64xf32>
    %771 = tpu.matmul %770, %763, %cst_235 {dimension_numbers = #tpu.dot_dimension_numbers<[1], [1], [0], [0], [0, 0, 1, 0], [], []>} : vector<64x32xf32>, vector<64x32xf32>, vector<64x64xf32> -> vector<64x64xf32>
    %772 = vector.extract_strided_slice %769 {offsets = [0, 32], sizes = [64, 32], strides = [1, 1]} : vector<64x192xf32> to vector<64x32xf32>
    %cst_236 = arith.constant dense<0.000000e+00> : vector<64x64xf32>
    %773 = tpu.matmul %772, %763, %cst_236 {dimension_numbers = #tpu.dot_dimension_numbers<[1], [1], [0], [0], [0, 0, 1, 0], [], []>} : vector<64x32xf32>, vector<64x32xf32>, vector<64x64xf32> -> vector<64x64xf32>
    %774 = vector.extract_strided_slice %769 {offsets = [0, 64], sizes = [64, 32], strides = [1, 1]} : vector<64x192xf32> to vector<64x32xf32>
    %cst_237 = arith.constant dense<0.000000e+00> : vector<64x64xf32>
    %775 = tpu.matmul %774, %763, %cst_237 {dimension_numbers = #tpu.dot_dimension_numbers<[1], [1], [0], [0], [0, 0, 1, 0], [], []>} : vector<64x32xf32>, vector<64x32xf32>, vector<64x64xf32> -> vector<64x64xf32>
    %776 = vector.extract_strided_slice %769 {offsets = [0, 96], sizes = [64, 32], strides = [1, 1]} : vector<64x192xf32> to vector<64x32xf32>
    %cst_238 = arith.constant dense<0.000000e+00> : vector<64x64xf32>
    %777 = tpu.matmul %776, %763, %cst_238 {dimension_numbers = #tpu.dot_dimension_numbers<[1], [1], [0], [0], [0, 0, 1, 0], [], []>} : vector<64x32xf32>, vector<64x32xf32>, vector<64x64xf32> -> vector<64x64xf32>
    %778 = vector.extract_strided_slice %769 {offsets = [0, 128], sizes = [64, 32], strides = [1, 1]} : vector<64x192xf32> to vector<64x32xf32>
    %cst_239 = arith.constant dense<0.000000e+00> : vector<64x64xf32>
    %779 = tpu.matmul %778, %763, %cst_239 {dimension_numbers = #tpu.dot_dimension_numbers<[1], [1], [0], [0], [0, 0, 1, 0], [], []>} : vector<64x32xf32>, vector<64x32xf32>, vector<64x64xf32> -> vector<64x64xf32>
    %780 = vector.extract_strided_slice %769 {offsets = [0, 160], sizes = [64, 32], strides = [1, 1]} : vector<64x192xf32> to vector<64x32xf32>
    %cst_240 = arith.constant dense<0.000000e+00> : vector<64x64xf32>
    %781 = tpu.matmul %780, %763, %cst_240 {dimension_numbers = #tpu.dot_dimension_numbers<[1], [1], [0], [0], [0, 0, 1, 0], [], []>} : vector<64x32xf32>, vector<64x32xf32>, vector<64x64xf32> -> vector<64x64xf32>
    %782 = tpu.concatenate %767, %771, %773, %775, %777, %779, %781, %764 in 1 : vector<64x64xf32>, vector<64x64xf32>, vector<64x64xf32>, vector<64x64xf32>, vector<64x64xf32>, vector<64x64xf32>, vector<64x64xf32>, vector<64x64xf32> -> vector<64x512xf32>
    %c0_241 = arith.constant 0 : index
    %c0_242 = arith.constant 0 : index
    %783 = vector.load %arg16[%c0_241, %c0_242] : memref<64x512xf32, #tpu.memory_space<vmem>>, vector<64x512xf32>
    tpu.vector_store %arg16[%c0_241, %c0_242], %782 {strides = array<i32>} : memref<64x512xf32, #tpu.memory_space<vmem>>, vector<64x512xf32>,
    return
  }
}

</mosaic_0001>

<llo_original>
// kernel: biaffine_parser_forward.1
$region0: #{biaffine_parser_forward.1}
  #allocation0 [shape = 'u32[]', space=smem, size = 0x4, offset = 0x4, fixed_abs, tag = 'smem constant byte address 0x4 - core index']
  #allocation1 [shape = 'u32[144,128]{1,0:T(1,128)}', space=vmem, size = 0x12000, scoped, tag = 'internal scratch']
  #allocation2 [shape = 'f32[64,128]{1,0:T(8,128)}', space=vmem, size = 0x8000, scoped, tag = 'scratch operand']
  #allocation3 [shape = 'f32[64,128]{1,0:T(8,128)}', space=vmem, size = 0x8000, scoped, tag = 'scratch operand']
  #allocation4 [shape = 'f32[64,128]{1,0:T(8,128)}', space=vmem, size = 0x8000, scoped, tag = 'scratch operand']
  %s0 = inlined_call_operand.vmem [shape: f32[64,64], index: 0, kind: input, shape index: {}]
  %s1 = inlined_call_operand.hbm [shape: f32[64,256], index: 1, kind: input, shape index: {}]
  %s2 = inlined_call_operand.hbm [shape: f32[64,256], index: 2, kind: input, shape index: {}]
  %s3 = inlined_call_operand.hbm [shape: f32[1,256], index: 3, kind: input, shape index: {}]
  %s4 = inlined_call_operand.hbm [shape: f32[128,256], index: 4, kind: input, shape index: {}]
  %s5 = inlined_call_operand.hbm [shape: f32[64,256], index: 5, kind: input, shape index: {}]
  %s6 = inlined_call_operand.hbm [shape: f32[1,256], index: 6, kind: input, shape index: {}]
  %s7 = inlined_call_operand.hbm [shape: f32[128,256], index: 7, kind: input, shape index: {}]
  %s8 = inlined_call_operand.hbm [shape: f32[64,256], index: 8, kind: input, shape index: {}]
  %s9 = inlined_call_operand.hbm [shape: f32[1,256], index: 9, kind: input, shape index: {}]
  %s10 = inlined_call_operand.vmem [shape: f32[128,160], index: 10, kind: input, shape index: {}]
  %s11 = inlined_call_operand.hbm [shape: f32[1,160], index: 11, kind: input, shape index: {}]
  %s12 = inlined_call_operand.hbm [shape: f32[160,256], index: 12, kind: input, shape index: {}]
  %s13 = inlined_call_operand.hbm [shape: f32[1,256], index: 13, kind: input, shape index: {}]
  %s14 = inlined_call_operand.hbm [shape: f32[32,32], index: 14, kind: input, shape index: {}]
  %s15 = inlined_call_operand.hbm [shape: f32[32,192], index: 15, kind: input, shape index: {}]
  %s16 = inlined_call_operand.vmem [shape: f32[64,512], index: 16, kind: output, shape index: {}]
  %s17 = sld [smem:[#allocation0]]
  $region130: #{biaffine_parser_forward.1} parent=0
    _
  %s19 = ssub.s32 1, %s17
  %s20 = scalar_select 0, %s19, %s17
  $region1: #{biaffine_parser_forward.1} parent=0
    #allocation5 [shape = 'u8[65536]{0}', space=vmem, size = 0x10000, scoped, tag = 'input window, operand 1, single buffered']
    #allocation6 [shape = 's32[1]{0}', space=sflag, size = 0x4, scoped, tag = 'scoped memory for biaffine_parser_forward.1']
    #allocation7 [shape = 'u8[65536]{0}', space=vmem, size = 0x10000, scoped, tag = 'input window, operand 2, single buffered']
    #allocation8 [shape = 's32[1]{0}', space=sflag, size = 0x4, scoped, tag = 'scoped memory for biaffine_parser_forward.1']
    #allocation9 [shape = 'u8[1024]{0}', space=vmem, size = 0x400, scoped, tag = 'input window, operand 3, single buffered']
    #allocation10 [shape = 'u8[131072]{0}', space=vmem, size = 0x20000, scoped, tag = 'input window, operand 4, single buffered']
    #allocation11 [shape = 's32[1]{0}', space=sflag, size = 0x4, scoped, tag = 'scoped memory for biaffine_parser_forward.1']
    #allocation12 [shape = 'u8[65536]{0}', space=vmem, size = 0x10000, scoped, tag = 'input window, operand 5, single buffered']
    #allocation13 [shape = 'u8[1024]{0}', space=vmem, size = 0x400, scoped, tag = 'input window, operand 6, single buffered']
    #allocation14 [shape = 's32[1]{0}', space=sflag, size = 0x4, scoped, tag = 'scoped memory for biaffine_parser_forward.1']
    #allocation15 [shape = 'u8[131072]{0}', space=vmem, size = 0x20000, scoped, tag = 'input window, operand 7, single buffered']
    #allocation16 [shape = 'u8[65536]{0}', space=vmem, size = 0x10000, scoped, tag = 'input window, operand 8, single buffered']
    #allocation17 [shape = 's32[1]{0}', space=sflag, size = 0x4, scoped, tag = 'scoped memory for biaffine_parser_forward.1']
    #allocation18 [shape = 'u8[1024]{0}', space=vmem, size = 0x400, scoped, tag = 'input window, operand 9, single buffered']
    #allocation19 [shape = 'u8[1024]{0}', space=vmem, size = 0x400, scoped, tag = 'input window, operand 11, single buffered']
    #allocation20 [shape = 's32[1]{0}', space=sflag, size = 0x4, scoped, tag = 'scoped memory for biaffine_parser_forward.1']
    #allocation21 [shape = 'u8[163840]{0}', space=vmem, size = 0x28000, scoped, tag = 'input window, operand 12, single buffered']
    #allocation22 [shape = 'u8[1024]{0}', space=vmem, size = 0x400, scoped, tag = 'input window, operand 13, single buffered']
    #allocation23 [shape = 's32[1]{0}', space=sflag, size = 0x4, scoped, tag = 'scoped memory for biaffine_parser_forward.1']
    #allocation24 [shape = 'u8[16384]{0}', space=vmem, size = 0x4000, scoped, tag = 'input window, operand 14, single buffered']
    #allocation25 [shape = 'u8[32768]{0}', space=vmem, size = 0x8000, scoped, tag = 'input window, operand 15, single buffered']
    #allocation26 [shape = 's32[1]{0}', space=sflag, size = 0x4, scoped, tag = 'scoped memory for biaffine_parser_forward.1']
    %21 = vsyncpa [#allocation6], 0
    %22 = vsyncpa [#allocation8], 0
    %23 = vsyncpa [#allocation11], 0
    %24 = vsyncpa [#allocation14], 0
    %25 = vsyncpa [#allocation17], 0
    %26 = vsyncpa [#allocation20], 0
    %27 = vsyncpa [#allocation23], 0
    %28 = vsyncpa [#allocation26], 0
    // Predicated region
    $region2: #{biaffine_parser_forward.1} parent=1 // pred_check
      _
    $region3: #{biaffine_parser_forward.1} parent=1 // pred_check_branch
      %30 = sbr.rel (0) target = $region5
    $region4: #{biaffine_parser_forward.1} parent=1 // pred_region
      _
    $region5: #{biaffine_parser_forward.1} parent=1 // pred_fallthru
      _
    // Predicated region
    $region6: #{biaffine_parser_forward.1} parent=1 // pred_check
      _
    $region7: #{biaffine_parser_forward.1} parent=1 // pred_check_branch
      %32 = sbr.rel (0) target = $region9
    $region8: #{biaffine_parser_forward.1} parent=1 // pred_region
      %s34 = ssub.s32 2048, 2048
      %35 = vsyncadd [#allocation6], %s34
      %s36 = sshll.u32 [#allocation5], 4
      %s37 = int_to_ptr.vmem [resolvable:$true] %s36
      %42 = dma.hbm_to_vmem [thread:$0]  %s1, 2048, %s37, [#allocation6], 256, 256, 16
    $region9: #{biaffine_parser_forward.1} parent=1 // pred_fallthru
      _
    // Predicated region
    $region10: #{biaffine_parser_forward.1} parent=1 // pred_check
      _
    $region11: #{biaffine_parser_forward.1} parent=1 // pred_check_branch
      %44 = sbr.rel (0) target = $region13
    $region12: #{biaffine_parser_forward.1} parent=1 // pred_region
      %s46 = ssub.s32 2048, 2048
      %47 = vsyncadd [#allocation8], %s46
      %s48 = sshll.u32 [#allocation7], 4
      %s49 = int_to_ptr.vmem [resolvable:$true] %s48
      %54 = dma.hbm_to_vmem [thread:$0]  %s2, 2048, %s49, [#allocation8], 256, 256, 16
    $region13: #{biaffine_parser_forward.1} parent=1 // pred_fallthru
      _
    // Predicated region
    $region14: #{biaffine_parser_forward.1} parent=1 // pred_check
      _
    $region15: #{biaffine_parser_forward.1} parent=1 // pred_check_branch
      %56 = sbr.rel (0) target = $region17
    $region16: #{biaffine_parser_forward.1} parent=1 // pred_region
      %s58 = ssub.s32 32, 32
      %59 = vsyncadd [#allocation8], %s58
      %s61 = sshll.u32 [#allocation9], 4
      %s62 = int_to_ptr.vmem [resolvable:$true] %s61
      %64 = dma.hbm_to_vmem [thread:$0]  %s3, 32, %s62, [#allocation8]
    $region17: #{biaffine_parser_forward.1} parent=1 // pred_fallthru
      _
    // Predicated region
    $region18: #{biaffine_parser_forward.1} parent=1 // pred_check
      _
    $region19: #{biaffine_parser_forward.1} parent=1 // pred_check_branch
      %66 = sbr.rel (0) target = $region21
    $region20: #{biaffine_parser_forward.1} parent=1 // pred_region
      %s68 = ssub.s32 4096, 4096
      %69 = vsyncadd [#allocation11], %s68
      %s70 = sshll.u32 [#allocation10], 4
      %s71 = int_to_ptr.vmem [resolvable:$true] %s70
      %76 = dma.hbm_to_vmem [thread:$0]  %s4, 4096, %s71, [#allocation11], 256, 256, 16
    $region21: #{biaffine_parser_forward.1} parent=1 // pred_fallthru
      _
    // Predicated region
    $region22: #{biaffine_parser_forward.1} parent=1 // pred_check
      _
    $region23: #{biaffine_parser_forward.1} parent=1 // pred_check_branch
      %78 = sbr.rel (0) target = $region25
    $region24: #{biaffine_parser_forward.1} parent=1 // pred_region
      %s80 = ssub.s32 2048, 2048
      %81 = vsyncadd [#allocation11], %s80
      %s82 = sshll.u32 [#allocation12], 4
      %s83 = int_to_ptr.vmem [resolvable:$true] %s82
      %88 = dma.hbm_to_vmem [thread:$0]  %s5, 2048, %s83, [#allocation11], 256, 256, 16
    $region25: #{biaffine_parser_forward.1} parent=1 // pred_fallthru
      _
    // Predicated region
    $region26: #{biaffine_parser_forward.1} parent=1 // pred_check
      _
    $region27: #{biaffine_parser_forward.1} parent=1 // pred_check_branch
      %90 = sbr.rel (0) target = $region29
    $region28: #{biaffine_parser_forward.1} parent=1 // pred_region
      %s92 = ssub.s32 32, 32
      %93 = vsyncadd [#allocation14], %s92
      %s95 = sshll.u32 [#allocation13], 4
      %s96 = int_to_ptr.vmem [resolvable:$true] %s95
      %98 = dma.hbm_to_vmem [thread:$0]  %s6, 32, %s96, [#allocation14]
    $region29: #{biaffine_parser_forward.1} parent=1 // pred_fallthru
      _
    // Predicated region
    $region30: #{biaffine_parser_forward.1} parent=1 // pred_check
      _
    $region31: #{biaffine_parser_forward.1} parent=1 // pred_check_branch
      %100 = sbr.rel (0) target = $region33
    $region32: #{biaffine_parser_forward.1} parent=1 // pred_region
      %s102 = ssub.s32 4096, 4096
      %103 = vsyncadd [#allocation14], %s102
      %s104 = sshll.u32 [#allocation15], 4
      %s105 = int_to_ptr.vmem [resolvable:$true] %s104
      %110 = dma.hbm_to_vmem [thread:$0]  %s7, 4096, %s105, [#allocation14], 256, 256, 16
    $region33: #{biaffine_parser_forward.1} parent=1 // pred_fallthru
      _
    // Predicated region
    $region34: #{biaffine_parser_forward.1} parent=1 // pred_check
      _
    $region35: #{biaffine_parser_forward.1} parent=1 // pred_check_branch
      %112 = sbr.rel (0) target = $region37
    $region36: #{biaffine_parser_forward.1} parent=1 // pred_region
      %s114 = ssub.s32 2048, 2048
      %115 = vsyncadd [#allocation17], %s114
      %s116 = sshll.u32 [#allocation16], 4
      %s117 = int_to_ptr.vmem [resolvable:$true] %s116
      %122 = dma.hbm_to_vmem [thread:$0]  %s8, 2048, %s117, [#allocation17], 256, 256, 16
    $region37: #{biaffine_parser_forward.1} parent=1 // pred_fallthru
      _
    // Predicated region
    $region38: #{biaffine_parser_forward.1} parent=1 // pred_check
      _
    $region39: #{biaffine_parser_forward.1} parent=1 // pred_check_branch
      %124 = sbr.rel (0) target = $region41
    $region40: #{biaffine_parser_forward.1} parent=1 // pred_region
      %s126 = ssub.s32 32, 32
      %127 = vsyncadd [#allocation17], %s126
      %s129 = sshll.u32 [#allocation18], 4
      %s130 = int_to_ptr.vmem [resolvable:$true] %s129
      %132 = dma.hbm_to_vmem [thread:$0]  %s9, 32, %s130, [#allocation17]
    $region41: #{biaffine_parser_forward.1} parent=1 // pred_fallthru
      _
    // Predicated region
    $region42: #{biaffine_parser_forward.1} parent=1 // pred_check
      _
    $region43: #{biaffine_parser_forward.1} parent=1 // pred_check_branch
      %134 = sbr.rel (0) target = $region45
    $region44: #{biaffine_parser_forward.1} parent=1 // pred_region
      _
    $region45: #{biaffine_parser_forward.1} parent=1 // pred_fallthru
      _
    // Predicated region
    $region46: #{biaffine_parser_forward.1} parent=1 // pred_check
      _
    $region47: #{biaffine_parser_forward.1} parent=1 // pred_check_branch
      %136 = sbr.rel (0) target = $region49
    $region48: #{biaffine_parser_forward.1} parent=1 // pred_region
      %s138 = ssub.s32 32, 32
      %139 = vsyncadd [#allocation20], %s138
      %s141 = sshll.u32 [#allocation19], 4
      %s142 = int_to_ptr.vmem [resolvable:$true] %s141
      %144 = dma.hbm_to_vmem [thread:$0]  %s11, 32, %s142, [#allocation20]
    $region49: #{biaffine_parser_forward.1} parent=1 // pred_fallthru
      _
    // Predicated region
    $region50: #{biaffine_parser_forward.1} parent=1 // pred_check
      _
    $region51: #{biaffine_parser_forward.1} parent=1 // pred_check_branch
      %146 = sbr.rel (0) target = $region53
    $region52: #{biaffine_parser_forward.1} parent=1 // pred_region
      %s148 = ssub.s32 5120, 5120
      %149 = vsyncadd [#allocation20], %s148
      %s150 = sshll.u32 [#allocation21], 4
      %s151 = int_to_ptr.vmem [resolvable:$true] %s150
      %156 = dma.hbm_to_vmem [thread:$0]  %s12, 5120, %s151, [#allocation20], 256, 256, 16
    $region53: #{biaffine_parser_forward.1} parent=1 // pred_fallthru
      _
    // Predicated region
    $region54: #{biaffine_parser_forward.1} parent=1 // pred_check
      _
    $region55: #{biaffine_parser_forward.1} parent=1 // pred_check_branch
      %158 = sbr.rel (0) target = $region57
    $region56: #{biaffine_parser_forward.1} parent=1 // pred_region
      %s160 = ssub.s32 32, 32
      %161 = vsyncadd [#allocation23], %s160
      %s163 = sshll.u32 [#allocation22], 4
      %s164 = int_to_ptr.vmem [resolvable:$true] %s163
      %166 = dma.hbm_to_vmem [thread:$0]  %s13, 32, %s164, [#allocation23]
    $region57: #{biaffine_parser_forward.1} parent=1 // pred_fallthru
      _
    // Predicated region
    $region58: #{biaffine_parser_forward.1} parent=1 // pred_check
      _
    $region59: #{biaffine_parser_forward.1} parent=1 // pred_check_branch
      %168 = sbr.rel (0) target = $region61
    $region60: #{biaffine_parser_forward.1} parent=1 // pred_region
      %s170 = ssub.s32 512, 512
      %171 = vsyncadd [#allocation23], %s170
      %s172 = sshll.u32 [#allocation24], 4
      %s173 = int_to_ptr.vmem [resolvable:$true] %s172
      %178 = dma.hbm_to_vmem [thread:$0]  %s14, 512, %s173, [#allocation23], 128, 128, 8
    $region61: #{biaffine_parser_forward.1} parent=1 // pred_fallthru
      _
    // Predicated region
    $region62: #{biaffine_parser_forward.1} parent=1 // pred_check
      _
    $region63: #{biaffine_parser_forward.1} parent=1 // pred_check_branch
      %180 = sbr.rel (0) target = $region65
    $region64: #{biaffine_parser_forward.1} parent=1 // pred_region
      %s182 = ssub.s32 1024, 1024
      %183 = vsyncadd [#allocation26], %s182
      %s184 = sshll.u32 [#allocation25], 4
      %s185 = int_to_ptr.vmem [resolvable:$true] %s184
      %190 = dma.hbm_to_vmem [thread:$0]  %s15, 1024, %s185, [#allocation26], 256, 256, 16
    $region65: #{biaffine_parser_forward.1} parent=1 // pred_fallthru
      _
    // Predicated region
    $region66: #{biaffine_parser_forward.1} parent=1 // pred_check
      _
    $region67: #{biaffine_parser_forward.1} parent=1 // pred_check_branch
      %192 = sbr.rel (0) target = $region69
    $region68: #{biaffine_parser_forward.1} parent=1 // pred_region
      %193 = dma.done [#allocation6], 2048
    $region69: #{biaffine_parser_forward.1} parent=1 // pred_fallthru
      _
    // Predicated region
    $region70: #{biaffine_parser_forward.1} parent=1 // pred_check
      _
    $region71: #{biaffine_parser_forward.1} parent=1 // pred_check_branch
      %195 = sbr.rel (0) target = $region73
    $region72: #{biaffine_parser_forward.1} parent=1 // pred_region
      %196 = dma.done [#allocation8], 2048
    $region73: #{biaffine_parser_forward.1} parent=1 // pred_fallthru
      _
    // Predicated region
    $region74: #{biaffine_parser_forward.1} parent=1 // pred_check
      _
    $region75: #{biaffine_parser_forward.1} parent=1 // pred_check_branch
      %198 = sbr.rel (0) target = $region77
    $region76: #{biaffine_parser_forward.1} parent=1 // pred_region
      %199 = dma.done [#allocation8], 32
    $region77: #{biaffine_parser_forward.1} parent=1 // pred_fallthru
      _
    // Predicated region
    $region78: #{biaffine_parser_forward.1} parent=1 // pred_check
      _
    $region79: #{biaffine_parser_forward.1} parent=1 // pred_check_branch
      %201 = sbr.rel (0) target = $region81
    $region80: #{biaffine_parser_forward.1} parent=1 // pred_region
      %202 = dma.done [#allocation11], 4096
    $region81: #{biaffine_parser_forward.1} parent=1 // pred_fallthru
      _
    // Predicated region
    $region82: #{biaffine_parser_forward.1} parent=1 // pred_check
      _
    $region83: #{biaffine_parser_forward.1} parent=1 // pred_check_branch
      %204 = sbr.rel (0) target = $region85
    $region84: #{biaffine_parser_forward.1} parent=1 // pred_region
      %205 = dma.done [#allocation11], 2048
    $region85: #{biaffine_parser_forward.1} parent=1 // pred_fallthru
      _
    // Predicated region
    $region86: #{biaffine_parser_forward.1} parent=1 // pred_check
      _
    $region87: #{biaffine_parser_forward.1} parent=1 // pred_check_branch
      %207 = sbr.rel (0) target = $region89
    $region88: #{biaffine_parser_forward.1} parent=1 // pred_region
      %208 = dma.done [#allocation14], 32
    $region89: #{biaffine_parser_forward.1} parent=1 // pred_fallthru
      _
    // Predicated region
    $region90: #{biaffine_parser_forward.1} parent=1 // pred_check
      _
    $region91: #{biaffine_parser_forward.1} parent=1 // pred_check_branch
      %210 = sbr.rel (0) target = $region93
    $region92: #{biaffine_parser_forward.1} parent=1 // pred_region
      %211 = dma.done [#allocation14], 4096
    $region93: #{biaffine_parser_forward.1} parent=1 // pred_fallthru
      _
    // Predicated region
    $region94: #{biaffine_parser_forward.1} parent=1 // pred_check
      _
    $region95: #{biaffine_parser_forward.1} parent=1 // pred_check_branch
      %213 = sbr.rel (0) target = $region97
    $region96: #{biaffine_parser_forward.1} parent=1 // pred_region
      %214 = dma.done [#allocation17], 2048
    $region97: #{biaffine_parser_forward.1} parent=1 // pred_fallthru
      _
    // Predicated region
    $region98: #{biaffine_parser_forward.1} parent=1 // pred_check
      _
    $region99: #{biaffine_parser_forward.1} parent=1 // pred_check_branch
      %216 = sbr.rel (0) target = $region101
    $region100: #{biaffine_parser_forward.1} parent=1 // pred_region
      %217 = dma.done [#allocation17], 32
    $region101: #{biaffine_parser_forward.1} parent=1 // pred_fallthru
      _
    // Predicated region
    $region102: #{biaffine_parser_forward.1} parent=1 // pred_check
      _
    $region103: #{biaffine_parser_forward.1} parent=1 // pred_check_branch
      %219 = sbr.rel (0) target = $region105
    $region104: #{biaffine_parser_forward.1} parent=1 // pred_region
      %220 = dma.done [#allocation20], 32
    $region105: #{biaffine_parser_forward.1} parent=1 // pred_fallthru
      _
    // Predicated region
    $region106: #{biaffine_parser_forward.1} parent=1 // pred_check
      _
    $region107: #{biaffine_parser_forward.1} parent=1 // pred_check_branch
      %222 = sbr.rel (0) target = $region109
    $region108: #{biaffine_parser_forward.1} parent=1 // pred_region
      %223 = dma.done [#allocation20], 5120
    $region109: #{biaffine_parser_forward.1} parent=1 // pred_fallthru
      _
    // Predicated region
    $region110: #{biaffine_parser_forward.1} parent=1 // pred_check
      _
    $region111: #{biaffine_parser_forward.1} parent=1 // pred_check_branch
      %225 = sbr.rel (0) target = $region113
    $region112: #{biaffine_parser_forward.1} parent=1 // pred_region
      %226 = dma.done [#allocation23], 32
    $region113: #{biaffine_parser_forward.1} parent=1 // pred_fallthru
      _
    // Predicated region
    $region114: #{biaffine_parser_forward.1} parent=1 // pred_check
      _
    $region115: #{biaffine_parser_forward.1} parent=1 // pred_check_branch
      %228 = sbr.rel (0) target = $region117
    $region116: #{biaffine_parser_forward.1} parent=1 // pred_region
      %229 = dma.done [#allocation23], 512
    $region117: #{biaffine_parser_forward.1} parent=1 // pred_fallthru
      _
    // Predicated region
    $region118: #{biaffine_parser_forward.1} parent=1 // pred_check
      _
    $region119: #{biaffine_parser_forward.1} parent=1 // pred_check_branch
      %231 = sbr.rel (0) target = $region121
    $region120: #{biaffine_parser_forward.1} parent=1 // pred_region
      %232 = dma.done [#allocation26], 1024
    $region121: #{biaffine_parser_forward.1} parent=1 // pred_fallthru
      _
    %v233 = vld [vmem:[%s0] sm:$0xff]
    %v234 = vld [vmem:[%s0 + $0x8] sm:$0xff]
    %v235 = vld [vmem:[%s0 + $0x10] sm:$0xff]
    %v236 = vld [vmem:[%s0 + $0x18] sm:$0xff]
    %v237 = vld [vmem:[%s0 + $0x20] sm:$0xff]
    %v238 = vld [vmem:[%s0 + $0x28] sm:$0xff]
    %v239 = vld [vmem:[%s0 + $0x30] sm:$0xff]
    %v240 = vld [vmem:[%s0 + $0x38] sm:$0xff]
    %v241 = vld [vmem:[#allocation5] sm:$0xff]
    %v242 = vld [vmem:[#allocation5 + $0x8] sm:$0xff]
    %v243 = vld [vmem:[#allocation5 + $0x10] sm:$0xff]
    %v244 = vld [vmem:[#allocation5 + $0x18] sm:$0xff]
    %v245 = vld [vmem:[#allocation5 + $0x20] sm:$0xff]
    %v246 = vld [vmem:[#allocation5 + $0x28] sm:$0xff]
    %v247 = vld [vmem:[#allocation5 + $0x30] sm:$0xff]
    %v248 = vld [vmem:[#allocation5 + $0x38] sm:$0xff]
    %v249 = vld [vmem:[#allocation5 + $0x40] sm:$0xff]
    %v250 = vld [vmem:[#allocation5 + $0x48] sm:$0xff]
    %v251 = vld [vmem:[#allocation5 + $0x50] sm:$0xff]
    %v252 = vld [vmem:[#allocation5 + $0x58] sm:$0xff]
    %v253 = vld [vmem:[#allocation5 + $0x60] sm:$0xff]
    %v254 = vld [vmem:[#allocation5 + $0x68] sm:$0xff]
    %v255 = vld [vmem:[#allocation5 + $0x70] sm:$0xff]
    %v256 = vld [vmem:[#allocation5 + $0x78] sm:$0xff]
    %v257 = vld [vmem:[#allocation9] sm:$0x3]
    %v259 = vlaneseq
    %v260 = vshrl.u32 %v259, 7
    %v261 = vsub.s32 0, %v260
    %v262 = vrot.slane %v257, %v261
    %v263 = vlaneseq
    %v264 = vshrl.u32 %v263, 7
    %v265 = vsub.s32 1, %v264
    %v266 = vrot.slane %v257, %v265
    %vm269 = vcmask 523264
    %v271 = vsel %vm269, %v233, 0
    %v274 = vsel %vm269, %v234, 0
    %v277 = vsel %vm269, %v235, 0
    %v280 = vsel %vm269, %v236, 0
    %v283 = vsel %vm269, %v237, 0
    %v286 = vsel %vm269, %v238, 0
    %v289 = vsel %vm269, %v239, 0
    %v292 = vsel %vm269, %v240, 0
    %294 = vmatprep.subr.mxu0 %v242
    %295 = vmatpush1.msra.mxu0 %v241
    %296 = vmatprep.subr.mxu0 %v244
    %297 = vmatpush1.msra.mxu0 %v243
    %298 = vmatprep.subr.mxu0 %v246
    %299 = vmatpush1.msra.mxu0 %v245
    %300 = vmatprep.subr.mxu0 %v248
    %301 = vmatpush1.msra.mxu0 %v247
    %302 = vmatprep.subr.mxu0 %v250
    %303 = vmatpush1.msra.mxu0 %v249
    %304 = vmatprep.subr.mxu0 %v252
    %305 = vmatpush1.msra.mxu0 %v251
    %306 = vmatprep.subr.mxu0 %v254
    %307 = vmatpush1.msra.mxu0 %v253
    %308 = vmatprep.subr.mxu0 %v256
    %309 = vmatpush1.msra.mxu0 %v255
    %310 = vmatprep.subr.mxu0 0.0
    %311 = vmatpush1.msra.mxu0 0.0
    %312 = vmatprep.subr.mxu0 0.0
    %313 = vmatpush1.msra.mxu0 0.0
    %314 = vmatprep.subr.mxu0 0.0
    %315 = vmatpush1.msra.mxu0 0.0
    %316 = vmatprep.subr.mxu0 0.0
    %317 = vmatpush1.msra.mxu0 0.0
    %318 = vmatprep.subr.mxu0 0.0
    %319 = vmatpush1.msra.mxu0 0.0
    %320 = vmatprep.subr.mxu0 0.0
    %321 = vmatpush1.msra.mxu0 0.0
    %322 = vmatprep.subr.mxu0 0.0
    %323 = vmatpush1.msra.mxu0 0.0
    %324 = vmatprep.subr.mxu0 0.0
    %325 = vmatpush1.msra.mxu0 0.0
    %326 = vmatprep.subr.mxu0 0.0
    %327 = vmatpush1.msra.mxu0 0.0
    %328 = vmatprep.subr.mxu0 0.0
    %329 = vmatpush1.msra.mxu0 0.0
    %330 = vmatprep.subr.mxu0 0.0
    %331 = vmatpush1.msra.mxu0 0.0
    %332 = vmatprep.subr.mxu0 0.0
    %333 = vmatpush1.msra.mxu0 0.0
    %334 = vmatprep.subr.mxu0 0.0
    %335 = vmatpush1.msra.mxu0 0.0
    %336 = vmatprep.subr.mxu0 0.0
    %337 = vmatpush1.msra.mxu0 0.0
    %338 = vmatprep.subr.mxu0 0.0
    %339 = vmatpush1.msra.mxu0 0.0
    %340 = vmatprep.subr.mxu0 0.0
    %341 = vmatpush1.msra.mxu0 0.0
    %342 = vmatprep.subr.mxu0 0.0
    %343 = vmatpush1.msra.mxu0 0.0
    %344 = vmatprep.subr.mxu0 0.0
    %345 = vmatpush1.msra.mxu0 0.0
    %346 = vmatprep.subr.mxu0 0.0
    %347 = vmatpush1.msra.mxu0 0.0
    %348 = vmatprep.subr.mxu0 0.0
    %349 = vmatpush1.msra.mxu0 0.0
    %350 = vmatprep.subr.mxu0 0.0
    %351 = vmatpush1.msra.mxu0 0.0
    %352 = vmatprep.subr.mxu0 0.0
    %353 = vmatpush1.msra.mxu0 0.0
    %354 = vmatprep.subr.mxu0 0.0
    %355 = vmatpush1.msra.mxu0 0.0
    %356 = vmatprep.subr.mxu0 0.0
    %357 = vmatpush1.msra.mxu0 0.0
    %358 = vmatprep.mubr.f32.mxu0 0.0
    %359 = vmatmul.mubr.f32.gmra.mrb[0].mxu0 %v271
    %v360 = vpop.f32.mrb[0].mxu0
    %v361 = vadd.f32 %v262, %v360
    %v362 = vpop.f32.mrb[0].mxu0
    %v363 = vadd.f32 %v266, %v362
    %364 = vmatprep.mubr.f32.mxu0 0.0
    %365 = vmatmul.mubr.f32.gmra.mrb[0].mxu0 %v274
    %v366 = vpop.f32.mrb[0].mxu0
    %v367 = vadd.f32 %v262, %v366
    %v368 = vpop.f32.mrb[0].mxu0
    %v369 = vadd.f32 %v266, %v368
    %370 = vmatprep.mubr.f32.mxu0 0.0
    %371 = vmatmul.mubr.f32.gmra.mrb[0].mxu0 %v277
    %v372 = vpop.f32.mrb[0].mxu0
    %v373 = vadd.f32 %v262, %v372
    %v374 = vpop.f32.mrb[0].mxu0
    %v375 = vadd.f32 %v266, %v374
    %376 = vmatprep.mubr.f32.mxu0 0.0
    %377 = vmatmul.mubr.f32.gmra.mrb[0].mxu0 %v280
    %v378 = vpop.f32.mrb[0].mxu0
    %v379 = vadd.f32 %v262, %v378
    %v380 = vpop.f32.mrb[0].mxu0
    %v381 = vadd.f32 %v266, %v380
    %382 = vmatprep.mubr.f32.mxu0 0.0
    %383 = vmatmul.mubr.f32.gmra.mrb[0].mxu0 %v283
    %v384 = vpop.f32.mrb[0].mxu0
    %v385 = vadd.f32 %v262, %v384
    %v386 = vpop.f32.mrb[0].mxu0
    %v387 = vadd.f32 %v266, %v386
    %388 = vmatprep.mubr.f32.mxu0 0.0
    %389 = vmatmul.mubr.f32.gmra.mrb[0].mxu0 %v286
    %v390 = vpop.f32.mrb[0].mxu0
    %v391 = vadd.f32 %v262, %v390
    %v392 = vpop.f32.mrb[0].mxu0
    %v393 = vadd.f32 %v266, %v392
    %394 = vmatprep.mubr.f32.mxu0 0.0
    %395 = vmatmul.mubr.f32.gmra.mrb[0].mxu0 %v289
    %v396 = vpop.f32.mrb[0].mxu0
    %v397 = vadd.f32 %v262, %v396
    %v398 = vpop.f32.mrb[0].mxu0
    %v399 = vadd.f32 %v266, %v398
    %400 = vmatprep.mubr.f32.mxu0 0.0
    %401 = vmatmul.mubr.f32.gmra.mrb[0].mxu0 %v292
    %v402 = vpop.f32.mrb[0].mxu0
    %v403 = vadd.f32 %v262, %v402
    %v404 = vpop.f32.mrb[0].mxu0
    %v405 = vadd.f32 %v266, %v404
    %406 = vdwg.mxu0
    %v407 = vld [vmem:[#allocation7] sm:$0xff]
    %v408 = vld [vmem:[#allocation7 + $0x8] sm:$0xff]
    %v409 = vld [vmem:[#allocation7 + $0x10] sm:$0xff]
    %v410 = vld [vmem:[#allocation7 + $0x18] sm:$0xff]
    %v411 = vld [vmem:[#allocation7 + $0x20] sm:$0xff]
    %v412 = vld [vmem:[#allocation7 + $0x28] sm:$0xff]
    %v413 = vld [vmem:[#allocation7 + $0x30] sm:$0xff]
    %v414 = vld [vmem:[#allocation7 + $0x38] sm:$0xff]
    %v415 = vld [vmem:[#allocation7 + $0x40] sm:$0xff]
    %v416 = vld [vmem:[#allocation7 + $0x48] sm:$0xff]
    %v417 = vld [vmem:[#allocation7 + $0x50] sm:$0xff]
    %v418 = vld [vmem:[#allocation7 + $0x58] sm:$0xff]
    %v419 = vld [vmem:[#allocation7 + $0x60] sm:$0xff]
    %v420 = vld [vmem:[#allocation7 + $0x68] sm:$0xff]
    %v421 = vld [vmem:[#allocation7 + $0x70] sm:$0xff]
    %v422 = vld [vmem:[#allocation7 + $0x78] sm:$0xff]
    %v424 = vsel %vm269, 0.0, 0
    %426 = vmatprep.subr.mxu0 %v408
    %427 = vmatpush1.msra.mxu0 %v407
    %428 = vmatprep.subr.mxu0 %v410
    %429 = vmatpush1.msra.mxu0 %v409
    %430 = vmatprep.subr.mxu0 %v412
    %431 = vmatpush1.msra.mxu0 %v411
    %432 = vmatprep.subr.mxu0 %v414
    %433 = vmatpush1.msra.mxu0 %v413
    %434 = vmatprep.subr.mxu0 %v416
    %435 = vmatpush1.msra.mxu0 %v415
    %436 = vmatprep.subr.mxu0 %v418
    %437 = vmatpush1.msra.mxu0 %v417
    %438 = vmatprep.subr.mxu0 %v420
    %439 = vmatpush1.msra.mxu0 %v419
    %440 = vmatprep.subr.mxu0 %v422
    %441 = vmatpush1.msra.mxu0 %v421
    %442 = vmatprep.subr.mxu0 0.0
    %443 = vmatpush1.msra.mxu0 0.0
    %444 = vmatprep.subr.mxu0 0.0
    %445 = vmatpush1.msra.mxu0 0.0
    %446 = vmatprep.subr.mxu0 0.0
    %447 = vmatpush1.msra.mxu0 0.0
    %448 = vmatprep.subr.mxu0 0.0
    %449 = vmatpush1.msra.mxu0 0.0
    %450 = vmatprep.subr.mxu0 0.0
    %451 = vmatpush1.msra.mxu0 0.0
    %452 = vmatprep.subr.mxu0 0.0
    %453 = vmatpush1.msra.mxu0 0.0
    %454 = vmatprep.subr.mxu0 0.0
    %455 = vmatpush1.msra.mxu0 0.0
    %456 = vmatprep.subr.mxu0 0.0
    %457 = vmatpush1.msra.mxu0 0.0
    %458 = vmatprep.subr.mxu0 0.0
    %459 = vmatpush1.msra.mxu0 0.0
    %460 = vmatprep.subr.mxu0 0.0
    %461 = vmatpush1.msra.mxu0 0.0
    %462 = vmatprep.subr.mxu0 0.0
    %463 = vmatpush1.msra.mxu0 0.0
    %464 = vmatprep.subr.mxu0 0.0
    %465 = vmatpush1.msra.mxu0 0.0
    %466 = vmatprep.subr.mxu0 0.0
    %467 = vmatpush1.msra.mxu0 0.0
    %468 = vmatprep.subr.mxu0 0.0
    %469 = vmatpush1.msra.mxu0 0.0
    %470 = vmatprep.subr.mxu0 0.0
    %471 = vmatpush1.msra.mxu0 0.0
    %472 = vmatprep.subr.mxu0 0.0
    %473 = vmatpush1.msra.mxu0 0.0
    %474 = vmatprep.subr.mxu0 0.0
    %475 = vmatpush1.msra.mxu0 0.0
    %476 = vmatprep.subr.mxu0 0.0
    %477 = vmatpush1.msra.mxu0 0.0
    %478 = vmatprep.subr.mxu0 0.0
    %479 = vmatpush1.msra.mxu0 0.0
    %480 = vmatprep.subr.mxu0 0.0
    %481 = vmatpush1.msra.mxu0 0.0
    %482 = vmatprep.subr.mxu0 0.0
    %483 = vmatpush1.msra.mxu0 0.0
    %484 = vmatprep.subr.mxu0 0.0
    %485 = vmatpush1.msra.mxu0 0.0
    %486 = vmatprep.subr.mxu0 0.0
    %487 = vmatpush1.msra.mxu0 0.0
    %488 = vmatprep.subr.mxu0 0.0
    %489 = vmatpush1.msra.mxu0 0.0
    %490 = vmatprep.mubr.f32.mxu0 0.0
    %491 = vmatmul.mubr.f32.gmra.mrb[0].mxu0 %v424
    %v492 = vpop.f32.mrb[0].mxu0
    %v493 = vadd.f32 0.0, %v492
    %v494 = vpop.f32.mrb[0].mxu0
    %v495 = vadd.f32 0.0, %v494
    %496 = vdwg.mxu0
    %v497 = vadd.f32 %v361, %v493
    %v498 = vadd.f32 %v363, %v495
    %v499 = vxor.u32 %v497, 2147483648
    %v500 = vmul.f32 %v499, 1.442695
    %v501 = vpow.pop %v500
    %v502 = vadd.f32 %v501, 1.0
    %v503 = vrcp.pop %v502
    %v504 = vmul.f32 1.0, %v503
    %v505 = vtanh.pop %v498
    %v506 = vxor.u32 %v498, 2147483648
    %v507 = vmul.f32 %v506, 1.442695
    %v508 = vpow.pop %v507
    %v509 = vadd.f32 %v508, 1.0
    %v510 = vrcp.pop %v509
    %v511 = vmul.f32 1.0, %v510
    %v512 = vmul.f32 %v504, 0.0
    %v513 = vmul.f32 %v504, %v505
    %515 = vrot.lane.b32.xlu0 %v513, 64
    %v516 = vpop.permute.xlu0 %515
    %v518 = vadd.f32 %v512, %v516
    %v519 = vtanh.pop %v518
    %v520 = vmul.f32 %v511, %v519
    %522 = vrot.lane.b32.xlu0 %v520, 64
    %v523 = vpop.permute.xlu0 %522
    %525 = vst.msk [vmem:[#allocation2] sm:$0xff] %vm269, %v523
    %vm526 = vcmask 1048064
    %527 = vst.msk [vmem:[#allocation2 + $0x38] sm:$0xff] %vm526, %v520
    %v528 = vsel %vm269, %v523, 0
    %530 = vmatprep.subr.mxu0 %v408
    %531 = vmatpush1.msra.mxu0 %v407
    %532 = vmatprep.subr.mxu0 %v410
    %533 = vmatpush1.msra.mxu0 %v409
    %534 = vmatprep.subr.mxu0 %v412
    %535 = vmatpush1.msra.mxu0 %v411
    %536 = vmatprep.subr.mxu0 %v414
    %537 = vmatpush1.msra.mxu0 %v413
    %538 = vmatprep.subr.mxu0 %v416
    %539 = vmatpush1.msra.mxu0 %v415
    %540 = vmatprep.subr.mxu0 %v418
    %541 = vmatpush1.msra.mxu0 %v417
    %542 = vmatprep.subr.mxu0 %v420
    %543 = vmatpush1.msra.mxu0 %v419
    %544 = vmatprep.subr.mxu0 %v422
    %545 = vmatpush1.msra.mxu0 %v421
    %546 = vmatprep.subr.mxu0 0.0
    %547 = vmatpush1.msra.mxu0 0.0
    %548 = vmatprep.subr.mxu0 0.0
    %549 = vmatpush1.msra.mxu0 0.0
    %550 = vmatprep.subr.mxu0 0.0
    %551 = vmatpush1.msra.mxu0 0.0
    %552 = vmatprep.subr.mxu0 0.0
    %553 = vmatpush1.msra.mxu0 0.0
    %554 = vmatprep.subr.mxu0 0.0
    %555 = vmatpush1.msra.mxu0 0.0
    %556 = vmatprep.subr.mxu0 0.0
    %557 = vmatpush1.msra.mxu0 0.0
    %558 = vmatprep.subr.mxu0 0.0
    %559 = vmatpush1.msra.mxu0 0.0
    %560 = vmatprep.subr.mxu0 0.0
    %561 = vmatpush1.msra.mxu0 0.0
    %562 = vmatprep.subr.mxu0 0.0
    %563 = vmatpush1.msra.mxu0 0.0
    %564 = vmatprep.subr.mxu0 0.0
    %565 = vmatpush1.msra.mxu0 0.0
    %566 = vmatprep.subr.mxu0 0.0
    %567 = vmatpush1.msra.mxu0 0.0
    %568 = vmatprep.subr.mxu0 0.0
    %569 = vmatpush1.msra.mxu0 0.0
    %570 = vmatprep.subr.mxu0 0.0
    %571 = vmatpush1.msra.mxu0 0.0
    %572 = vmatprep.subr.mxu0 0.0
    %573 = vmatpush1.msra.mxu0 0.0
    %574 = vmatprep.subr.mxu0 0.0
    %575 = vmatpush1.msra.mxu0 0.0
    %576 = vmatprep.subr.mxu0 0.0
    %577 = vmatpush1.msra.mxu0 0.0
    %578 = vmatprep.subr.mxu0 0.0
    %579 = vmatpush1.msra.mxu0 0.0
    %580 = vmatprep.subr.mxu0 0.0
    %581 = vmatpush1.msra.mxu0 0.0
    %582 = vmatprep.subr.mxu0 0.0
    %583 = vmatpush1.msra.mxu0 0.0
    %584 = vmatprep.subr.mxu0 0.0
    %585 = vmatpush1.msra.mxu0 0.0
    %586 = vmatprep.subr.mxu0 0.0
    %587 = vmatpush1.msra.mxu0 0.0
    %588 = vmatprep.subr.mxu0 0.0
    %589 = vmatpush1.msra.mxu0 0.0
    %590 = vmatprep.subr.mxu0 0.0
    %591 = vmatpush1.msra.mxu0 0.0
    %592 = vmatprep.subr.mxu0 0.0
    %593 = vmatpush1.msra.mxu0 0.0
    %594 = vmatprep.mubr.f32.mxu0 0.0
    %595 = vmatmul.mubr.f32.gmra.mrb[0].mxu0 %v528
    %v596 = vpop.f32.mrb[0].mxu0
    %v597 = vadd.f32 0.0, %v596
    %v598 = vpop.f32.mrb[0].mxu0
    %v599 = vadd.f32 0.0, %v598
    %600 = vdwg.mxu0
    %v601 = vadd.f32 %v367, %v597
    %v602 = vadd.f32 %v369, %v599
    %v603 = vxor.u32 %v601, 2147483648
    %v604 = vmul.f32 %v603, 1.442695
    %v605 = vpow.pop %v604
    %v606 = vadd.f32 %v605, 1.0
    %v607 = vrcp.pop %v606
    %v608 = vmul.f32 1.0, %v607
    %v609 = vtanh.pop %v602
    %v610 = vxor.u32 %v602, 2147483648
    %v611 = vmul.f32 %v610, 1.442695
    %v612 = vpow.pop %v611
    %v613 = vadd.f32 %v612, 1.0
    %v614 = vrcp.pop %v613
    %v615 = vmul.f32 1.0, %v614
    %v616 = vmul.f32 %v608, %v518
    %v617 = vmul.f32 %v608, %v609
    %619 = vrot.lane.b32.xlu0 %v617, 64
    %v620 = vpop.permute.xlu0 %619
    %v622 = vadd.f32 %v616, %v620
    %v623 = vtanh.pop %v622
    %v624 = vmul.f32 %v615, %v623
    %626 = vrot.lane.b32.xlu0 %v624, 64
    %v627 = vpop.permute.xlu0 %626
    %629 = vst.msk [vmem:[#allocation2 + $0x8] sm:$0xff] %vm269, %v627
    %630 = vst.msk [vmem:[#allocation2 + $0x30] sm:$0xff] %vm526, %v624
    %v631 = vsel %vm269, %v627, 0
    %633 = vmatprep.subr.mxu0 %v408
    %634 = vmatpush1.msra.mxu0 %v407
    %635 = vmatprep.subr.mxu0 %v410
    %636 = vmatpush1.msra.mxu0 %v409
    %637 = vmatprep.subr.mxu0 %v412
    %638 = vmatpush1.msra.mxu0 %v411
    %639 = vmatprep.subr.mxu0 %v414
    %640 = vmatpush1.msra.mxu0 %v413
    %641 = vmatprep.subr.mxu0 %v416
    %642 = vmatpush1.msra.mxu0 %v415
    %643 = vmatprep.subr.mxu0 %v418
    %644 = vmatpush1.msra.mxu0 %v417
    %645 = vmatprep.subr.mxu0 %v420
    %646 = vmatpush1.msra.mxu0 %v419
    %647 = vmatprep.subr.mxu0 %v422
    %648 = vmatpush1.msra.mxu0 %v421
    %649 = vmatprep.subr.mxu0 0.0
    %650 = vmatpush1.msra.mxu0 0.0
    %651 = vmatprep.subr.mxu0 0.0
    %652 = vmatpush1.msra.mxu0 0.0
    %653 = vmatprep.subr.mxu0 0.0
    %654 = vmatpush1.msra.mxu0 0.0
    %655 = vmatprep.subr.mxu0 0.0
    %656 = vmatpush1.msra.mxu0 0.0
    %657 = vmatprep.subr.mxu0 0.0
    %658 = vmatpush1.msra.mxu0 0.0
    %659 = vmatprep.subr.mxu0 0.0
    %660 = vmatpush1.msra.mxu0 0.0
    %661 = vmatprep.subr.mxu0 0.0
    %662 = vmatpush1.msra.mxu0 0.0
    %663 = vmatprep.subr.mxu0 0.0
    %664 = vmatpush1.msra.mxu0 0.0
    %665 = vmatprep.subr.mxu0 0.0
    %666 = vmatpush1.msra.mxu0 0.0
    %667 = vmatprep.subr.mxu0 0.0
    %668 = vmatpush1.msra.mxu0 0.0
    %669 = vmatprep.subr.mxu0 0.0
    %670 = vmatpush1.msra.mxu0 0.0
    %671 = vmatprep.subr.mxu0 0.0
    %672 = vmatpush1.msra.mxu0 0.0
    %673 = vmatprep.subr.mxu0 0.0
    %674 = vmatpush1.msra.mxu0 0.0
    %675 = vmatprep.subr.mxu0 0.0
    %676 = vmatpush1.msra.mxu0 0.0
    %677 = vmatprep.subr.mxu0 0.0
    %678 = vmatpush1.msra.mxu0 0.0
    %679 = vmatprep.subr.mxu0 0.0
    %680 = vmatpush1.msra.mxu0 0.0
    %681 = vmatprep.subr.mxu0 0.0
    %682 = vmatpush1.msra.mxu0 0.0
    %683 = vmatprep.subr.mxu0 0.0
    %684 = vmatpush1.msra.mxu0 0.0
    %685 = vmatprep.subr.mxu0 0.0
    %686 = vmatpush1.msra.mxu0 0.0
    %687 = vmatprep.subr.mxu0 0.0
    %688 = vmatpush1.msra.mxu0 0.0
    %689 = vmatprep.subr.mxu0 0.0
    %690 = vmatpush1.msra.mxu0 0.0
    %691 = vmatprep.subr.mxu0 0.0
    %692 = vmatpush1.msra.mxu0 0.0
    %693 = vmatprep.subr.mxu0 0.0
    %694 = vmatpush1.msra.mxu0 0.0
    %695 = vmatprep.subr.mxu0 0.0
    %696 = vmatpush1.msra.mxu0 0.0
    %697 = vmatprep.mubr.f32.mxu0 0.0
    %698 = vmatmul.mubr.f32.gmra.mrb[0].mxu0 %v631
    %v699 = vpop.f32.mrb[0].mxu0
    %v700 = vadd.f32 0.0, %v699
    %v701 = vpop.f32.mrb[0].mxu0
    %v702 = vadd.f32 0.0, %v701
    %703 = vdwg.mxu0
    %v704 = vadd.f32 %v373, %v700
    %v705 = vadd.f32 %v375, %v702
    %v706 = vxor.u32 %v704, 2147483648
    %v707 = vmul.f32 %v706, 1.442695
    %v708 = vpow.pop %v707
    %v709 = vadd.f32 %v708, 1.0
    %v710 = vrcp.pop %v709
    %v711 = vmul.f32 1.0, %v710
    %v712 = vtanh.pop %v705
    %v713 = vxor.u32 %v705, 2147483648
    %v714 = vmul.f32 %v713, 1.442695
    %v715 = vpow.pop %v714
    %v716 = vadd.f32 %v715, 1.0
    %v717 = vrcp.pop %v716
    %v718 = vmul.f32 1.0, %v717
    %v719 = vmul.f32 %v711, %v622
    %v720 = vmul.f32 %v711, %v712
    %722 = vrot.lane.b32.xlu0 %v720, 64
    %v723 = vpop.permute.xlu0 %722
    %v725 = vadd.f32 %v719, %v723
    %v726 = vtanh.pop %v725
    %v727 = vmul.f32 %v718, %v726
    %729 = vrot.lane.b32.xlu0 %v727, 64
    %v730 = vpop.permute.xlu0 %729
    %732 = vst.msk [vmem:[#allocation2 + $0x10] sm:$0xff] %vm269, %v730
    %733 = vst.msk [vmem:[#allocation2 + $0x28] sm:$0xff] %vm526, %v727
    %v734 = vsel %vm269, %v730, 0
    %736 = vmatprep.subr.mxu0 %v408
    %737 = vmatpush1.msra.mxu0 %v407
    %738 = vmatprep.subr.mxu0 %v410
    %739 = vmatpush1.msra.mxu0 %v409
    %740 = vmatprep.subr.mxu0 %v412
    %741 = vmatpush1.msra.mxu0 %v411
    %742 = vmatprep.subr.mxu0 %v414
    %743 = vmatpush1.msra.mxu0 %v413
    %744 = vmatprep.subr.mxu0 %v416
    %745 = vmatpush1.msra.mxu0 %v415
    %746 = vmatprep.subr.mxu0 %v418
    %747 = vmatpush1.msra.mxu0 %v417
    %748 = vmatprep.subr.mxu0 %v420
    %749 = vmatpush1.msra.mxu0 %v419
    %750 = vmatprep.subr.mxu0 %v422
    %751 = vmatpush1.msra.mxu0 %v421
    %752 = vmatprep.subr.mxu0 0.0
    %753 = vmatpush1.msra.mxu0 0.0
    %754 = vmatprep.subr.mxu0 0.0
    %755 = vmatpush1.msra.mxu0 0.0
    %756 = vmatprep.subr.mxu0 0.0
    %757 = vmatpush1.msra.mxu0 0.0
    %758 = vmatprep.subr.mxu0 0.0
    %759 = vmatpush1.msra.mxu0 0.0
    %760 = vmatprep.subr.mxu0 0.0
    %761 = vmatpush1.msra.mxu0 0.0
    %762 = vmatprep.subr.mxu0 0.0
    %763 = vmatpush1.msra.mxu0 0.0
    %764 = vmatprep.subr.mxu0 0.0
    %765 = vmatpush1.msra.mxu0 0.0
    %766 = vmatprep.subr.mxu0 0.0
    %767 = vmatpush1.msra.mxu0 0.0
    %768 = vmatprep.subr.mxu0 0.0
    %769 = vmatpush1.msra.mxu0 0.0
    %770 = vmatprep.subr.mxu0 0.0
    %771 = vmatpush1.msra.mxu0 0.0
    %772 = vmatprep.subr.mxu0 0.0
    %773 = vmatpush1.msra.mxu0 0.0
    %774 = vmatprep.subr.mxu0 0.0
    %775 = vmatpush1.msra.mxu0 0.0
    %776 = vmatprep.subr.mxu0 0.0
    %777 = vmatpush1.msra.mxu0 0.0
    %778 = vmatprep.subr.mxu0 0.0
    %779 = vmatpush1.msra.mxu0 0.0
    %780 = vmatprep.subr.mxu0 0.0
    %781 = vmatpush1.msra.mxu0 0.0
    %782 = vmatprep.subr.mxu0 0.0
    %783 = vmatpush1.msra.mxu0 0.0
    %784 = vmatprep.subr.mxu0 0.0
    %785 = vmatpush1.msra.mxu0 0.0
    %786 = vmatprep.subr.mxu0 0.0
    %787 = vmatpush1.msra.mxu0 0.0
    %788 = vmatprep.subr.mxu0 0.0
    %789 = vmatpush1.msra.mxu0 0.0
    %790 = vmatprep.subr.mxu0 0.0
    %791 = vmatpush1.msra.mxu0 0.0
    %792 = vmatprep.subr.mxu0 0.0
    %793 = vmatpush1.msra.mxu0 0.0
    %794 = vmatprep.subr.mxu0 0.0
    %795 = vmatpush1.msra.mxu0 0.0
    %796 = vmatprep.subr.mxu0 0.0
    %797 = vmatpush1.msra.mxu0 0.0
    %798 = vmatprep.subr.mxu0 0.0
    %799 = vmatpush1.msra.mxu0 0.0
    %800 = vmatprep.mubr.f32.mxu0 0.0
    %801 = vmatmul.mubr.f32.gmra.mrb[0].mxu0 %v734
    %v802 = vpop.f32.mrb[0].mxu0
    %v803 = vadd.f32 0.0, %v802
    %v804 = vpop.f32.mrb[0].mxu0
    %v805 = vadd.f32 0.0, %v804
    %806 = vdwg.mxu0
    %v807 = vadd.f32 %v379, %v803
    %v808 = vadd.f32 %v381, %v805
    %v809 = vxor.u32 %v807, 2147483648
    %v810 = vmul.f32 %v809, 1.442695
    %v811 = vpow.pop %v810
    %v812 = vadd.f32 %v811, 1.0
    %v813 = vrcp.pop %v812
    %v814 = vmul.f32 1.0, %v813
    %v815 = vtanh.pop %v808
    %v816 = vxor.u32 %v808, 2147483648
    %v817 = vmul.f32 %v816, 1.442695
    %v818 = vpow.pop %v817
    %v819 = vadd.f32 %v818, 1.0
    %v820 = vrcp.pop %v819
    %v821 = vmul.f32 1.0, %v820
    %v822 = vmul.f32 %v814, %v725
    %v823 = vmul.f32 %v814, %v815
    %825 = vrot.lane.b32.xlu0 %v823, 64
    %v826 = vpop.permute.xlu0 %825
    %v828 = vadd.f32 %v822, %v826
    %v829 = vtanh.pop %v828
    %v830 = vmul.f32 %v821, %v829
    %832 = vrot.lane.b32.xlu0 %v830, 64
    %v833 = vpop.permute.xlu0 %832
    %835 = vst.msk [vmem:[#allocation2 + $0x18] sm:$0xff] %vm269, %v833
    %836 = vst.msk [vmem:[#allocation2 + $0x20] sm:$0xff] %vm526, %v830
    %v837 = vsel %vm269, %v833, 0
    %839 = vmatprep.subr.mxu0 %v408
    %840 = vmatpush1.msra.mxu0 %v407
    %841 = vmatprep.subr.mxu0 %v410
    %842 = vmatpush1.msra.mxu0 %v409
    %843 = vmatprep.subr.mxu0 %v412
    %844 = vmatpush1.msra.mxu0 %v411
    %845 = vmatprep.subr.mxu0 %v414
    %846 = vmatpush1.msra.mxu0 %v413
    %847 = vmatprep.subr.mxu0 %v416
    %848 = vmatpush1.msra.mxu0 %v415
    %849 = vmatprep.subr.mxu0 %v418
    %850 = vmatpush1.msra.mxu0 %v417
    %851 = vmatprep.subr.mxu0 %v420
    %852 = vmatpush1.msra.mxu0 %v419
    %853 = vmatprep.subr.mxu0 %v422
    %854 = vmatpush1.msra.mxu0 %v421
    %855 = vmatprep.subr.mxu0 0.0
    %856 = vmatpush1.msra.mxu0 0.0
    %857 = vmatprep.subr.mxu0 0.0
    %858 = vmatpush1.msra.mxu0 0.0
    %859 = vmatprep.subr.mxu0 0.0
    %860 = vmatpush1.msra.mxu0 0.0
    %861 = vmatprep.subr.mxu0 0.0
    %862 = vmatpush1.msra.mxu0 0.0
    %863 = vmatprep.subr.mxu0 0.0
    %864 = vmatpush1.msra.mxu0 0.0
    %865 = vmatprep.subr.mxu0 0.0
    %866 = vmatpush1.msra.mxu0 0.0
    %867 = vmatprep.subr.mxu0 0.0
    %868 = vmatpush1.msra.mxu0 0.0
    %869 = vmatprep.subr.mxu0 0.0
    %870 = vmatpush1.msra.mxu0 0.0
    %871 = vmatprep.subr.mxu0 0.0
    %872 = vmatpush1.msra.mxu0 0.0
    %873 = vmatprep.subr.mxu0 0.0
    %874 = vmatpush1.msra.mxu0 0.0
    %875 = vmatprep.subr.mxu0 0.0
    %876 = vmatpush1.msra.mxu0 0.0
    %877 = vmatprep.subr.mxu0 0.0
    %878 = vmatpush1.msra.mxu0 0.0
    %879 = vmatprep.subr.mxu0 0.0
    %880 = vmatpush1.msra.mxu0 0.0
    %881 = vmatprep.subr.mxu0 0.0
    %882 = vmatpush1.msra.mxu0 0.0
    %883 = vmatprep.subr.mxu0 0.0
    %884 = vmatpush1.msra.mxu0 0.0
    %885 = vmatprep.subr.mxu0 0.0
    %886 = vmatpush1.msra.mxu0 0.0
    %887 = vmatprep.subr.mxu0 0.0
    %888 = vmatpush1.msra.mxu0 0.0
    %889 = vmatprep.subr.mxu0 0.0
    %890 = vmatpush1.msra.mxu0 0.0
    %891 = vmatprep.subr.mxu0 0.0
    %892 = vmatpush1.msra.mxu0 0.0
    %893 = vmatprep.subr.mxu0 0.0
    %894 = vmatpush1.msra.mxu0 0.0
    %895 = vmatprep.subr.mxu0 0.0
    %896 = vmatpush1.msra.mxu0 0.0
    %897 = vmatprep.subr.mxu0 0.0
    %898 = vmatpush1.msra.mxu0 0.0
    %899 = vmatprep.subr.mxu0 0.0
    %900 = vmatpush1.msra.mxu0 0.0
    %901 = vmatprep.subr.mxu0 0.0
    %902 = vmatpush1.msra.mxu0 0.0
    %903 = vmatprep.mubr.f32.mxu0 0.0
    %904 = vmatmul.mubr.f32.gmra.mrb[0].mxu0 %v837
    %v905 = vpop.f32.mrb[0].mxu0
    %v906 = vadd.f32 0.0, %v905
    %v907 = vpop.f32.mrb[0].mxu0
    %v908 = vadd.f32 0.0, %v907
    %909 = vdwg.mxu0
    %v910 = vadd.f32 %v385, %v906
    %v911 = vadd.f32 %v387, %v908
    %v912 = vxor.u32 %v910, 2147483648
    %v913 = vmul.f32 %v912, 1.442695
    %v914 = vpow.pop %v913
    %v915 = vadd.f32 %v914, 1.0
    %v916 = vrcp.pop %v915
    %v917 = vmul.f32 1.0, %v916
    %v918 = vtanh.pop %v911
    %v919 = vxor.u32 %v911, 2147483648
    %v920 = vmul.f32 %v919, 1.442695
    %v921 = vpow.pop %v920
    %v922 = vadd.f32 %v921, 1.0
    %v923 = vrcp.pop %v922
    %v924 = vmul.f32 1.0, %v923
    %v925 = vmul.f32 %v917, %v828
    %v926 = vmul.f32 %v917, %v918
    %928 = vrot.lane.b32.xlu0 %v926, 64
    %v929 = vpop.permute.xlu0 %928
    %v931 = vadd.f32 %v925, %v929
    %v932 = vtanh.pop %v931
    %v933 = vmul.f32 %v924, %v932
    %935 = vrot.lane.b32.xlu0 %v933, 64
    %v936 = vpop.permute.xlu0 %935
    %938 = vst.msk [vmem:[#allocation2 + $0x20] sm:$0xff] %vm269, %v936
    %939 = vst.msk [vmem:[#allocation2 + $0x18] sm:$0xff] %vm526, %v933
    %v940 = vsel %vm269, %v936, 0
    %942 = vmatprep.subr.mxu0 %v408
    %943 = vmatpush1.msra.mxu0 %v407
    %944 = vmatprep.subr.mxu0 %v410
    %945 = vmatpush1.msra.mxu0 %v409
    %946 = vmatprep.subr.mxu0 %v412
    %947 = vmatpush1.msra.mxu0 %v411
    %948 = vmatprep.subr.mxu0 %v414
    %949 = vmatpush1.msra.mxu0 %v413
    %950 = vmatprep.subr.mxu0 %v416
    %951 = vmatpush1.msra.mxu0 %v415
    %952 = vmatprep.subr.mxu0 %v418
    %953 = vmatpush1.msra.mxu0 %v417
    %954 = vmatprep.subr.mxu0 %v420
    %955 = vmatpush1.msra.mxu0 %v419
    %956 = vmatprep.subr.mxu0 %v422
    %957 = vmatpush1.msra.mxu0 %v421
    %958 = vmatprep.subr.mxu0 0.0
    %959 = vmatpush1.msra.mxu0 0.0
    %960 = vmatprep.subr.mxu0 0.0
    %961 = vmatpush1.msra.mxu0 0.0
    %962 = vmatprep.subr.mxu0 0.0
    %963 = vmatpush1.msra.mxu0 0.0
    %964 = vmatprep.subr.mxu0 0.0
    %965 = vmatpush1.msra.mxu0 0.0
    %966 = vmatprep.subr.mxu0 0.0
    %967 = vmatpush1.msra.mxu0 0.0
    %968 = vmatprep.subr.mxu0 0.0
    %969 = vmatpush1.msra.mxu0 0.0
    %970 = vmatprep.subr.mxu0 0.0
    %971 = vmatpush1.msra.mxu0 0.0
    %972 = vmatprep.subr.mxu0 0.0
    %973 = vmatpush1.msra.mxu0 0.0
    %974 = vmatprep.subr.mxu0 0.0
    %975 = vmatpush1.msra.mxu0 0.0
    %976 = vmatprep.subr.mxu0 0.0
    %977 = vmatpush1.msra.mxu0 0.0
    %978 = vmatprep.subr.mxu0 0.0
    %979 = vmatpush1.msra.mxu0 0.0
    %980 = vmatprep.subr.mxu0 0.0
    %981 = vmatpush1.msra.mxu0 0.0
    %982 = vmatprep.subr.mxu0 0.0
    %983 = vmatpush1.msra.mxu0 0.0
    %984 = vmatprep.subr.mxu0 0.0
    %985 = vmatpush1.msra.mxu0 0.0
    %986 = vmatprep.subr.mxu0 0.0
    %987 = vmatpush1.msra.mxu0 0.0
    %988 = vmatprep.subr.mxu0 0.0
    %989 = vmatpush1.msra.mxu0 0.0
    %990 = vmatprep.subr.mxu0 0.0
    %991 = vmatpush1.msra.mxu0 0.0
    %992 = vmatprep.subr.mxu0 0.0
    %993 = vmatpush1.msra.mxu0 0.0
    %994 = vmatprep.subr.mxu0 0.0
    %995 = vmatpush1.msra.mxu0 0.0
    %996 = vmatprep.subr.mxu0 0.0
    %997 = vmatpush1.msra.mxu0 0.0
    %998 = vmatprep.subr.mxu0 0.0
    %999 = vmatpush1.msra.mxu0 0.0
    %1000 = vmatprep.subr.mxu0 0.0
    %1001 = vmatpush1.msra.mxu0 0.0
    %1002 = vmatprep.subr.mxu0 0.0
    %1003 = vmatpush1.msra.mxu0 0.0
    %1004 = vmatprep.subr.mxu0 0.0
    %1005 = vmatpush1.msra.mxu0 0.0
    %1006 = vmatprep.mubr.f32.mxu0 0.0
    %1007 = vmatmul.mubr.f32.gmra.mrb[0].mxu0 %v940
    %v1008 = vpop.f32.mrb[0].mxu0
    %v1009 = vadd.f32 0.0, %v1008
    %v1010 = vpop.f32.mrb[0].mxu0
    %v1011 = vadd.f32 0.0, %v1010
    %1012 = vdwg.mxu0
    %v1013 = vadd.f32 %v391, %v1009
    %v1014 = vadd.f32 %v393, %v1011
    %v1015 = vxor.u32 %v1013, 2147483648
    %v1016 = vmul.f32 %v1015, 1.442695
    %v1017 = vpow.pop %v1016
    %v1018 = vadd.f32 %v1017, 1.0
    %v1019 = vrcp.pop %v1018
    %v1020 = vmul.f32 1.0, %v1019
    %v1021 = vtanh.pop %v1014
    %v1022 = vxor.u32 %v1014, 2147483648
    %v1023 = vmul.f32 %v1022, 1.442695
    %v1024 = vpow.pop %v1023
    %v1025 = vadd.f32 %v1024, 1.0
    %v1026 = vrcp.pop %v1025
    %v1027 = vmul.f32 1.0, %v1026
    %v1028 = vmul.f32 %v1020, %v931
    %v1029 = vmul.f32 %v1020, %v1021
    %1031 = vrot.lane.b32.xlu0 %v1029, 64
    %v1032 = vpop.permute.xlu0 %1031
    %v1034 = vadd.f32 %v1028, %v1032
    %v1035 = vtanh.pop %v1034
    %v1036 = vmul.f32 %v1027, %v1035
    %1038 = vrot.lane.b32.xlu0 %v1036, 64
    %v1039 = vpop.permute.xlu0 %1038
    %1041 = vst.msk [vmem:[#allocation2 + $0x28] sm:$0xff] %vm269, %v1039
    %1042 = vst.msk [vmem:[#allocation2 + $0x10] sm:$0xff] %vm526, %v1036
    %v1043 = vsel %vm269, %v1039, 0
    %1045 = vmatprep.subr.mxu0 %v408
    %1046 = vmatpush1.msra.mxu0 %v407
    %1047 = vmatprep.subr.mxu0 %v410
    %1048 = vmatpush1.msra.mxu0 %v409
    %1049 = vmatprep.subr.mxu0 %v412
    %1050 = vmatpush1.msra.mxu0 %v411
    %1051 = vmatprep.subr.mxu0 %v414
    %1052 = vmatpush1.msra.mxu0 %v413
    %1053 = vmatprep.subr.mxu0 %v416
    %1054 = vmatpush1.msra.mxu0 %v415
    %1055 = vmatprep.subr.mxu0 %v418
    %1056 = vmatpush1.msra.mxu0 %v417
    %1057 = vmatprep.subr.mxu0 %v420
    %1058 = vmatpush1.msra.mxu0 %v419
    %1059 = vmatprep.subr.mxu0 %v422
    %1060 = vmatpush1.msra.mxu0 %v421
    %1061 = vmatprep.subr.mxu0 0.0
    %1062 = vmatpush1.msra.mxu0 0.0
    %1063 = vmatprep.subr.mxu0 0.0
    %1064 = vmatpush1.msra.mxu0 0.0
    %1065 = vmatprep.subr.mxu0 0.0
    %1066 = vmatpush1.msra.mxu0 0.0
    %1067 = vmatprep.subr.mxu0 0.0
    %1068 = vmatpush1.msra.mxu0 0.0
    %1069 = vmatprep.subr.mxu0 0.0
    %1070 = vmatpush1.msra.mxu0 0.0
    %1071 = vmatprep.subr.mxu0 0.0
    %1072 = vmatpush1.msra.mxu0 0.0
    %1073 = vmatprep.subr.mxu0 0.0
    %1074 = vmatpush1.msra.mxu0 0.0
    %1075 = vmatprep.subr.mxu0 0.0
    %1076 = vmatpush1.msra.mxu0 0.0
    %1077 = vmatprep.subr.mxu0 0.0
    %1078 = vmatpush1.msra.mxu0 0.0
    %1079 = vmatprep.subr.mxu0 0.0
    %1080 = vmatpush1.msra.mxu0 0.0
    %1081 = vmatprep.subr.mxu0 0.0
    %1082 = vmatpush1.msra.mxu0 0.0
    %1083 = vmatprep.subr.mxu0 0.0
    %1084 = vmatpush1.msra.mxu0 0.0
    %1085 = vmatprep.subr.mxu0 0.0
    %1086 = vmatpush1.msra.mxu0 0.0
    %1087 = vmatprep.subr.mxu0 0.0
    %1088 = vmatpush1.msra.mxu0 0.0
    %1089 = vmatprep.subr.mxu0 0.0
    %1090 = vmatpush1.msra.mxu0 0.0
    %1091 = vmatprep.subr.mxu0 0.0
    %1092 = vmatpush1.msra.mxu0 0.0
    %1093 = vmatprep.subr.mxu0 0.0
    %1094 = vmatpush1.msra.mxu0 0.0
    %1095 = vmatprep.subr.mxu0 0.0
    %1096 = vmatpush1.msra.mxu0 0.0
    %1097 = vmatprep.subr.mxu0 0.0
    %1098 = vmatpush1.msra.mxu0 0.0
    %1099 = vmatprep.subr.mxu0 0.0
    %1100 = vmatpush1.msra.mxu0 0.0
    %1101 = vmatprep.subr.mxu0 0.0
    %1102 = vmatpush1.msra.mxu0 0.0
    %1103 = vmatprep.subr.mxu0 0.0
    %1104 = vmatpush1.msra.mxu0 0.0
    %1105 = vmatprep.subr.mxu0 0.0
    %1106 = vmatpush1.msra.mxu0 0.0
    %1107 = vmatprep.subr.mxu0 0.0
    %1108 = vmatpush1.msra.mxu0 0.0
    %1109 = vmatprep.mubr.f32.mxu0 0.0
    %1110 = vmatmul.mubr.f32.gmra.mrb[0].mxu0 %v1043
    %v1111 = vpop.f32.mrb[0].mxu0
    %v1112 = vadd.f32 0.0, %v1111
    %v1113 = vpop.f32.mrb[0].mxu0
    %v1114 = vadd.f32 0.0, %v1113
    %1115 = vdwg.mxu0
    %v1116 = vadd.f32 %v397, %v1112
    %v1117 = vadd.f32 %v399, %v1114
    %v1118 = vxor.u32 %v1116, 2147483648
    %v1119 = vmul.f32 %v1118, 1.442695
    %v1120 = vpow.pop %v1119
    %v1121 = vadd.f32 %v1120, 1.0
    %v1122 = vrcp.pop %v1121
    %v1123 = vmul.f32 1.0, %v1122
    %v1124 = vtanh.pop %v1117
    %v1125 = vxor.u32 %v1117, 2147483648
    %v1126 = vmul.f32 %v1125, 1.442695
    %v1127 = vpow.pop %v1126
    %v1128 = vadd.f32 %v1127, 1.0
    %v1129 = vrcp.pop %v1128
    %v1130 = vmul.f32 1.0, %v1129
    %v1131 = vmul.f32 %v1123, %v1034
    %v1132 = vmul.f32 %v1123, %v1124
    %1134 = vrot.lane.b32.xlu0 %v1132, 64
    %v1135 = vpop.permute.xlu0 %1134
    %v1137 = vadd.f32 %v1131, %v1135
    %v1138 = vtanh.pop %v1137
    %v1139 = vmul.f32 %v1130, %v1138
    %1141 = vrot.lane.b32.xlu0 %v1139, 64
    %v1142 = vpop.permute.xlu0 %1141
    %1144 = vst.msk [vmem:[#allocation2 + $0x30] sm:$0xff] %vm269, %v1142
    %1145 = vst.msk [vmem:[#allocation2 + $0x8] sm:$0xff] %vm526, %v1139
    %v1146 = vsel %vm269, %v1142, 0
    %1148 = vmatprep.subr.mxu0 %v408
    %1149 = vmatpush1.msra.mxu0 %v407
    %1150 = vmatprep.subr.mxu0 %v410
    %1151 = vmatpush1.msra.mxu0 %v409
    %1152 = vmatprep.subr.mxu0 %v412
    %1153 = vmatpush1.msra.mxu0 %v411
    %1154 = vmatprep.subr.mxu0 %v414
    %1155 = vmatpush1.msra.mxu0 %v413
    %1156 = vmatprep.subr.mxu0 %v416
    %1157 = vmatpush1.msra.mxu0 %v415
    %1158 = vmatprep.subr.mxu0 %v418
    %1159 = vmatpush1.msra.mxu0 %v417
    %1160 = vmatprep.subr.mxu0 %v420
    %1161 = vmatpush1.msra.mxu0 %v419
    %1162 = vmatprep.subr.mxu0 %v422
    %1163 = vmatpush1.msra.mxu0 %v421
    %1164 = vmatprep.subr.mxu0 0.0
    %1165 = vmatpush1.msra.mxu0 0.0
    %1166 = vmatprep.subr.mxu0 0.0
    %1167 = vmatpush1.msra.mxu0 0.0
    %1168 = vmatprep.subr.mxu0 0.0
    %1169 = vmatpush1.msra.mxu0 0.0
    %1170 = vmatprep.subr.mxu0 0.0
    %1171 = vmatpush1.msra.mxu0 0.0
    %1172 = vmatprep.subr.mxu0 0.0
    %1173 = vmatpush1.msra.mxu0 0.0
    %1174 = vmatprep.subr.mxu0 0.0
    %1175 = vmatpush1.msra.mxu0 0.0
    %1176 = vmatprep.subr.mxu0 0.0
    %1177 = vmatpush1.msra.mxu0 0.0
    %1178 = vmatprep.subr.mxu0 0.0
    %1179 = vmatpush1.msra.mxu0 0.0
    %1180 = vmatprep.subr.mxu0 0.0
    %1181 = vmatpush1.msra.mxu0 0.0
    %1182 = vmatprep.subr.mxu0 0.0
    %1183 = vmatpush1.msra.mxu0 0.0
    %1184 = vmatprep.subr.mxu0 0.0
    %1185 = vmatpush1.msra.mxu0 0.0
    %1186 = vmatprep.subr.mxu0 0.0
    %1187 = vmatpush1.msra.mxu0 0.0
    %1188 = vmatprep.subr.mxu0 0.0
    %1189 = vmatpush1.msra.mxu0 0.0
    %1190 = vmatprep.subr.mxu0 0.0
    %1191 = vmatpush1.msra.mxu0 0.0
    %1192 = vmatprep.subr.mxu0 0.0
    %1193 = vmatpush1.msra.mxu0 0.0
    %1194 = vmatprep.subr.mxu0 0.0
    %1195 = vmatpush1.msra.mxu0 0.0
    %1196 = vmatprep.subr.mxu0 0.0
    %1197 = vmatpush1.msra.mxu0 0.0
    %1198 = vmatprep.subr.mxu0 0.0
    %1199 = vmatpush1.msra.mxu0 0.0
    %1200 = vmatprep.subr.mxu0 0.0
    %1201 = vmatpush1.msra.mxu0 0.0
    %1202 = vmatprep.subr.mxu0 0.0
    %1203 = vmatpush1.msra.mxu0 0.0
    %1204 = vmatprep.subr.mxu0 0.0
    %1205 = vmatpush1.msra.mxu0 0.0
    %1206 = vmatprep.subr.mxu0 0.0
    %1207 = vmatpush1.msra.mxu0 0.0
    %1208 = vmatprep.subr.mxu0 0.0
    %1209 = vmatpush1.msra.mxu0 0.0
    %1210 = vmatprep.subr.mxu0 0.0
    %1211 = vmatpush1.msra.mxu0 0.0
    %1212 = vmatprep.mubr.f32.mxu0 0.0
    %1213 = vmatmul.mubr.f32.gmra.mrb[0].mxu0 %v1146
    %v1214 = vpop.f32.mrb[0].mxu0
    %v1215 = vadd.f32 0.0, %v1214
    %v1216 = vpop.f32.mrb[0].mxu0
    %v1217 = vadd.f32 0.0, %v1216
    %1218 = vdwg.mxu0
    %v1219 = vadd.f32 %v403, %v1215
    %v1220 = vadd.f32 %v405, %v1217
    %v1221 = vxor.u32 %v1219, 2147483648
    %v1222 = vmul.f32 %v1221, 1.442695
    %v1223 = vpow.pop %v1222
    %v1224 = vadd.f32 %v1223, 1.0
    %v1225 = vrcp.pop %v1224
    %v1226 = vmul.f32 1.0, %v1225
    %v1227 = vtanh.pop %v1220
    %v1228 = vxor.u32 %v1220, 2147483648
    %v1229 = vmul.f32 %v1228, 1.442695
    %v1230 = vpow.pop %v1229
    %v1231 = vadd.f32 %v1230, 1.0
    %v1232 = vrcp.pop %v1231
    %v1233 = vmul.f32 1.0, %v1232
    %v1234 = vmul.f32 %v1226, %v1137
    %v1235 = vmul.f32 %v1226, %v1227
    %1237 = vrot.lane.b32.xlu0 %v1235, 64
    %v1238 = vpop.permute.xlu0 %1237
    %v1240 = vadd.f32 %v1234, %v1238
    %v1241 = vtanh.pop %v1240
    %v1242 = vmul.f32 %v1233, %v1241
    %1244 = vrot.lane.b32.xlu0 %v1242, 64
    %v1245 = vpop.permute.xlu0 %1244
    %1247 = vst.msk [vmem:[#allocation2 + $0x38] sm:$0xff] %vm269, %v1245
    %1248 = vst.msk [vmem:[#allocation2] sm:$0xff] %vm526, %v1242
    %v1249 = vld [vmem:[#allocation2] sm:$0xff]
    %v1250 = vld [vmem:[#allocation2 + $0x8] sm:$0xff]
    %v1251 = vld [vmem:[#allocation2 + $0x10] sm:$0xff]
    %v1252 = vld [vmem:[#allocation2 + $0x18] sm:$0xff]
    %v1253 = vld [vmem:[#allocation2 + $0x20] sm:$0xff]
    %v1254 = vld [vmem:[#allocation2 + $0x28] sm:$0xff]
    %v1255 = vld [vmem:[#allocation2 + $0x30] sm:$0xff]
    %v1256 = vld [vmem:[#allocation2 + $0x38] sm:$0xff]
    %v1257 = vld [vmem:[#allocation10] sm:$0xff]
    %v1258 = vld [vmem:[#allocation10 + $0x8] sm:$0xff]
    %v1259 = vld [vmem:[#allocation10 + $0x10] sm:$0xff]
    %v1260 = vld [vmem:[#allocation10 + $0x18] sm:$0xff]
    %v1261 = vld [vmem:[#allocation10 + $0x20] sm:$0xff]
    %v1262 = vld [vmem:[#allocation10 + $0x28] sm:$0xff]
    %v1263 = vld [vmem:[#allocation10 + $0x30] sm:$0xff]
    %v1264 = vld [vmem:[#allocation10 + $0x38] sm:$0xff]
    %v1265 = vld [vmem:[#allocation10 + $0x40] sm:$0xff]
    %v1266 = vld [vmem:[#allocation10 + $0x48] sm:$0xff]
    %v1267 = vld [vmem:[#allocation10 + $0x50] sm:$0xff]
    %v1268 = vld [vmem:[#allocation10 + $0x58] sm:$0xff]
    %v1269 = vld [vmem:[#allocation10 + $0x60] sm:$0xff]
    %v1270 = vld [vmem:[#allocation10 + $0x68] sm:$0xff]
    %v1271 = vld [vmem:[#allocation10 + $0x70] sm:$0xff]
    %v1272 = vld [vmem:[#allocation10 + $0x78] sm:$0xff]
    %v1273 = vld [vmem:[#allocation10 + $0x80] sm:$0xff]
    %v1274 = vld [vmem:[#allocation10 + $0x88] sm:$0xff]
    %v1275 = vld [vmem:[#allocation10 + $0x90] sm:$0xff]
    %v1276 = vld [vmem:[#allocation10 + $0x98] sm:$0xff]
    %v1277 = vld [vmem:[#allocation10 + $0xa0] sm:$0xff]
    %v1278 = vld [vmem:[#allocation10 + $0xa8] sm:$0xff]
    %v1279 = vld [vmem:[#allocation10 + $0xb0] sm:$0xff]
    %v1280 = vld [vmem:[#allocation10 + $0xb8] sm:$0xff]
    %v1281 = vld [vmem:[#allocation10 + $0xc0] sm:$0xff]
    %v1282 = vld [vmem:[#allocation10 + $0xc8] sm:$0xff]
    %v1283 = vld [vmem:[#allocation10 + $0xd0] sm:$0xff]
    %v1284 = vld [vmem:[#allocation10 + $0xd8] sm:$0xff]
    %v1285 = vld [vmem:[#allocation10 + $0xe0] sm:$0xff]
    %v1286 = vld [vmem:[#allocation10 + $0xe8] sm:$0xff]
    %v1287 = vld [vmem:[#allocation10 + $0xf0] sm:$0xff]
    %v1288 = vld [vmem:[#allocation10 + $0xf8] sm:$0xff]
    %v1289 = vld [vmem:[#allocation13] sm:$0x3]
    %v1291 = vlaneseq
    %v1292 = vshrl.u32 %v1291, 7
    %v1293 = vsub.s32 0, %v1292
    %v1294 = vrot.slane %v1289, %v1293
    %v1295 = vlaneseq
    %v1296 = vshrl.u32 %v1295, 7
    %v1297 = vsub.s32 1, %v1296
    %v1298 = vrot.slane %v1289, %v1297
    %1301 = vmatprep.subr.mxu0 %v1258
    %1302 = vmatpush1.msra.mxu0 %v1257
    %1303 = vmatprep.subr.mxu0 %v1260
    %1304 = vmatpush1.msra.mxu0 %v1259
    %1305 = vmatprep.subr.mxu0 %v1262
    %1306 = vmatpush1.msra.mxu0 %v1261
    %1307 = vmatprep.subr.mxu0 %v1264
    %1308 = vmatpush1.msra.mxu0 %v1263
    %1309 = vmatprep.subr.mxu0 %v1266
    %1310 = vmatpush1.msra.mxu0 %v1265
    %1311 = vmatprep.subr.mxu0 %v1268
    %1312 = vmatpush1.msra.mxu0 %v1267
    %1313 = vmatprep.subr.mxu0 %v1270
    %1314 = vmatpush1.msra.mxu0 %v1269
    %1315 = vmatprep.subr.mxu0 %v1272
    %1316 = vmatpush1.msra.mxu0 %v1271
    %1317 = vmatprep.subr.mxu0 %v1274
    %1318 = vmatpush1.msra.mxu0 %v1273
    %1319 = vmatprep.subr.mxu0 %v1276
    %1320 = vmatpush1.msra.mxu0 %v1275
    %1321 = vmatprep.subr.mxu0 %v1278
    %1322 = vmatpush1.msra.mxu0 %v1277
    %1323 = vmatprep.subr.mxu0 %v1280
    %1324 = vmatpush1.msra.mxu0 %v1279
    %1325 = vmatprep.subr.mxu0 %v1282
    %1326 = vmatpush1.msra.mxu0 %v1281
    %1327 = vmatprep.subr.mxu0 %v1284
    %1328 = vmatpush1.msra.mxu0 %v1283
    %1329 = vmatprep.subr.mxu0 %v1286
    %1330 = vmatpush1.msra.mxu0 %v1285
    %1331 = vmatprep.subr.mxu0 %v1288
    %1332 = vmatpush1.msra.mxu0 %v1287
    %1333 = vmatprep.subr.mxu0 0.0
    %1334 = vmatpush1.msra.mxu0 0.0
    %1335 = vmatprep.subr.mxu0 0.0
    %1336 = vmatpush1.msra.mxu0 0.0
    %1337 = vmatprep.subr.mxu0 0.0
    %1338 = vmatpush1.msra.mxu0 0.0
    %1339 = vmatprep.subr.mxu0 0.0
    %1340 = vmatpush1.msra.mxu0 0.0
    %1341 = vmatprep.subr.mxu0 0.0
    %1342 = vmatpush1.msra.mxu0 0.0
    %1343 = vmatprep.subr.mxu0 0.0
    %1344 = vmatpush1.msra.mxu0 0.0
    %1345 = vmatprep.subr.mxu0 0.0
    %1346 = vmatpush1.msra.mxu0 0.0
    %1347 = vmatprep.subr.mxu0 0.0
    %1348 = vmatpush1.msra.mxu0 0.0
    %1349 = vmatprep.subr.mxu0 0.0
    %1350 = vmatpush1.msra.mxu0 0.0
    %1351 = vmatprep.subr.mxu0 0.0
    %1352 = vmatpush1.msra.mxu0 0.0
    %1353 = vmatprep.subr.mxu0 0.0
    %1354 = vmatpush1.msra.mxu0 0.0
    %1355 = vmatprep.subr.mxu0 0.0
    %1356 = vmatpush1.msra.mxu0 0.0
    %1357 = vmatprep.subr.mxu0 0.0
    %1358 = vmatpush1.msra.mxu0 0.0
    %1359 = vmatprep.subr.mxu0 0.0
    %1360 = vmatpush1.msra.mxu0 0.0
    %1361 = vmatprep.subr.mxu0 0.0
    %1362 = vmatpush1.msra.mxu0 0.0
    %1363 = vmatprep.subr.mxu0 0.0
    %1364 = vmatpush1.msra.mxu0 0.0
    %1365 = vmatprep.mubr.f32.mxu0 0.0
    %1366 = vmatmul.mubr.f32.gmra.mrb[0].mxu0 %v1249
    %v1367 = vpop.f32.mrb[0].mxu0
    %v1368 = vadd.f32 %v1294, %v1367
    %v1369 = vpop.f32.mrb[0].mxu0
    %v1370 = vadd.f32 %v1298, %v1369
    %1371 = vmatprep.mubr.f32.mxu0 0.0
    %1372 = vmatmul.mubr.f32.gmra.mrb[0].mxu0 %v1250
    %v1373 = vpop.f32.mrb[0].mxu0
    %v1374 = vadd.f32 %v1294, %v1373
    %v1375 = vpop.f32.mrb[0].mxu0
    %v1376 = vadd.f32 %v1298, %v1375
    %1377 = vmatprep.mubr.f32.mxu0 0.0
    %1378 = vmatmul.mubr.f32.gmra.mrb[0].mxu0 %v1251
    %v1379 = vpop.f32.mrb[0].mxu0
    %v1380 = vadd.f32 %v1294, %v1379
    %v1381 = vpop.f32.mrb[0].mxu0
    %v1382 = vadd.f32 %v1298, %v1381
    %1383 = vmatprep.mubr.f32.mxu0 0.0
    %1384 = vmatmul.mubr.f32.gmra.mrb[0].mxu0 %v1252
    %v1385 = vpop.f32.mrb[0].mxu0
    %v1386 = vadd.f32 %v1294, %v1385
    %v1387 = vpop.f32.mrb[0].mxu0
    %v1388 = vadd.f32 %v1298, %v1387
    %1389 = vmatprep.mubr.f32.mxu0 0.0
    %1390 = vmatmul.mubr.f32.gmra.mrb[0].mxu0 %v1253
    %v1391 = vpop.f32.mrb[0].mxu0
    %v1392 = vadd.f32 %v1294, %v1391
    %v1393 = vpop.f32.mrb[0].mxu0
    %v1394 = vadd.f32 %v1298, %v1393
    %1395 = vmatprep.mubr.f32.mxu0 0.0
    %1396 = vmatmul.mubr.f32.gmra.mrb[0].mxu0 %v1254
    %v1397 = vpop.f32.mrb[0].mxu0
    %v1398 = vadd.f32 %v1294, %v1397
    %v1399 = vpop.f32.mrb[0].mxu0
    %v1400 = vadd.f32 %v1298, %v1399
    %1401 = vmatprep.mubr.f32.mxu0 0.0
    %1402 = vmatmul.mubr.f32.gmra.mrb[0].mxu0 %v1255
    %v1403 = vpop.f32.mrb[0].mxu0
    %v1404 = vadd.f32 %v1294, %v1403
    %v1405 = vpop.f32.mrb[0].mxu0
    %v1406 = vadd.f32 %v1298, %v1405
    %1407 = vmatprep.mubr.f32.mxu0 0.0
    %1408 = vmatmul.mubr.f32.gmra.mrb[0].mxu0 %v1256
    %v1409 = vpop.f32.mrb[0].mxu0
    %v1410 = vadd.f32 %v1294, %v1409
    %v1411 = vpop.f32.mrb[0].mxu0
    %v1412 = vadd.f32 %v1298, %v1411
    %1413 = vdwg.mxu0
    %v1414 = vld [vmem:[#allocation12] sm:$0xff]
    %v1415 = vld [vmem:[#allocation12 + $0x8] sm:$0xff]
    %v1416 = vld [vmem:[#allocation12 + $0x10] sm:$0xff]
    %v1417 = vld [vmem:[#allocation12 + $0x18] sm:$0xff]
    %v1418 = vld [vmem:[#allocation12 + $0x20] sm:$0xff]
    %v1419 = vld [vmem:[#allocation12 + $0x28] sm:$0xff]
    %v1420 = vld [vmem:[#allocation12 + $0x30] sm:$0xff]
    %v1421 = vld [vmem:[#allocation12 + $0x38] sm:$0xff]
    %v1422 = vld [vmem:[#allocation12 + $0x40] sm:$0xff]
    %v1423 = vld [vmem:[#allocation12 + $0x48] sm:$0xff]
    %v1424 = vld [vmem:[#allocation12 + $0x50] sm:$0xff]
    %v1425 = vld [vmem:[#allocation12 + $0x58] sm:$0xff]
    %v1426 = vld [vmem:[#allocation12 + $0x60] sm:$0xff]
    %v1427 = vld [vmem:[#allocation12 + $0x68] sm:$0xff]
    %v1428 = vld [vmem:[#allocation12 + $0x70] sm:$0xff]
    %v1429 = vld [vmem:[#allocation12 + $0x78] sm:$0xff]
    %1430 = vmatprep.subr.mxu0 %v1415
    %1431 = vmatpush1.msra.mxu0 %v1414
    %1432 = vmatprep.subr.mxu0 %v1417
    %1433 = vmatpush1.msra.mxu0 %v1416
    %1434 = vmatprep.subr.mxu0 %v1419
    %1435 = vmatpush1.msra.mxu0 %v1418
    %1436 = vmatprep.subr.mxu0 %v1421
    %1437 = vmatpush1.msra.mxu0 %v1420
    %1438 = vmatprep.subr.mxu0 %v1423
    %1439 = vmatpush1.msra.mxu0 %v1422
    %1440 = vmatprep.subr.mxu0 %v1425
    %1441 = vmatpush1.msra.mxu0 %v1424
    %1442 = vmatprep.subr.mxu0 %v1427
    %1443 = vmatpush1.msra.mxu0 %v1426
    %1444 = vmatprep.subr.mxu0 %v1429
    %1445 = vmatpush1.msra.mxu0 %v1428
    %1446 = vmatprep.subr.mxu0 0.0
    %1447 = vmatpush1.msra.mxu0 0.0
    %1448 = vmatprep.subr.mxu0 0.0
    %1449 = vmatpush1.msra.mxu0 0.0
    %1450 = vmatprep.subr.mxu0 0.0
    %1451 = vmatpush1.msra.mxu0 0.0
    %1452 = vmatprep.subr.mxu0 0.0
    %1453 = vmatpush1.msra.mxu0 0.0
    %1454 = vmatprep.subr.mxu0 0.0
    %1455 = vmatpush1.msra.mxu0 0.0
    %1456 = vmatprep.subr.mxu0 0.0
    %1457 = vmatpush1.msra.mxu0 0.0
    %1458 = vmatprep.subr.mxu0 0.0
    %1459 = vmatpush1.msra.mxu0 0.0
    %1460 = vmatprep.subr.mxu0 0.0
    %1461 = vmatpush1.msra.mxu0 0.0
    %1462 = vmatprep.subr.mxu0 0.0
    %1463 = vmatpush1.msra.mxu0 0.0
    %1464 = vmatprep.subr.mxu0 0.0
    %1465 = vmatpush1.msra.mxu0 0.0
    %1466 = vmatprep.subr.mxu0 0.0
    %1467 = vmatpush1.msra.mxu0 0.0
    %1468 = vmatprep.subr.mxu0 0.0
    %1469 = vmatpush1.msra.mxu0 0.0
    %1470 = vmatprep.subr.mxu0 0.0
    %1471 = vmatpush1.msra.mxu0 0.0
    %1472 = vmatprep.subr.mxu0 0.0
    %1473 = vmatpush1.msra.mxu0 0.0
    %1474 = vmatprep.subr.mxu0 0.0
    %1475 = vmatpush1.msra.mxu0 0.0
    %1476 = vmatprep.subr.mxu0 0.0
    %1477 = vmatpush1.msra.mxu0 0.0
    %1478 = vmatprep.subr.mxu0 0.0
    %1479 = vmatpush1.msra.mxu0 0.0
    %1480 = vmatprep.subr.mxu0 0.0
    %1481 = vmatpush1.msra.mxu0 0.0
    %1482 = vmatprep.subr.mxu0 0.0
    %1483 = vmatpush1.msra.mxu0 0.0
    %1484 = vmatprep.subr.mxu0 0.0
    %1485 = vmatpush1.msra.mxu0 0.0
    %1486 = vmatprep.subr.mxu0 0.0
    %1487 = vmatpush1.msra.mxu0 0.0
    %1488 = vmatprep.subr.mxu0 0.0
    %1489 = vmatpush1.msra.mxu0 0.0
    %1490 = vmatprep.subr.mxu0 0.0
    %1491 = vmatpush1.msra.mxu0 0.0
    %1492 = vmatprep.subr.mxu0 0.0
    %1493 = vmatpush1.msra.mxu0 0.0
    %1494 = vmatprep.mubr.f32.mxu0 0.0
    %1495 = vmatmul.mubr.f32.gmra.mrb[0].mxu0 %v424
    %v1496 = vpop.f32.mrb[0].mxu0
    %v1497 = vadd.f32 0.0, %v1496
    %v1498 = vpop.f32.mrb[0].mxu0
    %v1499 = vadd.f32 0.0, %v1498
    %1500 = vdwg.mxu0
    %v1501 = vadd.f32 %v1368, %v1497
    %v1502 = vadd.f32 %v1370, %v1499
    %v1503 = vxor.u32 %v1501, 2147483648
    %v1504 = vmul.f32 %v1503, 1.442695
    %v1505 = vpow.pop %v1504
    %v1506 = vadd.f32 %v1505, 1.0
    %v1507 = vrcp.pop %v1506
    %v1508 = vmul.f32 1.0, %v1507
    %v1509 = vtanh.pop %v1502
    %v1510 = vxor.u32 %v1502, 2147483648
    %v1511 = vmul.f32 %v1510, 1.442695
    %v1512 = vpow.pop %v1511
    %v1513 = vadd.f32 %v1512, 1.0
    %v1514 = vrcp.pop %v1513
    %v1515 = vmul.f32 1.0, %v1514
    %v1516 = vmul.f32 %v1508, 0.0
    %v1517 = vmul.f32 %v1508, %v1509
    %1519 = vrot.lane.b32.xlu0 %v1517, 64
    %v1520 = vpop.permute.xlu0 %1519
    %v1522 = vadd.f32 %v1516, %v1520
    %v1523 = vtanh.pop %v1522
    %v1524 = vmul.f32 %v1515, %v1523
    %1526 = vrot.lane.b32.xlu0 %v1524, 64
    %v1527 = vpop.permute.xlu0 %1526
    %1529 = vst.msk [vmem:[#allocation3] sm:$0xff] %vm269, %v1527
    %1530 = vst.msk [vmem:[#allocation3 + $0x38] sm:$0xff] %vm526, %v1524
    %v1531 = vsel %vm269, %v1527, 0
    %1533 = vmatprep.subr.mxu0 %v1415
    %1534 = vmatpush1.msra.mxu0 %v1414
    %1535 = vmatprep.subr.mxu0 %v1417
    %1536 = vmatpush1.msra.mxu0 %v1416
    %1537 = vmatprep.subr.mxu0 %v1419
    %1538 = vmatpush1.msra.mxu0 %v1418
    %1539 = vmatprep.subr.mxu0 %v1421
    %1540 = vmatpush1.msra.mxu0 %v1420
    %1541 = vmatprep.subr.mxu0 %v1423
    %1542 = vmatpush1.msra.mxu0 %v1422
    %1543 = vmatprep.subr.mxu0 %v1425
    %1544 = vmatpush1.msra.mxu0 %v1424
    %1545 = vmatprep.subr.mxu0 %v1427
    %1546 = vmatpush1.msra.mxu0 %v1426
    %1547 = vmatprep.subr.mxu0 %v1429
    %1548 = vmatpush1.msra.mxu0 %v1428
    %1549 = vmatprep.subr.mxu0 0.0
    %1550 = vmatpush1.msra.mxu0 0.0
    %1551 = vmatprep.subr.mxu0 0.0
    %1552 = vmatpush1.msra.mxu0 0.0
    %1553 = vmatprep.subr.mxu0 0.0
    %1554 = vmatpush1.msra.mxu0 0.0
    %1555 = vmatprep.subr.mxu0 0.0
    %1556 = vmatpush1.msra.mxu0 0.0
    %1557 = vmatprep.subr.mxu0 0.0
    %1558 = vmatpush1.msra.mxu0 0.0
    %1559 = vmatprep.subr.mxu0 0.0
    %1560 = vmatpush1.msra.mxu0 0.0
    %1561 = vmatprep.subr.mxu0 0.0
    %1562 = vmatpush1.msra.mxu0 0.0
    %1563 = vmatprep.subr.mxu0 0.0
    %1564 = vmatpush1.msra.mxu0 0.0
    %1565 = vmatprep.subr.mxu0 0.0
    %1566 = vmatpush1.msra.mxu0 0.0
    %1567 = vmatprep.subr.mxu0 0.0
    %1568 = vmatpush1.msra.mxu0 0.0
    %1569 = vmatprep.subr.mxu0 0.0
    %1570 = vmatpush1.msra.mxu0 0.0
    %1571 = vmatprep.subr.mxu0 0.0
    %1572 = vmatpush1.msra.mxu0 0.0
    %1573 = vmatprep.subr.mxu0 0.0
    %1574 = vmatpush1.msra.mxu0 0.0
    %1575 = vmatprep.subr.mxu0 0.0
    %1576 = vmatpush1.msra.mxu0 0.0
    %1577 = vmatprep.subr.mxu0 0.0
    %1578 = vmatpush1.msra.mxu0 0.0
    %1579 = vmatprep.subr.mxu0 0.0
    %1580 = vmatpush1.msra.mxu0 0.0
    %1581 = vmatprep.subr.mxu0 0.0
    %1582 = vmatpush1.msra.mxu0 0.0
    %1583 = vmatprep.subr.mxu0 0.0
    %1584 = vmatpush1.msra.mxu0 0.0
    %1585 = vmatprep.subr.mxu0 0.0
    %1586 = vmatpush1.msra.mxu0 0.0
    %1587 = vmatprep.subr.mxu0 0.0
    %1588 = vmatpush1.msra.mxu0 0.0
    %1589 = vmatprep.subr.mxu0 0.0
    %1590 = vmatpush1.msra.mxu0 0.0
    %1591 = vmatprep.subr.mxu0 0.0
    %1592 = vmatpush1.msra.mxu0 0.0
    %1593 = vmatprep.subr.mxu0 0.0
    %1594 = vmatpush1.msra.mxu0 0.0
    %1595 = vmatprep.subr.mxu0 0.0
    %1596 = vmatpush1.msra.mxu0 0.0
    %1597 = vmatprep.mubr.f32.mxu0 0.0
    %1598 = vmatmul.mubr.f32.gmra.mrb[0].mxu0 %v1531
    %v1599 = vpop.f32.mrb[0].mxu0
    %v1600 = vadd.f32 0.0, %v1599
    %v1601 = vpop.f32.mrb[0].mxu0
    %v1602 = vadd.f32 0.0, %v1601
    %1603 = vdwg.mxu0
    %v1604 = vadd.f32 %v1374, %v1600
    %v1605 = vadd.f32 %v1376, %v1602
    %v1606 = vxor.u32 %v1604, 2147483648
    %v1607 = vmul.f32 %v1606, 1.442695
    %v1608 = vpow.pop %v1607
    %v1609 = vadd.f32 %v1608, 1.0
    %v1610 = vrcp.pop %v1609
    %v1611 = vmul.f32 1.0, %v1610
    %v1612 = vtanh.pop %v1605
    %v1613 = vxor.u32 %v1605, 2147483648
    %v1614 = vmul.f32 %v1613, 1.442695
    %v1615 = vpow.pop %v1614
    %v1616 = vadd.f32 %v1615, 1.0
    %v1617 = vrcp.pop %v1616
    %v1618 = vmul.f32 1.0, %v1617
    %v1619 = vmul.f32 %v1611, %v1522
    %v1620 = vmul.f32 %v1611, %v1612
    %1622 = vrot.lane.b32.xlu0 %v1620, 64
    %v1623 = vpop.permute.xlu0 %1622
    %v1625 = vadd.f32 %v1619, %v1623
    %v1626 = vtanh.pop %v1625
    %v1627 = vmul.f32 %v1618, %v1626
    %1629 = vrot.lane.b32.xlu0 %v1627, 64
    %v1630 = vpop.permute.xlu0 %1629
    %1632 = vst.msk [vmem:[#allocation3 + $0x8] sm:$0xff] %vm269, %v1630
    %1633 = vst.msk [vmem:[#allocation3 + $0x30] sm:$0xff] %vm526, %v1627
    %v1634 = vsel %vm269, %v1630, 0
    %1636 = vmatprep.subr.mxu0 %v1415
    %1637 = vmatpush1.msra.mxu0 %v1414
    %1638 = vmatprep.subr.mxu0 %v1417
    %1639 = vmatpush1.msra.mxu0 %v1416
    %1640 = vmatprep.subr.mxu0 %v1419
    %1641 = vmatpush1.msra.mxu0 %v1418
    %1642 = vmatprep.subr.mxu0 %v1421
    %1643 = vmatpush1.msra.mxu0 %v1420
    %1644 = vmatprep.subr.mxu0 %v1423
    %1645 = vmatpush1.msra.mxu0 %v1422
    %1646 = vmatprep.subr.mxu0 %v1425
    %1647 = vmatpush1.msra.mxu0 %v1424
    %1648 = vmatprep.subr.mxu0 %v1427
    %1649 = vmatpush1.msra.mxu0 %v1426
    %1650 = vmatprep.subr.mxu0 %v1429
    %1651 = vmatpush1.msra.mxu0 %v1428
    %1652 = vmatprep.subr.mxu0 0.0
    %1653 = vmatpush1.msra.mxu0 0.0
    %1654 = vmatprep.subr.mxu0 0.0
    %1655 = vmatpush1.msra.mxu0 0.0
    %1656 = vmatprep.subr.mxu0 0.0
    %1657 = vmatpush1.msra.mxu0 0.0
    %1658 = vmatprep.subr.mxu0 0.0
    %1659 = vmatpush1.msra.mxu0 0.0
    %1660 = vmatprep.subr.mxu0 0.0
    %1661 = vmatpush1.msra.mxu0 0.0
    %1662 = vmatprep.subr.mxu0 0.0
    %1663 = vmatpush1.msra.mxu0 0.0
    %1664 = vmatprep.subr.mxu0 0.0
    %1665 = vmatpush1.msra.mxu0 0.0
    %1666 = vmatprep.subr.mxu0 0.0
    %1667 = vmatpush1.msra.mxu0 0.0
    %1668 = vmatprep.subr.mxu0 0.0
    %1669 = vmatpush1.msra.mxu0 0.0
    %1670 = vmatprep.subr.mxu0 0.0
    %1671 = vmatpush1.msra.mxu0 0.0
    %1672 = vmatprep.subr.mxu0 0.0
    %1673 = vmatpush1.msra.mxu0 0.0
    %1674 = vmatprep.subr.mxu0 0.0
    %1675 = vmatpush1.msra.mxu0 0.0
    %1676 = vmatprep.subr.mxu0 0.0
    %1677 = vmatpush1.msra.mxu0 0.0
    %1678 = vmatprep.subr.mxu0 0.0
    %1679 = vmatpush1.msra.mxu0 0.0
    %1680 = vmatprep.subr.mxu0 0.0
    %1681 = vmatpush1.msra.mxu0 0.0
    %1682 = vmatprep.subr.mxu0 0.0
    %1683 = vmatpush1.msra.mxu0 0.0
    %1684 = vmatprep.subr.mxu0 0.0
    %1685 = vmatpush1.msra.mxu0 0.0
    %1686 = vmatprep.subr.mxu0 0.0
    %1687 = vmatpush1.msra.mxu0 0.0
    %1688 = vmatprep.subr.mxu0 0.0
    %1689 = vmatpush1.msra.mxu0 0.0
    %1690 = vmatprep.subr.mxu0 0.0
    %1691 = vmatpush1.msra.mxu0 0.0
    %1692 = vmatprep.subr.mxu0 0.0
    %1693 = vmatpush1.msra.mxu0 0.0
    %1694 = vmatprep.subr.mxu0 0.0
    %1695 = vmatpush1.msra.mxu0 0.0
    %1696 = vmatprep.subr.mxu0 0.0
    %1697 = vmatpush1.msra.mxu0 0.0
    %1698 = vmatprep.subr.mxu0 0.0
    %1699 = vmatpush1.msra.mxu0 0.0
    %1700 = vmatprep.mubr.f32.mxu0 0.0
    %1701 = vmatmul.mubr.f32.gmra.mrb[0].mxu0 %v1634
    %v1702 = vpop.f32.mrb[0].mxu0
    %v1703 = vadd.f32 0.0, %v1702
    %v1704 = vpop.f32.mrb[0].mxu0
    %v1705 = vadd.f32 0.0, %v1704
    %1706 = vdwg.mxu0
    %v1707 = vadd.f32 %v1380, %v1703
    %v1708 = vadd.f32 %v1382, %v1705
    %v1709 = vxor.u32 %v1707, 2147483648
    %v1710 = vmul.f32 %v1709, 1.442695
    %v1711 = vpow.pop %v1710
    %v1712 = vadd.f32 %v1711, 1.0
    %v1713 = vrcp.pop %v1712
    %v1714 = vmul.f32 1.0, %v1713
    %v1715 = vtanh.pop %v1708
    %v1716 = vxor.u32 %v1708, 2147483648
    %v1717 = vmul.f32 %v1716, 1.442695
    %v1718 = vpow.pop %v1717
    %v1719 = vadd.f32 %v1718, 1.0
    %v1720 = vrcp.pop %v1719
    %v1721 = vmul.f32 1.0, %v1720
    %v1722 = vmul.f32 %v1714, %v1625
    %v1723 = vmul.f32 %v1714, %v1715
    %1725 = vrot.lane.b32.xlu0 %v1723, 64
    %v1726 = vpop.permute.xlu0 %1725
    %v1728 = vadd.f32 %v1722, %v1726
    %v1729 = vtanh.pop %v1728
    %v1730 = vmul.f32 %v1721, %v1729
    %1732 = vrot.lane.b32.xlu0 %v1730, 64
    %v1733 = vpop.permute.xlu0 %1732
    %1735 = vst.msk [vmem:[#allocation3 + $0x10] sm:$0xff] %vm269, %v1733
    %1736 = vst.msk [vmem:[#allocation3 + $0x28] sm:$0xff] %vm526, %v1730
    %v1737 = vsel %vm269, %v1733, 0
    %1739 = vmatprep.subr.mxu0 %v1415
    %1740 = vmatpush1.msra.mxu0 %v1414
    %1741 = vmatprep.subr.mxu0 %v1417
    %1742 = vmatpush1.msra.mxu0 %v1416
    %1743 = vmatprep.subr.mxu0 %v1419
    %1744 = vmatpush1.msra.mxu0 %v1418
    %1745 = vmatprep.subr.mxu0 %v1421
    %1746 = vmatpush1.msra.mxu0 %v1420
    %1747 = vmatprep.subr.mxu0 %v1423
    %1748 = vmatpush1.msra.mxu0 %v1422
    %1749 = vmatprep.subr.mxu0 %v1425
    %1750 = vmatpush1.msra.mxu0 %v1424
    %1751 = vmatprep.subr.mxu0 %v1427
    %1752 = vmatpush1.msra.mxu0 %v1426
    %1753 = vmatprep.subr.mxu0 %v1429
    %1754 = vmatpush1.msra.mxu0 %v1428
    %1755 = vmatprep.subr.mxu0 0.0
    %1756 = vmatpush1.msra.mxu0 0.0
    %1757 = vmatprep.subr.mxu0 0.0
    %1758 = vmatpush1.msra.mxu0 0.0
    %1759 = vmatprep.subr.mxu0 0.0
    %1760 = vmatpush1.msra.mxu0 0.0
    %1761 = vmatprep.subr.mxu0 0.0
    %1762 = vmatpush1.msra.mxu0 0.0
    %1763 = vmatprep.subr.mxu0 0.0
    %1764 = vmatpush1.msra.mxu0 0.0
    %1765 = vmatprep.subr.mxu0 0.0
    %1766 = vmatpush1.msra.mxu0 0.0
    %1767 = vmatprep.subr.mxu0 0.0
    %1768 = vmatpush1.msra.mxu0 0.0
    %1769 = vmatprep.subr.mxu0 0.0
    %1770 = vmatpush1.msra.mxu0 0.0
    %1771 = vmatprep.subr.mxu0 0.0
    %1772 = vmatpush1.msra.mxu0 0.0
    %1773 = vmatprep.subr.mxu0 0.0
    %1774 = vmatpush1.msra.mxu0 0.0
    %1775 = vmatprep.subr.mxu0 0.0
    %1776 = vmatpush1.msra.mxu0 0.0
    %1777 = vmatprep.subr.mxu0 0.0
    %1778 = vmatpush1.msra.mxu0 0.0
    %1779 = vmatprep.subr.mxu0 0.0
    %1780 = vmatpush1.msra.mxu0 0.0
    %1781 = vmatprep.subr.mxu0 0.0
    %1782 = vmatpush1.msra.mxu0 0.0
    %1783 = vmatprep.subr.mxu0 0.0
    %1784 = vmatpush1.msra.mxu0 0.0
    %1785 = vmatprep.subr.mxu0 0.0
    %1786 = vmatpush1.msra.mxu0 0.0
    %1787 = vmatprep.subr.mxu0 0.0
    %1788 = vmatpush1.msra.mxu0 0.0
    %1789 = vmatprep.subr.mxu0 0.0
    %1790 = vmatpush1.msra.mxu0 0.0
    %1791 = vmatprep.subr.mxu0 0.0
    %1792 = vmatpush1.msra.mxu0 0.0
    %1793 = vmatprep.subr.mxu0 0.0
    %1794 = vmatpush1.msra.mxu0 0.0
    %1795 = vmatprep.subr.mxu0 0.0
    %1796 = vmatpush1.msra.mxu0 0.0
    %1797 = vmatprep.subr.mxu0 0.0
    %1798 = vmatpush1.msra.mxu0 0.0
    %1799 = vmatprep.subr.mxu0 0.0
    %1800 = vmatpush1.msra.mxu0 0.0
    %1801 = vmatprep.subr.mxu0 0.0
    %1802 = vmatpush1.msra.mxu0 0.0
    %1803 = vmatprep.mubr.f32.mxu0 0.0
    %1804 = vmatmul.mubr.f32.gmra.mrb[0].mxu0 %v1737
    %v1805 = vpop.f32.mrb[0].mxu0
    %v1806 = vadd.f32 0.0, %v1805
    %v1807 = vpop.f32.mrb[0].mxu0
    %v1808 = vadd.f32 0.0, %v1807
    %1809 = vdwg.mxu0
    %v1810 = vadd.f32 %v1386, %v1806
    %v1811 = vadd.f32 %v1388, %v1808
    %v1812 = vxor.u32 %v1810, 2147483648
    %v1813 = vmul.f32 %v1812, 1.442695
    %v1814 = vpow.pop %v1813
    %v1815 = vadd.f32 %v1814, 1.0
    %v1816 = vrcp.pop %v1815
    %v1817 = vmul.f32 1.0, %v1816
    %v1818 = vtanh.pop %v1811
    %v1819 = vxor.u32 %v1811, 2147483648
    %v1820 = vmul.f32 %v1819, 1.442695
    %v1821 = vpow.pop %v1820
    %v1822 = vadd.f32 %v1821, 1.0
    %v1823 = vrcp.pop %v1822
    %v1824 = vmul.f32 1.0, %v1823
    %v1825 = vmul.f32 %v1817, %v1728
    %v1826 = vmul.f32 %v1817, %v1818
    %1828 = vrot.lane.b32.xlu0 %v1826, 64
    %v1829 = vpop.permute.xlu0 %1828
    %v1831 = vadd.f32 %v1825, %v1829
    %v1832 = vtanh.pop %v1831
    %v1833 = vmul.f32 %v1824, %v1832
    %1835 = vrot.lane.b32.xlu0 %v1833, 64
    %v1836 = vpop.permute.xlu0 %1835
    %1838 = vst.msk [vmem:[#allocation3 + $0x18] sm:$0xff] %vm269, %v1836
    %1839 = vst.msk [vmem:[#allocation3 + $0x20] sm:$0xff] %vm526, %v1833
    %v1840 = vsel %vm269, %v1836, 0
    %1842 = vmatprep.subr.mxu0 %v1415
    %1843 = vmatpush1.msra.mxu0 %v1414
    %1844 = vmatprep.subr.mxu0 %v1417
    %1845 = vmatpush1.msra.mxu0 %v1416
    %1846 = vmatprep.subr.mxu0 %v1419
    %1847 = vmatpush1.msra.mxu0 %v1418
    %1848 = vmatprep.subr.mxu0 %v1421
    %1849 = vmatpush1.msra.mxu0 %v1420
    %1850 = vmatprep.subr.mxu0 %v1423
    %1851 = vmatpush1.msra.mxu0 %v1422
    %1852 = vmatprep.subr.mxu0 %v1425
    %1853 = vmatpush1.msra.mxu0 %v1424
    %1854 = vmatprep.subr.mxu0 %v1427
    %1855 = vmatpush1.msra.mxu0 %v1426
    %1856 = vmatprep.subr.mxu0 %v1429
    %1857 = vmatpush1.msra.mxu0 %v1428
    %1858 = vmatprep.subr.mxu0 0.0
    %1859 = vmatpush1.msra.mxu0 0.0
    %1860 = vmatprep.subr.mxu0 0.0
    %1861 = vmatpush1.msra.mxu0 0.0
    %1862 = vmatprep.subr.mxu0 0.0
    %1863 = vmatpush1.msra.mxu0 0.0
    %1864 = vmatprep.subr.mxu0 0.0
    %1865 = vmatpush1.msra.mxu0 0.0
    %1866 = vmatprep.subr.mxu0 0.0
    %1867 = vmatpush1.msra.mxu0 0.0
    %1868 = vmatprep.subr.mxu0 0.0
    %1869 = vmatpush1.msra.mxu0 0.0
    %1870 = vmatprep.subr.mxu0 0.0
    %1871 = vmatpush1.msra.mxu0 0.0
    %1872 = vmatprep.subr.mxu0 0.0
    %1873 = vmatpush1.msra.mxu0 0.0
    %1874 = vmatprep.subr.mxu0 0.0
    %1875 = vmatpush1.msra.mxu0 0.0
    %1876 = vmatprep.subr.mxu0 0.0
    %1877 = vmatpush1.msra.mxu0 0.0
    %1878 = vmatprep.subr.mxu0 0.0
    %1879 = vmatpush1.msra.mxu0 0.0
    %1880 = vmatprep.subr.mxu0 0.0
    %1881 = vmatpush1.msra.mxu0 0.0
    %1882 = vmatprep.subr.mxu0 0.0
    %1883 = vmatpush1.msra.mxu0 0.0
    %1884 = vmatprep.subr.mxu0 0.0
    %1885 = vmatpush1.msra.mxu0 0.0
    %1886 = vmatprep.subr.mxu0 0.0
    %1887 = vmatpush1.msra.mxu0 0.0
    %1888 = vmatprep.subr.mxu0 0.0
    %1889 = vmatpush1.msra.mxu0 0.0
    %1890 = vmatprep.subr.mxu0 0.0
    %1891 = vmatpush1.msra.mxu0 0.0
    %1892 = vmatprep.subr.mxu0 0.0
    %1893 = vmatpush1.msra.mxu0 0.0
    %1894 = vmatprep.subr.mxu0 0.0
    %1895 = vmatpush1.msra.mxu0 0.0
    %1896 = vmatprep.subr.mxu0 0.0
    %1897 = vmatpush1.msra.mxu0 0.0
    %1898 = vmatprep.subr.mxu0 0.0
    %1899 = vmatpush1.msra.mxu0 0.0
    %1900 = vmatprep.subr.mxu0 0.0
    %1901 = vmatpush1.msra.mxu0 0.0
    %1902 = vmatprep.subr.mxu0 0.0
    %1903 = vmatpush1.msra.mxu0 0.0
    %1904 = vmatprep.subr.mxu0 0.0
    %1905 = vmatpush1.msra.mxu0 0.0
    %1906 = vmatprep.mubr.f32.mxu0 0.0
    %1907 = vmatmul.mubr.f32.gmra.mrb[0].mxu0 %v1840
    %v1908 = vpop.f32.mrb[0].mxu0
    %v1909 = vadd.f32 0.0, %v1908
    %v1910 = vpop.f32.mrb[0].mxu0
    %v1911 = vadd.f32 0.0, %v1910
    %1912 = vdwg.mxu0
    %v1913 = vadd.f32 %v1392, %v1909
    %v1914 = vadd.f32 %v1394, %v1911
    %v1915 = vxor.u32 %v1913, 2147483648
    %v1916 = vmul.f32 %v1915, 1.442695
    %v1917 = vpow.pop %v1916
    %v1918 = vadd.f32 %v1917, 1.0
    %v1919 = vrcp.pop %v1918
    %v1920 = vmul.f32 1.0, %v1919
    %v1921 = vtanh.pop %v1914
    %v1922 = vxor.u32 %v1914, 2147483648
    %v1923 = vmul.f32 %v1922, 1.442695
    %v1924 = vpow.pop %v1923
    %v1925 = vadd.f32 %v1924, 1.0
    %v1926 = vrcp.pop %v1925
    %v1927 = vmul.f32 1.0, %v1926
    %v1928 = vmul.f32 %v1920, %v1831
    %v1929 = vmul.f32 %v1920, %v1921
    %1931 = vrot.lane.b32.xlu0 %v1929, 64
    %v1932 = vpop.permute.xlu0 %1931
    %v1934 = vadd.f32 %v1928, %v1932
    %v1935 = vtanh.pop %v1934
    %v1936 = vmul.f32 %v1927, %v1935
    %1938 = vrot.lane.b32.xlu0 %v1936, 64
    %v1939 = vpop.permute.xlu0 %1938
    %1941 = vst.msk [vmem:[#allocation3 + $0x20] sm:$0xff] %vm269, %v1939
    %1942 = vst.msk [vmem:[#allocation3 + $0x18] sm:$0xff] %vm526, %v1936
    %v1943 = vsel %vm269, %v1939, 0
    %1945 = vmatprep.subr.mxu0 %v1415
    %1946 = vmatpush1.msra.mxu0 %v1414
    %1947 = vmatprep.subr.mxu0 %v1417
    %1948 = vmatpush1.msra.mxu0 %v1416
    %1949 = vmatprep.subr.mxu0 %v1419
    %1950 = vmatpush1.msra.mxu0 %v1418
    %1951 = vmatprep.subr.mxu0 %v1421
    %1952 = vmatpush1.msra.mxu0 %v1420
    %1953 = vmatprep.subr.mxu0 %v1423
    %1954 = vmatpush1.msra.mxu0 %v1422
    %1955 = vmatprep.subr.mxu0 %v1425
    %1956 = vmatpush1.msra.mxu0 %v1424
    %1957 = vmatprep.subr.mxu0 %v1427
    %1958 = vmatpush1.msra.mxu0 %v1426
    %1959 = vmatprep.subr.mxu0 %v1429
    %1960 = vmatpush1.msra.mxu0 %v1428
    %1961 = vmatprep.subr.mxu0 0.0
    %1962 = vmatpush1.msra.mxu0 0.0
    %1963 = vmatprep.subr.mxu0 0.0
    %1964 = vmatpush1.msra.mxu0 0.0
    %1965 = vmatprep.subr.mxu0 0.0
    %1966 = vmatpush1.msra.mxu0 0.0
    %1967 = vmatprep.subr.mxu0 0.0
    %1968 = vmatpush1.msra.mxu0 0.0
    %1969 = vmatprep.subr.mxu0 0.0
    %1970 = vmatpush1.msra.mxu0 0.0
    %1971 = vmatprep.subr.mxu0 0.0
    %1972 = vmatpush1.msra.mxu0 0.0
    %1973 = vmatprep.subr.mxu0 0.0
    %1974 = vmatpush1.msra.mxu0 0.0
    %1975 = vmatprep.subr.mxu0 0.0
    %1976 = vmatpush1.msra.mxu0 0.0
    %1977 = vmatprep.subr.mxu0 0.0
    %1978 = vmatpush1.msra.mxu0 0.0
    %1979 = vmatprep.subr.mxu0 0.0
    %1980 = vmatpush1.msra.mxu0 0.0
    %1981 = vmatprep.subr.mxu0 0.0
    %1982 = vmatpush1.msra.mxu0 0.0
    %1983 = vmatprep.subr.mxu0 0.0
    %1984 = vmatpush1.msra.mxu0 0.0
    %1985 = vmatprep.subr.mxu0 0.0
    %1986 = vmatpush1.msra.mxu0 0.0
    %1987 = vmatprep.subr.mxu0 0.0
    %1988 = vmatpush1.msra.mxu0 0.0
    %1989 = vmatprep.subr.mxu0 0.0
    %1990 = vmatpush1.msra.mxu0 0.0
    %1991 = vmatprep.subr.mxu0 0.0
    %1992 = vmatpush1.msra.mxu0 0.0
    %1993 = vmatprep.subr.mxu0 0.0
    %1994 = vmatpush1.msra.mxu0 0.0
    %1995 = vmatprep.subr.mxu0 0.0
    %1996 = vmatpush1.msra.mxu0 0.0
    %1997 = vmatprep.subr.mxu0 0.0
    %1998 = vmatpush1.msra.mxu0 0.0
    %1999 = vmatprep.subr.mxu0 0.0
    %2000 = vmatpush1.msra.mxu0 0.0
    %2001 = vmatprep.subr.mxu0 0.0
    %2002 = vmatpush1.msra.mxu0 0.0
    %2003 = vmatprep.subr.mxu0 0.0
    %2004 = vmatpush1.msra.mxu0 0.0
    %2005 = vmatprep.subr.mxu0 0.0
    %2006 = vmatpush1.msra.mxu0 0.0
    %2007 = vmatprep.subr.mxu0 0.0
    %2008 = vmatpush1.msra.mxu0 0.0
    %2009 = vmatprep.mubr.f32.mxu0 0.0
    %2010 = vmatmul.mubr.f32.gmra.mrb[0].mxu0 %v1943
    %v2011 = vpop.f32.mrb[0].mxu0
    %v2012 = vadd.f32 0.0, %v2011
    %v2013 = vpop.f32.mrb[0].mxu0
    %v2014 = vadd.f32 0.0, %v2013
    %2015 = vdwg.mxu0
    %v2016 = vadd.f32 %v1398, %v2012
    %v2017 = vadd.f32 %v1400, %v2014
    %v2018 = vxor.u32 %v2016, 2147483648
    %v2019 = vmul.f32 %v2018, 1.442695
    %v2020 = vpow.pop %v2019
    %v2021 = vadd.f32 %v2020, 1.0
    %v2022 = vrcp.pop %v2021
    %v2023 = vmul.f32 1.0, %v2022
    %v2024 = vtanh.pop %v2017
    %v2025 = vxor.u32 %v2017, 2147483648
    %v2026 = vmul.f32 %v2025, 1.442695
    %v2027 = vpow.pop %v2026
    %v2028 = vadd.f32 %v2027, 1.0
    %v2029 = vrcp.pop %v2028
    %v2030 = vmul.f32 1.0, %v2029
    %v2031 = vmul.f32 %v2023, %v1934
    %v2032 = vmul.f32 %v2023, %v2024
    %2034 = vrot.lane.b32.xlu0 %v2032, 64
    %v2035 = vpop.permute.xlu0 %2034
    %v2037 = vadd.f32 %v2031, %v2035
    %v2038 = vtanh.pop %v2037
    %v2039 = vmul.f32 %v2030, %v2038
    %2041 = vrot.lane.b32.xlu0 %v2039, 64
    %v2042 = vpop.permute.xlu0 %2041
    %2044 = vst.msk [vmem:[#allocation3 + $0x28] sm:$0xff] %vm269, %v2042
    %2045 = vst.msk [vmem:[#allocation3 + $0x10] sm:$0xff] %vm526, %v2039
    %v2046 = vsel %vm269, %v2042, 0
    %2048 = vmatprep.subr.mxu0 %v1415
    %2049 = vmatpush1.msra.mxu0 %v1414
    %2050 = vmatprep.subr.mxu0 %v1417
    %2051 = vmatpush1.msra.mxu0 %v1416
    %2052 = vmatprep.subr.mxu0 %v1419
    %2053 = vmatpush1.msra.mxu0 %v1418
    %2054 = vmatprep.subr.mxu0 %v1421
    %2055 = vmatpush1.msra.mxu0 %v1420
    %2056 = vmatprep.subr.mxu0 %v1423
    %2057 = vmatpush1.msra.mxu0 %v1422
    %2058 = vmatprep.subr.mxu0 %v1425
    %2059 = vmatpush1.msra.mxu0 %v1424
    %2060 = vmatprep.subr.mxu0 %v1427
    %2061 = vmatpush1.msra.mxu0 %v1426
    %2062 = vmatprep.subr.mxu0 %v1429
    %2063 = vmatpush1.msra.mxu0 %v1428
    %2064 = vmatprep.subr.mxu0 0.0
    %2065 = vmatpush1.msra.mxu0 0.0
    %2066 = vmatprep.subr.mxu0 0.0
    %2067 = vmatpush1.msra.mxu0 0.0
    %2068 = vmatprep.subr.mxu0 0.0
    %2069 = vmatpush1.msra.mxu0 0.0
    %2070 = vmatprep.subr.mxu0 0.0
    %2071 = vmatpush1.msra.mxu0 0.0
    %2072 = vmatprep.subr.mxu0 0.0
    %2073 = vmatpush1.msra.mxu0 0.0
    %2074 = vmatprep.subr.mxu0 0.0
    %2075 = vmatpush1.msra.mxu0 0.0
    %2076 = vmatprep.subr.mxu0 0.0
    %2077 = vmatpush1.msra.mxu0 0.0
    %2078 = vmatprep.subr.mxu0 0.0
    %2079 = vmatpush1.msra.mxu0 0.0
    %2080 = vmatprep.subr.mxu0 0.0
    %2081 = vmatpush1.msra.mxu0 0.0
    %2082 = vmatprep.subr.mxu0 0.0
    %2083 = vmatpush1.msra.mxu0 0.0
    %2084 = vmatprep.subr.mxu0 0.0
    %2085 = vmatpush1.msra.mxu0 0.0
    %2086 = vmatprep.subr.mxu0 0.0
    %2087 = vmatpush1.msra.mxu0 0.0
    %2088 = vmatprep.subr.mxu0 0.0
    %2089 = vmatpush1.msra.mxu0 0.0
    %2090 = vmatprep.subr.mxu0 0.0
    %2091 = vmatpush1.msra.mxu0 0.0
    %2092 = vmatprep.subr.mxu0 0.0
    %2093 = vmatpush1.msra.mxu0 0.0
    %2094 = vmatprep.subr.mxu0 0.0
    %2095 = vmatpush1.msra.mxu0 0.0
    %2096 = vmatprep.subr.mxu0 0.0
    %2097 = vmatpush1.msra.mxu0 0.0
    %2098 = vmatprep.subr.mxu0 0.0
    %2099 = vmatpush1.msra.mxu0 0.0
    %2100 = vmatprep.subr.mxu0 0.0
    %2101 = vmatpush1.msra.mxu0 0.0
    %2102 = vmatprep.subr.mxu0 0.0
    %2103 = vmatpush1.msra.mxu0 0.0
    %2104 = vmatprep.subr.mxu0 0.0
    %2105 = vmatpush1.msra.mxu0 0.0
    %2106 = vmatprep.subr.mxu0 0.0
    %2107 = vmatpush1.msra.mxu0 0.0
    %2108 = vmatprep.subr.mxu0 0.0
    %2109 = vmatpush1.msra.mxu0 0.0
    %2110 = vmatprep.subr.mxu0 0.0
    %2111 = vmatpush1.msra.mxu0 0.0
    %2112 = vmatprep.mubr.f32.mxu0 0.0
    %2113 = vmatmul.mubr.f32.gmra.mrb[0].mxu0 %v2046
    %v2114 = vpop.f32.mrb[0].mxu0
    %v2115 = vadd.f32 0.0, %v2114
    %v2116 = vpop.f32.mrb[0].mxu0
    %v2117 = vadd.f32 0.0, %v2116
    %2118 = vdwg.mxu0
    %v2119 = vadd.f32 %v1404, %v2115
    %v2120 = vadd.f32 %v1406, %v2117
    %v2121 = vxor.u32 %v2119, 2147483648
    %v2122 = vmul.f32 %v2121, 1.442695
    %v2123 = vpow.pop %v2122
    %v2124 = vadd.f32 %v2123, 1.0
    %v2125 = vrcp.pop %v2124
    %v2126 = vmul.f32 1.0, %v2125
    %v2127 = vtanh.pop %v2120
    %v2128 = vxor.u32 %v2120, 2147483648
    %v2129 = vmul.f32 %v2128, 1.442695
    %v2130 = vpow.pop %v2129
    %v2131 = vadd.f32 %v2130, 1.0
    %v2132 = vrcp.pop %v2131
    %v2133 = vmul.f32 1.0, %v2132
    %v2134 = vmul.f32 %v2126, %v2037
    %v2135 = vmul.f32 %v2126, %v2127
    %2137 = vrot.lane.b32.xlu0 %v2135, 64
    %v2138 = vpop.permute.xlu0 %2137
    %v2140 = vadd.f32 %v2134, %v2138
    %v2141 = vtanh.pop %v2140
    %v2142 = vmul.f32 %v2133, %v2141
    %2144 = vrot.lane.b32.xlu0 %v2142, 64
    %v2145 = vpop.permute.xlu0 %2144
    %2147 = vst.msk [vmem:[#allocation3 + $0x30] sm:$0xff] %vm269, %v2145
    %2148 = vst.msk [vmem:[#allocation3 + $0x8] sm:$0xff] %vm526, %v2142
    %v2149 = vsel %vm269, %v2145, 0
    %2151 = vmatprep.subr.mxu0 %v1415
    %2152 = vmatpush1.msra.mxu0 %v1414
    %2153 = vmatprep.subr.mxu0 %v1417
    %2154 = vmatpush1.msra.mxu0 %v1416
    %2155 = vmatprep.subr.mxu0 %v1419
    %2156 = vmatpush1.msra.mxu0 %v1418
    %2157 = vmatprep.subr.mxu0 %v1421
    %2158 = vmatpush1.msra.mxu0 %v1420
    %2159 = vmatprep.subr.mxu0 %v1423
    %2160 = vmatpush1.msra.mxu0 %v1422
    %2161 = vmatprep.subr.mxu0 %v1425
    %2162 = vmatpush1.msra.mxu0 %v1424
    %2163 = vmatprep.subr.mxu0 %v1427
    %2164 = vmatpush1.msra.mxu0 %v1426
    %2165 = vmatprep.subr.mxu0 %v1429
    %2166 = vmatpush1.msra.mxu0 %v1428
    %2167 = vmatprep.subr.mxu0 0.0
    %2168 = vmatpush1.msra.mxu0 0.0
    %2169 = vmatprep.subr.mxu0 0.0
    %2170 = vmatpush1.msra.mxu0 0.0
    %2171 = vmatprep.subr.mxu0 0.0
    %2172 = vmatpush1.msra.mxu0 0.0
    %2173 = vmatprep.subr.mxu0 0.0
    %2174 = vmatpush1.msra.mxu0 0.0
    %2175 = vmatprep.subr.mxu0 0.0
    %2176 = vmatpush1.msra.mxu0 0.0
    %2177 = vmatprep.subr.mxu0 0.0
    %2178 = vmatpush1.msra.mxu0 0.0
    %2179 = vmatprep.subr.mxu0 0.0
    %2180 = vmatpush1.msra.mxu0 0.0
    %2181 = vmatprep.subr.mxu0 0.0
    %2182 = vmatpush1.msra.mxu0 0.0
    %2183 = vmatprep.subr.mxu0 0.0
    %2184 = vmatpush1.msra.mxu0 0.0
    %2185 = vmatprep.subr.mxu0 0.0
    %2186 = vmatpush1.msra.mxu0 0.0
    %2187 = vmatprep.subr.mxu0 0.0
    %2188 = vmatpush1.msra.mxu0 0.0
    %2189 = vmatprep.subr.mxu0 0.0
    %2190 = vmatpush1.msra.mxu0 0.0
    %2191 = vmatprep.subr.mxu0 0.0
    %2192 = vmatpush1.msra.mxu0 0.0
    %2193 = vmatprep.subr.mxu0 0.0
    %2194 = vmatpush1.msra.mxu0 0.0
    %2195 = vmatprep.subr.mxu0 0.0
    %2196 = vmatpush1.msra.mxu0 0.0
    %2197 = vmatprep.subr.mxu0 0.0
    %2198 = vmatpush1.msra.mxu0 0.0
    %2199 = vmatprep.subr.mxu0 0.0
    %2200 = vmatpush1.msra.mxu0 0.0
    %2201 = vmatprep.subr.mxu0 0.0
    %2202 = vmatpush1.msra.mxu0 0.0
    %2203 = vmatprep.subr.mxu0 0.0
    %2204 = vmatpush1.msra.mxu0 0.0
    %2205 = vmatprep.subr.mxu0 0.0
    %2206 = vmatpush1.msra.mxu0 0.0
    %2207 = vmatprep.subr.mxu0 0.0
    %2208 = vmatpush1.msra.mxu0 0.0
    %2209 = vmatprep.subr.mxu0 0.0
    %2210 = vmatpush1.msra.mxu0 0.0
    %2211 = vmatprep.subr.mxu0 0.0
    %2212 = vmatpush1.msra.mxu0 0.0
    %2213 = vmatprep.subr.mxu0 0.0
    %2214 = vmatpush1.msra.mxu0 0.0
    %2215 = vmatprep.mubr.f32.mxu0 0.0
    %2216 = vmatmul.mubr.f32.gmra.mrb[0].mxu0 %v2149
    %v2217 = vpop.f32.mrb[0].mxu0
    %v2218 = vadd.f32 0.0, %v2217
    %v2219 = vpop.f32.mrb[0].mxu0
    %v2220 = vadd.f32 0.0, %v2219
    %2221 = vdwg.mxu0
    %v2222 = vadd.f32 %v1410, %v2218
    %v2223 = vadd.f32 %v1412, %v2220
    %v2224 = vxor.u32 %v2222, 2147483648
    %v2225 = vmul.f32 %v2224, 1.442695
    %v2226 = vpow.pop %v2225
    %v2227 = vadd.f32 %v2226, 1.0
    %v2228 = vrcp.pop %v2227
    %v2229 = vmul.f32 1.0, %v2228
    %v2230 = vtanh.pop %v2223
    %v2231 = vxor.u32 %v2223, 2147483648
    %v2232 = vmul.f32 %v2231, 1.442695
    %v2233 = vpow.pop %v2232
    %v2234 = vadd.f32 %v2233, 1.0
    %v2235 = vrcp.pop %v2234
    %v2236 = vmul.f32 1.0, %v2235
    %v2237 = vmul.f32 %v2229, %v2140
    %v2238 = vmul.f32 %v2229, %v2230
    %2240 = vrot.lane.b32.xlu0 %v2238, 64
    %v2241 = vpop.permute.xlu0 %2240
    %v2243 = vadd.f32 %v2237, %v2241
    %v2244 = vtanh.pop %v2243
    %v2245 = vmul.f32 %v2236, %v2244
    %2247 = vrot.lane.b32.xlu0 %v2245, 64
    %v2248 = vpop.permute.xlu0 %2247
    %2250 = vst.msk [vmem:[#allocation3 + $0x38] sm:$0xff] %vm269, %v2248
    %2251 = vst.msk [vmem:[#allocation3] sm:$0xff] %vm526, %v2245
    %v2252 = vld [vmem:[#allocation3] sm:$0xff]
    %v2253 = vld [vmem:[#allocation3 + $0x8] sm:$0xff]
    %v2254 = vld [vmem:[#allocation3 + $0x10] sm:$0xff]
    %v2255 = vld [vmem:[#allocation3 + $0x18] sm:$0xff]
    %v2256 = vld [vmem:[#allocation3 + $0x20] sm:$0xff]
    %v2257 = vld [vmem:[#allocation3 + $0x28] sm:$0xff]
    %v2258 = vld [vmem:[#allocation3 + $0x30] sm:$0xff]
    %v2259 = vld [vmem:[#allocation3 + $0x38] sm:$0xff]
    %v2260 = vld [vmem:[#allocation15] sm:$0xff]
    %v2261 = vld [vmem:[#allocation15 + $0x8] sm:$0xff]
    %v2262 = vld [vmem:[#allocation15 + $0x10] sm:$0xff]
    %v2263 = vld [vmem:[#allocation15 + $0x18] sm:$0xff]
    %v2264 = vld [vmem:[#allocation15 + $0x20] sm:$0xff]
    %v2265 = vld [vmem:[#allocation15 + $0x28] sm:$0xff]
    %v2266 = vld [vmem:[#allocation15 + $0x30] sm:$0xff]
    %v2267 = vld [vmem:[#allocation15 + $0x38] sm:$0xff]
    %v2268 = vld [vmem:[#allocation15 + $0x40] sm:$0xff]
    %v2269 = vld [vmem:[#allocation15 + $0x48] sm:$0xff]
    %v2270 = vld [vmem:[#allocation15 + $0x50] sm:$0xff]
    %v2271 = vld [vmem:[#allocation15 + $0x58] sm:$0xff]
    %v2272 = vld [vmem:[#allocation15 + $0x60] sm:$0xff]
    %v2273 = vld [vmem:[#allocation15 + $0x68] sm:$0xff]
    %v2274 = vld [vmem:[#allocation15 + $0x70] sm:$0xff]
    %v2275 = vld [vmem:[#allocation15 + $0x78] sm:$0xff]
    %v2276 = vld [vmem:[#allocation15 + $0x80] sm:$0xff]
    %v2277 = vld [vmem:[#allocation15 + $0x88] sm:$0xff]
    %v2278 = vld [vmem:[#allocation15 + $0x90] sm:$0xff]
    %v2279 = vld [vmem:[#allocation15 + $0x98] sm:$0xff]
    %v2280 = vld [vmem:[#allocation15 + $0xa0] sm:$0xff]
    %v2281 = vld [vmem:[#allocation15 + $0xa8] sm:$0xff]
    %v2282 = vld [vmem:[#allocation15 + $0xb0] sm:$0xff]
    %v2283 = vld [vmem:[#allocation15 + $0xb8] sm:$0xff]
    %v2284 = vld [vmem:[#allocation15 + $0xc0] sm:$0xff]
    %v2285 = vld [vmem:[#allocation15 + $0xc8] sm:$0xff]
    %v2286 = vld [vmem:[#allocation15 + $0xd0] sm:$0xff]
    %v2287 = vld [vmem:[#allocation15 + $0xd8] sm:$0xff]
    %v2288 = vld [vmem:[#allocation15 + $0xe0] sm:$0xff]
    %v2289 = vld [vmem:[#allocation15 + $0xe8] sm:$0xff]
    %v2290 = vld [vmem:[#allocation15 + $0xf0] sm:$0xff]
    %v2291 = vld [vmem:[#allocation15 + $0xf8] sm:$0xff]
    %v2292 = vld [vmem:[#allocation18] sm:$0x3]
    %v2294 = vlaneseq
    %v2295 = vshrl.u32 %v2294, 7
    %v2296 = vsub.s32 0, %v2295
    %v2297 = vrot.slane %v2292, %v2296
    %v2298 = vlaneseq
    %v2299 = vshrl.u32 %v2298, 7
    %v2300 = vsub.s32 1, %v2299
    %v2301 = vrot.slane %v2292, %v2300
    %2304 = vmatprep.subr.mxu0 %v2261
    %2305 = vmatpush1.msra.mxu0 %v2260
    %2306 = vmatprep.subr.mxu0 %v2263
    %2307 = vmatpush1.msra.mxu0 %v2262
    %2308 = vmatprep.subr.mxu0 %v2265
    %2309 = vmatpush1.msra.mxu0 %v2264
    %2310 = vmatprep.subr.mxu0 %v2267
    %2311 = vmatpush1.msra.mxu0 %v2266
    %2312 = vmatprep.subr.mxu0 %v2269
    %2313 = vmatpush1.msra.mxu0 %v2268
    %2314 = vmatprep.subr.mxu0 %v2271
    %2315 = vmatpush1.msra.mxu0 %v2270
    %2316 = vmatprep.subr.mxu0 %v2273
    %2317 = vmatpush1.msra.mxu0 %v2272
    %2318 = vmatprep.subr.mxu0 %v2275
    %2319 = vmatpush1.msra.mxu0 %v2274
    %2320 = vmatprep.subr.mxu0 %v2277
    %2321 = vmatpush1.msra.mxu0 %v2276
    %2322 = vmatprep.subr.mxu0 %v2279
    %2323 = vmatpush1.msra.mxu0 %v2278
    %2324 = vmatprep.subr.mxu0 %v2281
    %2325 = vmatpush1.msra.mxu0 %v2280
    %2326 = vmatprep.subr.mxu0 %v2283
    %2327 = vmatpush1.msra.mxu0 %v2282
    %2328 = vmatprep.subr.mxu0 %v2285
    %2329 = vmatpush1.msra.mxu0 %v2284
    %2330 = vmatprep.subr.mxu0 %v2287
    %2331 = vmatpush1.msra.mxu0 %v2286
    %2332 = vmatprep.subr.mxu0 %v2289
    %2333 = vmatpush1.msra.mxu0 %v2288
    %2334 = vmatprep.subr.mxu0 %v2291
    %2335 = vmatpush1.msra.mxu0 %v2290
    %2336 = vmatprep.subr.mxu0 0.0
    %2337 = vmatpush1.msra.mxu0 0.0
    %2338 = vmatprep.subr.mxu0 0.0
    %2339 = vmatpush1.msra.mxu0 0.0
    %2340 = vmatprep.subr.mxu0 0.0
    %2341 = vmatpush1.msra.mxu0 0.0
    %2342 = vmatprep.subr.mxu0 0.0
    %2343 = vmatpush1.msra.mxu0 0.0
    %2344 = vmatprep.subr.mxu0 0.0
    %2345 = vmatpush1.msra.mxu0 0.0
    %2346 = vmatprep.subr.mxu0 0.0
    %2347 = vmatpush1.msra.mxu0 0.0
    %2348 = vmatprep.subr.mxu0 0.0
    %2349 = vmatpush1.msra.mxu0 0.0
    %2350 = vmatprep.subr.mxu0 0.0
    %2351 = vmatpush1.msra.mxu0 0.0
    %2352 = vmatprep.subr.mxu0 0.0
    %2353 = vmatpush1.msra.mxu0 0.0
    %2354 = vmatprep.subr.mxu0 0.0
    %2355 = vmatpush1.msra.mxu0 0.0
    %2356 = vmatprep.subr.mxu0 0.0
    %2357 = vmatpush1.msra.mxu0 0.0
    %2358 = vmatprep.subr.mxu0 0.0
    %2359 = vmatpush1.msra.mxu0 0.0
    %2360 = vmatprep.subr.mxu0 0.0
    %2361 = vmatpush1.msra.mxu0 0.0
    %2362 = vmatprep.subr.mxu0 0.0
    %2363 = vmatpush1.msra.mxu0 0.0
    %2364 = vmatprep.subr.mxu0 0.0
    %2365 = vmatpush1.msra.mxu0 0.0
    %2366 = vmatprep.subr.mxu0 0.0
    %2367 = vmatpush1.msra.mxu0 0.0
    %2368 = vmatprep.mubr.f32.mxu0 0.0
    %2369 = vmatmul.mubr.f32.gmra.mrb[0].mxu0 %v2252
    %v2370 = vpop.f32.mrb[0].mxu0
    %v2371 = vadd.f32 %v2297, %v2370
    %v2372 = vpop.f32.mrb[0].mxu0
    %v2373 = vadd.f32 %v2301, %v2372
    %2374 = vmatprep.mubr.f32.mxu0 0.0
    %2375 = vmatmul.mubr.f32.gmra.mrb[0].mxu0 %v2253
    %v2376 = vpop.f32.mrb[0].mxu0
    %v2377 = vadd.f32 %v2297, %v2376
    %v2378 = vpop.f32.mrb[0].mxu0
    %v2379 = vadd.f32 %v2301, %v2378
    %2380 = vmatprep.mubr.f32.mxu0 0.0
    %2381 = vmatmul.mubr.f32.gmra.mrb[0].mxu0 %v2254
    %v2382 = vpop.f32.mrb[0].mxu0
    %v2383 = vadd.f32 %v2297, %v2382
    %v2384 = vpop.f32.mrb[0].mxu0
    %v2385 = vadd.f32 %v2301, %v2384
    %2386 = vmatprep.mubr.f32.mxu0 0.0
    %2387 = vmatmul.mubr.f32.gmra.mrb[0].mxu0 %v2255
    %v2388 = vpop.f32.mrb[0].mxu0
    %v2389 = vadd.f32 %v2297, %v2388
    %v2390 = vpop.f32.mrb[0].mxu0
    %v2391 = vadd.f32 %v2301, %v2390
    %2392 = vmatprep.mubr.f32.mxu0 0.0
    %2393 = vmatmul.mubr.f32.gmra.mrb[0].mxu0 %v2256
    %v2394 = vpop.f32.mrb[0].mxu0
    %v2395 = vadd.f32 %v2297, %v2394
    %v2396 = vpop.f32.mrb[0].mxu0
    %v2397 = vadd.f32 %v2301, %v2396
    %2398 = vmatprep.mubr.f32.mxu0 0.0
    %2399 = vmatmul.mubr.f32.gmra.mrb[0].mxu0 %v2257
    %v2400 = vpop.f32.mrb[0].mxu0
    %v2401 = vadd.f32 %v2297, %v2400
    %v2402 = vpop.f32.mrb[0].mxu0
    %v2403 = vadd.f32 %v2301, %v2402
    %2404 = vmatprep.mubr.f32.mxu0 0.0
    %2405 = vmatmul.mubr.f32.gmra.mrb[0].mxu0 %v2258
    %v2406 = vpop.f32.mrb[0].mxu0
    %v2407 = vadd.f32 %v2297, %v2406
    %v2408 = vpop.f32.mrb[0].mxu0
    %v2409 = vadd.f32 %v2301, %v2408
    %2410 = vmatprep.mubr.f32.mxu0 0.0
    %2411 = vmatmul.mubr.f32.gmra.mrb[0].mxu0 %v2259
    %v2412 = vpop.f32.mrb[0].mxu0
    %v2413 = vadd.f32 %v2297, %v2412
    %v2414 = vpop.f32.mrb[0].mxu0
    %v2415 = vadd.f32 %v2301, %v2414
    %2416 = vdwg.mxu0
    %v2417 = vld [vmem:[#allocation16] sm:$0xff]
    %v2418 = vld [vmem:[#allocation16 + $0x8] sm:$0xff]
    %v2419 = vld [vmem:[#allocation16 + $0x10] sm:$0xff]
    %v2420 = vld [vmem:[#allocation16 + $0x18] sm:$0xff]
    %v2421 = vld [vmem:[#allocation16 + $0x20] sm:$0xff]
    %v2422 = vld [vmem:[#allocation16 + $0x28] sm:$0xff]
    %v2423 = vld [vmem:[#allocation16 + $0x30] sm:$0xff]
    %v2424 = vld [vmem:[#allocation16 + $0x38] sm:$0xff]
    %v2425 = vld [vmem:[#allocation16 + $0x40] sm:$0xff]
    %v2426 = vld [vmem:[#allocation16 + $0x48] sm:$0xff]
    %v2427 = vld [vmem:[#allocation16 + $0x50] sm:$0xff]
    %v2428 = vld [vmem:[#allocation16 + $0x58] sm:$0xff]
    %v2429 = vld [vmem:[#allocation16 + $0x60] sm:$0xff]
    %v2430 = vld [vmem:[#allocation16 + $0x68] sm:$0xff]
    %v2431 = vld [vmem:[#allocation16 + $0x70] sm:$0xff]
    %v2432 = vld [vmem:[#allocation16 + $0x78] sm:$0xff]
    %2433 = vmatprep.subr.mxu0 %v2418
    %2434 = vmatpush1.msra.mxu0 %v2417
    %2435 = vmatprep.subr.mxu0 %v2420
    %2436 = vmatpush1.msra.mxu0 %v2419
    %2437 = vmatprep.subr.mxu0 %v2422
    %2438 = vmatpush1.msra.mxu0 %v2421
    %2439 = vmatprep.subr.mxu0 %v2424
    %2440 = vmatpush1.msra.mxu0 %v2423
    %2441 = vmatprep.subr.mxu0 %v2426
    %2442 = vmatpush1.msra.mxu0 %v2425
    %2443 = vmatprep.subr.mxu0 %v2428
    %2444 = vmatpush1.msra.mxu0 %v2427
    %2445 = vmatprep.subr.mxu0 %v2430
    %2446 = vmatpush1.msra.mxu0 %v2429
    %2447 = vmatprep.subr.mxu0 %v2432
    %2448 = vmatpush1.msra.mxu0 %v2431
    %2449 = vmatprep.subr.mxu0 0.0
    %2450 = vmatpush1.msra.mxu0 0.0
    %2451 = vmatprep.subr.mxu0 0.0
    %2452 = vmatpush1.msra.mxu0 0.0
    %2453 = vmatprep.subr.mxu0 0.0
    %2454 = vmatpush1.msra.mxu0 0.0
    %2455 = vmatprep.subr.mxu0 0.0
    %2456 = vmatpush1.msra.mxu0 0.0
    %2457 = vmatprep.subr.mxu0 0.0
    %2458 = vmatpush1.msra.mxu0 0.0
    %2459 = vmatprep.subr.mxu0 0.0
    %2460 = vmatpush1.msra.mxu0 0.0
    %2461 = vmatprep.subr.mxu0 0.0
    %2462 = vmatpush1.msra.mxu0 0.0
    %2463 = vmatprep.subr.mxu0 0.0
    %2464 = vmatpush1.msra.mxu0 0.0
    %2465 = vmatprep.subr.mxu0 0.0
    %2466 = vmatpush1.msra.mxu0 0.0
    %2467 = vmatprep.subr.mxu0 0.0
    %2468 = vmatpush1.msra.mxu0 0.0
    %2469 = vmatprep.subr.mxu0 0.0
    %2470 = vmatpush1.msra.mxu0 0.0
    %2471 = vmatprep.subr.mxu0 0.0
    %2472 = vmatpush1.msra.mxu0 0.0
    %2473 = vmatprep.subr.mxu0 0.0
    %2474 = vmatpush1.msra.mxu0 0.0
    %2475 = vmatprep.subr.mxu0 0.0
    %2476 = vmatpush1.msra.mxu0 0.0
    %2477 = vmatprep.subr.mxu0 0.0
    %2478 = vmatpush1.msra.mxu0 0.0
    %2479 = vmatprep.subr.mxu0 0.0
    %2480 = vmatpush1.msra.mxu0 0.0
    %2481 = vmatprep.subr.mxu0 0.0
    %2482 = vmatpush1.msra.mxu0 0.0
    %2483 = vmatprep.subr.mxu0 0.0
    %2484 = vmatpush1.msra.mxu0 0.0
    %2485 = vmatprep.subr.mxu0 0.0
    %2486 = vmatpush1.msra.mxu0 0.0
    %2487 = vmatprep.subr.mxu0 0.0
    %2488 = vmatpush1.msra.mxu0 0.0
    %2489 = vmatprep.subr.mxu0 0.0
    %2490 = vmatpush1.msra.mxu0 0.0
    %2491 = vmatprep.subr.mxu0 0.0
    %2492 = vmatpush1.msra.mxu0 0.0
    %2493 = vmatprep.subr.mxu0 0.0
    %2494 = vmatpush1.msra.mxu0 0.0
    %2495 = vmatprep.subr.mxu0 0.0
    %2496 = vmatpush1.msra.mxu0 0.0
    %2497 = vmatprep.mubr.f32.mxu0 0.0
    %2498 = vmatmul.mubr.f32.gmra.mrb[0].mxu0 %v424
    %v2499 = vpop.f32.mrb[0].mxu0
    %v2500 = vadd.f32 0.0, %v2499
    %v2501 = vpop.f32.mrb[0].mxu0
    %v2502 = vadd.f32 0.0, %v2501
    %2503 = vdwg.mxu0
    %v2504 = vadd.f32 %v2371, %v2500
    %v2505 = vadd.f32 %v2373, %v2502
    %v2506 = vxor.u32 %v2504, 2147483648
    %v2507 = vmul.f32 %v2506, 1.442695
    %v2508 = vpow.pop %v2507
    %v2509 = vadd.f32 %v2508, 1.0
    %v2510 = vrcp.pop %v2509
    %v2511 = vmul.f32 1.0, %v2510
    %v2512 = vtanh.pop %v2505
    %v2513 = vxor.u32 %v2505, 2147483648
    %v2514 = vmul.f32 %v2513, 1.442695
    %v2515 = vpow.pop %v2514
    %v2516 = vadd.f32 %v2515, 1.0
    %v2517 = vrcp.pop %v2516
    %v2518 = vmul.f32 1.0, %v2517
    %v2519 = vmul.f32 %v2511, 0.0
    %v2520 = vmul.f32 %v2511, %v2512
    %2522 = vrot.lane.b32.xlu0 %v2520, 64
    %v2523 = vpop.permute.xlu0 %2522
    %v2525 = vadd.f32 %v2519, %v2523
    %v2526 = vtanh.pop %v2525
    %v2527 = vmul.f32 %v2518, %v2526
    %2529 = vrot.lane.b32.xlu0 %v2527, 64
    %v2530 = vpop.permute.xlu0 %2529
    %2532 = vst.msk [vmem:[#allocation4] sm:$0xff] %vm269, %v2530
    %2533 = vst.msk [vmem:[#allocation4 + $0x38] sm:$0xff] %vm526, %v2527
    %v2534 = vsel %vm269, %v2530, 0
    %2536 = vmatprep.subr.mxu0 %v2418
    %2537 = vmatpush1.msra.mxu0 %v2417
    %2538 = vmatprep.subr.mxu0 %v2420
    %2539 = vmatpush1.msra.mxu0 %v2419
    %2540 = vmatprep.subr.mxu0 %v2422
    %2541 = vmatpush1.msra.mxu0 %v2421
    %2542 = vmatprep.subr.mxu0 %v2424
    %2543 = vmatpush1.msra.mxu0 %v2423
    %2544 = vmatprep.subr.mxu0 %v2426
    %2545 = vmatpush1.msra.mxu0 %v2425
    %2546 = vmatprep.subr.mxu0 %v2428
    %2547 = vmatpush1.msra.mxu0 %v2427
    %2548 = vmatprep.subr.mxu0 %v2430
    %2549 = vmatpush1.msra.mxu0 %v2429
    %2550 = vmatprep.subr.mxu0 %v2432
    %2551 = vmatpush1.msra.mxu0 %v2431
    %2552 = vmatprep.subr.mxu0 0.0
    %2553 = vmatpush1.msra.mxu0 0.0
    %2554 = vmatprep.subr.mxu0 0.0
    %2555 = vmatpush1.msra.mxu0 0.0
    %2556 = vmatprep.subr.mxu0 0.0
    %2557 = vmatpush1.msra.mxu0 0.0
    %2558 = vmatprep.subr.mxu0 0.0
    %2559 = vmatpush1.msra.mxu0 0.0
    %2560 = vmatprep.subr.mxu0 0.0
    %2561 = vmatpush1.msra.mxu0 0.0
    %2562 = vmatprep.subr.mxu0 0.0
    %2563 = vmatpush1.msra.mxu0 0.0
    %2564 = vmatprep.subr.mxu0 0.0
    %2565 = vmatpush1.msra.mxu0 0.0
    %2566 = vmatprep.subr.mxu0 0.0
    %2567 = vmatpush1.msra.mxu0 0.0
    %2568 = vmatprep.subr.mxu0 0.0
    %2569 = vmatpush1.msra.mxu0 0.0
    %2570 = vmatprep.subr.mxu0 0.0
    %2571 = vmatpush1.msra.mxu0 0.0
    %2572 = vmatprep.subr.mxu0 0.0
    %2573 = vmatpush1.msra.mxu0 0.0
    %2574 = vmatprep.subr.mxu0 0.0
    %2575 = vmatpush1.msra.mxu0 0.0
    %2576 = vmatprep.subr.mxu0 0.0
    %2577 = vmatpush1.msra.mxu0 0.0
    %2578 = vmatprep.subr.mxu0 0.0
    %2579 = vmatpush1.msra.mxu0 0.0
    %2580 = vmatprep.subr.mxu0 0.0
    %2581 = vmatpush1.msra.mxu0 0.0
    %2582 = vmatprep.subr.mxu0 0.0
    %2583 = vmatpush1.msra.mxu0 0.0
    %2584 = vmatprep.subr.mxu0 0.0
    %2585 = vmatpush1.msra.mxu0 0.0
    %2586 = vmatprep.subr.mxu0 0.0
    %2587 = vmatpush1.msra.mxu0 0.0
    %2588 = vmatprep.subr.mxu0 0.0
    %2589 = vmatpush1.msra.mxu0 0.0
    %2590 = vmatprep.subr.mxu0 0.0
    %2591 = vmatpush1.msra.mxu0 0.0
    %2592 = vmatprep.subr.mxu0 0.0
    %2593 = vmatpush1.msra.mxu0 0.0
    %2594 = vmatprep.subr.mxu0 0.0
    %2595 = vmatpush1.msra.mxu0 0.0
    %2596 = vmatprep.subr.mxu0 0.0
    %2597 = vmatpush1.msra.mxu0 0.0
    %2598 = vmatprep.subr.mxu0 0.0
    %2599 = vmatpush1.msra.mxu0 0.0
    %2600 = vmatprep.mubr.f32.mxu0 0.0
    %2601 = vmatmul.mubr.f32.gmra.mrb[0].mxu0 %v2534
    %v2602 = vpop.f32.mrb[0].mxu0
    %v2603 = vadd.f32 0.0, %v2602
    %v2604 = vpop.f32.mrb[0].mxu0
    %v2605 = vadd.f32 0.0, %v2604
    %2606 = vdwg.mxu0
    %v2607 = vadd.f32 %v2377, %v2603
    %v2608 = vadd.f32 %v2379, %v2605
    %v2609 = vxor.u32 %v2607, 2147483648
    %v2610 = vmul.f32 %v2609, 1.442695
    %v2611 = vpow.pop %v2610
    %v2612 = vadd.f32 %v2611, 1.0
    %v2613 = vrcp.pop %v2612
    %v2614 = vmul.f32 1.0, %v2613
    %v2615 = vtanh.pop %v2608
    %v2616 = vxor.u32 %v2608, 2147483648
    %v2617 = vmul.f32 %v2616, 1.442695
    %v2618 = vpow.pop %v2617
    %v2619 = vadd.f32 %v2618, 1.0
    %v2620 = vrcp.pop %v2619
    %v2621 = vmul.f32 1.0, %v2620
    %v2622 = vmul.f32 %v2614, %v2525
    %v2623 = vmul.f32 %v2614, %v2615
    %2625 = vrot.lane.b32.xlu0 %v2623, 64
    %v2626 = vpop.permute.xlu0 %2625
    %v2628 = vadd.f32 %v2622, %v2626
    %v2629 = vtanh.pop %v2628
    %v2630 = vmul.f32 %v2621, %v2629
    %2632 = vrot.lane.b32.xlu0 %v2630, 64
    %v2633 = vpop.permute.xlu0 %2632
    %2635 = vst.msk [vmem:[#allocation4 + $0x8] sm:$0xff] %vm269, %v2633
    %2636 = vst.msk [vmem:[#allocation4 + $0x30] sm:$0xff] %vm526, %v2630
    %v2637 = vsel %vm269, %v2633, 0
    %2639 = vmatprep.subr.mxu0 %v2418
    %2640 = vmatpush1.msra.mxu0 %v2417
    %2641 = vmatprep.subr.mxu0 %v2420
    %2642 = vmatpush1.msra.mxu0 %v2419
    %2643 = vmatprep.subr.mxu0 %v2422
    %2644 = vmatpush1.msra.mxu0 %v2421
    %2645 = vmatprep.subr.mxu0 %v2424
    %2646 = vmatpush1.msra.mxu0 %v2423
    %2647 = vmatprep.subr.mxu0 %v2426
    %2648 = vmatpush1.msra.mxu0 %v2425
    %2649 = vmatprep.subr.mxu0 %v2428
    %2650 = vmatpush1.msra.mxu0 %v2427
    %2651 = vmatprep.subr.mxu0 %v2430
    %2652 = vmatpush1.msra.mxu0 %v2429
    %2653 = vmatprep.subr.mxu0 %v2432
    %2654 = vmatpush1.msra.mxu0 %v2431
    %2655 = vmatprep.subr.mxu0 0.0
    %2656 = vmatpush1.msra.mxu0 0.0
    %2657 = vmatprep.subr.mxu0 0.0
    %2658 = vmatpush1.msra.mxu0 0.0
    %2659 = vmatprep.subr.mxu0 0.0
    %2660 = vmatpush1.msra.mxu0 0.0
    %2661 = vmatprep.subr.mxu0 0.0
    %2662 = vmatpush1.msra.mxu0 0.0
    %2663 = vmatprep.subr.mxu0 0.0
    %2664 = vmatpush1.msra.mxu0 0.0
    %2665 = vmatprep.subr.mxu0 0.0
    %2666 = vmatpush1.msra.mxu0 0.0
    %2667 = vmatprep.subr.mxu0 0.0
    %2668 = vmatpush1.msra.mxu0 0.0
    %2669 = vmatprep.subr.mxu0 0.0
    %2670 = vmatpush1.msra.mxu0 0.0
    %2671 = vmatprep.subr.mxu0 0.0
    %2672 = vmatpush1.msra.mxu0 0.0
    %2673 = vmatprep.subr.mxu0 0.0
    %2674 = vmatpush1.msra.mxu0 0.0
    %2675 = vmatprep.subr.mxu0 0.0
    %2676 = vmatpush1.msra.mxu0 0.0
    %2677 = vmatprep.subr.mxu0 0.0
    %2678 = vmatpush1.msra.mxu0 0.0
    %2679 = vmatprep.subr.mxu0 0.0
    %2680 = vmatpush1.msra.mxu0 0.0
    %2681 = vmatprep.subr.mxu0 0.0
    %2682 = vmatpush1.msra.mxu0 0.0
    %2683 = vmatprep.subr.mxu0 0.0
    %2684 = vmatpush1.msra.mxu0 0.0
    %2685 = vmatprep.subr.mxu0 0.0
    %2686 = vmatpush1.msra.mxu0 0.0
    %2687 = vmatprep.subr.mxu0 0.0
    %2688 = vmatpush1.msra.mxu0 0.0
    %2689 = vmatprep.subr.mxu0 0.0
    %2690 = vmatpush1.msra.mxu0 0.0
    %2691 = vmatprep.subr.mxu0 0.0
    %2692 = vmatpush1.msra.mxu0 0.0
    %2693 = vmatprep.subr.mxu0 0.0
    %2694 = vmatpush1.msra.mxu0 0.0
    %2695 = vmatprep.subr.mxu0 0.0
    %2696 = vmatpush1.msra.mxu0 0.0
    %2697 = vmatprep.subr.mxu0 0.0
    %2698 = vmatpush1.msra.mxu0 0.0
    %2699 = vmatprep.subr.mxu0 0.0
    %2700 = vmatpush1.msra.mxu0 0.0
    %2701 = vmatprep.subr.mxu0 0.0
    %2702 = vmatpush1.msra.mxu0 0.0
    %2703 = vmatprep.mubr.f32.mxu0 0.0
    %2704 = vmatmul.mubr.f32.gmra.mrb[0].mxu0 %v2637
    %v2705 = vpop.f32.mrb[0].mxu0
    %v2706 = vadd.f32 0.0, %v2705
    %v2707 = vpop.f32.mrb[0].mxu0
    %v2708 = vadd.f32 0.0, %v2707
    %2709 = vdwg.mxu0
    %v2710 = vadd.f32 %v2383, %v2706
    %v2711 = vadd.f32 %v2385, %v2708
    %v2712 = vxor.u32 %v2710, 2147483648
    %v2713 = vmul.f32 %v2712, 1.442695
    %v2714 = vpow.pop %v2713
    %v2715 = vadd.f32 %v2714, 1.0
    %v2716 = vrcp.pop %v2715
    %v2717 = vmul.f32 1.0, %v2716
    %v2718 = vtanh.pop %v2711
    %v2719 = vxor.u32 %v2711, 2147483648
    %v2720 = vmul.f32 %v2719, 1.442695
    %v2721 = vpow.pop %v2720
    %v2722 = vadd.f32 %v2721, 1.0
    %v2723 = vrcp.pop %v2722
    %v2724 = vmul.f32 1.0, %v2723
    %v2725 = vmul.f32 %v2717, %v2628
    %v2726 = vmul.f32 %v2717, %v2718
    %2728 = vrot.lane.b32.xlu0 %v2726, 64
    %v2729 = vpop.permute.xlu0 %2728
    %v2731 = vadd.f32 %v2725, %v2729
    %v2732 = vtanh.pop %v2731
    %v2733 = vmul.f32 %v2724, %v2732
    %2735 = vrot.lane.b32.xlu0 %v2733, 64
    %v2736 = vpop.permute.xlu0 %2735
    %2738 = vst.msk [vmem:[#allocation4 + $0x10] sm:$0xff] %vm269, %v2736
    %2739 = vst.msk [vmem:[#allocation4 + $0x28] sm:$0xff] %vm526, %v2733
    %v2740 = vsel %vm269, %v2736, 0
    %2742 = vmatprep.subr.mxu0 %v2418
    %2743 = vmatpush1.msra.mxu0 %v2417
    %2744 = vmatprep.subr.mxu0 %v2420
    %2745 = vmatpush1.msra.mxu0 %v2419
    %2746 = vmatprep.subr.mxu0 %v2422
    %2747 = vmatpush1.msra.mxu0 %v2421
    %2748 = vmatprep.subr.mxu0 %v2424
    %2749 = vmatpush1.msra.mxu0 %v2423
    %2750 = vmatprep.subr.mxu0 %v2426
    %2751 = vmatpush1.msra.mxu0 %v2425
    %2752 = vmatprep.subr.mxu0 %v2428
    %2753 = vmatpush1.msra.mxu0 %v2427
    %2754 = vmatprep.subr.mxu0 %v2430
    %2755 = vmatpush1.msra.mxu0 %v2429
    %2756 = vmatprep.subr.mxu0 %v2432
    %2757 = vmatpush1.msra.mxu0 %v2431
    %2758 = vmatprep.subr.mxu0 0.0
    %2759 = vmatpush1.msra.mxu0 0.0
    %2760 = vmatprep.subr.mxu0 0.0
    %2761 = vmatpush1.msra.mxu0 0.0
    %2762 = vmatprep.subr.mxu0 0.0
    %2763 = vmatpush1.msra.mxu0 0.0
    %2764 = vmatprep.subr.mxu0 0.0
    %2765 = vmatpush1.msra.mxu0 0.0
    %2766 = vmatprep.subr.mxu0 0.0
    %2767 = vmatpush1.msra.mxu0 0.0
    %2768 = vmatprep.subr.mxu0 0.0
    %2769 = vmatpush1.msra.mxu0 0.0
    %2770 = vmatprep.subr.mxu0 0.0
    %2771 = vmatpush1.msra.mxu0 0.0
    %2772 = vmatprep.subr.mxu0 0.0
    %2773 = vmatpush1.msra.mxu0 0.0
    %2774 = vmatprep.subr.mxu0 0.0
    %2775 = vmatpush1.msra.mxu0 0.0
    %2776 = vmatprep.subr.mxu0 0.0
    %2777 = vmatpush1.msra.mxu0 0.0
    %2778 = vmatprep.subr.mxu0 0.0
    %2779 = vmatpush1.msra.mxu0 0.0
    %2780 = vmatprep.subr.mxu0 0.0
    %2781 = vmatpush1.msra.mxu0 0.0
    %2782 = vmatprep.subr.mxu0 0.0
    %2783 = vmatpush1.msra.mxu0 0.0
    %2784 = vmatprep.subr.mxu0 0.0
    %2785 = vmatpush1.msra.mxu0 0.0
    %2786 = vmatprep.subr.mxu0 0.0
    %2787 = vmatpush1.msra.mxu0 0.0
    %2788 = vmatprep.subr.mxu0 0.0
    %2789 = vmatpush1.msra.mxu0 0.0
    %2790 = vmatprep.subr.mxu0 0.0
    %2791 = vmatpush1.msra.mxu0 0.0
    %2792 = vmatprep.subr.mxu0 0.0
    %2793 = vmatpush1.msra.mxu0 0.0
    %2794 = vmatprep.subr.mxu0 0.0
    %2795 = vmatpush1.msra.mxu0 0.0
    %2796 = vmatprep.subr.mxu0 0.0
    %2797 = vmatpush1.msra.mxu0 0.0
    %2798 = vmatprep.subr.mxu0 0.0
    %2799 = vmatpush1.msra.mxu0 0.0
    %2800 = vmatprep.subr.mxu0 0.0
    %2801 = vmatpush1.msra.mxu0 0.0
    %2802 = vmatprep.subr.mxu0 0.0
    %2803 = vmatpush1.msra.mxu0 0.0
    %2804 = vmatprep.subr.mxu0 0.0
    %2805 = vmatpush1.msra.mxu0 0.0
    %2806 = vmatprep.mubr.f32.mxu0 0.0
    %2807 = vmatmul.mubr.f32.gmra.mrb[0].mxu0 %v2740
    %v2808 = vpop.f32.mrb[0].mxu0
    %v2809 = vadd.f32 0.0, %v2808
    %v2810 = vpop.f32.mrb[0].mxu0
    %v2811 = vadd.f32 0.0, %v2810
    %2812 = vdwg.mxu0
    %v2813 = vadd.f32 %v2389, %v2809
    %v2814 = vadd.f32 %v2391, %v2811
    %v2815 = vxor.u32 %v2813, 2147483648
    %v2816 = vmul.f32 %v2815, 1.442695
    %v2817 = vpow.pop %v2816
    %v2818 = vadd.f32 %v2817, 1.0
    %v2819 = vrcp.pop %v2818
    %v2820 = vmul.f32 1.0, %v2819
    %v2821 = vtanh.pop %v2814
    %v2822 = vxor.u32 %v2814, 2147483648
    %v2823 = vmul.f32 %v2822, 1.442695
    %v2824 = vpow.pop %v2823
    %v2825 = vadd.f32 %v2824, 1.0
    %v2826 = vrcp.pop %v2825
    %v2827 = vmul.f32 1.0, %v2826
    %v2828 = vmul.f32 %v2820, %v2731
    %v2829 = vmul.f32 %v2820, %v2821
    %2831 = vrot.lane.b32.xlu0 %v2829, 64
    %v2832 = vpop.permute.xlu0 %2831
    %v2834 = vadd.f32 %v2828, %v2832
    %v2835 = vtanh.pop %v2834
    %v2836 = vmul.f32 %v2827, %v2835
    %2838 = vrot.lane.b32.xlu0 %v2836, 64
    %v2839 = vpop.permute.xlu0 %2838
    %2841 = vst.msk [vmem:[#allocation4 + $0x18] sm:$0xff] %vm269, %v2839
    %2842 = vst.msk [vmem:[#allocation4 + $0x20] sm:$0xff] %vm526, %v2836
    %v2843 = vsel %vm269, %v2839, 0
    %2845 = vmatprep.subr.mxu0 %v2418
    %2846 = vmatpush1.msra.mxu0 %v2417
    %2847 = vmatprep.subr.mxu0 %v2420
    %2848 = vmatpush1.msra.mxu0 %v2419
    %2849 = vmatprep.subr.mxu0 %v2422
    %2850 = vmatpush1.msra.mxu0 %v2421
    %2851 = vmatprep.subr.mxu0 %v2424
    %2852 = vmatpush1.msra.mxu0 %v2423
    %2853 = vmatprep.subr.mxu0 %v2426
    %2854 = vmatpush1.msra.mxu0 %v2425
    %2855 = vmatprep.subr.mxu0 %v2428
    %2856 = vmatpush1.msra.mxu0 %v2427
    %2857 = vmatprep.subr.mxu0 %v2430
    %2858 = vmatpush1.msra.mxu0 %v2429
    %2859 = vmatprep.subr.mxu0 %v2432
    %2860 = vmatpush1.msra.mxu0 %v2431
    %2861 = vmatprep.subr.mxu0 0.0
    %2862 = vmatpush1.msra.mxu0 0.0
    %2863 = vmatprep.subr.mxu0 0.0
    %2864 = vmatpush1.msra.mxu0 0.0
    %2865 = vmatprep.subr.mxu0 0.0
    %2866 = vmatpush1.msra.mxu0 0.0
    %2867 = vmatprep.subr.mxu0 0.0
    %2868 = vmatpush1.msra.mxu0 0.0
    %2869 = vmatprep.subr.mxu0 0.0
    %2870 = vmatpush1.msra.mxu0 0.0
    %2871 = vmatprep.subr.mxu0 0.0
    %2872 = vmatpush1.msra.mxu0 0.0
    %2873 = vmatprep.subr.mxu0 0.0
    %2874 = vmatpush1.msra.mxu0 0.0
    %2875 = vmatprep.subr.mxu0 0.0
    %2876 = vmatpush1.msra.mxu0 0.0
    %2877 = vmatprep.subr.mxu0 0.0
    %2878 = vmatpush1.msra.mxu0 0.0
    %2879 = vmatprep.subr.mxu0 0.0
    %2880 = vmatpush1.msra.mxu0 0.0
    %2881 = vmatprep.subr.mxu0 0.0
    %2882 = vmatpush1.msra.mxu0 0.0
    %2883 = vmatprep.subr.mxu0 0.0
    %2884 = vmatpush1.msra.mxu0 0.0
    %2885 = vmatprep.subr.mxu0 0.0
    %2886 = vmatpush1.msra.mxu0 0.0
    %2887 = vmatprep.subr.mxu0 0.0
    %2888 = vmatpush1.msra.mxu0 0.0
    %2889 = vmatprep.subr.mxu0 0.0
    %2890 = vmatpush1.msra.mxu0 0.0
    %2891 = vmatprep.subr.mxu0 0.0
    %2892 = vmatpush1.msra.mxu0 0.0
    %2893 = vmatprep.subr.mxu0 0.0
    %2894 = vmatpush1.msra.mxu0 0.0
    %2895 = vmatprep.subr.mxu0 0.0
    %2896 = vmatpush1.msra.mxu0 0.0
    %2897 = vmatprep.subr.mxu0 0.0
    %2898 = vmatpush1.msra.mxu0 0.0
    %2899 = vmatprep.subr.mxu0 0.0
    %2900 = vmatpush1.msra.mxu0 0.0
    %2901 = vmatprep.subr.mxu0 0.0
    %2902 = vmatpush1.msra.mxu0 0.0
    %2903 = vmatprep.subr.mxu0 0.0
    %2904 = vmatpush1.msra.mxu0 0.0
    %2905 = vmatprep.subr.mxu0 0.0
    %2906 = vmatpush1.msra.mxu0 0.0
    %2907 = vmatprep.subr.mxu0 0.0
    %2908 = vmatpush1.msra.mxu0 0.0
    %2909 = vmatprep.mubr.f32.mxu0 0.0
    %2910 = vmatmul.mubr.f32.gmra.mrb[0].mxu0 %v2843
    %v2911 = vpop.f32.mrb[0].mxu0
    %v2912 = vadd.f32 0.0, %v2911
    %v2913 = vpop.f32.mrb[0].mxu0
    %v2914 = vadd.f32 0.0, %v2913
    %2915 = vdwg.mxu0
    %v2916 = vadd.f32 %v2395, %v2912
    %v2917 = vadd.f32 %v2397, %v2914
    %v2918 = vxor.u32 %v2916, 2147483648
    %v2919 = vmul.f32 %v2918, 1.442695
    %v2920 = vpow.pop %v2919
    %v2921 = vadd.f32 %v2920, 1.0
    %v2922 = vrcp.pop %v2921
    %v2923 = vmul.f32 1.0, %v2922
    %v2924 = vtanh.pop %v2917
    %v2925 = vxor.u32 %v2917, 2147483648
    %v2926 = vmul.f32 %v2925, 1.442695
    %v2927 = vpow.pop %v2926
    %v2928 = vadd.f32 %v2927, 1.0
    %v2929 = vrcp.pop %v2928
    %v2930 = vmul.f32 1.0, %v2929
    %v2931 = vmul.f32 %v2923, %v2834
    %v2932 = vmul.f32 %v2923, %v2924
    %2934 = vrot.lane.b32.xlu0 %v2932, 64
    %v2935 = vpop.permute.xlu0 %2934
    %v2937 = vadd.f32 %v2931, %v2935
    %v2938 = vtanh.pop %v2937
    %v2939 = vmul.f32 %v2930, %v2938
    %2941 = vrot.lane.b32.xlu0 %v2939, 64
    %v2942 = vpop.permute.xlu0 %2941
    %2944 = vst.msk [vmem:[#allocation4 + $0x20] sm:$0xff] %vm269, %v2942
    %2945 = vst.msk [vmem:[#allocation4 + $0x18] sm:$0xff] %vm526, %v2939
    %v2946 = vsel %vm269, %v2942, 0
    %2948 = vmatprep.subr.mxu0 %v2418
    %2949 = vmatpush1.msra.mxu0 %v2417
    %2950 = vmatprep.subr.mxu0 %v2420
    %2951 = vmatpush1.msra.mxu0 %v2419
    %2952 = vmatprep.subr.mxu0 %v2422
    %2953 = vmatpush1.msra.mxu0 %v2421
    %2954 = vmatprep.subr.mxu0 %v2424
    %2955 = vmatpush1.msra.mxu0 %v2423
    %2956 = vmatprep.subr.mxu0 %v2426
    %2957 = vmatpush1.msra.mxu0 %v2425
    %2958 = vmatprep.subr.mxu0 %v2428
    %2959 = vmatpush1.msra.mxu0 %v2427
    %2960 = vmatprep.subr.mxu0 %v2430
    %2961 = vmatpush1.msra.mxu0 %v2429
    %2962 = vmatprep.subr.mxu0 %v2432
    %2963 = vmatpush1.msra.mxu0 %v2431
    %2964 = vmatprep.subr.mxu0 0.0
    %2965 = vmatpush1.msra.mxu0 0.0
    %2966 = vmatprep.subr.mxu0 0.0
    %2967 = vmatpush1.msra.mxu0 0.0
    %2968 = vmatprep.subr.mxu0 0.0
    %2969 = vmatpush1.msra.mxu0 0.0
    %2970 = vmatprep.subr.mxu0 0.0
    %2971 = vmatpush1.msra.mxu0 0.0
    %2972 = vmatprep.subr.mxu0 0.0
    %2973 = vmatpush1.msra.mxu0 0.0
    %2974 = vmatprep.subr.mxu0 0.0
    %2975 = vmatpush1.msra.mxu0 0.0
    %2976 = vmatprep.subr.mxu0 0.0
    %2977 = vmatpush1.msra.mxu0 0.0
    %2978 = vmatprep.subr.mxu0 0.0
    %2979 = vmatpush1.msra.mxu0 0.0
    %2980 = vmatprep.subr.mxu0 0.0
    %2981 = vmatpush1.msra.mxu0 0.0
    %2982 = vmatprep.subr.mxu0 0.0
    %2983 = vmatpush1.msra.mxu0 0.0
    %2984 = vmatprep.subr.mxu0 0.0
    %2985 = vmatpush1.msra.mxu0 0.0
    %2986 = vmatprep.subr.mxu0 0.0
    %2987 = vmatpush1.msra.mxu0 0.0
    %2988 = vmatprep.subr.mxu0 0.0
    %2989 = vmatpush1.msra.mxu0 0.0
    %2990 = vmatprep.subr.mxu0 0.0
    %2991 = vmatpush1.msra.mxu0 0.0
    %2992 = vmatprep.subr.mxu0 0.0
    %2993 = vmatpush1.msra.mxu0 0.0
    %2994 = vmatprep.subr.mxu0 0.0
    %2995 = vmatpush1.msra.mxu0 0.0
    %2996 = vmatprep.subr.mxu0 0.0
    %2997 = vmatpush1.msra.mxu0 0.0
    %2998 = vmatprep.subr.mxu0 0.0
    %2999 = vmatpush1.msra.mxu0 0.0
    %3000 = vmatprep.subr.mxu0 0.0
    %3001 = vmatpush1.msra.mxu0 0.0
    %3002 = vmatprep.subr.mxu0 0.0
    %3003 = vmatpush1.msra.mxu0 0.0
    %3004 = vmatprep.subr.mxu0 0.0
    %3005 = vmatpush1.msra.mxu0 0.0
    %3006 = vmatprep.subr.mxu0 0.0
    %3007 = vmatpush1.msra.mxu0 0.0
    %3008 = vmatprep.subr.mxu0 0.0
    %3009 = vmatpush1.msra.mxu0 0.0
    %3010 = vmatprep.subr.mxu0 0.0
    %3011 = vmatpush1.msra.mxu0 0.0
    %3012 = vmatprep.mubr.f32.mxu0 0.0
    %3013 = vmatmul.mubr.f32.gmra.mrb[0].mxu0 %v2946
    %v3014 = vpop.f32.mrb[0].mxu0
    %v3015 = vadd.f32 0.0, %v3014
    %v3016 = vpop.f32.mrb[0].mxu0
    %v3017 = vadd.f32 0.0, %v3016
    %3018 = vdwg.mxu0
    %v3019 = vadd.f32 %v2401, %v3015
    %v3020 = vadd.f32 %v2403, %v3017
    %v3021 = vxor.u32 %v3019, 2147483648
    %v3022 = vmul.f32 %v3021, 1.442695
    %v3023 = vpow.pop %v3022
    %v3024 = vadd.f32 %v3023, 1.0
    %v3025 = vrcp.pop %v3024
    %v3026 = vmul.f32 1.0, %v3025
    %v3027 = vtanh.pop %v3020
    %v3028 = vxor.u32 %v3020, 2147483648
    %v3029 = vmul.f32 %v3028, 1.442695
    %v3030 = vpow.pop %v3029
    %v3031 = vadd.f32 %v3030, 1.0
    %v3032 = vrcp.pop %v3031
    %v3033 = vmul.f32 1.0, %v3032
    %v3034 = vmul.f32 %v3026, %v2937
    %v3035 = vmul.f32 %v3026, %v3027
    %3037 = vrot.lane.b32.xlu0 %v3035, 64
    %v3038 = vpop.permute.xlu0 %3037
    %v3040 = vadd.f32 %v3034, %v3038
    %v3041 = vtanh.pop %v3040
    %v3042 = vmul.f32 %v3033, %v3041
    %3044 = vrot.lane.b32.xlu0 %v3042, 64
    %v3045 = vpop.permute.xlu0 %3044
    %3047 = vst.msk [vmem:[#allocation4 + $0x28] sm:$0xff] %vm269, %v3045
    %3048 = vst.msk [vmem:[#allocation4 + $0x10] sm:$0xff] %vm526, %v3042
    %v3049 = vsel %vm269, %v3045, 0
    %3051 = vmatprep.subr.mxu0 %v2418
    %3052 = vmatpush1.msra.mxu0 %v2417
    %3053 = vmatprep.subr.mxu0 %v2420
    %3054 = vmatpush1.msra.mxu0 %v2419
    %3055 = vmatprep.subr.mxu0 %v2422
    %3056 = vmatpush1.msra.mxu0 %v2421
    %3057 = vmatprep.subr.mxu0 %v2424
    %3058 = vmatpush1.msra.mxu0 %v2423
    %3059 = vmatprep.subr.mxu0 %v2426
    %3060 = vmatpush1.msra.mxu0 %v2425
    %3061 = vmatprep.subr.mxu0 %v2428
    %3062 = vmatpush1.msra.mxu0 %v2427
    %3063 = vmatprep.subr.mxu0 %v2430
    %3064 = vmatpush1.msra.mxu0 %v2429
    %3065 = vmatprep.subr.mxu0 %v2432
    %3066 = vmatpush1.msra.mxu0 %v2431
    %3067 = vmatprep.subr.mxu0 0.0
    %3068 = vmatpush1.msra.mxu0 0.0
    %3069 = vmatprep.subr.mxu0 0.0
    %3070 = vmatpush1.msra.mxu0 0.0
    %3071 = vmatprep.subr.mxu0 0.0
    %3072 = vmatpush1.msra.mxu0 0.0
    %3073 = vmatprep.subr.mxu0 0.0
    %3074 = vmatpush1.msra.mxu0 0.0
    %3075 = vmatprep.subr.mxu0 0.0
    %3076 = vmatpush1.msra.mxu0 0.0
    %3077 = vmatprep.subr.mxu0 0.0
    %3078 = vmatpush1.msra.mxu0 0.0
    %3079 = vmatprep.subr.mxu0 0.0
    %3080 = vmatpush1.msra.mxu0 0.0
    %3081 = vmatprep.subr.mxu0 0.0
    %3082 = vmatpush1.msra.mxu0 0.0
    %3083 = vmatprep.subr.mxu0 0.0
    %3084 = vmatpush1.msra.mxu0 0.0
    %3085 = vmatprep.subr.mxu0 0.0
    %3086 = vmatpush1.msra.mxu0 0.0
    %3087 = vmatprep.subr.mxu0 0.0
    %3088 = vmatpush1.msra.mxu0 0.0
    %3089 = vmatprep.subr.mxu0 0.0
    %3090 = vmatpush1.msra.mxu0 0.0
    %3091 = vmatprep.subr.mxu0 0.0
    %3092 = vmatpush1.msra.mxu0 0.0
    %3093 = vmatprep.subr.mxu0 0.0
    %3094 = vmatpush1.msra.mxu0 0.0
    %3095 = vmatprep.subr.mxu0 0.0
    %3096 = vmatpush1.msra.mxu0 0.0
    %3097 = vmatprep.subr.mxu0 0.0
    %3098 = vmatpush1.msra.mxu0 0.0
    %3099 = vmatprep.subr.mxu0 0.0
    %3100 = vmatpush1.msra.mxu0 0.0
    %3101 = vmatprep.subr.mxu0 0.0
    %3102 = vmatpush1.msra.mxu0 0.0
    %3103 = vmatprep.subr.mxu0 0.0
    %3104 = vmatpush1.msra.mxu0 0.0
    %3105 = vmatprep.subr.mxu0 0.0
    %3106 = vmatpush1.msra.mxu0 0.0
    %3107 = vmatprep.subr.mxu0 0.0
    %3108 = vmatpush1.msra.mxu0 0.0
    %3109 = vmatprep.subr.mxu0 0.0
    %3110 = vmatpush1.msra.mxu0 0.0
    %3111 = vmatprep.subr.mxu0 0.0
    %3112 = vmatpush1.msra.mxu0 0.0
    %3113 = vmatprep.subr.mxu0 0.0
    %3114 = vmatpush1.msra.mxu0 0.0
    %3115 = vmatprep.mubr.f32.mxu0 0.0
    %3116 = vmatmul.mubr.f32.gmra.mrb[0].mxu0 %v3049
    %v3117 = vpop.f32.mrb[0].mxu0
    %v3118 = vadd.f32 0.0, %v3117
    %v3119 = vpop.f32.mrb[0].mxu0
    %v3120 = vadd.f32 0.0, %v3119
    %3121 = vdwg.mxu0
    %v3122 = vadd.f32 %v2407, %v3118
    %v3123 = vadd.f32 %v2409, %v3120
    %v3124 = vxor.u32 %v3122, 2147483648
    %v3125 = vmul.f32 %v3124, 1.442695
    %v3126 = vpow.pop %v3125
    %v3127 = vadd.f32 %v3126, 1.0
    %v3128 = vrcp.pop %v3127
    %v3129 = vmul.f32 1.0, %v3128
    %v3130 = vtanh.pop %v3123
    %v3131 = vxor.u32 %v3123, 2147483648
    %v3132 = vmul.f32 %v3131, 1.442695
    %v3133 = vpow.pop %v3132
    %v3134 = vadd.f32 %v3133, 1.0
    %v3135 = vrcp.pop %v3134
    %v3136 = vmul.f32 1.0, %v3135
    %v3137 = vmul.f32 %v3129, %v3040
    %v3138 = vmul.f32 %v3129, %v3130
    %3140 = vrot.lane.b32.xlu0 %v3138, 64
    %v3141 = vpop.permute.xlu0 %3140
    %v3143 = vadd.f32 %v3137, %v3141
    %v3144 = vtanh.pop %v3143
    %v3145 = vmul.f32 %v3136, %v3144
    %3147 = vrot.lane.b32.xlu0 %v3145, 64
    %v3148 = vpop.permute.xlu0 %3147
    %3150 = vst.msk [vmem:[#allocation4 + $0x30] sm:$0xff] %vm269, %v3148
    %3151 = vst.msk [vmem:[#allocation4 + $0x8] sm:$0xff] %vm526, %v3145
    %v3152 = vsel %vm269, %v3148, 0
    %3154 = vmatprep.subr.mxu0 %v2418
    %3155 = vmatpush1.msra.mxu0 %v2417
    %3156 = vmatprep.subr.mxu0 %v2420
    %3157 = vmatpush1.msra.mxu0 %v2419
    %3158 = vmatprep.subr.mxu0 %v2422
    %3159 = vmatpush1.msra.mxu0 %v2421
    %3160 = vmatprep.subr.mxu0 %v2424
    %3161 = vmatpush1.msra.mxu0 %v2423
    %3162 = vmatprep.subr.mxu0 %v2426
    %3163 = vmatpush1.msra.mxu0 %v2425
    %3164 = vmatprep.subr.mxu0 %v2428
    %3165 = vmatpush1.msra.mxu0 %v2427
    %3166 = vmatprep.subr.mxu0 %v2430
    %3167 = vmatpush1.msra.mxu0 %v2429
    %3168 = vmatprep.subr.mxu0 %v2432
    %3169 = vmatpush1.msra.mxu0 %v2431
    %3170 = vmatprep.subr.mxu0 0.0
    %3171 = vmatpush1.msra.mxu0 0.0
    %3172 = vmatprep.subr.mxu0 0.0
    %3173 = vmatpush1.msra.mxu0 0.0
    %3174 = vmatprep.subr.mxu0 0.0
    %3175 = vmatpush1.msra.mxu0 0.0
    %3176 = vmatprep.subr.mxu0 0.0
    %3177 = vmatpush1.msra.mxu0 0.0
    %3178 = vmatprep.subr.mxu0 0.0
    %3179 = vmatpush1.msra.mxu0 0.0
    %3180 = vmatprep.subr.mxu0 0.0
    %3181 = vmatpush1.msra.mxu0 0.0
    %3182 = vmatprep.subr.mxu0 0.0
    %3183 = vmatpush1.msra.mxu0 0.0
    %3184 = vmatprep.subr.mxu0 0.0
    %3185 = vmatpush1.msra.mxu0 0.0
    %3186 = vmatprep.subr.mxu0 0.0
    %3187 = vmatpush1.msra.mxu0 0.0
    %3188 = vmatprep.subr.mxu0 0.0
    %3189 = vmatpush1.msra.mxu0 0.0
    %3190 = vmatprep.subr.mxu0 0.0
    %3191 = vmatpush1.msra.mxu0 0.0
    %3192 = vmatprep.subr.mxu0 0.0
    %3193 = vmatpush1.msra.mxu0 0.0
    %3194 = vmatprep.subr.mxu0 0.0
    %3195 = vmatpush1.msra.mxu0 0.0
    %3196 = vmatprep.subr.mxu0 0.0
    %3197 = vmatpush1.msra.mxu0 0.0
    %3198 = vmatprep.subr.mxu0 0.0
    %3199 = vmatpush1.msra.mxu0 0.0
    %3200 = vmatprep.subr.mxu0 0.0
    %3201 = vmatpush1.msra.mxu0 0.0
    %3202 = vmatprep.subr.mxu0 0.0
    %3203 = vmatpush1.msra.mxu0 0.0
    %3204 = vmatprep.subr.mxu0 0.0
    %3205 = vmatpush1.msra.mxu0 0.0
    %3206 = vmatprep.subr.mxu0 0.0
    %3207 = vmatpush1.msra.mxu0 0.0
    %3208 = vmatprep.subr.mxu0 0.0
    %3209 = vmatpush1.msra.mxu0 0.0
    %3210 = vmatprep.subr.mxu0 0.0
    %3211 = vmatpush1.msra.mxu0 0.0
    %3212 = vmatprep.subr.mxu0 0.0
    %3213 = vmatpush1.msra.mxu0 0.0
    %3214 = vmatprep.subr.mxu0 0.0
    %3215 = vmatpush1.msra.mxu0 0.0
    %3216 = vmatprep.subr.mxu0 0.0
    %3217 = vmatpush1.msra.mxu0 0.0
    %3218 = vmatprep.mubr.f32.mxu0 0.0
    %3219 = vmatmul.mubr.f32.gmra.mrb[0].mxu0 %v3152
    %v3220 = vpop.f32.mrb[0].mxu0
    %v3221 = vadd.f32 0.0, %v3220
    %v3222 = vpop.f32.mrb[0].mxu0
    %v3223 = vadd.f32 0.0, %v3222
    %3224 = vdwg.mxu0
    %v3225 = vadd.f32 %v2413, %v3221
    %v3226 = vadd.f32 %v2415, %v3223
    %v3227 = vxor.u32 %v3225, 2147483648
    %v3228 = vmul.f32 %v3227, 1.442695
    %v3229 = vpow.pop %v3228
    %v3230 = vadd.f32 %v3229, 1.0
    %v3231 = vrcp.pop %v3230
    %v3232 = vmul.f32 1.0, %v3231
    %v3233 = vtanh.pop %v3226
    %v3234 = vxor.u32 %v3226, 2147483648
    %v3235 = vmul.f32 %v3234, 1.442695
    %v3236 = vpow.pop %v3235
    %v3237 = vadd.f32 %v3236, 1.0
    %v3238 = vrcp.pop %v3237
    %v3239 = vmul.f32 1.0, %v3238
    %v3240 = vmul.f32 %v3232, %v3143
    %v3241 = vmul.f32 %v3232, %v3233
    %3243 = vrot.lane.b32.xlu0 %v3241, 64
    %v3244 = vpop.permute.xlu0 %3243
    %v3246 = vadd.f32 %v3240, %v3244
    %v3247 = vtanh.pop %v3246
    %v3248 = vmul.f32 %v3239, %v3247
    %3250 = vrot.lane.b32.xlu0 %v3248, 64
    %v3251 = vpop.permute.xlu0 %3250
    %3253 = vst.msk [vmem:[#allocation4 + $0x38] sm:$0xff] %vm269, %v3251
    %3254 = vst.msk [vmem:[#allocation4] sm:$0xff] %vm526, %v3248
    %v3255 = vld [vmem:[#allocation4] sm:$0xff]
    %v3256 = vld [vmem:[#allocation4 + $0x8] sm:$0xff]
    %v3257 = vld [vmem:[#allocation4 + $0x10] sm:$0xff]
    %v3258 = vld [vmem:[#allocation4 + $0x18] sm:$0xff]
    %v3259 = vld [vmem:[#allocation4 + $0x20] sm:$0xff]
    %v3260 = vld [vmem:[#allocation4 + $0x28] sm:$0xff]
    %v3261 = vld [vmem:[#allocation4 + $0x30] sm:$0xff]
    %v3262 = vld [vmem:[#allocation4 + $0x38] sm:$0xff]
    %v3263 = vld [vmem:[%s10] sm:$0xff]
    %v3264 = vld [vmem:[%s10 + $0x8] sm:$0xff]
    %v3265 = vld [vmem:[%s10 + $0x10] sm:$0xff]
    %v3266 = vld [vmem:[%s10 + $0x18] sm:$0xff]
    %v3267 = vld [vmem:[%s10 + $0x20] sm:$0xff]
    %v3268 = vld [vmem:[%s10 + $0x28] sm:$0xff]
    %v3269 = vld [vmem:[%s10 + $0x30] sm:$0xff]
    %v3270 = vld [vmem:[%s10 + $0x38] sm:$0xff]
    %v3271 = vld [vmem:[%s10 + $0x40] sm:$0xff]
    %v3272 = vld [vmem:[%s10 + $0x48] sm:$0xff]
    %v3273 = vld [vmem:[%s10 + $0x50] sm:$0xff]
    %v3274 = vld [vmem:[%s10 + $0x58] sm:$0xff]
    %v3275 = vld [vmem:[%s10 + $0x60] sm:$0xff]
    %v3276 = vld [vmem:[%s10 + $0x68] sm:$0xff]
    %v3277 = vld [vmem:[%s10 + $0x70] sm:$0xff]
    %v3278 = vld [vmem:[%s10 + $0x78] sm:$0xff]
    %v3279 = vld [vmem:[%s10 + $0x80] sm:$0xff]
    %v3280 = vld [vmem:[%s10 + $0x88] sm:$0xff]
    %v3281 = vld [vmem:[%s10 + $0x90] sm:$0xff]
    %v3282 = vld [vmem:[%s10 + $0x98] sm:$0xff]
    %v3283 = vld [vmem:[%s10 + $0xa0] sm:$0xff]
    %v3284 = vld [vmem:[%s10 + $0xa8] sm:$0xff]
    %v3285 = vld [vmem:[%s10 + $0xb0] sm:$0xff]
    %v3286 = vld [vmem:[%s10 + $0xb8] sm:$0xff]
    %v3287 = vld [vmem:[%s10 + $0xc0] sm:$0xff]
    %v3288 = vld [vmem:[%s10 + $0xc8] sm:$0xff]
    %v3289 = vld [vmem:[%s10 + $0xd0] sm:$0xff]
    %v3290 = vld [vmem:[%s10 + $0xd8] sm:$0xff]
    %v3291 = vld [vmem:[%s10 + $0xe0] sm:$0xff]
    %v3292 = vld [vmem:[%s10 + $0xe8] sm:$0xff]
    %v3293 = vld [vmem:[%s10 + $0xf0] sm:$0xff]
    %v3294 = vld [vmem:[%s10 + $0xf8] sm:$0xff]
    %v3295 = vld [vmem:[#allocation19] sm:$0x3]
    %v3297 = vlaneseq
    %v3298 = vshrl.u32 %v3297, 7
    %v3299 = vsub.s32 0, %v3298
    %v3300 = vrot.slane %v3295, %v3299
    %v3301 = vlaneseq
    %v3302 = vshrl.u32 %v3301, 7
    %v3303 = vsub.s32 1, %v3302
    %v3304 = vrot.slane %v3295, %v3303
    %3307 = vmatprep.subr.mxu0 %v3264
    %3308 = vmatpush1.msra.mxu0 %v3263
    %3309 = vmatprep.subr.mxu0 %v3266
    %3310 = vmatpush1.msra.mxu0 %v3265
    %3311 = vmatprep.subr.mxu0 %v3268
    %3312 = vmatpush1.msra.mxu0 %v3267
    %3313 = vmatprep.subr.mxu0 %v3270
    %3314 = vmatpush1.msra.mxu0 %v3269
    %3315 = vmatprep.subr.mxu0 %v3272
    %3316 = vmatpush1.msra.mxu0 %v3271
    %3317 = vmatprep.subr.mxu0 %v3274
    %3318 = vmatpush1.msra.mxu0 %v3273
    %3319 = vmatprep.subr.mxu0 %v3276
    %3320 = vmatpush1.msra.mxu0 %v3275
    %3321 = vmatprep.subr.mxu0 %v3278
    %3322 = vmatpush1.msra.mxu0 %v3277
    %3323 = vmatprep.subr.mxu0 %v3280
    %3324 = vmatpush1.msra.mxu0 %v3279
    %3325 = vmatprep.subr.mxu0 %v3282
    %3326 = vmatpush1.msra.mxu0 %v3281
    %3327 = vmatprep.subr.mxu0 %v3284
    %3328 = vmatpush1.msra.mxu0 %v3283
    %3329 = vmatprep.subr.mxu0 %v3286
    %3330 = vmatpush1.msra.mxu0 %v3285
    %3331 = vmatprep.subr.mxu0 %v3288
    %3332 = vmatpush1.msra.mxu0 %v3287
    %3333 = vmatprep.subr.mxu0 %v3290
    %3334 = vmatpush1.msra.mxu0 %v3289
    %3335 = vmatprep.subr.mxu0 %v3292
    %3336 = vmatpush1.msra.mxu0 %v3291
    %3337 = vmatprep.subr.mxu0 %v3294
    %3338 = vmatpush1.msra.mxu0 %v3293
    %3339 = vmatprep.subr.mxu0 0.0
    %3340 = vmatpush1.msra.mxu0 0.0
    %3341 = vmatprep.subr.mxu0 0.0
    %3342 = vmatpush1.msra.mxu0 0.0
    %3343 = vmatprep.subr.mxu0 0.0
    %3344 = vmatpush1.msra.mxu0 0.0
    %3345 = vmatprep.subr.mxu0 0.0
    %3346 = vmatpush1.msra.mxu0 0.0
    %3347 = vmatprep.subr.mxu0 0.0
    %3348 = vmatpush1.msra.mxu0 0.0
    %3349 = vmatprep.subr.mxu0 0.0
    %3350 = vmatpush1.msra.mxu0 0.0
    %3351 = vmatprep.subr.mxu0 0.0
    %3352 = vmatpush1.msra.mxu0 0.0
    %3353 = vmatprep.subr.mxu0 0.0
    %3354 = vmatpush1.msra.mxu0 0.0
    %3355 = vmatprep.subr.mxu0 0.0
    %3356 = vmatpush1.msra.mxu0 0.0
    %3357 = vmatprep.subr.mxu0 0.0
    %3358 = vmatpush1.msra.mxu0 0.0
    %3359 = vmatprep.subr.mxu0 0.0
    %3360 = vmatpush1.msra.mxu0 0.0
    %3361 = vmatprep.subr.mxu0 0.0
    %3362 = vmatpush1.msra.mxu0 0.0
    %3363 = vmatprep.subr.mxu0 0.0
    %3364 = vmatpush1.msra.mxu0 0.0
    %3365 = vmatprep.subr.mxu0 0.0
    %3366 = vmatpush1.msra.mxu0 0.0
    %3367 = vmatprep.subr.mxu0 0.0
    %3368 = vmatpush1.msra.mxu0 0.0
    %3369 = vmatprep.subr.mxu0 0.0
    %3370 = vmatpush1.msra.mxu0 0.0
    %3371 = vmatprep.mubr.f32.mxu0 0.0
    %3372 = vmatmul.mubr.f32.gmra.mrb[0].mxu0 %v3255
    %v3373 = vpop.f32.mrb[0].mxu0
    %v3374 = vadd.f32 %v3300, %v3373
    %v3375 = vpop.f32.mrb[0].mxu0
    %v3376 = vadd.f32 %v3304, %v3375
    %3377 = vmatprep.mubr.f32.mxu0 0.0
    %3378 = vmatmul.mubr.f32.gmra.mrb[0].mxu0 %v3256
    %v3379 = vpop.f32.mrb[0].mxu0
    %v3380 = vadd.f32 %v3300, %v3379
    %v3381 = vpop.f32.mrb[0].mxu0
    %v3382 = vadd.f32 %v3304, %v3381
    %3383 = vmatprep.mubr.f32.mxu0 0.0
    %3384 = vmatmul.mubr.f32.gmra.mrb[0].mxu0 %v3257
    %v3385 = vpop.f32.mrb[0].mxu0
    %v3386 = vadd.f32 %v3300, %v3385
    %v3387 = vpop.f32.mrb[0].mxu0
    %v3388 = vadd.f32 %v3304, %v3387
    %3389 = vmatprep.mubr.f32.mxu0 0.0
    %3390 = vmatmul.mubr.f32.gmra.mrb[0].mxu0 %v3258
    %v3391 = vpop.f32.mrb[0].mxu0
    %v3392 = vadd.f32 %v3300, %v3391
    %v3393 = vpop.f32.mrb[0].mxu0
    %v3394 = vadd.f32 %v3304, %v3393
    %3395 = vmatprep.mubr.f32.mxu0 0.0
    %3396 = vmatmul.mubr.f32.gmra.mrb[0].mxu0 %v3259
    %v3397 = vpop.f32.mrb[0].mxu0
    %v3398 = vadd.f32 %v3300, %v3397
    %v3399 = vpop.f32.mrb[0].mxu0
    %v3400 = vadd.f32 %v3304, %v3399
    %3401 = vmatprep.mubr.f32.mxu0 0.0
    %3402 = vmatmul.mubr.f32.gmra.mrb[0].mxu0 %v3260
    %v3403 = vpop.f32.mrb[0].mxu0
    %v3404 = vadd.f32 %v3300, %v3403
    %v3405 = vpop.f32.mrb[0].mxu0
    %v3406 = vadd.f32 %v3304, %v3405
    %3407 = vmatprep.mubr.f32.mxu0 0.0
    %3408 = vmatmul.mubr.f32.gmra.mrb[0].mxu0 %v3261
    %v3409 = vpop.f32.mrb[0].mxu0
    %v3410 = vadd.f32 %v3300, %v3409
    %v3411 = vpop.f32.mrb[0].mxu0
    %v3412 = vadd.f32 %v3304, %v3411
    %3413 = vmatprep.mubr.f32.mxu0 0.0
    %3414 = vmatmul.mubr.f32.gmra.mrb[0].mxu0 %v3262
    %v3415 = vpop.f32.mrb[0].mxu0
    %v3416 = vadd.f32 %v3300, %v3415
    %v3417 = vpop.f32.mrb[0].mxu0
    %v3418 = vadd.f32 %v3304, %v3417
    %3419 = vdwg.mxu0
    %v3420 = vmax.f32 %v3374, 0.0
    %v3421 = vmax.f32 %v3376, 0.0
    %v3422 = vmax.f32 %v3380, 0.0
    %v3423 = vmax.f32 %v3382, 0.0
    %v3424 = vmax.f32 %v3386, 0.0
    %v3425 = vmax.f32 %v3388, 0.0
    %v3426 = vmax.f32 %v3392, 0.0
    %v3427 = vmax.f32 %v3394, 0.0
    %v3428 = vmax.f32 %v3398, 0.0
    %v3429 = vmax.f32 %v3400, 0.0
    %v3430 = vmax.f32 %v3404, 0.0
    %v3431 = vmax.f32 %v3406, 0.0
    %v3432 = vmax.f32 %v3410, 0.0
    %v3433 = vmax.f32 %v3412, 0.0
    %v3434 = vmax.f32 %v3416, 0.0
    %v3435 = vmax.f32 %v3418, 0.0
    %v3436 = vld [vmem:[#allocation21] sm:$0xff]
    %v3437 = vld [vmem:[#allocation21 + $0x8] sm:$0xff]
    %v3438 = vld [vmem:[#allocation21 + $0x10] sm:$0xff]
    %v3439 = vld [vmem:[#allocation21 + $0x18] sm:$0xff]
    %v3440 = vld [vmem:[#allocation21 + $0x20] sm:$0xff]
    %v3441 = vld [vmem:[#allocation21 + $0x28] sm:$0xff]
    %v3442 = vld [vmem:[#allocation21 + $0x30] sm:$0xff]
    %v3443 = vld [vmem:[#allocation21 + $0x38] sm:$0xff]
    %v3444 = vld [vmem:[#allocation21 + $0x40] sm:$0xff]
    %v3445 = vld [vmem:[#allocation21 + $0x48] sm:$0xff]
    %v3446 = vld [vmem:[#allocation21 + $0x50] sm:$0xff]
    %v3447 = vld [vmem:[#allocation21 + $0x58] sm:$0xff]
    %v3448 = vld [vmem:[#allocation21 + $0x60] sm:$0xff]
    %v3449 = vld [vmem:[#allocation21 + $0x68] sm:$0xff]
    %v3450 = vld [vmem:[#allocation21 + $0x70] sm:$0xff]
    %v3451 = vld [vmem:[#allocation21 + $0x78] sm:$0xff]
    %v3452 = vld [vmem:[#allocation21 + $0x80] sm:$0xff]
    %v3453 = vld [vmem:[#allocation21 + $0x88] sm:$0xff]
    %v3454 = vld [vmem:[#allocation21 + $0x90] sm:$0xff]
    %v3455 = vld [vmem:[#allocation21 + $0x98] sm:$0xff]
    %v3456 = vld [vmem:[#allocation21 + $0xa0] sm:$0xff]
    %v3457 = vld [vmem:[#allocation21 + $0xa8] sm:$0xff]
    %v3458 = vld [vmem:[#allocation21 + $0xb0] sm:$0xff]
    %v3459 = vld [vmem:[#allocation21 + $0xb8] sm:$0xff]
    %v3460 = vld [vmem:[#allocation21 + $0xc0] sm:$0xff]
    %v3461 = vld [vmem:[#allocation21 + $0xc8] sm:$0xff]
    %v3462 = vld [vmem:[#allocation21 + $0xd0] sm:$0xff]
    %v3463 = vld [vmem:[#allocation21 + $0xd8] sm:$0xff]
    %v3464 = vld [vmem:[#allocation21 + $0xe0] sm:$0xff]
    %v3465 = vld [vmem:[#allocation21 + $0xe8] sm:$0xff]
    %v3466 = vld [vmem:[#allocation21 + $0xf0] sm:$0xff]
    %v3467 = vld [vmem:[#allocation21 + $0xf8] sm:$0xff]
    %v3468 = vld [vmem:[#allocation21 + $0x100] sm:$0xff]
    %v3469 = vld [vmem:[#allocation21 + $0x108] sm:$0xff]
    %v3470 = vld [vmem:[#allocation21 + $0x110] sm:$0xff]
    %v3471 = vld [vmem:[#allocation21 + $0x118] sm:$0xff]
    %v3472 = vld [vmem:[#allocation21 + $0x120] sm:$0xff]
    %v3473 = vld [vmem:[#allocation21 + $0x128] sm:$0xff]
    %v3474 = vld [vmem:[#allocation21 + $0x130] sm:$0xff]
    %v3475 = vld [vmem:[#allocation21 + $0x138] sm:$0xff]
    %v3476 = vld [vmem:[#allocation22] sm:$0x3]
    %v3478 = vlaneseq
    %v3479 = vshrl.u32 %v3478, 7
    %v3480 = vsub.s32 0, %v3479
    %v3481 = vrot.slane %v3476, %v3480
    %v3482 = vlaneseq
    %v3483 = vshrl.u32 %v3482, 7
    %v3484 = vsub.s32 1, %v3483
    %v3485 = vrot.slane %v3476, %v3484
    %vm3488 = vcmask 261120
    %v3490 = vsel %vm3488, %v3421, 0
    %v3493 = vsel %vm3488, %v3423, 0
    %v3496 = vsel %vm3488, %v3425, 0
    %v3499 = vsel %vm3488, %v3427, 0
    %v3502 = vsel %vm3488, %v3429, 0
    %v3505 = vsel %vm3488, %v3431, 0
    %v3508 = vsel %vm3488, %v3433, 0
    %v3511 = vsel %vm3488, %v3435, 0
    %3513 = vmatprep.subr.mxu0 %v3437
    %3514 = vmatpush1.msra.mxu0 %v3436
    %3515 = vmatprep.subr.mxu0 %v3439
    %3516 = vmatpush1.msra.mxu0 %v3438
    %3517 = vmatprep.subr.mxu0 %v3441
    %3518 = vmatpush1.msra.mxu0 %v3440
    %3519 = vmatprep.subr.mxu0 %v3443
    %3520 = vmatpush1.msra.mxu0 %v3442
    %3521 = vmatprep.subr.mxu0 %v3445
    %3522 = vmatpush1.msra.mxu0 %v3444
    %3523 = vmatprep.subr.mxu0 %v3447
    %3524 = vmatpush1.msra.mxu0 %v3446
    %3525 = vmatprep.subr.mxu0 %v3449
    %3526 = vmatpush1.msra.mxu0 %v3448
    %3527 = vmatprep.subr.mxu0 %v3451
    %3528 = vmatpush1.msra.mxu0 %v3450
    %3529 = vmatprep.subr.mxu0 %v3453
    %3530 = vmatpush1.msra.mxu0 %v3452
    %3531 = vmatprep.subr.mxu0 %v3455
    %3532 = vmatpush1.msra.mxu0 %v3454
    %3533 = vmatprep.subr.mxu0 %v3457
    %3534 = vmatpush1.msra.mxu0 %v3456
    %3535 = vmatprep.subr.mxu0 %v3459
    %3536 = vmatpush1.msra.mxu0 %v3458
    %3537 = vmatprep.subr.mxu0 %v3461
    %3538 = vmatpush1.msra.mxu0 %v3460
    %3539 = vmatprep.subr.mxu0 %v3463
    %3540 = vmatpush1.msra.mxu0 %v3462
    %3541 = vmatprep.subr.mxu0 %v3465
    %3542 = vmatpush1.msra.mxu0 %v3464
    %3543 = vmatprep.subr.mxu0 %v3467
    %3544 = vmatpush1.msra.mxu0 %v3466
    %3545 = vmatprep.subr.mxu0 %v3469
    %3546 = vmatpush1.msra.mxu0 %v3468
    %3547 = vmatprep.subr.mxu0 %v3471
    %3548 = vmatpush1.msra.mxu0 %v3470
    %3549 = vmatprep.subr.mxu0 %v3473
    %3550 = vmatpush1.msra.mxu0 %v3472
    %3551 = vmatprep.subr.mxu0 %v3475
    %3552 = vmatpush1.msra.mxu0 %v3474
    %3553 = vmatprep.subr.mxu0 0.0
    %3554 = vmatpush1.msra.mxu0 0.0
    %3555 = vmatprep.subr.mxu0 0.0
    %3556 = vmatpush1.msra.mxu0 0.0
    %3557 = vmatprep.subr.mxu0 0.0
    %3558 = vmatpush1.msra.mxu0 0.0
    %3559 = vmatprep.subr.mxu0 0.0
    %3560 = vmatpush1.msra.mxu0 0.0
    %3561 = vmatprep.subr.mxu0 0.0
    %3562 = vmatpush1.msra.mxu0 0.0
    %3563 = vmatprep.subr.mxu0 0.0
    %3564 = vmatpush1.msra.mxu0 0.0
    %3565 = vmatprep.subr.mxu0 0.0
    %3566 = vmatpush1.msra.mxu0 0.0
    %3567 = vmatprep.subr.mxu0 0.0
    %3568 = vmatpush1.msra.mxu0 0.0
    %3569 = vmatprep.subr.mxu0 0.0
    %3570 = vmatpush1.msra.mxu0 0.0
    %3571 = vmatprep.subr.mxu0 0.0
    %3572 = vmatpush1.msra.mxu0 0.0
    %3573 = vmatprep.subr.mxu0 0.0
    %3574 = vmatpush1.msra.mxu0 0.0
    %3575 = vmatprep.subr.mxu0 0.0
    %3576 = vmatpush1.msra.mxu0 0.0
    %3577 = vmatprep.mubr.f32.mxu0 %v3490
    %3578 = vmatmul.mubr.f32.gmra.mrb[0].mxu0 %v3420
    %v3579 = vpop.f32.mrb[0].mxu0
    %v3580 = vadd.f32 %v3481, %v3579
    %v3581 = vpop.f32.mrb[0].mxu0
    %v3582 = vadd.f32 %v3485, %v3581
    %3583 = vmatprep.mubr.f32.mxu0 %v3493
    %3584 = vmatmul.mubr.f32.gmra.mrb[0].mxu0 %v3422
    %v3585 = vpop.f32.mrb[0].mxu0
    %v3586 = vadd.f32 %v3481, %v3585
    %v3587 = vpop.f32.mrb[0].mxu0
    %v3588 = vadd.f32 %v3485, %v3587
    %3589 = vmatprep.mubr.f32.mxu0 %v3496
    %3590 = vmatmul.mubr.f32.gmra.mrb[0].mxu0 %v3424
    %v3591 = vpop.f32.mrb[0].mxu0
    %v3592 = vadd.f32 %v3481, %v3591
    %v3593 = vpop.f32.mrb[0].mxu0
    %v3594 = vadd.f32 %v3485, %v3593
    %3595 = vmatprep.mubr.f32.mxu0 %v3499
    %3596 = vmatmul.mubr.f32.gmra.mrb[0].mxu0 %v3426
    %v3597 = vpop.f32.mrb[0].mxu0
    %v3598 = vadd.f32 %v3481, %v3597
    %v3599 = vpop.f32.mrb[0].mxu0
    %v3600 = vadd.f32 %v3485, %v3599
    %3601 = vmatprep.mubr.f32.mxu0 %v3502
    %3602 = vmatmul.mubr.f32.gmra.mrb[0].mxu0 %v3428
    %v3603 = vpop.f32.mrb[0].mxu0
    %v3604 = vadd.f32 %v3481, %v3603
    %v3605 = vpop.f32.mrb[0].mxu0
    %v3606 = vadd.f32 %v3485, %v3605
    %3607 = vmatprep.mubr.f32.mxu0 %v3505
    %3608 = vmatmul.mubr.f32.gmra.mrb[0].mxu0 %v3430
    %v3609 = vpop.f32.mrb[0].mxu0
    %v3610 = vadd.f32 %v3481, %v3609
    %v3611 = vpop.f32.mrb[0].mxu0
    %v3612 = vadd.f32 %v3485, %v3611
    %3613 = vmatprep.mubr.f32.mxu0 %v3508
    %3614 = vmatmul.mubr.f32.gmra.mrb[0].mxu0 %v3432
    %v3615 = vpop.f32.mrb[0].mxu0
    %v3616 = vadd.f32 %v3481, %v3615
    %v3617 = vpop.f32.mrb[0].mxu0
    %v3618 = vadd.f32 %v3485, %v3617
    %3619 = vmatprep.mubr.f32.mxu0 %v3511
    %3620 = vmatmul.mubr.f32.gmra.mrb[0].mxu0 %v3434
    %v3621 = vpop.f32.mrb[0].mxu0
    %v3622 = vadd.f32 %v3481, %v3621
    %v3623 = vpop.f32.mrb[0].mxu0
    %v3624 = vadd.f32 %v3485, %v3623
    %3625 = vdwg.mxu0
    %v3626 = vld [vmem:[#allocation24] sm:$0xff]
    %v3627 = vld [vmem:[#allocation24 + $0x8] sm:$0xff]
    %v3628 = vld [vmem:[#allocation24 + $0x10] sm:$0xff]
    %v3629 = vld [vmem:[#allocation24 + $0x18] sm:$0xff]
    %v3631 = vsel %vm3488, %v3580, 0
    %v3634 = vsel %vm3488, %v3586, 0
    %v3637 = vsel %vm3488, %v3592, 0
    %v3640 = vsel %vm3488, %v3598, 0
    %v3643 = vsel %vm3488, %v3604, 0
    %v3646 = vsel %vm3488, %v3610, 0
    %v3649 = vsel %vm3488, %v3616, 0
    %v3652 = vsel %vm3488, %v3622, 0
    %3654 = vmatprep.subr.mxu0 0.0
    %3655 = vmatpush1.msra.mxu0 %v3626
    %3656 = vmatprep.subr.mxu0 0.0
    %3657 = vmatpush1.msra.mxu0 %v3627
    %3658 = vmatprep.subr.mxu0 0.0
    %3659 = vmatpush1.msra.mxu0 %v3628
    %3660 = vmatprep.subr.mxu0 0.0
    %3661 = vmatpush1.msra.mxu0 %v3629
    %3662 = vmatprep.subr.mxu0 0.0
    %3663 = vmatpush1.msra.mxu0 0.0
    %3664 = vmatprep.subr.mxu0 0.0
    %3665 = vmatpush1.msra.mxu0 0.0
    %3666 = vmatprep.subr.mxu0 0.0
    %3667 = vmatpush1.msra.mxu0 0.0
    %3668 = vmatprep.subr.mxu0 0.0
    %3669 = vmatpush1.msra.mxu0 0.0
    %3670 = vmatprep.subr.mxu0 0.0
    %3671 = vmatpush1.msra.mxu0 0.0
    %3672 = vmatprep.subr.mxu0 0.0
    %3673 = vmatpush1.msra.mxu0 0.0
    %3674 = vmatprep.subr.mxu0 0.0
    %3675 = vmatpush1.msra.mxu0 0.0
    %3676 = vmatprep.subr.mxu0 0.0
    %3677 = vmatpush1.msra.mxu0 0.0
    %3678 = vmatprep.subr.mxu0 0.0
    %3679 = vmatpush1.msra.mxu0 0.0
    %3680 = vmatprep.subr.mxu0 0.0
    %3681 = vmatpush1.msra.mxu0 0.0
    %3682 = vmatprep.subr.mxu0 0.0
    %3683 = vmatpush1.msra.mxu0 0.0
    %3684 = vmatprep.subr.mxu0 0.0
    %3685 = vmatpush1.msra.mxu0 0.0
    %3686 = vmatprep.subr.mxu0 0.0
    %3687 = vmatpush1.msra.mxu0 0.0
    %3688 = vmatprep.subr.mxu0 0.0
    %3689 = vmatpush1.msra.mxu0 0.0
    %3690 = vmatprep.subr.mxu0 0.0
    %3691 = vmatpush1.msra.mxu0 0.0
    %3692 = vmatprep.subr.mxu0 0.0
    %3693 = vmatpush1.msra.mxu0 0.0
    %3694 = vmatprep.subr.mxu0 0.0
    %3695 = vmatpush1.msra.mxu0 0.0
    %3696 = vmatprep.subr.mxu0 0.0
    %3697 = vmatpush1.msra.mxu0 0.0
    %3698 = vmatprep.subr.mxu0 0.0
    %3699 = vmatpush1.msra.mxu0 0.0
    %3700 = vmatprep.subr.mxu0 0.0
    %3701 = vmatpush1.msra.mxu0 0.0
    %3702 = vmatprep.subr.mxu0 0.0
    %3703 = vmatpush1.msra.mxu0 0.0
    %3704 = vmatprep.subr.mxu0 0.0
    %3705 = vmatpush1.msra.mxu0 0.0
    %3706 = vmatprep.subr.mxu0 0.0
    %3707 = vmatpush1.msra.mxu0 0.0
    %3708 = vmatprep.subr.mxu0 0.0
    %3709 = vmatpush1.msra.mxu0 0.0
    %3710 = vmatprep.subr.mxu0 0.0
    %3711 = vmatpush1.msra.mxu0 0.0
    %3712 = vmatprep.subr.mxu0 0.0
    %3713 = vmatpush1.msra.mxu0 0.0
    %3714 = vmatprep.subr.mxu0 0.0
    %3715 = vmatpush1.msra.mxu0 0.0
    %3716 = vmatprep.subr.mxu0 0.0
    %3717 = vmatpush1.msra.mxu0 0.0
    %3718 = vmatprep.mubr.f32.mxu0 0.0
    %3719 = vmatmul.mubr.f32.gmra.mrb[0].mxu0 %v3631
    %v3720 = vpop.f32.mrb[0].mxu0
    %v3721 = vadd.f32 0.0, %v3720
    %v3722 = vpop.f32.mrb[0].mxu0
    %3723 = vmatprep.mubr.f32.mxu0 0.0
    %3724 = vmatmul.mubr.f32.gmra.mrb[0].mxu0 %v3634
    %v3725 = vpop.f32.mrb[0].mxu0
    %v3726 = vadd.f32 0.0, %v3725
    %v3727 = vpop.f32.mrb[0].mxu0
    %3728 = vmatprep.mubr.f32.mxu0 0.0
    %3729 = vmatmul.mubr.f32.gmra.mrb[0].mxu0 %v3637
    %v3730 = vpop.f32.mrb[0].mxu0
    %v3731 = vadd.f32 0.0, %v3730
    %v3732 = vpop.f32.mrb[0].mxu0
    %3733 = vmatprep.mubr.f32.mxu0 0.0
    %3734 = vmatmul.mubr.f32.gmra.mrb[0].mxu0 %v3640
    %v3735 = vpop.f32.mrb[0].mxu0
    %v3736 = vadd.f32 0.0, %v3735
    %v3737 = vpop.f32.mrb[0].mxu0
    %3738 = vmatprep.mubr.f32.mxu0 0.0
    %3739 = vmatmul.mubr.f32.gmra.mrb[0].mxu0 %v3643
    %v3740 = vpop.f32.mrb[0].mxu0
    %v3741 = vadd.f32 0.0, %v3740
    %v3742 = vpop.f32.mrb[0].mxu0
    %3743 = vmatprep.mubr.f32.mxu0 0.0
    %3744 = vmatmul.mubr.f32.gmra.mrb[0].mxu0 %v3646
    %v3745 = vpop.f32.mrb[0].mxu0
    %v3746 = vadd.f32 0.0, %v3745
    %v3747 = vpop.f32.mrb[0].mxu0
    %3748 = vmatprep.mubr.f32.mxu0 0.0
    %3749 = vmatmul.mubr.f32.gmra.mrb[0].mxu0 %v3649
    %v3750 = vpop.f32.mrb[0].mxu0
    %v3751 = vadd.f32 0.0, %v3750
    %v3752 = vpop.f32.mrb[0].mxu0
    %3753 = vmatprep.mubr.f32.mxu0 0.0
    %3754 = vmatmul.mubr.f32.gmra.mrb[0].mxu0 %v3652
    %v3755 = vpop.f32.mrb[0].mxu0
    %v3756 = vadd.f32 0.0, %v3755
    %v3757 = vpop.f32.mrb[0].mxu0
    %3758 = vdwg.mxu0
    %3759 = vrot.lane.b32.xlu0 %v3580, 96
    %v3760 = vpop.permute.xlu0 %3759
    %3761 = vrot.lane.b32.xlu0 %v3586, 96
    %v3762 = vpop.permute.xlu0 %3761
    %3763 = vrot.lane.b32.xlu0 %v3592, 96
    %v3764 = vpop.permute.xlu0 %3763
    %3765 = vrot.lane.b32.xlu0 %v3598, 96
    %v3766 = vpop.permute.xlu0 %3765
    %3767 = vrot.lane.b32.xlu0 %v3604, 96
    %v3768 = vpop.permute.xlu0 %3767
    %3769 = vrot.lane.b32.xlu0 %v3610, 96
    %v3770 = vpop.permute.xlu0 %3769
    %3771 = vrot.lane.b32.xlu0 %v3616, 96
    %v3772 = vpop.permute.xlu0 %3771
    %3773 = vrot.lane.b32.xlu0 %v3622, 96
    %v3774 = vpop.permute.xlu0 %3773
    %v3776 = vsel %vm3488, %v3721, 0
    %v3779 = vsel %vm3488, %v3726, 0
    %v3782 = vsel %vm3488, %v3731, 0
    %v3785 = vsel %vm3488, %v3736, 0
    %v3788 = vsel %vm3488, %v3741, 0
    %v3791 = vsel %vm3488, %v3746, 0
    %v3794 = vsel %vm3488, %v3751, 0
    %v3797 = vsel %vm3488, %v3756, 0
    %v3799 = vsel %vm3488, %v3760, 0
    %v3801 = vsel %vm3488, %v3762, 0
    %v3803 = vsel %vm3488, %v3764, 0
    %v3805 = vsel %vm3488, %v3766, 0
    %v3807 = vsel %vm3488, %v3768, 0
    %v3809 = vsel %vm3488, %v3770, 0
    %v3811 = vsel %vm3488, %v3772, 0
    %v3813 = vsel %vm3488, %v3774, 0
    %3815 = vmatprep.subr.mxu0 0.0
    %3816 = vmatpush1.xpose.msra.mxu0 %v3799
    %3817 = vmatprep.subr.mxu0 0.0
    %3818 = vmatpush1.xpose.msra.mxu0 %v3801
    %3819 = vmatprep.subr.mxu0 0.0
    %3820 = vmatpush1.xpose.msra.mxu0 %v3803
    %3821 = vmatprep.subr.mxu0 0.0
    %3822 = vmatpush1.xpose.msra.mxu0 %v3805
    %3823 = vmatprep.subr.mxu0 0.0
    %3824 = vmatpush1.xpose.msra.mxu0 %v3807
    %3825 = vmatprep.subr.mxu0 0.0
    %3826 = vmatpush1.xpose.msra.mxu0 %v3809
    %3827 = vmatprep.subr.mxu0 0.0
    %3828 = vmatpush1.xpose.msra.mxu0 %v3811
    %3829 = vmatprep.subr.mxu0 0.0
    %3830 = vmatpush1.xpose.msra.mxu0 %v3813
    %3831 = vmatprep.subr.mxu0 0.0
    %3832 = vmatpush1.xpose.msra.mxu0 0.0
    %3833 = vmatprep.subr.mxu0 0.0
    %3834 = vmatpush1.xpose.msra.mxu0 0.0
    %3835 = vmatprep.subr.mxu0 0.0
    %3836 = vmatpush1.xpose.msra.mxu0 0.0
    %3837 = vmatprep.subr.mxu0 0.0
    %3838 = vmatpush1.xpose.msra.mxu0 0.0
    %3839 = vmatprep.subr.mxu0 0.0
    %3840 = vmatpush1.xpose.msra.mxu0 0.0
    %3841 = vmatprep.subr.mxu0 0.0
    %3842 = vmatpush1.xpose.msra.mxu0 0.0
    %3843 = vmatprep.subr.mxu0 0.0
    %3844 = vmatpush1.xpose.msra.mxu0 0.0
    %3845 = vmatprep.subr.mxu0 0.0
    %3846 = vmatpush1.xpose.msra.mxu0 0.0
    %3847 = vmatprep.subr.mxu0 0.0
    %3848 = vmatpush1.xpose.msra.mxu0 0.0
    %3849 = vmatprep.subr.mxu0 0.0
    %3850 = vmatpush1.xpose.msra.mxu0 0.0
    %3851 = vmatprep.subr.mxu0 0.0
    %3852 = vmatpush1.xpose.msra.mxu0 0.0
    %3853 = vmatprep.subr.mxu0 0.0
    %3854 = vmatpush1.xpose.msra.mxu0 0.0
    %3855 = vmatprep.subr.mxu0 0.0
    %3856 = vmatpush1.xpose.msra.mxu0 0.0
    %3857 = vmatprep.subr.mxu0 0.0
    %3858 = vmatpush1.xpose.msra.mxu0 0.0
    %3859 = vmatprep.subr.mxu0 0.0
    %3860 = vmatpush1.xpose.msra.mxu0 0.0
    %3861 = vmatprep.subr.mxu0 0.0
    %3862 = vmatpush1.xpose.msra.mxu0 0.0
    %3863 = vmatprep.subr.mxu0 0.0
    %3864 = vmatpush1.xpose.msra.mxu0 0.0
    %3865 = vmatprep.subr.mxu0 0.0
    %3866 = vmatpush1.xpose.msra.mxu0 0.0
    %3867 = vmatprep.subr.mxu0 0.0
    %3868 = vmatpush1.xpose.msra.mxu0 0.0
    %3869 = vmatprep.subr.mxu0 0.0
    %3870 = vmatpush1.xpose.msra.mxu0 0.0
    %3871 = vmatprep.subr.mxu0 0.0
    %3872 = vmatpush1.xpose.msra.mxu0 0.0
    %3873 = vmatprep.subr.mxu0 0.0
    %3874 = vmatpush1.xpose.msra.mxu0 0.0
    %3875 = vmatprep.subr.mxu0 0.0
    %3876 = vmatpush1.xpose.msra.mxu0 0.0
    %3877 = vmatprep.subr.mxu0 0.0
    %3878 = vmatpush1.xpose.msra.mxu0 0.0
    %3879 = vmatprep.mubr.f32.mxu0 0.0
    %3880 = vmatmul.mubr.f32.gmra.mrb[0].mxu0 %v3776
    %v3881 = vpop.f32.mrb[0].mxu0
    %v3882 = vadd.f32 0.0, %v3881
    %v3883 = vpop.f32.mrb[0].mxu0
    %3884 = vmatprep.mubr.f32.mxu0 0.0
    %3885 = vmatmul.mubr.f32.gmra.mrb[0].mxu0 %v3779
    %v3886 = vpop.f32.mrb[0].mxu0
    %v3887 = vadd.f32 0.0, %v3886
    %v3888 = vpop.f32.mrb[0].mxu0
    %3889 = vmatprep.mubr.f32.mxu0 0.0
    %3890 = vmatmul.mubr.f32.gmra.mrb[0].mxu0 %v3782
    %v3891 = vpop.f32.mrb[0].mxu0
    %v3892 = vadd.f32 0.0, %v3891
    %v3893 = vpop.f32.mrb[0].mxu0
    %3894 = vmatprep.mubr.f32.mxu0 0.0
    %3895 = vmatmul.mubr.f32.gmra.mrb[0].mxu0 %v3785
    %v3896 = vpop.f32.mrb[0].mxu0
    %v3897 = vadd.f32 0.0, %v3896
    %v3898 = vpop.f32.mrb[0].mxu0
    %3899 = vmatprep.mubr.f32.mxu0 0.0
    %3900 = vmatmul.mubr.f32.gmra.mrb[0].mxu0 %v3788
    %v3901 = vpop.f32.mrb[0].mxu0
    %v3902 = vadd.f32 0.0, %v3901
    %v3903 = vpop.f32.mrb[0].mxu0
    %3904 = vmatprep.mubr.f32.mxu0 0.0
    %3905 = vmatmul.mubr.f32.gmra.mrb[0].mxu0 %v3791
    %v3906 = vpop.f32.mrb[0].mxu0
    %v3907 = vadd.f32 0.0, %v3906
    %v3908 = vpop.f32.mrb[0].mxu0
    %3909 = vmatprep.mubr.f32.mxu0 0.0
    %3910 = vmatmul.mubr.f32.gmra.mrb[0].mxu0 %v3794
    %v3911 = vpop.f32.mrb[0].mxu0
    %v3912 = vadd.f32 0.0, %v3911
    %v3913 = vpop.f32.mrb[0].mxu0
    %3914 = vmatprep.mubr.f32.mxu0 0.0
    %3915 = vmatmul.mubr.f32.gmra.mrb[0].mxu0 %v3797
    %v3916 = vpop.f32.mrb[0].mxu0
    %v3917 = vadd.f32 0.0, %v3916
    %v3918 = vpop.f32.mrb[0].mxu0
    %3919 = vdwg.mxu0
    %v3920 = vld [vmem:[#allocation25] sm:$0xff]
    %v3921 = vld [vmem:[#allocation25 + $0x8] sm:$0xff]
    %v3922 = vld [vmem:[#allocation25 + $0x10] sm:$0xff]
    %v3923 = vld [vmem:[#allocation25 + $0x18] sm:$0xff]
    %v3924 = vld [vmem:[#allocation25 + $0x20] sm:$0xff]
    %v3925 = vld [vmem:[#allocation25 + $0x28] sm:$0xff]
    %v3926 = vld [vmem:[#allocation25 + $0x30] sm:$0xff]
    %v3927 = vld [vmem:[#allocation25 + $0x38] sm:$0xff]
    %3928 = vrot.lane.b32.xlu0 %v3580, 64
    %v3929 = vpop.permute.xlu0 %3928
    %3930 = vrot.lane.b32.xlu0 %v3586, 64
    %v3931 = vpop.permute.xlu0 %3930
    %3932 = vrot.lane.b32.xlu0 %v3592, 64
    %v3933 = vpop.permute.xlu0 %3932
    %3934 = vrot.lane.b32.xlu0 %v3598, 64
    %v3935 = vpop.permute.xlu0 %3934
    %3936 = vrot.lane.b32.xlu0 %v3604, 64
    %v3937 = vpop.permute.xlu0 %3936
    %3938 = vrot.lane.b32.xlu0 %v3610, 64
    %v3939 = vpop.permute.xlu0 %3938
    %3940 = vrot.lane.b32.xlu0 %v3616, 64
    %v3941 = vpop.permute.xlu0 %3940
    %3942 = vrot.lane.b32.xlu0 %v3622, 64
    %v3943 = vpop.permute.xlu0 %3942
    %v3944 = vsel %vm3488, %v3929, 0
    %v3946 = vsel %vm3488, %v3931, 0
    %v3948 = vsel %vm3488, %v3933, 0
    %v3950 = vsel %vm3488, %v3935, 0
    %v3952 = vsel %vm3488, %v3937, 0
    %v3954 = vsel %vm3488, %v3939, 0
    %v3956 = vsel %vm3488, %v3941, 0
    %v3958 = vsel %vm3488, %v3943, 0
    %3960 = vmatprep.subr.mxu0 %v3921
    %3961 = vmatpush1.msra.mxu0 %v3920
    %3962 = vmatprep.subr.mxu0 %v3923
    %3963 = vmatpush1.msra.mxu0 %v3922
    %3964 = vmatprep.subr.mxu0 %v3925
    %3965 = vmatpush1.msra.mxu0 %v3924
    %3966 = vmatprep.subr.mxu0 %v3927
    %3967 = vmatpush1.msra.mxu0 %v3926
    %3968 = vmatprep.subr.mxu0 0.0
    %3969 = vmatpush1.msra.mxu0 0.0
    %3970 = vmatprep.subr.mxu0 0.0
    %3971 = vmatpush1.msra.mxu0 0.0
    %3972 = vmatprep.subr.mxu0 0.0
    %3973 = vmatpush1.msra.mxu0 0.0
    %3974 = vmatprep.subr.mxu0 0.0
    %3975 = vmatpush1.msra.mxu0 0.0
    %3976 = vmatprep.subr.mxu0 0.0
    %3977 = vmatpush1.msra.mxu0 0.0
    %3978 = vmatprep.subr.mxu0 0.0
    %3979 = vmatpush1.msra.mxu0 0.0
    %3980 = vmatprep.subr.mxu0 0.0
    %3981 = vmatpush1.msra.mxu0 0.0
    %3982 = vmatprep.subr.mxu0 0.0
    %3983 = vmatpush1.msra.mxu0 0.0
    %3984 = vmatprep.subr.mxu0 0.0
    %3985 = vmatpush1.msra.mxu0 0.0
    %3986 = vmatprep.subr.mxu0 0.0
    %3987 = vmatpush1.msra.mxu0 0.0
    %3988 = vmatprep.subr.mxu0 0.0
    %3989 = vmatpush1.msra.mxu0 0.0
    %3990 = vmatprep.subr.mxu0 0.0
    %3991 = vmatpush1.msra.mxu0 0.0
    %3992 = vmatprep.subr.mxu0 0.0
    %3993 = vmatpush1.msra.mxu0 0.0
    %3994 = vmatprep.subr.mxu0 0.0
    %3995 = vmatpush1.msra.mxu0 0.0
    %3996 = vmatprep.subr.mxu0 0.0
    %3997 = vmatpush1.msra.mxu0 0.0
    %3998 = vmatprep.subr.mxu0 0.0
    %3999 = vmatpush1.msra.mxu0 0.0
    %4000 = vmatprep.subr.mxu0 0.0
    %4001 = vmatpush1.msra.mxu0 0.0
    %4002 = vmatprep.subr.mxu0 0.0
    %4003 = vmatpush1.msra.mxu0 0.0
    %4004 = vmatprep.subr.mxu0 0.0
    %4005 = vmatpush1.msra.mxu0 0.0
    %4006 = vmatprep.subr.mxu0 0.0
    %4007 = vmatpush1.msra.mxu0 0.0
    %4008 = vmatprep.subr.mxu0 0.0
    %4009 = vmatpush1.msra.mxu0 0.0
    %4010 = vmatprep.subr.mxu0 0.0
    %4011 = vmatpush1.msra.mxu0 0.0
    %4012 = vmatprep.subr.mxu0 0.0
    %4013 = vmatpush1.msra.mxu0 0.0
    %4014 = vmatprep.subr.mxu0 0.0
    %4015 = vmatpush1.msra.mxu0 0.0
    %4016 = vmatprep.subr.mxu0 0.0
    %4017 = vmatpush1.msra.mxu0 0.0
    %4018 = vmatprep.subr.mxu0 0.0
    %4019 = vmatpush1.msra.mxu0 0.0
    %4020 = vmatprep.subr.mxu0 0.0
    %4021 = vmatpush1.msra.mxu0 0.0
    %4022 = vmatprep.subr.mxu0 0.0
    %4023 = vmatpush1.msra.mxu0 0.0
    %4024 = vmatprep.mubr.f32.mxu0 0.0
    %4025 = vmatmul.mubr.f32.gmra.mrb[0].mxu0 %v3944
    %v4026 = vpop.f32.mrb[0].mxu0
    %v4027 = vadd.f32 0.0, %v4026
    %v4028 = vpop.f32.mrb[0].mxu0
    %v4029 = vadd.f32 0.0, %v4028
    %4030 = vmatprep.mubr.f32.mxu0 0.0
    %4031 = vmatmul.mubr.f32.gmra.mrb[0].mxu0 %v3946
    %v4032 = vpop.f32.mrb[0].mxu0
    %v4033 = vadd.f32 0.0, %v4032
    %v4034 = vpop.f32.mrb[0].mxu0
    %v4035 = vadd.f32 0.0, %v4034
    %4036 = vmatprep.mubr.f32.mxu0 0.0
    %4037 = vmatmul.mubr.f32.gmra.mrb[0].mxu0 %v3948
    %v4038 = vpop.f32.mrb[0].mxu0
    %v4039 = vadd.f32 0.0, %v4038
    %v4040 = vpop.f32.mrb[0].mxu0
    %v4041 = vadd.f32 0.0, %v4040
    %4042 = vmatprep.mubr.f32.mxu0 0.0
    %4043 = vmatmul.mubr.f32.gmra.mrb[0].mxu0 %v3950
    %v4044 = vpop.f32.mrb[0].mxu0
    %v4045 = vadd.f32 0.0, %v4044
    %v4046 = vpop.f32.mrb[0].mxu0
    %v4047 = vadd.f32 0.0, %v4046
    %4048 = vmatprep.mubr.f32.mxu0 0.0
    %4049 = vmatmul.mubr.f32.gmra.mrb[0].mxu0 %v3952
    %v4050 = vpop.f32.mrb[0].mxu0
    %v4051 = vadd.f32 0.0, %v4050
    %v4052 = vpop.f32.mrb[0].mxu0
    %v4053 = vadd.f32 0.0, %v4052
    %4054 = vmatprep.mubr.f32.mxu0 0.0
    %4055 = vmatmul.mubr.f32.gmra.mrb[0].mxu0 %v3954
    %v4056 = vpop.f32.mrb[0].mxu0
    %v4057 = vadd.f32 0.0, %v4056
    %v4058 = vpop.f32.mrb[0].mxu0
    %v4059 = vadd.f32 0.0, %v4058
    %4060 = vmatprep.mubr.f32.mxu0 0.0
    %4061 = vmatmul.mubr.f32.gmra.mrb[0].mxu0 %v3956
    %v4062 = vpop.f32.mrb[0].mxu0
    %v4063 = vadd.f32 0.0, %v4062
    %v4064 = vpop.f32.mrb[0].mxu0
    %v4065 = vadd.f32 0.0, %v4064
    %4066 = vmatprep.mubr.f32.mxu0 0.0
    %4067 = vmatmul.mubr.f32.gmra.mrb[0].mxu0 %v3958
    %v4068 = vpop.f32.mrb[0].mxu0
    %v4069 = vadd.f32 0.0, %v4068
    %v4070 = vpop.f32.mrb[0].mxu0
    %v4071 = vadd.f32 0.0, %v4070
    %4072 = vdwg.mxu0
    %4073 = vrot.lane.b32.xlu0 %v3580, 32
    %v4074 = vpop.permute.xlu0 %4073
    %4075 = vrot.lane.b32.xlu0 %v3586, 32
    %v4076 = vpop.permute.xlu0 %4075
    %4077 = vrot.lane.b32.xlu0 %v3592, 32
    %v4078 = vpop.permute.xlu0 %4077
    %4079 = vrot.lane.b32.xlu0 %v3598, 32
    %v4080 = vpop.permute.xlu0 %4079
    %4081 = vrot.lane.b32.xlu0 %v3604, 32
    %v4082 = vpop.permute.xlu0 %4081
    %4083 = vrot.lane.b32.xlu0 %v3610, 32
    %v4084 = vpop.permute.xlu0 %4083
    %4085 = vrot.lane.b32.xlu0 %v3616, 32
    %v4086 = vpop.permute.xlu0 %4085
    %4087 = vrot.lane.b32.xlu0 %v3622, 32
    %v4088 = vpop.permute.xlu0 %4087
    %v4090 = vsel %vm3488, %v4027, 0
    %v4093 = vsel %vm3488, %v4033, 0
    %v4096 = vsel %vm3488, %v4039, 0
    %v4099 = vsel %vm3488, %v4045, 0
    %v4102 = vsel %vm3488, %v4051, 0
    %v4105 = vsel %vm3488, %v4057, 0
    %v4108 = vsel %vm3488, %v4063, 0
    %v4111 = vsel %vm3488, %v4069, 0
    %v4113 = vsel %vm3488, %v4074, 0
    %v4115 = vsel %vm3488, %v4076, 0
    %v4117 = vsel %vm3488, %v4078, 0
    %v4119 = vsel %vm3488, %v4080, 0
    %v4121 = vsel %vm3488, %v4082, 0
    %v4123 = vsel %vm3488, %v4084, 0
    %v4125 = vsel %vm3488, %v4086, 0
    %v4127 = vsel %vm3488, %v4088, 0
    %4129 = vmatprep.subr.mxu0 0.0
    %4130 = vmatpush1.xpose.msra.mxu0 %v4113
    %4131 = vmatprep.subr.mxu0 0.0
    %4132 = vmatpush1.xpose.msra.mxu0 %v4115
    %4133 = vmatprep.subr.mxu0 0.0
    %4134 = vmatpush1.xpose.msra.mxu0 %v4117
    %4135 = vmatprep.subr.mxu0 0.0
    %4136 = vmatpush1.xpose.msra.mxu0 %v4119
    %4137 = vmatprep.subr.mxu0 0.0
    %4138 = vmatpush1.xpose.msra.mxu0 %v4121
    %4139 = vmatprep.subr.mxu0 0.0
    %4140 = vmatpush1.xpose.msra.mxu0 %v4123
    %4141 = vmatprep.subr.mxu0 0.0
    %4142 = vmatpush1.xpose.msra.mxu0 %v4125
    %4143 = vmatprep.subr.mxu0 0.0
    %4144 = vmatpush1.xpose.msra.mxu0 %v4127
    %4145 = vmatprep.subr.mxu0 0.0
    %4146 = vmatpush1.xpose.msra.mxu0 0.0
    %4147 = vmatprep.subr.mxu0 0.0
    %4148 = vmatpush1.xpose.msra.mxu0 0.0
    %4149 = vmatprep.subr.mxu0 0.0
    %4150 = vmatpush1.xpose.msra.mxu0 0.0
    %4151 = vmatprep.subr.mxu0 0.0
    %4152 = vmatpush1.xpose.msra.mxu0 0.0
    %4153 = vmatprep.subr.mxu0 0.0
    %4154 = vmatpush1.xpose.msra.mxu0 0.0
    %4155 = vmatprep.subr.mxu0 0.0
    %4156 = vmatpush1.xpose.msra.mxu0 0.0
    %4157 = vmatprep.subr.mxu0 0.0
    %4158 = vmatpush1.xpose.msra.mxu0 0.0
    %4159 = vmatprep.subr.mxu0 0.0
    %4160 = vmatpush1.xpose.msra.mxu0 0.0
    %4161 = vmatprep.subr.mxu0 0.0
    %4162 = vmatpush1.xpose.msra.mxu0 0.0
    %4163 = vmatprep.subr.mxu0 0.0
    %4164 = vmatpush1.xpose.msra.mxu0 0.0
    %4165 = vmatprep.subr.mxu0 0.0
    %4166 = vmatpush1.xpose.msra.mxu0 0.0
    %4167 = vmatprep.subr.mxu0 0.0
    %4168 = vmatpush1.xpose.msra.mxu0 0.0
    %4169 = vmatprep.subr.mxu0 0.0
    %4170 = vmatpush1.xpose.msra.mxu0 0.0
    %4171 = vmatprep.subr.mxu0 0.0
    %4172 = vmatpush1.xpose.msra.mxu0 0.0
    %4173 = vmatprep.subr.mxu0 0.0
    %4174 = vmatpush1.xpose.msra.mxu0 0.0
    %4175 = vmatprep.subr.mxu0 0.0
    %4176 = vmatpush1.xpose.msra.mxu0 0.0
    %4177 = vmatprep.subr.mxu0 0.0
    %4178 = vmatpush1.xpose.msra.mxu0 0.0
    %4179 = vmatprep.subr.mxu0 0.0
    %4180 = vmatpush1.xpose.msra.mxu0 0.0
    %4181 = vmatprep.subr.mxu0 0.0
    %4182 = vmatpush1.xpose.msra.mxu0 0.0
    %4183 = vmatprep.subr.mxu0 0.0
    %4184 = vmatpush1.xpose.msra.mxu0 0.0
    %4185 = vmatprep.subr.mxu0 0.0
    %4186 = vmatpush1.xpose.msra.mxu0 0.0
    %4187 = vmatprep.subr.mxu0 0.0
    %4188 = vmatpush1.xpose.msra.mxu0 0.0
    %4189 = vmatprep.subr.mxu0 0.0
    %4190 = vmatpush1.xpose.msra.mxu0 0.0
    %4191 = vmatprep.subr.mxu0 0.0
    %4192 = vmatpush1.xpose.msra.mxu0 0.0
    %4193 = vmatprep.mubr.f32.mxu0 0.0
    %4194 = vmatmul.mubr.f32.gmra.mrb[0].mxu0 %v4090
    %v4195 = vpop.f32.mrb[0].mxu0
    %v4196 = vadd.f32 0.0, %v4195
    %v4197 = vpop.f32.mrb[0].mxu0
    %4198 = vmatprep.mubr.f32.mxu0 0.0
    %4199 = vmatmul.mubr.f32.gmra.mrb[0].mxu0 %v4093
    %v4200 = vpop.f32.mrb[0].mxu0
    %v4201 = vadd.f32 0.0, %v4200
    %v4202 = vpop.f32.mrb[0].mxu0
    %4203 = vmatprep.mubr.f32.mxu0 0.0
    %4204 = vmatmul.mubr.f32.gmra.mrb[0].mxu0 %v4096
    %v4205 = vpop.f32.mrb[0].mxu0
    %v4206 = vadd.f32 0.0, %v4205
    %v4207 = vpop.f32.mrb[0].mxu0
    %4208 = vmatprep.mubr.f32.mxu0 0.0
    %4209 = vmatmul.mubr.f32.gmra.mrb[0].mxu0 %v4099
    %v4210 = vpop.f32.mrb[0].mxu0
    %v4211 = vadd.f32 0.0, %v4210
    %v4212 = vpop.f32.mrb[0].mxu0
    %4213 = vmatprep.mubr.f32.mxu0 0.0
    %4214 = vmatmul.mubr.f32.gmra.mrb[0].mxu0 %v4102
    %v4215 = vpop.f32.mrb[0].mxu0
    %v4216 = vadd.f32 0.0, %v4215
    %v4217 = vpop.f32.mrb[0].mxu0
    %4218 = vmatprep.mubr.f32.mxu0 0.0
    %4219 = vmatmul.mubr.f32.gmra.mrb[0].mxu0 %v4105
    %v4220 = vpop.f32.mrb[0].mxu0
    %v4221 = vadd.f32 0.0, %v4220
    %v4222 = vpop.f32.mrb[0].mxu0
    %4223 = vmatprep.mubr.f32.mxu0 0.0
    %4224 = vmatmul.mubr.f32.gmra.mrb[0].mxu0 %v4108
    %v4225 = vpop.f32.mrb[0].mxu0
    %v4226 = vadd.f32 0.0, %v4225
    %v4227 = vpop.f32.mrb[0].mxu0
    %4228 = vmatprep.mubr.f32.mxu0 0.0
    %4229 = vmatmul.mubr.f32.gmra.mrb[0].mxu0 %v4111
    %v4230 = vpop.f32.mrb[0].mxu0
    %v4231 = vadd.f32 0.0, %v4230
    %v4232 = vpop.f32.mrb[0].mxu0
    %4233 = vdwg.mxu0
    %4234 = vrot.lane.b32.xlu0 %v4027, 96
    %v4235 = vpop.permute.xlu0 %4234
    %4236 = vrot.lane.b32.xlu0 %v4033, 96
    %v4237 = vpop.permute.xlu0 %4236
    %4238 = vrot.lane.b32.xlu0 %v4039, 96
    %v4239 = vpop.permute.xlu0 %4238
    %4240 = vrot.lane.b32.xlu0 %v4045, 96
    %v4241 = vpop.permute.xlu0 %4240
    %4242 = vrot.lane.b32.xlu0 %v4051, 96
    %v4243 = vpop.permute.xlu0 %4242
    %4244 = vrot.lane.b32.xlu0 %v4057, 96
    %v4245 = vpop.permute.xlu0 %4244
    %4246 = vrot.lane.b32.xlu0 %v4063, 96
    %v4247 = vpop.permute.xlu0 %4246
    %4248 = vrot.lane.b32.xlu0 %v4069, 96
    %v4249 = vpop.permute.xlu0 %4248
    %v4250 = vsel %vm3488, %v4235, 0
    %v4252 = vsel %vm3488, %v4237, 0
    %v4254 = vsel %vm3488, %v4239, 0
    %v4256 = vsel %vm3488, %v4241, 0
    %v4258 = vsel %vm3488, %v4243, 0
    %v4260 = vsel %vm3488, %v4245, 0
    %v4262 = vsel %vm3488, %v4247, 0
    %v4264 = vsel %vm3488, %v4249, 0
    %4266 = vmatprep.subr.mxu0 0.0
    %4267 = vmatpush1.xpose.msra.mxu0 %v4113
    %4268 = vmatprep.subr.mxu0 0.0
    %4269 = vmatpush1.xpose.msra.mxu0 %v4115
    %4270 = vmatprep.subr.mxu0 0.0
    %4271 = vmatpush1.xpose.msra.mxu0 %v4117
    %4272 = vmatprep.subr.mxu0 0.0
    %4273 = vmatpush1.xpose.msra.mxu0 %v4119
    %4274 = vmatprep.subr.mxu0 0.0
    %4275 = vmatpush1.xpose.msra.mxu0 %v4121
    %4276 = vmatprep.subr.mxu0 0.0
    %4277 = vmatpush1.xpose.msra.mxu0 %v4123
    %4278 = vmatprep.subr.mxu0 0.0
    %4279 = vmatpush1.xpose.msra.mxu0 %v4125
    %4280 = vmatprep.subr.mxu0 0.0
    %4281 = vmatpush1.xpose.msra.mxu0 %v4127
    %4282 = vmatprep.subr.mxu0 0.0
    %4283 = vmatpush1.xpose.msra.mxu0 0.0
    %4284 = vmatprep.subr.mxu0 0.0
    %4285 = vmatpush1.xpose.msra.mxu0 0.0
    %4286 = vmatprep.subr.mxu0 0.0
    %4287 = vmatpush1.xpose.msra.mxu0 0.0
    %4288 = vmatprep.subr.mxu0 0.0
    %4289 = vmatpush1.xpose.msra.mxu0 0.0
    %4290 = vmatprep.subr.mxu0 0.0
    %4291 = vmatpush1.xpose.msra.mxu0 0.0
    %4292 = vmatprep.subr.mxu0 0.0
    %4293 = vmatpush1.xpose.msra.mxu0 0.0
    %4294 = vmatprep.subr.mxu0 0.0
    %4295 = vmatpush1.xpose.msra.mxu0 0.0
    %4296 = vmatprep.subr.mxu0 0.0
    %4297 = vmatpush1.xpose.msra.mxu0 0.0
    %4298 = vmatprep.subr.mxu0 0.0
    %4299 = vmatpush1.xpose.msra.mxu0 0.0
    %4300 = vmatprep.subr.mxu0 0.0
    %4301 = vmatpush1.xpose.msra.mxu0 0.0
    %4302 = vmatprep.subr.mxu0 0.0
    %4303 = vmatpush1.xpose.msra.mxu0 0.0
    %4304 = vmatprep.subr.mxu0 0.0
    %4305 = vmatpush1.xpose.msra.mxu0 0.0
    %4306 = vmatprep.subr.mxu0 0.0
    %4307 = vmatpush1.xpose.msra.mxu0 0.0
    %4308 = vmatprep.subr.mxu0 0.0
    %4309 = vmatpush1.xpose.msra.mxu0 0.0
    %4310 = vmatprep.subr.mxu0 0.0
    %4311 = vmatpush1.xpose.msra.mxu0 0.0
    %4312 = vmatprep.subr.mxu0 0.0
    %4313 = vmatpush1.xpose.msra.mxu0 0.0
    %4314 = vmatprep.subr.mxu0 0.0
    %4315 = vmatpush1.xpose.msra.mxu0 0.0
    %4316 = vmatprep.subr.mxu0 0.0
    %4317 = vmatpush1.xpose.msra.mxu0 0.0
    %4318 = vmatprep.subr.mxu0 0.0
    %4319 = vmatpush1.xpose.msra.mxu0 0.0
    %4320 = vmatprep.subr.mxu0 0.0
    %4321 = vmatpush1.xpose.msra.mxu0 0.0
    %4322 = vmatprep.subr.mxu0 0.0
    %4323 = vmatpush1.xpose.msra.mxu0 0.0
    %4324 = vmatprep.subr.mxu0 0.0
    %4325 = vmatpush1.xpose.msra.mxu0 0.0
    %4326 = vmatprep.subr.mxu0 0.0
    %4327 = vmatpush1.xpose.msra.mxu0 0.0
    %4328 = vmatprep.subr.mxu0 0.0
    %4329 = vmatpush1.xpose.msra.mxu0 0.0
    %4330 = vmatprep.mubr.f32.mxu0 0.0
    %4331 = vmatmul.mubr.f32.gmra.mrb[0].mxu0 %v4250
    %v4332 = vpop.f32.mrb[0].mxu0
    %v4333 = vadd.f32 0.0, %v4332
    %v4334 = vpop.f32.mrb[0].mxu0
    %4335 = vmatprep.mubr.f32.mxu0 0.0
    %4336 = vmatmul.mubr.f32.gmra.mrb[0].mxu0 %v4252
    %v4337 = vpop.f32.mrb[0].mxu0
    %v4338 = vadd.f32 0.0, %v4337
    %v4339 = vpop.f32.mrb[0].mxu0
    %4340 = vmatprep.mubr.f32.mxu0 0.0
    %4341 = vmatmul.mubr.f32.gmra.mrb[0].mxu0 %v4254
    %v4342 = vpop.f32.mrb[0].mxu0
    %v4343 = vadd.f32 0.0, %v4342
    %v4344 = vpop.f32.mrb[0].mxu0
    %4345 = vmatprep.mubr.f32.mxu0 0.0
    %4346 = vmatmul.mubr.f32.gmra.mrb[0].mxu0 %v4256
    %v4347 = vpop.f32.mrb[0].mxu0
    %v4348 = vadd.f32 0.0, %v4347
    %v4349 = vpop.f32.mrb[0].mxu0
    %4350 = vmatprep.mubr.f32.mxu0 0.0
    %4351 = vmatmul.mubr.f32.gmra.mrb[0].mxu0 %v4258
    %v4352 = vpop.f32.mrb[0].mxu0
    %v4353 = vadd.f32 0.0, %v4352
    %v4354 = vpop.f32.mrb[0].mxu0
    %4355 = vmatprep.mubr.f32.mxu0 0.0
    %4356 = vmatmul.mubr.f32.gmra.mrb[0].mxu0 %v4260
    %v4357 = vpop.f32.mrb[0].mxu0
    %v4358 = vadd.f32 0.0, %v4357
    %v4359 = vpop.f32.mrb[0].mxu0
    %4360 = vmatprep.mubr.f32.mxu0 0.0
    %4361 = vmatmul.mubr.f32.gmra.mrb[0].mxu0 %v4262
    %v4362 = vpop.f32.mrb[0].mxu0
    %v4363 = vadd.f32 0.0, %v4362
    %v4364 = vpop.f32.mrb[0].mxu0
    %4365 = vmatprep.mubr.f32.mxu0 0.0
    %4366 = vmatmul.mubr.f32.gmra.mrb[0].mxu0 %v4264
    %v4367 = vpop.f32.mrb[0].mxu0
    %v4368 = vadd.f32 0.0, %v4367
    %v4369 = vpop.f32.mrb[0].mxu0
    %4370 = vdwg.mxu0
    %4371 = vrot.lane.b32.xlu0 %v4027, 64
    %v4372 = vpop.permute.xlu0 %4371
    %4373 = vrot.lane.b32.xlu0 %v4033, 64
    %v4374 = vpop.permute.xlu0 %4373
    %4375 = vrot.lane.b32.xlu0 %v4039, 64
    %v4376 = vpop.permute.xlu0 %4375
    %4377 = vrot.lane.b32.xlu0 %v4045, 64
    %v4378 = vpop.permute.xlu0 %4377
    %4379 = vrot.lane.b32.xlu0 %v4051, 64
    %v4380 = vpop.permute.xlu0 %4379
    %4381 = vrot.lane.b32.xlu0 %v4057, 64
    %v4382 = vpop.permute.xlu0 %4381
    %4383 = vrot.lane.b32.xlu0 %v4063, 64
    %v4384 = vpop.permute.xlu0 %4383
    %4385 = vrot.lane.b32.xlu0 %v4069, 64
    %v4386 = vpop.permute.xlu0 %4385
    %v4387 = vsel %vm3488, %v4372, 0
    %v4389 = vsel %vm3488, %v4374, 0
    %v4391 = vsel %vm3488, %v4376, 0
    %v4393 = vsel %vm3488, %v4378, 0
    %v4395 = vsel %vm3488, %v4380, 0
    %v4397 = vsel %vm3488, %v4382, 0
    %v4399 = vsel %vm3488, %v4384, 0
    %v4401 = vsel %vm3488, %v4386, 0
    %4403 = vmatprep.subr.mxu0 0.0
    %4404 = vmatpush1.xpose.msra.mxu0 %v4113
    %4405 = vmatprep.subr.mxu0 0.0
    %4406 = vmatpush1.xpose.msra.mxu0 %v4115
    %4407 = vmatprep.subr.mxu0 0.0
    %4408 = vmatpush1.xpose.msra.mxu0 %v4117
    %4409 = vmatprep.subr.mxu0 0.0
    %4410 = vmatpush1.xpose.msra.mxu0 %v4119
    %4411 = vmatprep.subr.mxu0 0.0
    %4412 = vmatpush1.xpose.msra.mxu0 %v4121
    %4413 = vmatprep.subr.mxu0 0.0
    %4414 = vmatpush1.xpose.msra.mxu0 %v4123
    %4415 = vmatprep.subr.mxu0 0.0
    %4416 = vmatpush1.xpose.msra.mxu0 %v4125
    %4417 = vmatprep.subr.mxu0 0.0
    %4418 = vmatpush1.xpose.msra.mxu0 %v4127
    %4419 = vmatprep.subr.mxu0 0.0
    %4420 = vmatpush1.xpose.msra.mxu0 0.0
    %4421 = vmatprep.subr.mxu0 0.0
    %4422 = vmatpush1.xpose.msra.mxu0 0.0
    %4423 = vmatprep.subr.mxu0 0.0
    %4424 = vmatpush1.xpose.msra.mxu0 0.0
    %4425 = vmatprep.subr.mxu0 0.0
    %4426 = vmatpush1.xpose.msra.mxu0 0.0
    %4427 = vmatprep.subr.mxu0 0.0
    %4428 = vmatpush1.xpose.msra.mxu0 0.0
    %4429 = vmatprep.subr.mxu0 0.0
    %4430 = vmatpush1.xpose.msra.mxu0 0.0
    %4431 = vmatprep.subr.mxu0 0.0
    %4432 = vmatpush1.xpose.msra.mxu0 0.0
    %4433 = vmatprep.subr.mxu0 0.0
    %4434 = vmatpush1.xpose.msra.mxu0 0.0
    %4435 = vmatprep.subr.mxu0 0.0
    %4436 = vmatpush1.xpose.msra.mxu0 0.0
    %4437 = vmatprep.subr.mxu0 0.0
    %4438 = vmatpush1.xpose.msra.mxu0 0.0
    %4439 = vmatprep.subr.mxu0 0.0
    %4440 = vmatpush1.xpose.msra.mxu0 0.0
    %4441 = vmatprep.subr.mxu0 0.0
    %4442 = vmatpush1.xpose.msra.mxu0 0.0
    %4443 = vmatprep.subr.mxu0 0.0
    %4444 = vmatpush1.xpose.msra.mxu0 0.0
    %4445 = vmatprep.subr.mxu0 0.0
    %4446 = vmatpush1.xpose.msra.mxu0 0.0
    %4447 = vmatprep.subr.mxu0 0.0
    %4448 = vmatpush1.xpose.msra.mxu0 0.0
    %4449 = vmatprep.subr.mxu0 0.0
    %4450 = vmatpush1.xpose.msra.mxu0 0.0
    %4451 = vmatprep.subr.mxu0 0.0
    %4452 = vmatpush1.xpose.msra.mxu0 0.0
    %4453 = vmatprep.subr.mxu0 0.0
    %4454 = vmatpush1.xpose.msra.mxu0 0.0
    %4455 = vmatprep.subr.mxu0 0.0
    %4456 = vmatpush1.xpose.msra.mxu0 0.0
    %4457 = vmatprep.subr.mxu0 0.0
    %4458 = vmatpush1.xpose.msra.mxu0 0.0
    %4459 = vmatprep.subr.mxu0 0.0
    %4460 = vmatpush1.xpose.msra.mxu0 0.0
    %4461 = vmatprep.subr.mxu0 0.0
    %4462 = vmatpush1.xpose.msra.mxu0 0.0
    %4463 = vmatprep.subr.mxu0 0.0
    %4464 = vmatpush1.xpose.msra.mxu0 0.0
    %4465 = vmatprep.subr.mxu0 0.0
    %4466 = vmatpush1.xpose.msra.mxu0 0.0
    %4467 = vmatprep.mubr.f32.mxu0 0.0
    %4468 = vmatmul.mubr.f32.gmra.mrb[0].mxu0 %v4387
    %v4469 = vpop.f32.mrb[0].mxu0
    %v4470 = vadd.f32 0.0, %v4469
    %v4471 = vpop.f32.mrb[0].mxu0
    %4472 = vmatprep.mubr.f32.mxu0 0.0
    %4473 = vmatmul.mubr.f32.gmra.mrb[0].mxu0 %v4389
    %v4474 = vpop.f32.mrb[0].mxu0
    %v4475 = vadd.f32 0.0, %v4474
    %v4476 = vpop.f32.mrb[0].mxu0
    %4477 = vmatprep.mubr.f32.mxu0 0.0
    %4478 = vmatmul.mubr.f32.gmra.mrb[0].mxu0 %v4391
    %v4479 = vpop.f32.mrb[0].mxu0
    %v4480 = vadd.f32 0.0, %v4479
    %v4481 = vpop.f32.mrb[0].mxu0
    %4482 = vmatprep.mubr.f32.mxu0 0.0
    %4483 = vmatmul.mubr.f32.gmra.mrb[0].mxu0 %v4393
    %v4484 = vpop.f32.mrb[0].mxu0
    %v4485 = vadd.f32 0.0, %v4484
    %v4486 = vpop.f32.mrb[0].mxu0
    %4487 = vmatprep.mubr.f32.mxu0 0.0
    %4488 = vmatmul.mubr.f32.gmra.mrb[0].mxu0 %v4395
    %v4489 = vpop.f32.mrb[0].mxu0
    %v4490 = vadd.f32 0.0, %v4489
    %v4491 = vpop.f32.mrb[0].mxu0
    %4492 = vmatprep.mubr.f32.mxu0 0.0
    %4493 = vmatmul.mubr.f32.gmra.mrb[0].mxu0 %v4397
    %v4494 = vpop.f32.mrb[0].mxu0
    %v4495 = vadd.f32 0.0, %v4494
    %v4496 = vpop.f32.mrb[0].mxu0
    %4497 = vmatprep.mubr.f32.mxu0 0.0
    %4498 = vmatmul.mubr.f32.gmra.mrb[0].mxu0 %v4399
    %v4499 = vpop.f32.mrb[0].mxu0
    %v4500 = vadd.f32 0.0, %v4499
    %v4501 = vpop.f32.mrb[0].mxu0
    %4502 = vmatprep.mubr.f32.mxu0 0.0
    %4503 = vmatmul.mubr.f32.gmra.mrb[0].mxu0 %v4401
    %v4504 = vpop.f32.mrb[0].mxu0
    %v4505 = vadd.f32 0.0, %v4504
    %v4506 = vpop.f32.mrb[0].mxu0
    %4507 = vdwg.mxu0
    %4508 = vrot.lane.b32.xlu0 %v4027, 32
    %v4509 = vpop.permute.xlu0 %4508
    %4510 = vrot.lane.b32.xlu0 %v4033, 32
    %v4511 = vpop.permute.xlu0 %4510
    %4512 = vrot.lane.b32.xlu0 %v4039, 32
    %v4513 = vpop.permute.xlu0 %4512
    %4514 = vrot.lane.b32.xlu0 %v4045, 32
    %v4515 = vpop.permute.xlu0 %4514
    %4516 = vrot.lane.b32.xlu0 %v4051, 32
    %v4517 = vpop.permute.xlu0 %4516
    %4518 = vrot.lane.b32.xlu0 %v4057, 32
    %v4519 = vpop.permute.xlu0 %4518
    %4520 = vrot.lane.b32.xlu0 %v4063, 32
    %v4521 = vpop.permute.xlu0 %4520
    %4522 = vrot.lane.b32.xlu0 %v4069, 32
    %v4523 = vpop.permute.xlu0 %4522
    %v4524 = vsel %vm3488, %v4509, 0
    %v4526 = vsel %vm3488, %v4511, 0
    %v4528 = vsel %vm3488, %v4513, 0
    %v4530 = vsel %vm3488, %v4515, 0
    %v4532 = vsel %vm3488, %v4517, 0
    %v4534 = vsel %vm3488, %v4519, 0
    %v4536 = vsel %vm3488, %v4521, 0
    %v4538 = vsel %vm3488, %v4523, 0
    %4540 = vmatprep.subr.mxu0 0.0
    %4541 = vmatpush1.xpose.msra.mxu0 %v4113
    %4542 = vmatprep.subr.mxu0 0.0
    %4543 = vmatpush1.xpose.msra.mxu0 %v4115
    %4544 = vmatprep.subr.mxu0 0.0
    %4545 = vmatpush1.xpose.msra.mxu0 %v4117
    %4546 = vmatprep.subr.mxu0 0.0
    %4547 = vmatpush1.xpose.msra.mxu0 %v4119
    %4548 = vmatprep.subr.mxu0 0.0
    %4549 = vmatpush1.xpose.msra.mxu0 %v4121
    %4550 = vmatprep.subr.mxu0 0.0
    %4551 = vmatpush1.xpose.msra.mxu0 %v4123
    %4552 = vmatprep.subr.mxu0 0.0
    %4553 = vmatpush1.xpose.msra.mxu0 %v4125
    %4554 = vmatprep.subr.mxu0 0.0
    %4555 = vmatpush1.xpose.msra.mxu0 %v4127
    %4556 = vmatprep.subr.mxu0 0.0
    %4557 = vmatpush1.xpose.msra.mxu0 0.0
    %4558 = vmatprep.subr.mxu0 0.0
    %4559 = vmatpush1.xpose.msra.mxu0 0.0
    %4560 = vmatprep.subr.mxu0 0.0
    %4561 = vmatpush1.xpose.msra.mxu0 0.0
    %4562 = vmatprep.subr.mxu0 0.0
    %4563 = vmatpush1.xpose.msra.mxu0 0.0
    %4564 = vmatprep.subr.mxu0 0.0
    %4565 = vmatpush1.xpose.msra.mxu0 0.0
    %4566 = vmatprep.subr.mxu0 0.0
    %4567 = vmatpush1.xpose.msra.mxu0 0.0
    %4568 = vmatprep.subr.mxu0 0.0
    %4569 = vmatpush1.xpose.msra.mxu0 0.0
    %4570 = vmatprep.subr.mxu0 0.0
    %4571 = vmatpush1.xpose.msra.mxu0 0.0
    %4572 = vmatprep.subr.mxu0 0.0
    %4573 = vmatpush1.xpose.msra.mxu0 0.0
    %4574 = vmatprep.subr.mxu0 0.0
    %4575 = vmatpush1.xpose.msra.mxu0 0.0
    %4576 = vmatprep.subr.mxu0 0.0
    %4577 = vmatpush1.xpose.msra.mxu0 0.0
    %4578 = vmatprep.subr.mxu0 0.0
    %4579 = vmatpush1.xpose.msra.mxu0 0.0
    %4580 = vmatprep.subr.mxu0 0.0
    %4581 = vmatpush1.xpose.msra.mxu0 0.0
    %4582 = vmatprep.subr.mxu0 0.0
    %4583 = vmatpush1.xpose.msra.mxu0 0.0
    %4584 = vmatprep.subr.mxu0 0.0
    %4585 = vmatpush1.xpose.msra.mxu0 0.0
    %4586 = vmatprep.subr.mxu0 0.0
    %4587 = vmatpush1.xpose.msra.mxu0 0.0
    %4588 = vmatprep.subr.mxu0 0.0
    %4589 = vmatpush1.xpose.msra.mxu0 0.0
    %4590 = vmatprep.subr.mxu0 0.0
    %4591 = vmatpush1.xpose.msra.mxu0 0.0
    %4592 = vmatprep.subr.mxu0 0.0
    %4593 = vmatpush1.xpose.msra.mxu0 0.0
    %4594 = vmatprep.subr.mxu0 0.0
    %4595 = vmatpush1.xpose.msra.mxu0 0.0
    %4596 = vmatprep.subr.mxu0 0.0
    %4597 = vmatpush1.xpose.msra.mxu0 0.0
    %4598 = vmatprep.subr.mxu0 0.0
    %4599 = vmatpush1.xpose.msra.mxu0 0.0
    %4600 = vmatprep.subr.mxu0 0.0
    %4601 = vmatpush1.xpose.msra.mxu0 0.0
    %4602 = vmatprep.subr.mxu0 0.0
    %4603 = vmatpush1.xpose.msra.mxu0 0.0
    %4604 = vmatprep.mubr.f32.mxu0 0.0
    %4605 = vmatmul.mubr.f32.gmra.mrb[0].mxu0 %v4524
    %v4606 = vpop.f32.mrb[0].mxu0
    %v4607 = vadd.f32 0.0, %v4606
    %v4608 = vpop.f32.mrb[0].mxu0
    %4609 = vmatprep.mubr.f32.mxu0 0.0
    %4610 = vmatmul.mubr.f32.gmra.mrb[0].mxu0 %v4526
    %v4611 = vpop.f32.mrb[0].mxu0
    %v4612 = vadd.f32 0.0, %v4611
    %v4613 = vpop.f32.mrb[0].mxu0
    %4614 = vmatprep.mubr.f32.mxu0 0.0
    %4615 = vmatmul.mubr.f32.gmra.mrb[0].mxu0 %v4528
    %v4616 = vpop.f32.mrb[0].mxu0
    %v4617 = vadd.f32 0.0, %v4616
    %v4618 = vpop.f32.mrb[0].mxu0
    %4619 = vmatprep.mubr.f32.mxu0 0.0
    %4620 = vmatmul.mubr.f32.gmra.mrb[0].mxu0 %v4530
    %v4621 = vpop.f32.mrb[0].mxu0
    %v4622 = vadd.f32 0.0, %v4621
    %v4623 = vpop.f32.mrb[0].mxu0
    %4624 = vmatprep.mubr.f32.mxu0 0.0
    %4625 = vmatmul.mubr.f32.gmra.mrb[0].mxu0 %v4532
    %v4626 = vpop.f32.mrb[0].mxu0
    %v4627 = vadd.f32 0.0, %v4626
    %v4628 = vpop.f32.mrb[0].mxu0
    %4629 = vmatprep.mubr.f32.mxu0 0.0
    %4630 = vmatmul.mubr.f32.gmra.mrb[0].mxu0 %v4534
    %v4631 = vpop.f32.mrb[0].mxu0
    %v4632 = vadd.f32 0.0, %v4631
    %v4633 = vpop.f32.mrb[0].mxu0
    %4634 = vmatprep.mubr.f32.mxu0 0.0
    %4635 = vmatmul.mubr.f32.gmra.mrb[0].mxu0 %v4536
    %v4636 = vpop.f32.mrb[0].mxu0
    %v4637 = vadd.f32 0.0, %v4636
    %v4638 = vpop.f32.mrb[0].mxu0
    %4639 = vmatprep.mubr.f32.mxu0 0.0
    %4640 = vmatmul.mubr.f32.gmra.mrb[0].mxu0 %v4538
    %v4641 = vpop.f32.mrb[0].mxu0
    %v4642 = vadd.f32 0.0, %v4641
    %v4643 = vpop.f32.mrb[0].mxu0
    %4644 = vdwg.mxu0
    %v4646 = vsel %vm3488, %v4029, 0
    %v4649 = vsel %vm3488, %v4035, 0
    %v4652 = vsel %vm3488, %v4041, 0
    %v4655 = vsel %vm3488, %v4047, 0
    %v4658 = vsel %vm3488, %v4053, 0
    %v4661 = vsel %vm3488, %v4059, 0
    %v4664 = vsel %vm3488, %v4065, 0
    %v4667 = vsel %vm3488, %v4071, 0
    %4669 = vmatprep.subr.mxu0 0.0
    %4670 = vmatpush1.xpose.msra.mxu0 %v4113
    %4671 = vmatprep.subr.mxu0 0.0
    %4672 = vmatpush1.xpose.msra.mxu0 %v4115
    %4673 = vmatprep.subr.mxu0 0.0
    %4674 = vmatpush1.xpose.msra.mxu0 %v4117
    %4675 = vmatprep.subr.mxu0 0.0
    %4676 = vmatpush1.xpose.msra.mxu0 %v4119
    %4677 = vmatprep.subr.mxu0 0.0
    %4678 = vmatpush1.xpose.msra.mxu0 %v4121
    %4679 = vmatprep.subr.mxu0 0.0
    %4680 = vmatpush1.xpose.msra.mxu0 %v4123
    %4681 = vmatprep.subr.mxu0 0.0
    %4682 = vmatpush1.xpose.msra.mxu0 %v4125
    %4683 = vmatprep.subr.mxu0 0.0
    %4684 = vmatpush1.xpose.msra.mxu0 %v4127
    %4685 = vmatprep.subr.mxu0 0.0
    %4686 = vmatpush1.xpose.msra.mxu0 0.0
    %4687 = vmatprep.subr.mxu0 0.0
    %4688 = vmatpush1.xpose.msra.mxu0 0.0
    %4689 = vmatprep.subr.mxu0 0.0
    %4690 = vmatpush1.xpose.msra.mxu0 0.0
    %4691 = vmatprep.subr.mxu0 0.0
    %4692 = vmatpush1.xpose.msra.mxu0 0.0
    %4693 = vmatprep.subr.mxu0 0.0
    %4694 = vmatpush1.xpose.msra.mxu0 0.0
    %4695 = vmatprep.subr.mxu0 0.0
    %4696 = vmatpush1.xpose.msra.mxu0 0.0
    %4697 = vmatprep.subr.mxu0 0.0
    %4698 = vmatpush1.xpose.msra.mxu0 0.0
    %4699 = vmatprep.subr.mxu0 0.0
    %4700 = vmatpush1.xpose.msra.mxu0 0.0
    %4701 = vmatprep.subr.mxu0 0.0
    %4702 = vmatpush1.xpose.msra.mxu0 0.0
    %4703 = vmatprep.subr.mxu0 0.0
    %4704 = vmatpush1.xpose.msra.mxu0 0.0
    %4705 = vmatprep.subr.mxu0 0.0
    %4706 = vmatpush1.xpose.msra.mxu0 0.0
    %4707 = vmatprep.subr.mxu0 0.0
    %4708 = vmatpush1.xpose.msra.mxu0 0.0
    %4709 = vmatprep.subr.mxu0 0.0
    %4710 = vmatpush1.xpose.msra.mxu0 0.0
    %4711 = vmatprep.subr.mxu0 0.0
    %4712 = vmatpush1.xpose.msra.mxu0 0.0
    %4713 = vmatprep.subr.mxu0 0.0
    %4714 = vmatpush1.xpose.msra.mxu0 0.0
    %4715 = vmatprep.subr.mxu0 0.0
    %4716 = vmatpush1.xpose.msra.mxu0 0.0
    %4717 = vmatprep.subr.mxu0 0.0
    %4718 = vmatpush1.xpose.msra.mxu0 0.0
    %4719 = vmatprep.subr.mxu0 0.0
    %4720 = vmatpush1.xpose.msra.mxu0 0.0
    %4721 = vmatprep.subr.mxu0 0.0
    %4722 = vmatpush1.xpose.msra.mxu0 0.0
    %4723 = vmatprep.subr.mxu0 0.0
    %4724 = vmatpush1.xpose.msra.mxu0 0.0
    %4725 = vmatprep.subr.mxu0 0.0
    %4726 = vmatpush1.xpose.msra.mxu0 0.0
    %4727 = vmatprep.subr.mxu0 0.0
    %4728 = vmatpush1.xpose.msra.mxu0 0.0
    %4729 = vmatprep.subr.mxu0 0.0
    %4730 = vmatpush1.xpose.msra.mxu0 0.0
    %4731 = vmatprep.subr.mxu0 0.0
    %4732 = vmatpush1.xpose.msra.mxu0 0.0
    %4733 = vmatprep.mubr.f32.mxu0 0.0
    %4734 = vmatmul.mubr.f32.gmra.mrb[0].mxu0 %v4646
    %v4735 = vpop.f32.mrb[0].mxu0
    %v4736 = vadd.f32 0.0, %v4735
    %v4737 = vpop.f32.mrb[0].mxu0
    %4738 = vmatprep.mubr.f32.mxu0 0.0
    %4739 = vmatmul.mubr.f32.gmra.mrb[0].mxu0 %v4649
    %v4740 = vpop.f32.mrb[0].mxu0
    %v4741 = vadd.f32 0.0, %v4740
    %v4742 = vpop.f32.mrb[0].mxu0
    %4743 = vmatprep.mubr.f32.mxu0 0.0
    %4744 = vmatmul.mubr.f32.gmra.mrb[0].mxu0 %v4652
    %v4745 = vpop.f32.mrb[0].mxu0
    %v4746 = vadd.f32 0.0, %v4745
    %v4747 = vpop.f32.mrb[0].mxu0
    %4748 = vmatprep.mubr.f32.mxu0 0.0
    %4749 = vmatmul.mubr.f32.gmra.mrb[0].mxu0 %v4655
    %v4750 = vpop.f32.mrb[0].mxu0
    %v4751 = vadd.f32 0.0, %v4750
    %v4752 = vpop.f32.mrb[0].mxu0
    %4753 = vmatprep.mubr.f32.mxu0 0.0
    %4754 = vmatmul.mubr.f32.gmra.mrb[0].mxu0 %v4658
    %v4755 = vpop.f32.mrb[0].mxu0
    %v4756 = vadd.f32 0.0, %v4755
    %v4757 = vpop.f32.mrb[0].mxu0
    %4758 = vmatprep.mubr.f32.mxu0 0.0
    %4759 = vmatmul.mubr.f32.gmra.mrb[0].mxu0 %v4661
    %v4760 = vpop.f32.mrb[0].mxu0
    %v4761 = vadd.f32 0.0, %v4760
    %v4762 = vpop.f32.mrb[0].mxu0
    %4763 = vmatprep.mubr.f32.mxu0 0.0
    %4764 = vmatmul.mubr.f32.gmra.mrb[0].mxu0 %v4664
    %v4765 = vpop.f32.mrb[0].mxu0
    %v4766 = vadd.f32 0.0, %v4765
    %v4767 = vpop.f32.mrb[0].mxu0
    %4768 = vmatprep.mubr.f32.mxu0 0.0
    %4769 = vmatmul.mubr.f32.gmra.mrb[0].mxu0 %v4667
    %v4770 = vpop.f32.mrb[0].mxu0
    %v4771 = vadd.f32 0.0, %v4770
    %v4772 = vpop.f32.mrb[0].mxu0
    %4773 = vdwg.mxu0
    %4774 = vrot.lane.b32.xlu0 %v4029, 96
    %v4775 = vpop.permute.xlu0 %4774
    %4776 = vrot.lane.b32.xlu0 %v4035, 96
    %v4777 = vpop.permute.xlu0 %4776
    %4778 = vrot.lane.b32.xlu0 %v4041, 96
    %v4779 = vpop.permute.xlu0 %4778
    %4780 = vrot.lane.b32.xlu0 %v4047, 96
    %v4781 = vpop.permute.xlu0 %4780
    %4782 = vrot.lane.b32.xlu0 %v4053, 96
    %v4783 = vpop.permute.xlu0 %4782
    %4784 = vrot.lane.b32.xlu0 %v4059, 96
    %v4785 = vpop.permute.xlu0 %4784
    %4786 = vrot.lane.b32.xlu0 %v4065, 96
    %v4787 = vpop.permute.xlu0 %4786
    %4788 = vrot.lane.b32.xlu0 %v4071, 96
    %v4789 = vpop.permute.xlu0 %4788
    %v4790 = vsel %vm3488, %v4775, 0
    %v4792 = vsel %vm3488, %v4777, 0
    %v4794 = vsel %vm3488, %v4779, 0
    %v4796 = vsel %vm3488, %v4781, 0
    %v4798 = vsel %vm3488, %v4783, 0
    %v4800 = vsel %vm3488, %v4785, 0
    %v4802 = vsel %vm3488, %v4787, 0
    %v4804 = vsel %vm3488, %v4789, 0
    %4806 = vmatprep.subr.mxu0 0.0
    %4807 = vmatpush1.xpose.msra.mxu0 %v4113
    %4808 = vmatprep.subr.mxu0 0.0
    %4809 = vmatpush1.xpose.msra.mxu0 %v4115
    %4810 = vmatprep.subr.mxu0 0.0
    %4811 = vmatpush1.xpose.msra.mxu0 %v4117
    %4812 = vmatprep.subr.mxu0 0.0
    %4813 = vmatpush1.xpose.msra.mxu0 %v4119
    %4814 = vmatprep.subr.mxu0 0.0
    %4815 = vmatpush1.xpose.msra.mxu0 %v4121
    %4816 = vmatprep.subr.mxu0 0.0
    %4817 = vmatpush1.xpose.msra.mxu0 %v4123
    %4818 = vmatprep.subr.mxu0 0.0
    %4819 = vmatpush1.xpose.msra.mxu0 %v4125
    %4820 = vmatprep.subr.mxu0 0.0
    %4821 = vmatpush1.xpose.msra.mxu0 %v4127
    %4822 = vmatprep.subr.mxu0 0.0
    %4823 = vmatpush1.xpose.msra.mxu0 0.0
    %4824 = vmatprep.subr.mxu0 0.0
    %4825 = vmatpush1.xpose.msra.mxu0 0.0
    %4826 = vmatprep.subr.mxu0 0.0
    %4827 = vmatpush1.xpose.msra.mxu0 0.0
    %4828 = vmatprep.subr.mxu0 0.0
    %4829 = vmatpush1.xpose.msra.mxu0 0.0
    %4830 = vmatprep.subr.mxu0 0.0
    %4831 = vmatpush1.xpose.msra.mxu0 0.0
    %4832 = vmatprep.subr.mxu0 0.0
    %4833 = vmatpush1.xpose.msra.mxu0 0.0
    %4834 = vmatprep.subr.mxu0 0.0
    %4835 = vmatpush1.xpose.msra.mxu0 0.0
    %4836 = vmatprep.subr.mxu0 0.0
    %4837 = vmatpush1.xpose.msra.mxu0 0.0
    %4838 = vmatprep.subr.mxu0 0.0
    %4839 = vmatpush1.xpose.msra.mxu0 0.0
    %4840 = vmatprep.subr.mxu0 0.0
    %4841 = vmatpush1.xpose.msra.mxu0 0.0
    %4842 = vmatprep.subr.mxu0 0.0
    %4843 = vmatpush1.xpose.msra.mxu0 0.0
    %4844 = vmatprep.subr.mxu0 0.0
    %4845 = vmatpush1.xpose.msra.mxu0 0.0
    %4846 = vmatprep.subr.mxu0 0.0
    %4847 = vmatpush1.xpose.msra.mxu0 0.0
    %4848 = vmatprep.subr.mxu0 0.0
    %4849 = vmatpush1.xpose.msra.mxu0 0.0
    %4850 = vmatprep.subr.mxu0 0.0
    %4851 = vmatpush1.xpose.msra.mxu0 0.0
    %4852 = vmatprep.subr.mxu0 0.0
    %4853 = vmatpush1.xpose.msra.mxu0 0.0
    %4854 = vmatprep.subr.mxu0 0.0
    %4855 = vmatpush1.xpose.msra.mxu0 0.0
    %4856 = vmatprep.subr.mxu0 0.0
    %4857 = vmatpush1.xpose.msra.mxu0 0.0
    %4858 = vmatprep.subr.mxu0 0.0
    %4859 = vmatpush1.xpose.msra.mxu0 0.0
    %4860 = vmatprep.subr.mxu0 0.0
    %4861 = vmatpush1.xpose.msra.mxu0 0.0
    %4862 = vmatprep.subr.mxu0 0.0
    %4863 = vmatpush1.xpose.msra.mxu0 0.0
    %4864 = vmatprep.subr.mxu0 0.0
    %4865 = vmatpush1.xpose.msra.mxu0 0.0
    %4866 = vmatprep.subr.mxu0 0.0
    %4867 = vmatpush1.xpose.msra.mxu0 0.0
    %4868 = vmatprep.subr.mxu0 0.0
    %4869 = vmatpush1.xpose.msra.mxu0 0.0
    %4870 = vmatprep.mubr.f32.mxu0 0.0
    %4871 = vmatmul.mubr.f32.gmra.mrb[0].mxu0 %v4790
    %v4872 = vpop.f32.mrb[0].mxu0
    %v4873 = vadd.f32 0.0, %v4872
    %v4874 = vpop.f32.mrb[0].mxu0
    %4875 = vmatprep.mubr.f32.mxu0 0.0
    %4876 = vmatmul.mubr.f32.gmra.mrb[0].mxu0 %v4792
    %v4877 = vpop.f32.mrb[0].mxu0
    %v4878 = vadd.f32 0.0, %v4877
    %v4879 = vpop.f32.mrb[0].mxu0
    %4880 = vmatprep.mubr.f32.mxu0 0.0
    %4881 = vmatmul.mubr.f32.gmra.mrb[0].mxu0 %v4794
    %v4882 = vpop.f32.mrb[0].mxu0
    %v4883 = vadd.f32 0.0, %v4882
    %v4884 = vpop.f32.mrb[0].mxu0
    %4885 = vmatprep.mubr.f32.mxu0 0.0
    %4886 = vmatmul.mubr.f32.gmra.mrb[0].mxu0 %v4796
    %v4887 = vpop.f32.mrb[0].mxu0
    %v4888 = vadd.f32 0.0, %v4887
    %v4889 = vpop.f32.mrb[0].mxu0
    %4890 = vmatprep.mubr.f32.mxu0 0.0
    %4891 = vmatmul.mubr.f32.gmra.mrb[0].mxu0 %v4798
    %v4892 = vpop.f32.mrb[0].mxu0
    %v4893 = vadd.f32 0.0, %v4892
    %v4894 = vpop.f32.mrb[0].mxu0
    %4895 = vmatprep.mubr.f32.mxu0 0.0
    %4896 = vmatmul.mubr.f32.gmra.mrb[0].mxu0 %v4800
    %v4897 = vpop.f32.mrb[0].mxu0
    %v4898 = vadd.f32 0.0, %v4897
    %v4899 = vpop.f32.mrb[0].mxu0
    %4900 = vmatprep.mubr.f32.mxu0 0.0
    %4901 = vmatmul.mubr.f32.gmra.mrb[0].mxu0 %v4802
    %v4902 = vpop.f32.mrb[0].mxu0
    %v4903 = vadd.f32 0.0, %v4902
    %v4904 = vpop.f32.mrb[0].mxu0
    %4905 = vmatprep.mubr.f32.mxu0 0.0
    %4906 = vmatmul.mubr.f32.gmra.mrb[0].mxu0 %v4804
    %v4907 = vpop.f32.mrb[0].mxu0
    %v4908 = vadd.f32 0.0, %v4907
    %v4909 = vpop.f32.mrb[0].mxu0
    %4910 = vdwg.mxu0
    %4919 = vrot.lane.b32.xlu0 %v4196, 64
    %v4920 = vpop.permute.xlu0 %4919
    %4921 = vrot.lane.b32.xlu0 %v4201, 64
    %v4922 = vpop.permute.xlu0 %4921
    %4923 = vrot.lane.b32.xlu0 %v4206, 64
    %v4924 = vpop.permute.xlu0 %4923
    %4925 = vrot.lane.b32.xlu0 %v4211, 64
    %v4926 = vpop.permute.xlu0 %4925
    %4927 = vrot.lane.b32.xlu0 %v4216, 64
    %v4928 = vpop.permute.xlu0 %4927
    %4929 = vrot.lane.b32.xlu0 %v4221, 64
    %v4930 = vpop.permute.xlu0 %4929
    %4931 = vrot.lane.b32.xlu0 %v4226, 64
    %v4932 = vpop.permute.xlu0 %4931
    %4933 = vrot.lane.b32.xlu0 %v4231, 64
    %v4934 = vpop.permute.xlu0 %4933
    %4951 = vrot.lane.b32.xlu0 %v4470, 64
    %v4952 = vpop.permute.xlu0 %4951
    %4953 = vrot.lane.b32.xlu0 %v4475, 64
    %v4954 = vpop.permute.xlu0 %4953
    %4955 = vrot.lane.b32.xlu0 %v4480, 64
    %v4956 = vpop.permute.xlu0 %4955
    %4957 = vrot.lane.b32.xlu0 %v4485, 64
    %v4958 = vpop.permute.xlu0 %4957
    %4959 = vrot.lane.b32.xlu0 %v4490, 64
    %v4960 = vpop.permute.xlu0 %4959
    %4961 = vrot.lane.b32.xlu0 %v4495, 64
    %v4962 = vpop.permute.xlu0 %4961
    %4963 = vrot.lane.b32.xlu0 %v4500, 64
    %v4964 = vpop.permute.xlu0 %4963
    %4965 = vrot.lane.b32.xlu0 %v4505, 64
    %v4966 = vpop.permute.xlu0 %4965
    %4983 = vrot.lane.b32.xlu0 %v4736, 64
    %v4984 = vpop.permute.xlu0 %4983
    %4985 = vrot.lane.b32.xlu0 %v4741, 64
    %v4986 = vpop.permute.xlu0 %4985
    %4987 = vrot.lane.b32.xlu0 %v4746, 64
    %v4988 = vpop.permute.xlu0 %4987
    %4989 = vrot.lane.b32.xlu0 %v4751, 64
    %v4990 = vpop.permute.xlu0 %4989
    %4991 = vrot.lane.b32.xlu0 %v4756, 64
    %v4992 = vpop.permute.xlu0 %4991
    %4993 = vrot.lane.b32.xlu0 %v4761, 64
    %v4994 = vpop.permute.xlu0 %4993
    %4995 = vrot.lane.b32.xlu0 %v4766, 64
    %v4996 = vpop.permute.xlu0 %4995
    %4997 = vrot.lane.b32.xlu0 %v4771, 64
    %v4998 = vpop.permute.xlu0 %4997
    %5015 = vrot.lane.b32.xlu0 %v3582, 64
    %v5016 = vpop.permute.xlu0 %5015
    %5017 = vrot.lane.b32.xlu0 %v3588, 64
    %v5018 = vpop.permute.xlu0 %5017
    %5019 = vrot.lane.b32.xlu0 %v3594, 64
    %v5020 = vpop.permute.xlu0 %5019
    %5021 = vrot.lane.b32.xlu0 %v3600, 64
    %v5022 = vpop.permute.xlu0 %5021
    %5023 = vrot.lane.b32.xlu0 %v3606, 64
    %v5024 = vpop.permute.xlu0 %5023
    %5025 = vrot.lane.b32.xlu0 %v3612, 64
    %v5026 = vpop.permute.xlu0 %5025
    %5027 = vrot.lane.b32.xlu0 %v3618, 64
    %v5028 = vpop.permute.xlu0 %5027
    %5029 = vrot.lane.b32.xlu0 %v3624, 64
    %v5030 = vpop.permute.xlu0 %5029
    %v5039 = vsel %vm269, %v3882, %v4920
    %v5040 = vsel %vm269, %v3887, %v4922
    %v5041 = vsel %vm269, %v3892, %v4924
    %v5042 = vsel %vm269, %v3897, %v4926
    %v5043 = vsel %vm269, %v3902, %v4928
    %v5044 = vsel %vm269, %v3907, %v4930
    %v5045 = vsel %vm269, %v3912, %v4932
    %v5046 = vsel %vm269, %v3917, %v4934
    %v5047 = vsel %vm269, %v4333, %v4952
    %v5048 = vsel %vm269, %v4338, %v4954
    %v5049 = vsel %vm269, %v4343, %v4956
    %v5050 = vsel %vm269, %v4348, %v4958
    %v5051 = vsel %vm269, %v4353, %v4960
    %v5052 = vsel %vm269, %v4358, %v4962
    %v5053 = vsel %vm269, %v4363, %v4964
    %v5054 = vsel %vm269, %v4368, %v4966
    %v5055 = vsel %vm269, %v4607, %v4984
    %v5056 = vsel %vm269, %v4612, %v4986
    %v5057 = vsel %vm269, %v4617, %v4988
    %v5058 = vsel %vm269, %v4622, %v4990
    %v5059 = vsel %vm269, %v4627, %v4992
    %v5060 = vsel %vm269, %v4632, %v4994
    %v5061 = vsel %vm269, %v4637, %v4996
    %v5062 = vsel %vm269, %v4642, %v4998
    %v5063 = vsel %vm269, %v4873, %v5016
    %v5064 = vsel %vm269, %v4878, %v5018
    %v5065 = vsel %vm269, %v4883, %v5020
    %v5066 = vsel %vm269, %v4888, %v5022
    %v5067 = vsel %vm269, %v4893, %v5024
    %v5068 = vsel %vm269, %v4898, %v5026
    %v5069 = vsel %vm269, %v4903, %v5028
    %v5070 = vsel %vm269, %v4908, %v5030
    %5071 = vst [vmem:[%s16] sm:$0xff] %v5039
    %5072 = vst [vmem:[%s16 + $0x8] sm:$0xff] %v5047
    %5073 = vst [vmem:[%s16 + $0x10] sm:$0xff] %v5055
    %5074 = vst [vmem:[%s16 + $0x18] sm:$0xff] %v5063
    %5075 = vst [vmem:[%s16 + $0x20] sm:$0xff] %v5040
    %5076 = vst [vmem:[%s16 + $0x28] sm:$0xff] %v5048
    %5077 = vst [vmem:[%s16 + $0x30] sm:$0xff] %v5056
    %5078 = vst [vmem:[%s16 + $0x38] sm:$0xff] %v5064
    %5079 = vst [vmem:[%s16 + $0x40] sm:$0xff] %v5041
    %5080 = vst [vmem:[%s16 + $0x48] sm:$0xff] %v5049
    %5081 = vst [vmem:[%s16 + $0x50] sm:$0xff] %v5057
    %5082 = vst [vmem:[%s16 + $0x58] sm:$0xff] %v5065
    %5083 = vst [vmem:[%s16 + $0x60] sm:$0xff] %v5042
    %5084 = vst [vmem:[%s16 + $0x68] sm:$0xff] %v5050
    %5085 = vst [vmem:[%s16 + $0x70] sm:$0xff] %v5058
    %5086 = vst [vmem:[%s16 + $0x78] sm:$0xff] %v5066
    %5087 = vst [vmem:[%s16 + $0x80] sm:$0xff] %v5043
    %5088 = vst [vmem:[%s16 + $0x88] sm:$0xff] %v5051
    %5089 = vst [vmem:[%s16 + $0x90] sm:$0xff] %v5059
    %5090 = vst [vmem:[%s16 + $0x98] sm:$0xff] %v5067
    %5091 = vst [vmem:[%s16 + $0xa0] sm:$0xff] %v5044
    %5092 = vst [vmem:[%s16 + $0xa8] sm:$0xff] %v5052
    %5093 = vst [vmem:[%s16 + $0xb0] sm:$0xff] %v5060
    %5094 = vst [vmem:[%s16 + $0xb8] sm:$0xff] %v5068
    %5095 = vst [vmem:[%s16 + $0xc0] sm:$0xff] %v5045
    %5096 = vst [vmem:[%s16 + $0xc8] sm:$0xff] %v5053
    %5097 = vst [vmem:[%s16 + $0xd0] sm:$0xff] %v5061
    %5098 = vst [vmem:[%s16 + $0xd8] sm:$0xff] %v5069
    %5099 = vst [vmem:[%s16 + $0xe0] sm:$0xff] %v5046
    %5100 = vst [vmem:[%s16 + $0xe8] sm:$0xff] %v5054
    %5101 = vst [vmem:[%s16 + $0xf0] sm:$0xff] %v5062
    %5102 = vst [vmem:[%s16 + $0xf8] sm:$0xff] %v5070
    // Predicated region
    $region122: #{biaffine_parser_forward.1} parent=1 // pred_check
      _
    $region123: #{biaffine_parser_forward.1} parent=1 // pred_check_branch
      %5104 = sbr.rel (0) target = $region125
    $region124: #{biaffine_parser_forward.1} parent=1 // pred_region
      _
    $region125: #{biaffine_parser_forward.1} parent=1 // pred_fallthru
      _
    // Predicated region
    $region126: #{biaffine_parser_forward.1} parent=1 // pred_check
      _
    $region127: #{biaffine_parser_forward.1} parent=1 // pred_check_branch
      %5106 = sbr.rel (0) target = $region129
    $region128: #{biaffine_parser_forward.1} parent=1 // pred_region
      _
    $region129: #{biaffine_parser_forward.1} parent=1 // pred_fallthru
      _
    %5107 = vsyncpa [#allocation6], 1
    %5108 = vsyncpa [#allocation8], 1
    %5109 = vsyncpa [#allocation11], 1
    %5110 = vsyncpa [#allocation14], 1
    %5111 = vsyncpa [#allocation17], 1
    %5112 = vsyncpa [#allocation20], 1
    %5113 = vsyncpa [#allocation23], 1
    %5114 = vsyncpa [#allocation26], 1

</llo_original>
